<compile_context>
chip_gen: v7x
topology: tpu7x:2x2x1
jax: 0.10.0
libtpu: 0.0.40
codegen_flags: <defaults>
</compile_context>

<pallas_src>
import functools

import jax
import jax.numpy as jnp
from jax import lax
from jax.experimental import pallas as pl
from jax.experimental.pallas import tpu as pltpu

# ----------------------------- model dimensions -----------------------------
V = 32      # vocab_size
E = 16      # embedding_size
FC1 = 16    # fc1_size (declared by the module but never used in forward)
H = 32      # hidden_size
LAT = 16    # latent_size
L = 2       # num_layers (encoder and decoder)
SX = 8      # encoder input sequence length
SY = 8      # decoder target sequence length
STRIDE = 4

V_PAD = 128     # vocab padded to a full 128-lane vreg
G = 4 * H       # packed gate width (i,f,g,o) = 128

# ---------------- packed weight blob layout (rows x 128 lanes) ---------------
# 8-aligned row offsets.  Encoder input->gate (WX) and hidden->gate (WH) are
# stored separately so WX can be applied to the whole sequence outside the
# recurrent loop.  Gate order everywhere is PyTorch's [i | f | g | o].
_ENC_WX = ((0, 128), (256, 384))     # [layer][dir]: 128 rows (rows 0:in_sz = W_ih^T, rest 0)
_ENC_WH = ((512, 544), (576, 608))   # [layer][dir]: 32 rows = W_hh^T
_ENC_B = ((640, 648), (656, 664))    # [layer][dir]: 1 row = b_ih + b_hh
_EMB = 672        # embedding (V rows, cols 0:E)
_FC2W = 704       # fc2 weight^T (H rows, cols 0:LAT)
_FC2B = 736       # fc2 bias (1 row, cols 0:LAT)
_FCUPW = 744      # fc_upscale weight^T (LAT rows, cols 0:H)
_FCUPB = 760      # fc_upscale bias (1 row, cols 0:H)
_DEC_WIH0 = 768   # decoder layer-0 W_ih^T (1 row; input_size == 1)
_DEC_WHH0 = 776   # decoder layer-0 W_hh^T (H rows)
_DEC_B0 = 808     # decoder layer-0 bias (1 row)
_DEC_WIH1 = 816   # decoder layer-1 W_ih^T (H rows)
_DEC_WHH1 = 848   # decoder layer-1 W_hh^T (H rows)
_DEC_B1 = 880     # decoder layer-1 bias (1 row)
_FCOUTW = 888     # fc_out weight^T (H rows, cols 0:V)
_FCOUTB = 920     # fc_out bias (1 row, cols 0:V)
_BLOB_ROWS = 928


# --------------------------------- kernel -----------------------------------
def _dae_kernel(x_ref, y0_ref, w_ref, out_ref,
                seq_sc, outf_sc, outb_sc, xf_sc, xb_sc, *, n_steps):
    f32 = jnp.float32
    Sx = x_ref.shape[0]

    # ---------------- Encoder: bidirectional 2-layer LSTM ----------------
    # embedding lookup as one-hot @ table (full 128-lane RHS; cols E:128 are 0)
    vocab_iota = lax.broadcasted_iota(jnp.int32, (Sx, V), 1)
    onehot = (x_ref[...] == vocab_iota).astype(f32)                       # (Sx, V)
    seq_sc[...] = jnp.dot(onehot, w_ref[_EMB:_EMB + V, :],
                          preferred_element_type=f32)                     # (Sx, 128)

    def enc_layer(l, store_out):
        # hoisted per-layer weights / biases (kept in vregs across the loop)
        whf = w_ref[_ENC_WH[l][0]:_ENC_WH[l][0] + H, :]                   # (H, 128)
        whb = w_ref[_ENC_WH[l][1]:_ENC_WH[l][1] + H, :]
        bf = w_ref[_ENC_B[l][0]:_ENC_B[l][0] + 1, :]                      # (1, 128)
        bb = w_ref[_ENC_B[l][1]:_ENC_B[l][1] + 1, :]

        # input->gate contributions for EVERY timestep, hoisted out of the
        # recurrence: one (Sx,128)x(128,128) matmul per direction (+ bias).
        xin = seq_sc[...]                                                 # (Sx, 128)
        xf_sc[...] = jnp.dot(xin, w_ref[_ENC_WX[l][0]:_ENC_WX[l][0] + 128, :],
                             preferred_element_type=f32) + bf
        xb_sc[...] = jnp.dot(xin, w_ref[_ENC_WX[l][1]:_ENC_WX[l][1] + 128, :],
                             preferred_element_type=f32) + bb

        def step(k, carry):
            h2, c2 = carry                       # (2, H): row0 = fwd, row1 = bwd
            t = k
            r = Sx - 1 - k
            # per-step work is only the K=32 hidden->gate matmuls + gate math
            hg_f = jnp.dot(h2[0:1, :], whf, preferred_element_type=f32)   # (1, 128)
            hg_b = jnp.dot(h2[1:2, :], whb, preferred_element_type=f32)
            gates = jnp.concatenate(
                [xf_sc[pl.ds(t, 1), :] + hg_f,
                 xb_sc[pl.ds(r, 1), :] + hg_b], axis=0)                   # (2, 128)
            sg = jax.nn.sigmoid(gates)           # full-vreg EUP push
            th = jnp.tanh(gates)                 # full-vreg EUP push
            c2n = sg[:, H:2 * H] * c2 + sg[:, 0:H] * th[:, 2 * H:3 * H]
            h2n = sg[:, 3 * H:4 * H] * jnp.tanh(c2n)
            if store_out:
                outf_sc[pl.ds(t, 1), :] = h2n[0:1, :]
                outb_sc[pl.ds(r, 1), :] = h2n[1:2, :]
            return (h2n, c2n)

        return lax.fori_loop(
            0, Sx, step,
            (jnp.zeros((2, H), f32), jnp.zeros((2, H), f32)),
            unroll=True)[0]

    enc_layer(0, True)
    # layer-1 input sequence = [h_fwd | h_bwd | 0 | 0]  (one concat, off the loop)
    seq_sc[...] = jnp.concatenate(
        [outf_sc[...], outb_sc[...], jnp.zeros((Sx, 2 * H), f32)], axis=1)
    h_last2 = enc_layer(1, False)                                         # (2, H)

    # fc2 (+ eval-mode dropout = identity); decoder bidirectional=False merge
    ctx2 = jnp.dot(h_last2, w_ref[_FC2W:_FC2W + H, :],
                   preferred_element_type=f32) + w_ref[_FC2B:_FC2B + 1, :]  # (2,128)
    ctx = (ctx2[0:1, :] * ctx2[1:2, :])[:, 0:LAT]                            # (1, LAT)
    h0 = (jnp.dot(ctx, w_ref[_FCUPW:_FCUPW + LAT, :],
                  preferred_element_type=f32)
          + w_ref[_FCUPB:_FCUPB + 1, :])[:, 0:H]                             # (1, H)

    # ---------------- Decoder: greedy 2-layer LSTM ----------------
    out_ref[...] = jnp.zeros_like(out_ref)          # rows past n_steps stay 0
    col_pad = lax.broadcasted_iota(jnp.int32, (1, V_PAD), 1)

    # hoisted decoder weights / biases
    wih0 = w_ref[_DEC_WIH0:_DEC_WIH0 + 1, :]
    whh0 = w_ref[_DEC_WHH0:_DEC_WHH0 + H, :]
    b0 = w_ref[_DEC_B0:_DEC_B0 + 1, :]
    wih1 = w_ref[_DEC_WIH1:_DEC_WIH1 + H, :]
    whh1 = w_ref[_DEC_WHH1:_DEC_WHH1 + H, :]
    b1 = w_ref[_DEC_B1:_DEC_B1 + 1, :]
    wout = w_ref[_FCOUTW:_FCOUTW + H, :]
    bout = w_ref[_FCOUTB:_FCOUTB + 1, :]

    cur0 = jnp.full((1, 1), y0_ref[0], dtype=f32)   # y[0] token id fed as raw float

    def dec_step(i, carry):
        cur, h0d, c0d, h1d, c1d = carry
        # layer 0: input_size == 1 -> scalar * W_ih^T row (VPU), no matmul
        g0 = cur * wih0 + jnp.dot(h0d, whh0, preferred_element_type=f32) + b0
        sg0 = jax.nn.sigmoid(g0)
        th0 = jnp.tanh(g0)
        c0n = sg0[:, H:2 * H] * c0d + sg0[:, 0:H] * th0[:, 2 * H:3 * H]
        h0n = sg0[:, 3 * H:4 * H] * jnp.tanh(c0n)
        # layer 1: two K=32 matmuls, no concat
        g1 = (jnp.dot(h0n, wih1, preferred_element_type=f32)
              + jnp.dot(h1d, whh1, preferred_element_type=f32) + b1)
        sg1 = jax.nn.sigmoid(g1)
        th1 = jnp.tanh(g1)
        c1n = sg1[:, H:2 * H] * c1d + sg1[:, 0:H] * th1[:, 2 * H:3 * H]
        h1n = sg1[:, 3 * H:4 * H] * jnp.tanh(c1n)
        # fc_out -> relu; lane-dense (1, 128) row (cols V:128 are exactly 0)
        pred = jnp.maximum(
            jnp.dot(h1n, wout, preferred_element_type=f32) + bout, 0.0)
        out_ref[pl.ds(i, 1), :] = pred
        # greedy argmax fused into ONE cross-lane reduction: pack the (>=0) relu
        # value bits and the inverted lane index into a single int key; ties and
        # the all-zero padded lanes resolve to the smallest real-vocab index.
        bits = pltpu.bitcast(pred, jnp.int32)
        key = (bits | jnp.int32(127)) - col_pad
        kmax = jnp.max(key, axis=1, keepdims=True)
        nxt = (jnp.int32(127) - (kmax & jnp.int32(127))).astype(f32)      # (1, 1)
        return (nxt, h0n, c0n, h1n, c1n)

    # reference: h_c = h_s = fc_upscale(ctx), replicated over decoder layers
    lax.fori_loop(0, n_steps, dec_step, (cur0, h0, h0, h0, h0), unroll=True)

    # eval-mode output: log_softmax over the real vocab lanes (rows past n_steps
    # stay all-zero); padded lanes -> -inf; single lane-dense store.
    logits = jnp.where(col_pad < V, out_ref[...], -jnp.inf)
    m = jnp.max(logits, axis=1, keepdims=True)
    z = logits - m
    out_ref[...] = z - jnp.log(jnp.sum(jnp.exp(z), axis=1, keepdims=True))


# --------------------------- parameter initialization ------------------------
def init_params(key):
    """Builds the packed (928, 128) f32 weight blob (PyTorch-equivalent init)."""
    keys = iter(jax.random.split(key, 64))

    def u(shape, bound):
        return jax.random.uniform(next(keys), shape, jnp.float32, -bound, bound)

    k_h = 1.0 / (H ** 0.5)
    k_lat = 1.0 / (LAT ** 0.5)

    blob = jnp.zeros((_BLOB_ROWS, V_PAD), jnp.float32)

    # Embedding (V, E) stored at cols 0:E
    emb = jax.random.normal(next(keys), (V, E), jnp.float32)
    blob = blob.at[_EMB:_EMB + V, 0:E].set(emb)

    # Encoder bidirectional LSTM: input->gate / hidden->gate stored separately
    for l in range(L):
        in_sz = E if l == 0 else 2 * H
        for d in range(2):
            w_ih = u((4 * H, in_sz), k_h)
            w_hh = u((4 * H, H), k_h)
            b_ih = u((4 * H,), k_h)
            b_hh = u((4 * H,), k_h)
            blob = blob.at[_ENC_WX[l][d]:_ENC_WX[l][d] + in_sz, :].set(w_ih.T)
            blob = blob.at[_ENC_WH[l][d]:_ENC_WH[l][d] + H, :].set(w_hh.T)
            blob = blob.at[_ENC_B[l][d], :].set(b_ih + b_hh)

    # fc2 (H -> LAT) and fc_upscale (LAT -> H)
    fc2_w = u((LAT, H), k_h)
    fc2_b = u((LAT,), k_h)
    blob = blob.at[_FC2W:_FC2W + H, 0:LAT].set(fc2_w.T)
    blob = blob.at[_FC2B, 0:LAT].set(fc2_b)
    fcup_w = u((H, LAT), k_lat)
    fcup_b = u((H,), k_lat)
    blob = blob.at[_FCUPW:_FCUPW + LAT, 0:H].set(fcup_w.T)
    blob = blob.at[_FCUPB, 0:H].set(fcup_b)

    # Decoder unidirectional LSTM (layer-0 input size is 1)
    dec_wih = (_DEC_WIH0, _DEC_WIH1)
    dec_whh = (_DEC_WHH0, _DEC_WHH1)
    dec_b = (_DEC_B0, _DEC_B1)
    for l in range(L):
        in_sz = 1 if l == 0 else H
        w_ih = u((4 * H, in_sz), k_h)
        w_hh = u((4 * H, H), k_h)
        b_ih = u((4 * H,), k_h)
        b_hh = u((4 * H,), k_h)
        blob = blob.at[dec_wih[l]:dec_wih[l] + in_sz, :].set(w_ih.T)
        blob = blob.at[dec_whh[l]:dec_whh[l] + H, :].set(w_hh.T)
        blob = blob.at[dec_b[l], :].set(b_ih + b_hh)

    # fc_out (H -> V), padded to 128 output lanes
    fcout_w = u((V, H), k_h)
    fcout_b = u((V,), k_h)
    blob = blob.at[_FCOUTW:_FCOUTW + H, 0:V].set(fcout_w.T)
    blob = blob.at[_FCOUTB, 0:V].set(fcout_b)

    return blob


# --------------------------------- wrapper -----------------------------------
@functools.partial(jax.jit, static_argnames=("stride",))
def denoising_ae_forward(blob, x, y, stride):
    """x: (SX,) int token ids; y: (SY,) int token ids. Returns (SY-1, V) log-probs."""
    Sx = x.shape[0]
    Sy = y.shape[0]
    n_steps = (Sy - 1) if stride <= 0 else min(Sy - 1, stride)
    rows_pad = max(8, ((Sy - 1 + 7) // 8) * 8)

    # glue: torch.flip(x, dims=(0,)) + unsqueeze — layout plumbing only
    x_flip = jnp.flip(x.astype(jnp.int32), axis=0).reshape(Sx, 1)
    y0 = y[0:1].astype(jnp.int32)          # only y[0] is used (tfr = 0 path)

    kern = functools.partial(_dae_kernel, n_steps=n_steps)
    vmem = pl.BlockSpec(memory_space=pltpu.MemorySpace.VMEM)
    smem = pl.BlockSpec(memory_space=pltpu.MemorySpace.SMEM)

    out_pad = pl.pallas_call(
        kern,
        out_shape=jax.ShapeDtypeStruct((rows_pad, V_PAD), jnp.float32),
        in_specs=[vmem, smem, vmem],
        out_specs=vmem,
        scratch_shapes=[
            pltpu.VMEM((Sx, V_PAD), jnp.float32),   # seq_sc: per-layer input sequence
            pltpu.VMEM((Sx, H), jnp.float32),       # outf_sc: layer-0 fwd outputs
            pltpu.VMEM((Sx, H), jnp.float32),       # outb_sc: layer-0 bwd outputs
            pltpu.VMEM((Sx, V_PAD), jnp.float32),   # xf_sc: fwd input-gate precompute
            pltpu.VMEM((Sx, V_PAD), jnp.float32),   # xb_sc: bwd input-gate precompute
        ],
    )(x_flip, y0, blob)

    return out_pad[:Sy - 1, :V]


if __name__ == "__main__":
    root = jax.random.PRNGKey(0)
    pkey, xkey, ykey = jax.random.split(root, 3)
    blob = init_params(pkey)
    x = jax.random.randint(xkey, (SX,), 0, V, dtype=jnp.int32)
    y = jax.random.randint(ykey, (SY,), 0, V, dtype=jnp.int32)

    out = denoising_ae_forward(blob, x, y, STRIDE)
    out = jax.block_until_ready(out)

    assert out.shape == (SY - 1, V) and out.dtype == jnp.float32
    # log_softmax rows must sum (in prob space) to ~1
    assert bool(jnp.all(jnp.abs(jnp.sum(jnp.exp(out), axis=1) - 1.0) < 1e-3))
    print("KERNEL_OK")
</pallas_src>

<mosaic_0001>
module attributes {stable_mosaic.version = 11 : i64} {
  func.func @_dae_kernel(%arg0: memref<8x1xi32, #tpu.memory_space<vmem>>, %arg1: memref<1xi32, #tpu.memory_space<smem>>, %arg2: memref<928x128xf32, #tpu.memory_space<vmem>>, %arg3: memref<8x128xf32, #tpu.memory_space<vmem>>, %arg4: memref<8x128xf32, #tpu.memory_space<vmem>>, %arg5: memref<8x32xf32, #tpu.memory_space<vmem>>, %arg6: memref<8x32xf32, #tpu.memory_space<vmem>>, %arg7: memref<8x128xf32, #tpu.memory_space<vmem>>, %arg8: memref<8x128xf32, #tpu.memory_space<vmem>>) attributes {dimension_semantics = [], scalar_prefetch = 0 : i64, scratch_operands = 5 : i64, tpu.core_type = #tpu.core_type<tc>} {
    %0 = tpu.iota {dimensions = array<i32: 1>} : vector<8x32xi32>
    %c0 = arith.constant 0 : index
    %c0_0 = arith.constant 0 : index
    %1 = vector.load %arg0[%c0, %c0_0] : memref<8x1xi32, #tpu.memory_space<vmem>>, vector<8x1xi32>
    %2 = vector.broadcast %1 : vector<8x1xi32> to vector<8x32xi32>
    %3 = arith.cmpi eq, %2, %0 : vector<8x32xi32>
    %4 = arith.extui %3 : vector<8x32xi1> to vector<8x32xi32>
    %5 = arith.sitofp %4 : vector<8x32xi32> to vector<8x32xf32>
    %c672 = arith.constant 672 : index
    %c0_1 = arith.constant 0 : index
    %6 = vector.load %arg2[%c672, %c0_1] : memref<928x128xf32, #tpu.memory_space<vmem>>, vector<32x128xf32>
    %cst = arith.constant dense<0.000000e+00> : vector<8x128xf32>
    %7 = tpu.matmul %5, %6, %cst {dimension_numbers = #tpu.dot_dimension_numbers<[1], [0], [0], [1], [0, 0, 1, 1], [], []>} : vector<8x32xf32>, vector<32x128xf32>, vector<8x128xf32> -> vector<8x128xf32>
    %c0_2 = arith.constant 0 : index
    %c0_3 = arith.constant 0 : index
    %8 = vector.load %arg4[%c0_2, %c0_3] : memref<8x128xf32, #tpu.memory_space<vmem>>, vector<8x128xf32>
    tpu.vector_store %arg4[%c0_2, %c0_3], %7 {strides = array<i32>} : memref<8x128xf32, #tpu.memory_space<vmem>>, vector<8x128xf32>,
    %c512 = arith.constant 512 : index
    %c0_4 = arith.constant 0 : index
    %9 = vector.load %arg2[%c512, %c0_4] : memref<928x128xf32, #tpu.memory_space<vmem>>, vector<32x128xf32>
    %c544 = arith.constant 544 : index
    %c0_5 = arith.constant 0 : index
    %10 = vector.load %arg2[%c544, %c0_5] : memref<928x128xf32, #tpu.memory_space<vmem>>, vector<32x128xf32>
    %c640 = arith.constant 640 : index
    %c0_6 = arith.constant 0 : index
    %11 = vector.load %arg2[%c640, %c0_6] : memref<928x128xf32, #tpu.memory_space<vmem>>, vector<1x128xf32>
    %c648 = arith.constant 648 : index
    %c0_7 = arith.constant 0 : index
    %12 = vector.load %arg2[%c648, %c0_7] : memref<928x128xf32, #tpu.memory_space<vmem>>, vector<1x128xf32>
    %c0_8 = arith.constant 0 : index
    %c0_9 = arith.constant 0 : index
    %13 = vector.load %arg4[%c0_8, %c0_9] : memref<8x128xf32, #tpu.memory_space<vmem>>, vector<8x128xf32>
    %c0_10 = arith.constant 0 : index
    %c0_11 = arith.constant 0 : index
    %14 = vector.load %arg2[%c0_10, %c0_11] : memref<928x128xf32, #tpu.memory_space<vmem>>, vector<128x128xf32>
    %cst_12 = arith.constant dense<0.000000e+00> : vector<8x128xf32>
    %15 = tpu.matmul %13, %14, %cst_12 {dimension_numbers = #tpu.dot_dimension_numbers<[1], [0], [0], [1], [0, 0, 1, 1], [], []>} : vector<8x128xf32>, vector<128x128xf32>, vector<8x128xf32> -> vector<8x128xf32>
    %16 = vector.broadcast %11 : vector<1x128xf32> to vector<8x128xf32>
    %17 = arith.addf %15, %16 : vector<8x128xf32>
    %c0_13 = arith.constant 0 : index
    %c0_14 = arith.constant 0 : index
    %18 = vector.load %arg7[%c0_13, %c0_14] : memref<8x128xf32, #tpu.memory_space<vmem>>, vector<8x128xf32>
    tpu.vector_store %arg7[%c0_13, %c0_14], %17 {strides = array<i32>} : memref<8x128xf32, #tpu.memory_space<vmem>>, vector<8x128xf32>,
    %c128 = arith.constant 128 : index
    %c0_15 = arith.constant 0 : index
    %19 = vector.load %arg2[%c128, %c0_15] : memref<928x128xf32, #tpu.memory_space<vmem>>, vector<128x128xf32>
    %cst_16 = arith.constant dense<0.000000e+00> : vector<8x128xf32>
    %20 = tpu.matmul %13, %19, %cst_16 {dimension_numbers = #tpu.dot_dimension_numbers<[1], [0], [0], [1], [0, 0, 1, 1], [], []>} : vector<8x128xf32>, vector<128x128xf32>, vector<8x128xf32> -> vector<8x128xf32>
    %21 = vector.broadcast %12 : vector<1x128xf32> to vector<8x128xf32>
    %22 = arith.addf %20, %21 : vector<8x128xf32>
    %c0_17 = arith.constant 0 : index
    %c0_18 = arith.constant 0 : index
    %23 = vector.load %arg8[%c0_17, %c0_18] : memref<8x128xf32, #tpu.memory_space<vmem>>, vector<8x128xf32>
    tpu.vector_store %arg8[%c0_17, %c0_18], %22 {strides = array<i32>} : memref<8x128xf32, #tpu.memory_space<vmem>>, vector<8x128xf32>,
    %cst_19 = arith.constant 0.000000e+00 : f32
    %24 = vector.broadcast %cst_19 : f32 to vector<2x32xf32>
    %cst_20 = arith.constant 0.000000e+00 : f32
    %25 = vector.broadcast %cst_20 : f32 to vector<2x32xf32>
    %c0_i32 = arith.constant 0 : i32
    %c7_i32 = arith.constant 7 : i32
    %26 = arith.subi %c7_i32, %c0_i32 : i32
    %27 = vector.extract_strided_slice %24 {offsets = [0, 0], sizes = [1, 32], strides = [1, 1]} : vector<2x32xf32> to vector<1x32xf32>
    %cst_21 = arith.constant dense<0.000000e+00> : vector<1x128xf32>
    %28 = tpu.matmul %27, %9, %cst_21 {dimension_numbers = #tpu.dot_dimension_numbers<[1], [0], [0], [1], [0, 0, 1, 1], [], []>} : vector<1x32xf32>, vector<32x128xf32>, vector<1x128xf32> -> vector<1x128xf32>
    %29 = vector.extract_strided_slice %24 {offsets = [1, 0], sizes = [1, 32], strides = [1, 1]} : vector<2x32xf32> to vector<1x32xf32>
    %cst_22 = arith.constant dense<0.000000e+00> : vector<1x128xf32>
    %30 = tpu.matmul %29, %10, %cst_22 {dimension_numbers = #tpu.dot_dimension_numbers<[1], [0], [0], [1], [0, 0, 1, 1], [], []>} : vector<1x32xf32>, vector<32x128xf32>, vector<1x128xf32> -> vector<1x128xf32>
    %31 = arith.index_cast %c0_i32 : i32 to index
    %c0_23 = arith.constant 0 : index
    %32 = vector.load %arg7[%31, %c0_23] : memref<8x128xf32, #tpu.memory_space<vmem>>, vector<1x128xf32>
    %33 = arith.addf %32, %28 : vector<1x128xf32>
    %34 = arith.index_cast %26 : i32 to index
    %c0_24 = arith.constant 0 : index
    %35 = vector.load %arg8[%34, %c0_24] : memref<8x128xf32, #tpu.memory_space<vmem>>, vector<1x128xf32>
    %36 = arith.addf %35, %30 : vector<1x128xf32>
    %37 = tpu.concatenate %33, %36 in 0 : vector<1x128xf32>, vector<1x128xf32> -> vector<2x128xf32>
    %38 = arith.negf %37 : vector<2x128xf32>
    %39 = math.exp %38 : vector<2x128xf32>
    %cst_25 = arith.constant 1.000000e+00 : f32
    %40 = vector.broadcast %cst_25 : f32 to vector<2x128xf32>
    %41 = arith.addf %40, %39 : vector<2x128xf32>
    %42 = arith.divf %40, %41 : vector<2x128xf32>
    %43 = math.tanh %37 : vector<2x128xf32>
    %44 = vector.extract_strided_slice %42 {offsets = [0, 32], sizes = [2, 32], strides = [1, 1]} : vector<2x128xf32> to vector<2x32xf32>
    %45 = arith.mulf %44, %25 : vector<2x32xf32>
    %46 = vector.extract_strided_slice %42 {offsets = [0, 0], sizes = [2, 32], strides = [1, 1]} : vector<2x128xf32> to vector<2x32xf32>
    %47 = vector.extract_strided_slice %43 {offsets = [0, 64], sizes = [2, 32], strides = [1, 1]} : vector<2x128xf32> to vector<2x32xf32>
    %48 = arith.mulf %46, %47 : vector<2x32xf32>
    %49 = arith.addf %45, %48 : vector<2x32xf32>
    %50 = vector.extract_strided_slice %42 {offsets = [0, 96], sizes = [2, 32], strides = [1, 1]} : vector<2x128xf32> to vector<2x32xf32>
    %51 = math.tanh %49 : vector<2x32xf32>
    %52 = arith.mulf %50, %51 : vector<2x32xf32>
    %53 = vector.extract_strided_slice %52 {offsets = [0, 0], sizes = [1, 32], strides = [1, 1]} : vector<2x32xf32> to vector<1x32xf32>
    %54 = arith.index_cast %c0_i32 : i32 to index
    %c0_26 = arith.constant 0 : index
    %55 = vector.load %arg5[%54, %c0_26] : memref<8x32xf32, #tpu.memory_space<vmem>>, vector<1x32xf32>
    tpu.vector_store %arg5[%54, %c0_26], %53 {strides = array<i32>} : memref<8x32xf32, #tpu.memory_space<vmem>>, vector<1x32xf32>,
    %56 = vector.extract_strided_slice %52 {offsets = [1, 0], sizes = [1, 32], strides = [1, 1]} : vector<2x32xf32> to vector<1x32xf32>
    %57 = arith.index_cast %26 : i32 to index
    %c0_27 = arith.constant 0 : index
    %58 = vector.load %arg6[%57, %c0_27] : memref<8x32xf32, #tpu.memory_space<vmem>>, vector<1x32xf32>
    tpu.vector_store %arg6[%57, %c0_27], %56 {strides = array<i32>} : memref<8x32xf32, #tpu.memory_space<vmem>>, vector<1x32xf32>,
    %c1_i32 = arith.constant 1 : i32
    %c7_i32_28 = arith.constant 7 : i32
    %59 = arith.subi %c7_i32_28, %c1_i32 : i32
    %60 = vector.extract_strided_slice %52 {offsets = [0, 0], sizes = [1, 32], strides = [1, 1]} : vector<2x32xf32> to vector<1x32xf32>
    %cst_29 = arith.constant dense<0.000000e+00> : vector<1x128xf32>
    %61 = tpu.matmul %60, %9, %cst_29 {dimension_numbers = #tpu.dot_dimension_numbers<[1], [0], [0], [1], [0, 0, 1, 1], [], []>} : vector<1x32xf32>, vector<32x128xf32>, vector<1x128xf32> -> vector<1x128xf32>
    %62 = vector.extract_strided_slice %52 {offsets = [1, 0], sizes = [1, 32], strides = [1, 1]} : vector<2x32xf32> to vector<1x32xf32>
    %cst_30 = arith.constant dense<0.000000e+00> : vector<1x128xf32>
    %63 = tpu.matmul %62, %10, %cst_30 {dimension_numbers = #tpu.dot_dimension_numbers<[1], [0], [0], [1], [0, 0, 1, 1], [], []>} : vector<1x32xf32>, vector<32x128xf32>, vector<1x128xf32> -> vector<1x128xf32>
    %64 = arith.index_cast %c1_i32 : i32 to index
    %c0_31 = arith.constant 0 : index
    %65 = vector.load %arg7[%64, %c0_31] : memref<8x128xf32, #tpu.memory_space<vmem>>, vector<1x128xf32>
    %66 = arith.addf %65, %61 : vector<1x128xf32>
    %67 = arith.index_cast %59 : i32 to index
    %c0_32 = arith.constant 0 : index
    %68 = vector.load %arg8[%67, %c0_32] : memref<8x128xf32, #tpu.memory_space<vmem>>, vector<1x128xf32>
    %69 = arith.addf %68, %63 : vector<1x128xf32>
    %70 = tpu.concatenate %66, %69 in 0 : vector<1x128xf32>, vector<1x128xf32> -> vector<2x128xf32>
    %71 = arith.negf %70 : vector<2x128xf32>
    %72 = math.exp %71 : vector<2x128xf32>
    %cst_33 = arith.constant 1.000000e+00 : f32
    %73 = vector.broadcast %cst_33 : f32 to vector<2x128xf32>
    %74 = arith.addf %73, %72 : vector<2x128xf32>
    %75 = arith.divf %73, %74 : vector<2x128xf32>
    %76 = math.tanh %70 : vector<2x128xf32>
    %77 = vector.extract_strided_slice %75 {offsets = [0, 32], sizes = [2, 32], strides = [1, 1]} : vector<2x128xf32> to vector<2x32xf32>
    %78 = arith.mulf %77, %49 : vector<2x32xf32>
    %79 = vector.extract_strided_slice %75 {offsets = [0, 0], sizes = [2, 32], strides = [1, 1]} : vector<2x128xf32> to vector<2x32xf32>
    %80 = vector.extract_strided_slice %76 {offsets = [0, 64], sizes = [2, 32], strides = [1, 1]} : vector<2x128xf32> to vector<2x32xf32>
    %81 = arith.mulf %79, %80 : vector<2x32xf32>
    %82 = arith.addf %78, %81 : vector<2x32xf32>
    %83 = vector.extract_strided_slice %75 {offsets = [0, 96], sizes = [2, 32], strides = [1, 1]} : vector<2x128xf32> to vector<2x32xf32>
    %84 = math.tanh %82 : vector<2x32xf32>
    %85 = arith.mulf %83, %84 : vector<2x32xf32>
    %86 = vector.extract_strided_slice %85 {offsets = [0, 0], sizes = [1, 32], strides = [1, 1]} : vector<2x32xf32> to vector<1x32xf32>
    %87 = arith.index_cast %c1_i32 : i32 to index
    %c0_34 = arith.constant 0 : index
    %88 = vector.load %arg5[%87, %c0_34] : memref<8x32xf32, #tpu.memory_space<vmem>>, vector<1x32xf32>
    tpu.vector_store %arg5[%87, %c0_34], %86 {strides = array<i32>} : memref<8x32xf32, #tpu.memory_space<vmem>>, vector<1x32xf32>,
    %89 = vector.extract_strided_slice %85 {offsets = [1, 0], sizes = [1, 32], strides = [1, 1]} : vector<2x32xf32> to vector<1x32xf32>
    %90 = arith.index_cast %59 : i32 to index
    %c0_35 = arith.constant 0 : index
    %91 = vector.load %arg6[%90, %c0_35] : memref<8x32xf32, #tpu.memory_space<vmem>>, vector<1x32xf32>
    tpu.vector_store %arg6[%90, %c0_35], %89 {strides = array<i32>} : memref<8x32xf32, #tpu.memory_space<vmem>>, vector<1x32xf32>,
    %c2_i32 = arith.constant 2 : i32
    %c7_i32_36 = arith.constant 7 : i32
    %92 = arith.subi %c7_i32_36, %c2_i32 : i32
    %93 = vector.extract_strided_slice %85 {offsets = [0, 0], sizes = [1, 32], strides = [1, 1]} : vector<2x32xf32> to vector<1x32xf32>
    %cst_37 = arith.constant dense<0.000000e+00> : vector<1x128xf32>
    %94 = tpu.matmul %93, %9, %cst_37 {dimension_numbers = #tpu.dot_dimension_numbers<[1], [0], [0], [1], [0, 0, 1, 1], [], []>} : vector<1x32xf32>, vector<32x128xf32>, vector<1x128xf32> -> vector<1x128xf32>
    %95 = vector.extract_strided_slice %85 {offsets = [1, 0], sizes = [1, 32], strides = [1, 1]} : vector<2x32xf32> to vector<1x32xf32>
    %cst_38 = arith.constant dense<0.000000e+00> : vector<1x128xf32>
    %96 = tpu.matmul %95, %10, %cst_38 {dimension_numbers = #tpu.dot_dimension_numbers<[1], [0], [0], [1], [0, 0, 1, 1], [], []>} : vector<1x32xf32>, vector<32x128xf32>, vector<1x128xf32> -> vector<1x128xf32>
    %97 = arith.index_cast %c2_i32 : i32 to index
    %c0_39 = arith.constant 0 : index
    %98 = vector.load %arg7[%97, %c0_39] : memref<8x128xf32, #tpu.memory_space<vmem>>, vector<1x128xf32>
    %99 = arith.addf %98, %94 : vector<1x128xf32>
    %100 = arith.index_cast %92 : i32 to index
    %c0_40 = arith.constant 0 : index
    %101 = vector.load %arg8[%100, %c0_40] : memref<8x128xf32, #tpu.memory_space<vmem>>, vector<1x128xf32>
    %102 = arith.addf %101, %96 : vector<1x128xf32>
    %103 = tpu.concatenate %99, %102 in 0 : vector<1x128xf32>, vector<1x128xf32> -> vector<2x128xf32>
    %104 = arith.negf %103 : vector<2x128xf32>
    %105 = math.exp %104 : vector<2x128xf32>
    %cst_41 = arith.constant 1.000000e+00 : f32
    %106 = vector.broadcast %cst_41 : f32 to vector<2x128xf32>
    %107 = arith.addf %106, %105 : vector<2x128xf32>
    %108 = arith.divf %106, %107 : vector<2x128xf32>
    %109 = math.tanh %103 : vector<2x128xf32>
    %110 = vector.extract_strided_slice %108 {offsets = [0, 32], sizes = [2, 32], strides = [1, 1]} : vector<2x128xf32> to vector<2x32xf32>
    %111 = arith.mulf %110, %82 : vector<2x32xf32>
    %112 = vector.extract_strided_slice %108 {offsets = [0, 0], sizes = [2, 32], strides = [1, 1]} : vector<2x128xf32> to vector<2x32xf32>
    %113 = vector.extract_strided_slice %109 {offsets = [0, 64], sizes = [2, 32], strides = [1, 1]} : vector<2x128xf32> to vector<2x32xf32>
    %114 = arith.mulf %112, %113 : vector<2x32xf32>
    %115 = arith.addf %111, %114 : vector<2x32xf32>
    %116 = vector.extract_strided_slice %108 {offsets = [0, 96], sizes = [2, 32], strides = [1, 1]} : vector<2x128xf32> to vector<2x32xf32>
    %117 = math.tanh %115 : vector<2x32xf32>
    %118 = arith.mulf %116, %117 : vector<2x32xf32>
    %119 = vector.extract_strided_slice %118 {offsets = [0, 0], sizes = [1, 32], strides = [1, 1]} : vector<2x32xf32> to vector<1x32xf32>
    %120 = arith.index_cast %c2_i32 : i32 to index
    %c0_42 = arith.constant 0 : index
    %121 = vector.load %arg5[%120, %c0_42] : memref<8x32xf32, #tpu.memory_space<vmem>>, vector<1x32xf32>
    tpu.vector_store %arg5[%120, %c0_42], %119 {strides = array<i32>} : memref<8x32xf32, #tpu.memory_space<vmem>>, vector<1x32xf32>,
    %122 = vector.extract_strided_slice %118 {offsets = [1, 0], sizes = [1, 32], strides = [1, 1]} : vector<2x32xf32> to vector<1x32xf32>
    %123 = arith.index_cast %92 : i32 to index
    %c0_43 = arith.constant 0 : index
    %124 = vector.load %arg6[%123, %c0_43] : memref<8x32xf32, #tpu.memory_space<vmem>>, vector<1x32xf32>
    tpu.vector_store %arg6[%123, %c0_43], %122 {strides = array<i32>} : memref<8x32xf32, #tpu.memory_space<vmem>>, vector<1x32xf32>,
    %c3_i32 = arith.constant 3 : i32
    %c7_i32_44 = arith.constant 7 : i32
    %125 = arith.subi %c7_i32_44, %c3_i32 : i32
    %126 = vector.extract_strided_slice %118 {offsets = [0, 0], sizes = [1, 32], strides = [1, 1]} : vector<2x32xf32> to vector<1x32xf32>
    %cst_45 = arith.constant dense<0.000000e+00> : vector<1x128xf32>
    %127 = tpu.matmul %126, %9, %cst_45 {dimension_numbers = #tpu.dot_dimension_numbers<[1], [0], [0], [1], [0, 0, 1, 1], [], []>} : vector<1x32xf32>, vector<32x128xf32>, vector<1x128xf32> -> vector<1x128xf32>
    %128 = vector.extract_strided_slice %118 {offsets = [1, 0], sizes = [1, 32], strides = [1, 1]} : vector<2x32xf32> to vector<1x32xf32>
    %cst_46 = arith.constant dense<0.000000e+00> : vector<1x128xf32>
    %129 = tpu.matmul %128, %10, %cst_46 {dimension_numbers = #tpu.dot_dimension_numbers<[1], [0], [0], [1], [0, 0, 1, 1], [], []>} : vector<1x32xf32>, vector<32x128xf32>, vector<1x128xf32> -> vector<1x128xf32>
    %130 = arith.index_cast %c3_i32 : i32 to index
    %c0_47 = arith.constant 0 : index
    %131 = vector.load %arg7[%130, %c0_47] : memref<8x128xf32, #tpu.memory_space<vmem>>, vector<1x128xf32>
    %132 = arith.addf %131, %127 : vector<1x128xf32>
    %133 = arith.index_cast %125 : i32 to index
    %c0_48 = arith.constant 0 : index
    %134 = vector.load %arg8[%133, %c0_48] : memref<8x128xf32, #tpu.memory_space<vmem>>, vector<1x128xf32>
    %135 = arith.addf %134, %129 : vector<1x128xf32>
    %136 = tpu.concatenate %132, %135 in 0 : vector<1x128xf32>, vector<1x128xf32> -> vector<2x128xf32>
    %137 = arith.negf %136 : vector<2x128xf32>
    %138 = math.exp %137 : vector<2x128xf32>
    %cst_49 = arith.constant 1.000000e+00 : f32
    %139 = vector.broadcast %cst_49 : f32 to vector<2x128xf32>
    %140 = arith.addf %139, %138 : vector<2x128xf32>
    %141 = arith.divf %139, %140 : vector<2x128xf32>
    %142 = math.tanh %136 : vector<2x128xf32>
    %143 = vector.extract_strided_slice %141 {offsets = [0, 32], sizes = [2, 32], strides = [1, 1]} : vector<2x128xf32> to vector<2x32xf32>
    %144 = arith.mulf %143, %115 : vector<2x32xf32>
    %145 = vector.extract_strided_slice %141 {offsets = [0, 0], sizes = [2, 32], strides = [1, 1]} : vector<2x128xf32> to vector<2x32xf32>
    %146 = vector.extract_strided_slice %142 {offsets = [0, 64], sizes = [2, 32], strides = [1, 1]} : vector<2x128xf32> to vector<2x32xf32>
    %147 = arith.mulf %145, %146 : vector<2x32xf32>
    %148 = arith.addf %144, %147 : vector<2x32xf32>
    %149 = vector.extract_strided_slice %141 {offsets = [0, 96], sizes = [2, 32], strides = [1, 1]} : vector<2x128xf32> to vector<2x32xf32>
    %150 = math.tanh %148 : vector<2x32xf32>
    %151 = arith.mulf %149, %150 : vector<2x32xf32>
    %152 = vector.extract_strided_slice %151 {offsets = [0, 0], sizes = [1, 32], strides = [1, 1]} : vector<2x32xf32> to vector<1x32xf32>
    %153 = arith.index_cast %c3_i32 : i32 to index
    %c0_50 = arith.constant 0 : index
    %154 = vector.load %arg5[%153, %c0_50] : memref<8x32xf32, #tpu.memory_space<vmem>>, vector<1x32xf32>
    tpu.vector_store %arg5[%153, %c0_50], %152 {strides = array<i32>} : memref<8x32xf32, #tpu.memory_space<vmem>>, vector<1x32xf32>,
    %155 = vector.extract_strided_slice %151 {offsets = [1, 0], sizes = [1, 32], strides = [1, 1]} : vector<2x32xf32> to vector<1x32xf32>
    %156 = arith.index_cast %125 : i32 to index
    %c0_51 = arith.constant 0 : index
    %157 = vector.load %arg6[%156, %c0_51] : memref<8x32xf32, #tpu.memory_space<vmem>>, vector<1x32xf32>
    tpu.vector_store %arg6[%156, %c0_51], %155 {strides = array<i32>} : memref<8x32xf32, #tpu.memory_space<vmem>>, vector<1x32xf32>,
    %c4_i32 = arith.constant 4 : i32
    %c7_i32_52 = arith.constant 7 : i32
    %158 = arith.subi %c7_i32_52, %c4_i32 : i32
    %159 = vector.extract_strided_slice %151 {offsets = [0, 0], sizes = [1, 32], strides = [1, 1]} : vector<2x32xf32> to vector<1x32xf32>
    %cst_53 = arith.constant dense<0.000000e+00> : vector<1x128xf32>
    %160 = tpu.matmul %159, %9, %cst_53 {dimension_numbers = #tpu.dot_dimension_numbers<[1], [0], [0], [1], [0, 0, 1, 1], [], []>} : vector<1x32xf32>, vector<32x128xf32>, vector<1x128xf32> -> vector<1x128xf32>
    %161 = vector.extract_strided_slice %151 {offsets = [1, 0], sizes = [1, 32], strides = [1, 1]} : vector<2x32xf32> to vector<1x32xf32>
    %cst_54 = arith.constant dense<0.000000e+00> : vector<1x128xf32>
    %162 = tpu.matmul %161, %10, %cst_54 {dimension_numbers = #tpu.dot_dimension_numbers<[1], [0], [0], [1], [0, 0, 1, 1], [], []>} : vector<1x32xf32>, vector<32x128xf32>, vector<1x128xf32> -> vector<1x128xf32>
    %163 = arith.index_cast %c4_i32 : i32 to index
    %c0_55 = arith.constant 0 : index
    %164 = vector.load %arg7[%163, %c0_55] : memref<8x128xf32, #tpu.memory_space<vmem>>, vector<1x128xf32>
    %165 = arith.addf %164, %160 : vector<1x128xf32>
    %166 = arith.index_cast %158 : i32 to index
    %c0_56 = arith.constant 0 : index
    %167 = vector.load %arg8[%166, %c0_56] : memref<8x128xf32, #tpu.memory_space<vmem>>, vector<1x128xf32>
    %168 = arith.addf %167, %162 : vector<1x128xf32>
    %169 = tpu.concatenate %165, %168 in 0 : vector<1x128xf32>, vector<1x128xf32> -> vector<2x128xf32>
    %170 = arith.negf %169 : vector<2x128xf32>
    %171 = math.exp %170 : vector<2x128xf32>
    %cst_57 = arith.constant 1.000000e+00 : f32
    %172 = vector.broadcast %cst_57 : f32 to vector<2x128xf32>
    %173 = arith.addf %172, %171 : vector<2x128xf32>
    %174 = arith.divf %172, %173 : vector<2x128xf32>
    %175 = math.tanh %169 : vector<2x128xf32>
    %176 = vector.extract_strided_slice %174 {offsets = [0, 32], sizes = [2, 32], strides = [1, 1]} : vector<2x128xf32> to vector<2x32xf32>
    %177 = arith.mulf %176, %148 : vector<2x32xf32>
    %178 = vector.extract_strided_slice %174 {offsets = [0, 0], sizes = [2, 32], strides = [1, 1]} : vector<2x128xf32> to vector<2x32xf32>
    %179 = vector.extract_strided_slice %175 {offsets = [0, 64], sizes = [2, 32], strides = [1, 1]} : vector<2x128xf32> to vector<2x32xf32>
    %180 = arith.mulf %178, %179 : vector<2x32xf32>
    %181 = arith.addf %177, %180 : vector<2x32xf32>
    %182 = vector.extract_strided_slice %174 {offsets = [0, 96], sizes = [2, 32], strides = [1, 1]} : vector<2x128xf32> to vector<2x32xf32>
    %183 = math.tanh %181 : vector<2x32xf32>
    %184 = arith.mulf %182, %183 : vector<2x32xf32>
    %185 = vector.extract_strided_slice %184 {offsets = [0, 0], sizes = [1, 32], strides = [1, 1]} : vector<2x32xf32> to vector<1x32xf32>
    %186 = arith.index_cast %c4_i32 : i32 to index
    %c0_58 = arith.constant 0 : index
    %187 = vector.load %arg5[%186, %c0_58] : memref<8x32xf32, #tpu.memory_space<vmem>>, vector<1x32xf32>
    tpu.vector_store %arg5[%186, %c0_58], %185 {strides = array<i32>} : memref<8x32xf32, #tpu.memory_space<vmem>>, vector<1x32xf32>,
    %188 = vector.extract_strided_slice %184 {offsets = [1, 0], sizes = [1, 32], strides = [1, 1]} : vector<2x32xf32> to vector<1x32xf32>
    %189 = arith.index_cast %158 : i32 to index
    %c0_59 = arith.constant 0 : index
    %190 = vector.load %arg6[%189, %c0_59] : memref<8x32xf32, #tpu.memory_space<vmem>>, vector<1x32xf32>
    tpu.vector_store %arg6[%189, %c0_59], %188 {strides = array<i32>} : memref<8x32xf32, #tpu.memory_space<vmem>>, vector<1x32xf32>,
    %c5_i32 = arith.constant 5 : i32
    %c7_i32_60 = arith.constant 7 : i32
    %191 = arith.subi %c7_i32_60, %c5_i32 : i32
    %192 = vector.extract_strided_slice %184 {offsets = [0, 0], sizes = [1, 32], strides = [1, 1]} : vector<2x32xf32> to vector<1x32xf32>
    %cst_61 = arith.constant dense<0.000000e+00> : vector<1x128xf32>
    %193 = tpu.matmul %192, %9, %cst_61 {dimension_numbers = #tpu.dot_dimension_numbers<[1], [0], [0], [1], [0, 0, 1, 1], [], []>} : vector<1x32xf32>, vector<32x128xf32>, vector<1x128xf32> -> vector<1x128xf32>
    %194 = vector.extract_strided_slice %184 {offsets = [1, 0], sizes = [1, 32], strides = [1, 1]} : vector<2x32xf32> to vector<1x32xf32>
    %cst_62 = arith.constant dense<0.000000e+00> : vector<1x128xf32>
    %195 = tpu.matmul %194, %10, %cst_62 {dimension_numbers = #tpu.dot_dimension_numbers<[1], [0], [0], [1], [0, 0, 1, 1], [], []>} : vector<1x32xf32>, vector<32x128xf32>, vector<1x128xf32> -> vector<1x128xf32>
    %196 = arith.index_cast %c5_i32 : i32 to index
    %c0_63 = arith.constant 0 : index
    %197 = vector.load %arg7[%196, %c0_63] : memref<8x128xf32, #tpu.memory_space<vmem>>, vector<1x128xf32>
    %198 = arith.addf %197, %193 : vector<1x128xf32>
    %199 = arith.index_cast %191 : i32 to index
    %c0_64 = arith.constant 0 : index
    %200 = vector.load %arg8[%199, %c0_64] : memref<8x128xf32, #tpu.memory_space<vmem>>, vector<1x128xf32>
    %201 = arith.addf %200, %195 : vector<1x128xf32>
    %202 = tpu.concatenate %198, %201 in 0 : vector<1x128xf32>, vector<1x128xf32> -> vector<2x128xf32>
    %203 = arith.negf %202 : vector<2x128xf32>
    %204 = math.exp %203 : vector<2x128xf32>
    %cst_65 = arith.constant 1.000000e+00 : f32
    %205 = vector.broadcast %cst_65 : f32 to vector<2x128xf32>
    %206 = arith.addf %205, %204 : vector<2x128xf32>
    %207 = arith.divf %205, %206 : vector<2x128xf32>
    %208 = math.tanh %202 : vector<2x128xf32>
    %209 = vector.extract_strided_slice %207 {offsets = [0, 32], sizes = [2, 32], strides = [1, 1]} : vector<2x128xf32> to vector<2x32xf32>
    %210 = arith.mulf %209, %181 : vector<2x32xf32>
    %211 = vector.extract_strided_slice %207 {offsets = [0, 0], sizes = [2, 32], strides = [1, 1]} : vector<2x128xf32> to vector<2x32xf32>
    %212 = vector.extract_strided_slice %208 {offsets = [0, 64], sizes = [2, 32], strides = [1, 1]} : vector<2x128xf32> to vector<2x32xf32>
    %213 = arith.mulf %211, %212 : vector<2x32xf32>
    %214 = arith.addf %210, %213 : vector<2x32xf32>
    %215 = vector.extract_strided_slice %207 {offsets = [0, 96], sizes = [2, 32], strides = [1, 1]} : vector<2x128xf32> to vector<2x32xf32>
    %216 = math.tanh %214 : vector<2x32xf32>
    %217 = arith.mulf %215, %216 : vector<2x32xf32>
    %218 = vector.extract_strided_slice %217 {offsets = [0, 0], sizes = [1, 32], strides = [1, 1]} : vector<2x32xf32> to vector<1x32xf32>
    %219 = arith.index_cast %c5_i32 : i32 to index
    %c0_66 = arith.constant 0 : index
    %220 = vector.load %arg5[%219, %c0_66] : memref<8x32xf32, #tpu.memory_space<vmem>>, vector<1x32xf32>
    tpu.vector_store %arg5[%219, %c0_66], %218 {strides = array<i32>} : memref<8x32xf32, #tpu.memory_space<vmem>>, vector<1x32xf32>,
    %221 = vector.extract_strided_slice %217 {offsets = [1, 0], sizes = [1, 32], strides = [1, 1]} : vector<2x32xf32> to vector<1x32xf32>
    %222 = arith.index_cast %191 : i32 to index
    %c0_67 = arith.constant 0 : index
    %223 = vector.load %arg6[%222, %c0_67] : memref<8x32xf32, #tpu.memory_space<vmem>>, vector<1x32xf32>
    tpu.vector_store %arg6[%222, %c0_67], %221 {strides = array<i32>} : memref<8x32xf32, #tpu.memory_space<vmem>>, vector<1x32xf32>,
    %c6_i32 = arith.constant 6 : i32
    %c7_i32_68 = arith.constant 7 : i32
    %224 = arith.subi %c7_i32_68, %c6_i32 : i32
    %225 = vector.extract_strided_slice %217 {offsets = [0, 0], sizes = [1, 32], strides = [1, 1]} : vector<2x32xf32> to vector<1x32xf32>
    %cst_69 = arith.constant dense<0.000000e+00> : vector<1x128xf32>
    %226 = tpu.matmul %225, %9, %cst_69 {dimension_numbers = #tpu.dot_dimension_numbers<[1], [0], [0], [1], [0, 0, 1, 1], [], []>} : vector<1x32xf32>, vector<32x128xf32>, vector<1x128xf32> -> vector<1x128xf32>
    %227 = vector.extract_strided_slice %217 {offsets = [1, 0], sizes = [1, 32], strides = [1, 1]} : vector<2x32xf32> to vector<1x32xf32>
    %cst_70 = arith.constant dense<0.000000e+00> : vector<1x128xf32>
    %228 = tpu.matmul %227, %10, %cst_70 {dimension_numbers = #tpu.dot_dimension_numbers<[1], [0], [0], [1], [0, 0, 1, 1], [], []>} : vector<1x32xf32>, vector<32x128xf32>, vector<1x128xf32> -> vector<1x128xf32>
    %229 = arith.index_cast %c6_i32 : i32 to index
    %c0_71 = arith.constant 0 : index
    %230 = vector.load %arg7[%229, %c0_71] : memref<8x128xf32, #tpu.memory_space<vmem>>, vector<1x128xf32>
    %231 = arith.addf %230, %226 : vector<1x128xf32>
    %232 = arith.index_cast %224 : i32 to index
    %c0_72 = arith.constant 0 : index
    %233 = vector.load %arg8[%232, %c0_72] : memref<8x128xf32, #tpu.memory_space<vmem>>, vector<1x128xf32>
    %234 = arith.addf %233, %228 : vector<1x128xf32>
    %235 = tpu.concatenate %231, %234 in 0 : vector<1x128xf32>, vector<1x128xf32> -> vector<2x128xf32>
    %236 = arith.negf %235 : vector<2x128xf32>
    %237 = math.exp %236 : vector<2x128xf32>
    %cst_73 = arith.constant 1.000000e+00 : f32
    %238 = vector.broadcast %cst_73 : f32 to vector<2x128xf32>
    %239 = arith.addf %238, %237 : vector<2x128xf32>
    %240 = arith.divf %238, %239 : vector<2x128xf32>
    %241 = math.tanh %235 : vector<2x128xf32>
    %242 = vector.extract_strided_slice %240 {offsets = [0, 32], sizes = [2, 32], strides = [1, 1]} : vector<2x128xf32> to vector<2x32xf32>
    %243 = arith.mulf %242, %214 : vector<2x32xf32>
    %244 = vector.extract_strided_slice %240 {offsets = [0, 0], sizes = [2, 32], strides = [1, 1]} : vector<2x128xf32> to vector<2x32xf32>
    %245 = vector.extract_strided_slice %241 {offsets = [0, 64], sizes = [2, 32], strides = [1, 1]} : vector<2x128xf32> to vector<2x32xf32>
    %246 = arith.mulf %244, %245 : vector<2x32xf32>
    %247 = arith.addf %243, %246 : vector<2x32xf32>
    %248 = vector.extract_strided_slice %240 {offsets = [0, 96], sizes = [2, 32], strides = [1, 1]} : vector<2x128xf32> to vector<2x32xf32>
    %249 = math.tanh %247 : vector<2x32xf32>
    %250 = arith.mulf %248, %249 : vector<2x32xf32>
    %251 = vector.extract_strided_slice %250 {offsets = [0, 0], sizes = [1, 32], strides = [1, 1]} : vector<2x32xf32> to vector<1x32xf32>
    %252 = arith.index_cast %c6_i32 : i32 to index
    %c0_74 = arith.constant 0 : index
    %253 = vector.load %arg5[%252, %c0_74] : memref<8x32xf32, #tpu.memory_space<vmem>>, vector<1x32xf32>
    tpu.vector_store %arg5[%252, %c0_74], %251 {strides = array<i32>} : memref<8x32xf32, #tpu.memory_space<vmem>>, vector<1x32xf32>,
    %254 = vector.extract_strided_slice %250 {offsets = [1, 0], sizes = [1, 32], strides = [1, 1]} : vector<2x32xf32> to vector<1x32xf32>
    %255 = arith.index_cast %224 : i32 to index
    %c0_75 = arith.constant 0 : index
    %256 = vector.load %arg6[%255, %c0_75] : memref<8x32xf32, #tpu.memory_space<vmem>>, vector<1x32xf32>
    tpu.vector_store %arg6[%255, %c0_75], %254 {strides = array<i32>} : memref<8x32xf32, #tpu.memory_space<vmem>>, vector<1x32xf32>,
    %c7_i32_76 = arith.constant 7 : i32
    %c7_i32_77 = arith.constant 7 : i32
    %257 = arith.subi %c7_i32_77, %c7_i32_76 : i32
    %258 = vector.extract_strided_slice %250 {offsets = [0, 0], sizes = [1, 32], strides = [1, 1]} : vector<2x32xf32> to vector<1x32xf32>
    %cst_78 = arith.constant dense<0.000000e+00> : vector<1x128xf32>
    %259 = tpu.matmul %258, %9, %cst_78 {dimension_numbers = #tpu.dot_dimension_numbers<[1], [0], [0], [1], [0, 0, 1, 1], [], []>} : vector<1x32xf32>, vector<32x128xf32>, vector<1x128xf32> -> vector<1x128xf32>
    %260 = vector.extract_strided_slice %250 {offsets = [1, 0], sizes = [1, 32], strides = [1, 1]} : vector<2x32xf32> to vector<1x32xf32>
    %cst_79 = arith.constant dense<0.000000e+00> : vector<1x128xf32>
    %261 = tpu.matmul %260, %10, %cst_79 {dimension_numbers = #tpu.dot_dimension_numbers<[1], [0], [0], [1], [0, 0, 1, 1], [], []>} : vector<1x32xf32>, vector<32x128xf32>, vector<1x128xf32> -> vector<1x128xf32>
    %262 = arith.index_cast %c7_i32_76 : i32 to index
    %c0_80 = arith.constant 0 : index
    %263 = vector.load %arg7[%262, %c0_80] : memref<8x128xf32, #tpu.memory_space<vmem>>, vector<1x128xf32>
    %264 = arith.addf %263, %259 : vector<1x128xf32>
    %265 = arith.index_cast %257 : i32 to index
    %c0_81 = arith.constant 0 : index
    %266 = vector.load %arg8[%265, %c0_81] : memref<8x128xf32, #tpu.memory_space<vmem>>, vector<1x128xf32>
    %267 = arith.addf %266, %261 : vector<1x128xf32>
    %268 = tpu.concatenate %264, %267 in 0 : vector<1x128xf32>, vector<1x128xf32> -> vector<2x128xf32>
    %269 = arith.negf %268 : vector<2x128xf32>
    %270 = math.exp %269 : vector<2x128xf32>
    %cst_82 = arith.constant 1.000000e+00 : f32
    %271 = vector.broadcast %cst_82 : f32 to vector<2x128xf32>
    %272 = arith.addf %271, %270 : vector<2x128xf32>
    %273 = arith.divf %271, %272 : vector<2x128xf32>
    %274 = math.tanh %268 : vector<2x128xf32>
    %275 = vector.extract_strided_slice %273 {offsets = [0, 32], sizes = [2, 32], strides = [1, 1]} : vector<2x128xf32> to vector<2x32xf32>
    %276 = arith.mulf %275, %247 : vector<2x32xf32>
    %277 = vector.extract_strided_slice %273 {offsets = [0, 0], sizes = [2, 32], strides = [1, 1]} : vector<2x128xf32> to vector<2x32xf32>
    %278 = vector.extract_strided_slice %274 {offsets = [0, 64], sizes = [2, 32], strides = [1, 1]} : vector<2x128xf32> to vector<2x32xf32>
    %279 = arith.mulf %277, %278 : vector<2x32xf32>
    %280 = arith.addf %276, %279 : vector<2x32xf32>
    %281 = vector.extract_strided_slice %273 {offsets = [0, 96], sizes = [2, 32], strides = [1, 1]} : vector<2x128xf32> to vector<2x32xf32>
    %282 = math.tanh %280 : vector<2x32xf32>
    %283 = arith.mulf %281, %282 : vector<2x32xf32>
    %284 = vector.extract_strided_slice %283 {offsets = [0, 0], sizes = [1, 32], strides = [1, 1]} : vector<2x32xf32> to vector<1x32xf32>
    %285 = arith.index_cast %c7_i32_76 : i32 to index
    %c0_83 = arith.constant 0 : index
    %286 = vector.load %arg5[%285, %c0_83] : memref<8x32xf32, #tpu.memory_space<vmem>>, vector<1x32xf32>
    tpu.vector_store %arg5[%285, %c0_83], %284 {strides = array<i32>} : memref<8x32xf32, #tpu.memory_space<vmem>>, vector<1x32xf32>,
    %287 = vector.extract_strided_slice %283 {offsets = [1, 0], sizes = [1, 32], strides = [1, 1]} : vector<2x32xf32> to vector<1x32xf32>
    %288 = arith.index_cast %257 : i32 to index
    %c0_84 = arith.constant 0 : index
    %289 = vector.load %arg6[%288, %c0_84] : memref<8x32xf32, #tpu.memory_space<vmem>>, vector<1x32xf32>
    tpu.vector_store %arg6[%288, %c0_84], %287 {strides = array<i32>} : memref<8x32xf32, #tpu.memory_space<vmem>>, vector<1x32xf32>,
    %c8_i32 = arith.constant 8 : i32
    %c0_85 = arith.constant 0 : index
    %c0_86 = arith.constant 0 : index
    %290 = vector.load %arg5[%c0_85, %c0_86] : memref<8x32xf32, #tpu.memory_space<vmem>>, vector<8x32xf32>
    %c0_87 = arith.constant 0 : index
    %c0_88 = arith.constant 0 : index
    %291 = vector.load %arg6[%c0_87, %c0_88] : memref<8x32xf32, #tpu.memory_space<vmem>>, vector<8x32xf32>
    %cst_89 = arith.constant 0.000000e+00 : f32
    %292 = vector.broadcast %cst_89 : f32 to vector<8x64xf32>
    %293 = tpu.concatenate %290, %291, %292 in 1 : vector<8x32xf32>, vector<8x32xf32>, vector<8x64xf32> -> vector<8x128xf32>
    %c0_90 = arith.constant 0 : index
    %c0_91 = arith.constant 0 : index
    %294 = vector.load %arg4[%c0_90, %c0_91] : memref<8x128xf32, #tpu.memory_space<vmem>>, vector<8x128xf32>
    tpu.vector_store %arg4[%c0_90, %c0_91], %293 {strides = array<i32>} : memref<8x128xf32, #tpu.memory_space<vmem>>, vector<8x128xf32>,
    %c576 = arith.constant 576 : index
    %c0_92 = arith.constant 0 : index
    %295 = vector.load %arg2[%c576, %c0_92] : memref<928x128xf32, #tpu.memory_space<vmem>>, vector<32x128xf32>
    %c608 = arith.constant 608 : index
    %c0_93 = arith.constant 0 : index
    %296 = vector.load %arg2[%c608, %c0_93] : memref<928x128xf32, #tpu.memory_space<vmem>>, vector<32x128xf32>
    %c656 = arith.constant 656 : index
    %c0_94 = arith.constant 0 : index
    %297 = vector.load %arg2[%c656, %c0_94] : memref<928x128xf32, #tpu.memory_space<vmem>>, vector<1x128xf32>
    %c664 = arith.constant 664 : index
    %c0_95 = arith.constant 0 : index
    %298 = vector.load %arg2[%c664, %c0_95] : memref<928x128xf32, #tpu.memory_space<vmem>>, vector<1x128xf32>
    %c0_96 = arith.constant 0 : index
    %c0_97 = arith.constant 0 : index
    %299 = vector.load %arg4[%c0_96, %c0_97] : memref<8x128xf32, #tpu.memory_space<vmem>>, vector<8x128xf32>
    %c256 = arith.constant 256 : index
    %c0_98 = arith.constant 0 : index
    %300 = vector.load %arg2[%c256, %c0_98] : memref<928x128xf32, #tpu.memory_space<vmem>>, vector<128x128xf32>
    %cst_99 = arith.constant dense<0.000000e+00> : vector<8x128xf32>
    %301 = tpu.matmul %299, %300, %cst_99 {dimension_numbers = #tpu.dot_dimension_numbers<[1], [0], [0], [1], [0, 0, 1, 1], [], []>} : vector<8x128xf32>, vector<128x128xf32>, vector<8x128xf32> -> vector<8x128xf32>
    %302 = vector.broadcast %297 : vector<1x128xf32> to vector<8x128xf32>
    %303 = arith.addf %301, %302 : vector<8x128xf32>
    %c0_100 = arith.constant 0 : index
    %c0_101 = arith.constant 0 : index
    %304 = vector.load %arg7[%c0_100, %c0_101] : memref<8x128xf32, #tpu.memory_space<vmem>>, vector<8x128xf32>
    tpu.vector_store %arg7[%c0_100, %c0_101], %303 {strides = array<i32>} : memref<8x128xf32, #tpu.memory_space<vmem>>, vector<8x128xf32>,
    %c384 = arith.constant 384 : index
    %c0_102 = arith.constant 0 : index
    %305 = vector.load %arg2[%c384, %c0_102] : memref<928x128xf32, #tpu.memory_space<vmem>>, vector<128x128xf32>
    %cst_103 = arith.constant dense<0.000000e+00> : vector<8x128xf32>
    %306 = tpu.matmul %299, %305, %cst_103 {dimension_numbers = #tpu.dot_dimension_numbers<[1], [0], [0], [1], [0, 0, 1, 1], [], []>} : vector<8x128xf32>, vector<128x128xf32>, vector<8x128xf32> -> vector<8x128xf32>
    %307 = vector.broadcast %298 : vector<1x128xf32> to vector<8x128xf32>
    %308 = arith.addf %306, %307 : vector<8x128xf32>
    %c0_104 = arith.constant 0 : index
    %c0_105 = arith.constant 0 : index
    %309 = vector.load %arg8[%c0_104, %c0_105] : memref<8x128xf32, #tpu.memory_space<vmem>>, vector<8x128xf32>
    tpu.vector_store %arg8[%c0_104, %c0_105], %308 {strides = array<i32>} : memref<8x128xf32, #tpu.memory_space<vmem>>, vector<8x128xf32>,
    %cst_106 = arith.constant 0.000000e+00 : f32
    %310 = vector.broadcast %cst_106 : f32 to vector<2x32xf32>
    %cst_107 = arith.constant 0.000000e+00 : f32
    %311 = vector.broadcast %cst_107 : f32 to vector<2x32xf32>
    %c0_i32_108 = arith.constant 0 : i32
    %c7_i32_109 = arith.constant 7 : i32
    %312 = arith.subi %c7_i32_109, %c0_i32_108 : i32
    %313 = vector.extract_strided_slice %310 {offsets = [0, 0], sizes = [1, 32], strides = [1, 1]} : vector<2x32xf32> to vector<1x32xf32>
    %cst_110 = arith.constant dense<0.000000e+00> : vector<1x128xf32>
    %314 = tpu.matmul %313, %295, %cst_110 {dimension_numbers = #tpu.dot_dimension_numbers<[1], [0], [0], [1], [0, 0, 1, 1], [], []>} : vector<1x32xf32>, vector<32x128xf32>, vector<1x128xf32> -> vector<1x128xf32>
    %315 = vector.extract_strided_slice %310 {offsets = [1, 0], sizes = [1, 32], strides = [1, 1]} : vector<2x32xf32> to vector<1x32xf32>
    %cst_111 = arith.constant dense<0.000000e+00> : vector<1x128xf32>
    %316 = tpu.matmul %315, %296, %cst_111 {dimension_numbers = #tpu.dot_dimension_numbers<[1], [0], [0], [1], [0, 0, 1, 1], [], []>} : vector<1x32xf32>, vector<32x128xf32>, vector<1x128xf32> -> vector<1x128xf32>
    %317 = arith.index_cast %c0_i32_108 : i32 to index
    %c0_112 = arith.constant 0 : index
    %318 = vector.load %arg7[%317, %c0_112] : memref<8x128xf32, #tpu.memory_space<vmem>>, vector<1x128xf32>
    %319 = arith.addf %318, %314 : vector<1x128xf32>
    %320 = arith.index_cast %312 : i32 to index
    %c0_113 = arith.constant 0 : index
    %321 = vector.load %arg8[%320, %c0_113] : memref<8x128xf32, #tpu.memory_space<vmem>>, vector<1x128xf32>
    %322 = arith.addf %321, %316 : vector<1x128xf32>
    %323 = tpu.concatenate %319, %322 in 0 : vector<1x128xf32>, vector<1x128xf32> -> vector<2x128xf32>
    %324 = arith.negf %323 : vector<2x128xf32>
    %325 = math.exp %324 : vector<2x128xf32>
    %cst_114 = arith.constant 1.000000e+00 : f32
    %326 = vector.broadcast %cst_114 : f32 to vector<2x128xf32>
    %327 = arith.addf %326, %325 : vector<2x128xf32>
    %328 = arith.divf %326, %327 : vector<2x128xf32>
    %329 = math.tanh %323 : vector<2x128xf32>
    %330 = vector.extract_strided_slice %328 {offsets = [0, 32], sizes = [2, 32], strides = [1, 1]} : vector<2x128xf32> to vector<2x32xf32>
    %331 = arith.mulf %330, %311 : vector<2x32xf32>
    %332 = vector.extract_strided_slice %328 {offsets = [0, 0], sizes = [2, 32], strides = [1, 1]} : vector<2x128xf32> to vector<2x32xf32>
    %333 = vector.extract_strided_slice %329 {offsets = [0, 64], sizes = [2, 32], strides = [1, 1]} : vector<2x128xf32> to vector<2x32xf32>
    %334 = arith.mulf %332, %333 : vector<2x32xf32>
    %335 = arith.addf %331, %334 : vector<2x32xf32>
    %336 = vector.extract_strided_slice %328 {offsets = [0, 96], sizes = [2, 32], strides = [1, 1]} : vector<2x128xf32> to vector<2x32xf32>
    %337 = math.tanh %335 : vector<2x32xf32>
    %338 = arith.mulf %336, %337 : vector<2x32xf32>
    %c1_i32_115 = arith.constant 1 : i32
    %c7_i32_116 = arith.constant 7 : i32
    %339 = arith.subi %c7_i32_116, %c1_i32_115 : i32
    %340 = vector.extract_strided_slice %338 {offsets = [0, 0], sizes = [1, 32], strides = [1, 1]} : vector<2x32xf32> to vector<1x32xf32>
    %cst_117 = arith.constant dense<0.000000e+00> : vector<1x128xf32>
    %341 = tpu.matmul %340, %295, %cst_117 {dimension_numbers = #tpu.dot_dimension_numbers<[1], [0], [0], [1], [0, 0, 1, 1], [], []>} : vector<1x32xf32>, vector<32x128xf32>, vector<1x128xf32> -> vector<1x128xf32>
    %342 = vector.extract_strided_slice %338 {offsets = [1, 0], sizes = [1, 32], strides = [1, 1]} : vector<2x32xf32> to vector<1x32xf32>
    %cst_118 = arith.constant dense<0.000000e+00> : vector<1x128xf32>
    %343 = tpu.matmul %342, %296, %cst_118 {dimension_numbers = #tpu.dot_dimension_numbers<[1], [0], [0], [1], [0, 0, 1, 1], [], []>} : vector<1x32xf32>, vector<32x128xf32>, vector<1x128xf32> -> vector<1x128xf32>
    %344 = arith.index_cast %c1_i32_115 : i32 to index
    %c0_119 = arith.constant 0 : index
    %345 = vector.load %arg7[%344, %c0_119] : memref<8x128xf32, #tpu.memory_space<vmem>>, vector<1x128xf32>
    %346 = arith.addf %345, %341 : vector<1x128xf32>
    %347 = arith.index_cast %339 : i32 to index
    %c0_120 = arith.constant 0 : index
    %348 = vector.load %arg8[%347, %c0_120] : memref<8x128xf32, #tpu.memory_space<vmem>>, vector<1x128xf32>
    %349 = arith.addf %348, %343 : vector<1x128xf32>
    %350 = tpu.concatenate %346, %349 in 0 : vector<1x128xf32>, vector<1x128xf32> -> vector<2x128xf32>
    %351 = arith.negf %350 : vector<2x128xf32>
    %352 = math.exp %351 : vector<2x128xf32>
    %cst_121 = arith.constant 1.000000e+00 : f32
    %353 = vector.broadcast %cst_121 : f32 to vector<2x128xf32>
    %354 = arith.addf %353, %352 : vector<2x128xf32>
    %355 = arith.divf %353, %354 : vector<2x128xf32>
    %356 = math.tanh %350 : vector<2x128xf32>
    %357 = vector.extract_strided_slice %355 {offsets = [0, 32], sizes = [2, 32], strides = [1, 1]} : vector<2x128xf32> to vector<2x32xf32>
    %358 = arith.mulf %357, %335 : vector<2x32xf32>
    %359 = vector.extract_strided_slice %355 {offsets = [0, 0], sizes = [2, 32], strides = [1, 1]} : vector<2x128xf32> to vector<2x32xf32>
    %360 = vector.extract_strided_slice %356 {offsets = [0, 64], sizes = [2, 32], strides = [1, 1]} : vector<2x128xf32> to vector<2x32xf32>
    %361 = arith.mulf %359, %360 : vector<2x32xf32>
    %362 = arith.addf %358, %361 : vector<2x32xf32>
    %363 = vector.extract_strided_slice %355 {offsets = [0, 96], sizes = [2, 32], strides = [1, 1]} : vector<2x128xf32> to vector<2x32xf32>
    %364 = math.tanh %362 : vector<2x32xf32>
    %365 = arith.mulf %363, %364 : vector<2x32xf32>
    %c2_i32_122 = arith.constant 2 : i32
    %c7_i32_123 = arith.constant 7 : i32
    %366 = arith.subi %c7_i32_123, %c2_i32_122 : i32
    %367 = vector.extract_strided_slice %365 {offsets = [0, 0], sizes = [1, 32], strides = [1, 1]} : vector<2x32xf32> to vector<1x32xf32>
    %cst_124 = arith.constant dense<0.000000e+00> : vector<1x128xf32>
    %368 = tpu.matmul %367, %295, %cst_124 {dimension_numbers = #tpu.dot_dimension_numbers<[1], [0], [0], [1], [0, 0, 1, 1], [], []>} : vector<1x32xf32>, vector<32x128xf32>, vector<1x128xf32> -> vector<1x128xf32>
    %369 = vector.extract_strided_slice %365 {offsets = [1, 0], sizes = [1, 32], strides = [1, 1]} : vector<2x32xf32> to vector<1x32xf32>
    %cst_125 = arith.constant dense<0.000000e+00> : vector<1x128xf32>
    %370 = tpu.matmul %369, %296, %cst_125 {dimension_numbers = #tpu.dot_dimension_numbers<[1], [0], [0], [1], [0, 0, 1, 1], [], []>} : vector<1x32xf32>, vector<32x128xf32>, vector<1x128xf32> -> vector<1x128xf32>
    %371 = arith.index_cast %c2_i32_122 : i32 to index
    %c0_126 = arith.constant 0 : index
    %372 = vector.load %arg7[%371, %c0_126] : memref<8x128xf32, #tpu.memory_space<vmem>>, vector<1x128xf32>
    %373 = arith.addf %372, %368 : vector<1x128xf32>
    %374 = arith.index_cast %366 : i32 to index
    %c0_127 = arith.constant 0 : index
    %375 = vector.load %arg8[%374, %c0_127] : memref<8x128xf32, #tpu.memory_space<vmem>>, vector<1x128xf32>
    %376 = arith.addf %375, %370 : vector<1x128xf32>
    %377 = tpu.concatenate %373, %376 in 0 : vector<1x128xf32>, vector<1x128xf32> -> vector<2x128xf32>
    %378 = arith.negf %377 : vector<2x128xf32>
    %379 = math.exp %378 : vector<2x128xf32>
    %cst_128 = arith.constant 1.000000e+00 : f32
    %380 = vector.broadcast %cst_128 : f32 to vector<2x128xf32>
    %381 = arith.addf %380, %379 : vector<2x128xf32>
    %382 = arith.divf %380, %381 : vector<2x128xf32>
    %383 = math.tanh %377 : vector<2x128xf32>
    %384 = vector.extract_strided_slice %382 {offsets = [0, 32], sizes = [2, 32], strides = [1, 1]} : vector<2x128xf32> to vector<2x32xf32>
    %385 = arith.mulf %384, %362 : vector<2x32xf32>
    %386 = vector.extract_strided_slice %382 {offsets = [0, 0], sizes = [2, 32], strides = [1, 1]} : vector<2x128xf32> to vector<2x32xf32>
    %387 = vector.extract_strided_slice %383 {offsets = [0, 64], sizes = [2, 32], strides = [1, 1]} : vector<2x128xf32> to vector<2x32xf32>
    %388 = arith.mulf %386, %387 : vector<2x32xf32>
    %389 = arith.addf %385, %388 : vector<2x32xf32>
    %390 = vector.extract_strided_slice %382 {offsets = [0, 96], sizes = [2, 32], strides = [1, 1]} : vector<2x128xf32> to vector<2x32xf32>
    %391 = math.tanh %389 : vector<2x32xf32>
    %392 = arith.mulf %390, %391 : vector<2x32xf32>
    %c3_i32_129 = arith.constant 3 : i32
    %c7_i32_130 = arith.constant 7 : i32
    %393 = arith.subi %c7_i32_130, %c3_i32_129 : i32
    %394 = vector.extract_strided_slice %392 {offsets = [0, 0], sizes = [1, 32], strides = [1, 1]} : vector<2x32xf32> to vector<1x32xf32>
    %cst_131 = arith.constant dense<0.000000e+00> : vector<1x128xf32>
    %395 = tpu.matmul %394, %295, %cst_131 {dimension_numbers = #tpu.dot_dimension_numbers<[1], [0], [0], [1], [0, 0, 1, 1], [], []>} : vector<1x32xf32>, vector<32x128xf32>, vector<1x128xf32> -> vector<1x128xf32>
    %396 = vector.extract_strided_slice %392 {offsets = [1, 0], sizes = [1, 32], strides = [1, 1]} : vector<2x32xf32> to vector<1x32xf32>
    %cst_132 = arith.constant dense<0.000000e+00> : vector<1x128xf32>
    %397 = tpu.matmul %396, %296, %cst_132 {dimension_numbers = #tpu.dot_dimension_numbers<[1], [0], [0], [1], [0, 0, 1, 1], [], []>} : vector<1x32xf32>, vector<32x128xf32>, vector<1x128xf32> -> vector<1x128xf32>
    %398 = arith.index_cast %c3_i32_129 : i32 to index
    %c0_133 = arith.constant 0 : index
    %399 = vector.load %arg7[%398, %c0_133] : memref<8x128xf32, #tpu.memory_space<vmem>>, vector<1x128xf32>
    %400 = arith.addf %399, %395 : vector<1x128xf32>
    %401 = arith.index_cast %393 : i32 to index
    %c0_134 = arith.constant 0 : index
    %402 = vector.load %arg8[%401, %c0_134] : memref<8x128xf32, #tpu.memory_space<vmem>>, vector<1x128xf32>
    %403 = arith.addf %402, %397 : vector<1x128xf32>
    %404 = tpu.concatenate %400, %403 in 0 : vector<1x128xf32>, vector<1x128xf32> -> vector<2x128xf32>
    %405 = arith.negf %404 : vector<2x128xf32>
    %406 = math.exp %405 : vector<2x128xf32>
    %cst_135 = arith.constant 1.000000e+00 : f32
    %407 = vector.broadcast %cst_135 : f32 to vector<2x128xf32>
    %408 = arith.addf %407, %406 : vector<2x128xf32>
    %409 = arith.divf %407, %408 : vector<2x128xf32>
    %410 = math.tanh %404 : vector<2x128xf32>
    %411 = vector.extract_strided_slice %409 {offsets = [0, 32], sizes = [2, 32], strides = [1, 1]} : vector<2x128xf32> to vector<2x32xf32>
    %412 = arith.mulf %411, %389 : vector<2x32xf32>
    %413 = vector.extract_strided_slice %409 {offsets = [0, 0], sizes = [2, 32], strides = [1, 1]} : vector<2x128xf32> to vector<2x32xf32>
    %414 = vector.extract_strided_slice %410 {offsets = [0, 64], sizes = [2, 32], strides = [1, 1]} : vector<2x128xf32> to vector<2x32xf32>
    %415 = arith.mulf %413, %414 : vector<2x32xf32>
    %416 = arith.addf %412, %415 : vector<2x32xf32>
    %417 = vector.extract_strided_slice %409 {offsets = [0, 96], sizes = [2, 32], strides = [1, 1]} : vector<2x128xf32> to vector<2x32xf32>
    %418 = math.tanh %416 : vector<2x32xf32>
    %419 = arith.mulf %417, %418 : vector<2x32xf32>
    %c4_i32_136 = arith.constant 4 : i32
    %c7_i32_137 = arith.constant 7 : i32
    %420 = arith.subi %c7_i32_137, %c4_i32_136 : i32
    %421 = vector.extract_strided_slice %419 {offsets = [0, 0], sizes = [1, 32], strides = [1, 1]} : vector<2x32xf32> to vector<1x32xf32>
    %cst_138 = arith.constant dense<0.000000e+00> : vector<1x128xf32>
    %422 = tpu.matmul %421, %295, %cst_138 {dimension_numbers = #tpu.dot_dimension_numbers<[1], [0], [0], [1], [0, 0, 1, 1], [], []>} : vector<1x32xf32>, vector<32x128xf32>, vector<1x128xf32> -> vector<1x128xf32>
    %423 = vector.extract_strided_slice %419 {offsets = [1, 0], sizes = [1, 32], strides = [1, 1]} : vector<2x32xf32> to vector<1x32xf32>
    %cst_139 = arith.constant dense<0.000000e+00> : vector<1x128xf32>
    %424 = tpu.matmul %423, %296, %cst_139 {dimension_numbers = #tpu.dot_dimension_numbers<[1], [0], [0], [1], [0, 0, 1, 1], [], []>} : vector<1x32xf32>, vector<32x128xf32>, vector<1x128xf32> -> vector<1x128xf32>
    %425 = arith.index_cast %c4_i32_136 : i32 to index
    %c0_140 = arith.constant 0 : index
    %426 = vector.load %arg7[%425, %c0_140] : memref<8x128xf32, #tpu.memory_space<vmem>>, vector<1x128xf32>
    %427 = arith.addf %426, %422 : vector<1x128xf32>
    %428 = arith.index_cast %420 : i32 to index
    %c0_141 = arith.constant 0 : index
    %429 = vector.load %arg8[%428, %c0_141] : memref<8x128xf32, #tpu.memory_space<vmem>>, vector<1x128xf32>
    %430 = arith.addf %429, %424 : vector<1x128xf32>
    %431 = tpu.concatenate %427, %430 in 0 : vector<1x128xf32>, vector<1x128xf32> -> vector<2x128xf32>
    %432 = arith.negf %431 : vector<2x128xf32>
    %433 = math.exp %432 : vector<2x128xf32>
    %cst_142 = arith.constant 1.000000e+00 : f32
    %434 = vector.broadcast %cst_142 : f32 to vector<2x128xf32>
    %435 = arith.addf %434, %433 : vector<2x128xf32>
    %436 = arith.divf %434, %435 : vector<2x128xf32>
    %437 = math.tanh %431 : vector<2x128xf32>
    %438 = vector.extract_strided_slice %436 {offsets = [0, 32], sizes = [2, 32], strides = [1, 1]} : vector<2x128xf32> to vector<2x32xf32>
    %439 = arith.mulf %438, %416 : vector<2x32xf32>
    %440 = vector.extract_strided_slice %436 {offsets = [0, 0], sizes = [2, 32], strides = [1, 1]} : vector<2x128xf32> to vector<2x32xf32>
    %441 = vector.extract_strided_slice %437 {offsets = [0, 64], sizes = [2, 32], strides = [1, 1]} : vector<2x128xf32> to vector<2x32xf32>
    %442 = arith.mulf %440, %441 : vector<2x32xf32>
    %443 = arith.addf %439, %442 : vector<2x32xf32>
    %444 = vector.extract_strided_slice %436 {offsets = [0, 96], sizes = [2, 32], strides = [1, 1]} : vector<2x128xf32> to vector<2x32xf32>
    %445 = math.tanh %443 : vector<2x32xf32>
    %446 = arith.mulf %444, %445 : vector<2x32xf32>
    %c5_i32_143 = arith.constant 5 : i32
    %c7_i32_144 = arith.constant 7 : i32
    %447 = arith.subi %c7_i32_144, %c5_i32_143 : i32
    %448 = vector.extract_strided_slice %446 {offsets = [0, 0], sizes = [1, 32], strides = [1, 1]} : vector<2x32xf32> to vector<1x32xf32>
    %cst_145 = arith.constant dense<0.000000e+00> : vector<1x128xf32>
    %449 = tpu.matmul %448, %295, %cst_145 {dimension_numbers = #tpu.dot_dimension_numbers<[1], [0], [0], [1], [0, 0, 1, 1], [], []>} : vector<1x32xf32>, vector<32x128xf32>, vector<1x128xf32> -> vector<1x128xf32>
    %450 = vector.extract_strided_slice %446 {offsets = [1, 0], sizes = [1, 32], strides = [1, 1]} : vector<2x32xf32> to vector<1x32xf32>
    %cst_146 = arith.constant dense<0.000000e+00> : vector<1x128xf32>
    %451 = tpu.matmul %450, %296, %cst_146 {dimension_numbers = #tpu.dot_dimension_numbers<[1], [0], [0], [1], [0, 0, 1, 1], [], []>} : vector<1x32xf32>, vector<32x128xf32>, vector<1x128xf32> -> vector<1x128xf32>
    %452 = arith.index_cast %c5_i32_143 : i32 to index
    %c0_147 = arith.constant 0 : index
    %453 = vector.load %arg7[%452, %c0_147] : memref<8x128xf32, #tpu.memory_space<vmem>>, vector<1x128xf32>
    %454 = arith.addf %453, %449 : vector<1x128xf32>
    %455 = arith.index_cast %447 : i32 to index
    %c0_148 = arith.constant 0 : index
    %456 = vector.load %arg8[%455, %c0_148] : memref<8x128xf32, #tpu.memory_space<vmem>>, vector<1x128xf32>
    %457 = arith.addf %456, %451 : vector<1x128xf32>
    %458 = tpu.concatenate %454, %457 in 0 : vector<1x128xf32>, vector<1x128xf32> -> vector<2x128xf32>
    %459 = arith.negf %458 : vector<2x128xf32>
    %460 = math.exp %459 : vector<2x128xf32>
    %cst_149 = arith.constant 1.000000e+00 : f32
    %461 = vector.broadcast %cst_149 : f32 to vector<2x128xf32>
    %462 = arith.addf %461, %460 : vector<2x128xf32>
    %463 = arith.divf %461, %462 : vector<2x128xf32>
    %464 = math.tanh %458 : vector<2x128xf32>
    %465 = vector.extract_strided_slice %463 {offsets = [0, 32], sizes = [2, 32], strides = [1, 1]} : vector<2x128xf32> to vector<2x32xf32>
    %466 = arith.mulf %465, %443 : vector<2x32xf32>
    %467 = vector.extract_strided_slice %463 {offsets = [0, 0], sizes = [2, 32], strides = [1, 1]} : vector<2x128xf32> to vector<2x32xf32>
    %468 = vector.extract_strided_slice %464 {offsets = [0, 64], sizes = [2, 32], strides = [1, 1]} : vector<2x128xf32> to vector<2x32xf32>
    %469 = arith.mulf %467, %468 : vector<2x32xf32>
    %470 = arith.addf %466, %469 : vector<2x32xf32>
    %471 = vector.extract_strided_slice %463 {offsets = [0, 96], sizes = [2, 32], strides = [1, 1]} : vector<2x128xf32> to vector<2x32xf32>
    %472 = math.tanh %470 : vector<2x32xf32>
    %473 = arith.mulf %471, %472 : vector<2x32xf32>
    %c6_i32_150 = arith.constant 6 : i32
    %c7_i32_151 = arith.constant 7 : i32
    %474 = arith.subi %c7_i32_151, %c6_i32_150 : i32
    %475 = vector.extract_strided_slice %473 {offsets = [0, 0], sizes = [1, 32], strides = [1, 1]} : vector<2x32xf32> to vector<1x32xf32>
    %cst_152 = arith.constant dense<0.000000e+00> : vector<1x128xf32>
    %476 = tpu.matmul %475, %295, %cst_152 {dimension_numbers = #tpu.dot_dimension_numbers<[1], [0], [0], [1], [0, 0, 1, 1], [], []>} : vector<1x32xf32>, vector<32x128xf32>, vector<1x128xf32> -> vector<1x128xf32>
    %477 = vector.extract_strided_slice %473 {offsets = [1, 0], sizes = [1, 32], strides = [1, 1]} : vector<2x32xf32> to vector<1x32xf32>
    %cst_153 = arith.constant dense<0.000000e+00> : vector<1x128xf32>
    %478 = tpu.matmul %477, %296, %cst_153 {dimension_numbers = #tpu.dot_dimension_numbers<[1], [0], [0], [1], [0, 0, 1, 1], [], []>} : vector<1x32xf32>, vector<32x128xf32>, vector<1x128xf32> -> vector<1x128xf32>
    %479 = arith.index_cast %c6_i32_150 : i32 to index
    %c0_154 = arith.constant 0 : index
    %480 = vector.load %arg7[%479, %c0_154] : memref<8x128xf32, #tpu.memory_space<vmem>>, vector<1x128xf32>
    %481 = arith.addf %480, %476 : vector<1x128xf32>
    %482 = arith.index_cast %474 : i32 to index
    %c0_155 = arith.constant 0 : index
    %483 = vector.load %arg8[%482, %c0_155] : memref<8x128xf32, #tpu.memory_space<vmem>>, vector<1x128xf32>
    %484 = arith.addf %483, %478 : vector<1x128xf32>
    %485 = tpu.concatenate %481, %484 in 0 : vector<1x128xf32>, vector<1x128xf32> -> vector<2x128xf32>
    %486 = arith.negf %485 : vector<2x128xf32>
    %487 = math.exp %486 : vector<2x128xf32>
    %cst_156 = arith.constant 1.000000e+00 : f32
    %488 = vector.broadcast %cst_156 : f32 to vector<2x128xf32>
    %489 = arith.addf %488, %487 : vector<2x128xf32>
    %490 = arith.divf %488, %489 : vector<2x128xf32>
    %491 = math.tanh %485 : vector<2x128xf32>
    %492 = vector.extract_strided_slice %490 {offsets = [0, 32], sizes = [2, 32], strides = [1, 1]} : vector<2x128xf32> to vector<2x32xf32>
    %493 = arith.mulf %492, %470 : vector<2x32xf32>
    %494 = vector.extract_strided_slice %490 {offsets = [0, 0], sizes = [2, 32], strides = [1, 1]} : vector<2x128xf32> to vector<2x32xf32>
    %495 = vector.extract_strided_slice %491 {offsets = [0, 64], sizes = [2, 32], strides = [1, 1]} : vector<2x128xf32> to vector<2x32xf32>
    %496 = arith.mulf %494, %495 : vector<2x32xf32>
    %497 = arith.addf %493, %496 : vector<2x32xf32>
    %498 = vector.extract_strided_slice %490 {offsets = [0, 96], sizes = [2, 32], strides = [1, 1]} : vector<2x128xf32> to vector<2x32xf32>
    %499 = math.tanh %497 : vector<2x32xf32>
    %500 = arith.mulf %498, %499 : vector<2x32xf32>
    %c7_i32_157 = arith.constant 7 : i32
    %c7_i32_158 = arith.constant 7 : i32
    %501 = arith.subi %c7_i32_158, %c7_i32_157 : i32
    %502 = vector.extract_strided_slice %500 {offsets = [0, 0], sizes = [1, 32], strides = [1, 1]} : vector<2x32xf32> to vector<1x32xf32>
    %cst_159 = arith.constant dense<0.000000e+00> : vector<1x128xf32>
    %503 = tpu.matmul %502, %295, %cst_159 {dimension_numbers = #tpu.dot_dimension_numbers<[1], [0], [0], [1], [0, 0, 1, 1], [], []>} : vector<1x32xf32>, vector<32x128xf32>, vector<1x128xf32> -> vector<1x128xf32>
    %504 = vector.extract_strided_slice %500 {offsets = [1, 0], sizes = [1, 32], strides = [1, 1]} : vector<2x32xf32> to vector<1x32xf32>
    %cst_160 = arith.constant dense<0.000000e+00> : vector<1x128xf32>
    %505 = tpu.matmul %504, %296, %cst_160 {dimension_numbers = #tpu.dot_dimension_numbers<[1], [0], [0], [1], [0, 0, 1, 1], [], []>} : vector<1x32xf32>, vector<32x128xf32>, vector<1x128xf32> -> vector<1x128xf32>
    %506 = arith.index_cast %c7_i32_157 : i32 to index
    %c0_161 = arith.constant 0 : index
    %507 = vector.load %arg7[%506, %c0_161] : memref<8x128xf32, #tpu.memory_space<vmem>>, vector<1x128xf32>
    %508 = arith.addf %507, %503 : vector<1x128xf32>
    %509 = arith.index_cast %501 : i32 to index
    %c0_162 = arith.constant 0 : index
    %510 = vector.load %arg8[%509, %c0_162] : memref<8x128xf32, #tpu.memory_space<vmem>>, vector<1x128xf32>
    %511 = arith.addf %510, %505 : vector<1x128xf32>
    %512 = tpu.concatenate %508, %511 in 0 : vector<1x128xf32>, vector<1x128xf32> -> vector<2x128xf32>
    %513 = arith.negf %512 : vector<2x128xf32>
    %514 = math.exp %513 : vector<2x128xf32>
    %cst_163 = arith.constant 1.000000e+00 : f32
    %515 = vector.broadcast %cst_163 : f32 to vector<2x128xf32>
    %516 = arith.addf %515, %514 : vector<2x128xf32>
    %517 = arith.divf %515, %516 : vector<2x128xf32>
    %518 = math.tanh %512 : vector<2x128xf32>
    %519 = vector.extract_strided_slice %517 {offsets = [0, 32], sizes = [2, 32], strides = [1, 1]} : vector<2x128xf32> to vector<2x32xf32>
    %520 = arith.mulf %519, %497 : vector<2x32xf32>
    %521 = vector.extract_strided_slice %517 {offsets = [0, 0], sizes = [2, 32], strides = [1, 1]} : vector<2x128xf32> to vector<2x32xf32>
    %522 = vector.extract_strided_slice %518 {offsets = [0, 64], sizes = [2, 32], strides = [1, 1]} : vector<2x128xf32> to vector<2x32xf32>
    %523 = arith.mulf %521, %522 : vector<2x32xf32>
    %524 = arith.addf %520, %523 : vector<2x32xf32>
    %525 = vector.extract_strided_slice %517 {offsets = [0, 96], sizes = [2, 32], strides = [1, 1]} : vector<2x128xf32> to vector<2x32xf32>
    %526 = math.tanh %524 : vector<2x32xf32>
    %527 = arith.mulf %525, %526 : vector<2x32xf32>
    %c8_i32_164 = arith.constant 8 : i32
    %c704 = arith.constant 704 : index
    %c0_165 = arith.constant 0 : index
    %528 = vector.load %arg2[%c704, %c0_165] : memref<928x128xf32, #tpu.memory_space<vmem>>, vector<32x128xf32>
    %cst_166 = arith.constant dense<0.000000e+00> : vector<2x128xf32>
    %529 = tpu.matmul %527, %528, %cst_166 {dimension_numbers = #tpu.dot_dimension_numbers<[1], [0], [0], [1], [0, 0, 1, 1], [], []>} : vector<2x32xf32>, vector<32x128xf32>, vector<2x128xf32> -> vector<2x128xf32>
    %c736 = arith.constant 736 : index
    %c0_167 = arith.constant 0 : index
    %530 = vector.load %arg2[%c736, %c0_167] : memref<928x128xf32, #tpu.memory_space<vmem>>, vector<1x128xf32>
    %531 = vector.broadcast %530 : vector<1x128xf32> to vector<2x128xf32>
    %532 = arith.addf %529, %531 : vector<2x128xf32>
    %533 = vector.extract_strided_slice %532 {offsets = [0, 0], sizes = [1, 128], strides = [1, 1]} : vector<2x128xf32> to vector<1x128xf32>
    %534 = vector.extract_strided_slice %532 {offsets = [1, 0], sizes = [1, 128], strides = [1, 1]} : vector<2x128xf32> to vector<1x128xf32>
    %535 = arith.mulf %533, %534 : vector<1x128xf32>
    %536 = vector.extract_strided_slice %535 {offsets = [0, 0], sizes = [1, 16], strides = [1, 1]} : vector<1x128xf32> to vector<1x16xf32>
    %c744 = arith.constant 744 : index
    %c0_168 = arith.constant 0 : index
    %537 = vector.load %arg2[%c744, %c0_168] : memref<928x128xf32, #tpu.memory_space<vmem>>, vector<16x128xf32>
    %cst_169 = arith.constant dense<0.000000e+00> : vector<1x128xf32>
    %538 = tpu.matmul %536, %537, %cst_169 {dimension_numbers = #tpu.dot_dimension_numbers<[1], [0], [0], [1], [0, 0, 1, 1], [], []>} : vector<1x16xf32>, vector<16x128xf32>, vector<1x128xf32> -> vector<1x128xf32>
    %c760 = arith.constant 760 : index
    %c0_170 = arith.constant 0 : index
    %539 = vector.load %arg2[%c760, %c0_170] : memref<928x128xf32, #tpu.memory_space<vmem>>, vector<1x128xf32>
    %540 = arith.addf %538, %539 : vector<1x128xf32>
    %541 = vector.extract_strided_slice %540 {offsets = [0, 0], sizes = [1, 32], strides = [1, 1]} : vector<1x128xf32> to vector<1x32xf32>
    %cst_171 = arith.constant 0.000000e+00 : f32
    %542 = vector.broadcast %cst_171 : f32 to vector<8x128xf32>
    %c0_172 = arith.constant 0 : index
    %c0_173 = arith.constant 0 : index
    %543 = vector.load %arg3[%c0_172, %c0_173] : memref<8x128xf32, #tpu.memory_space<vmem>>, vector<8x128xf32>
    tpu.vector_store %arg3[%c0_172, %c0_173], %542 {strides = array<i32>} : memref<8x128xf32, #tpu.memory_space<vmem>>, vector<8x128xf32>,
    %544 = tpu.iota {dimensions = array<i32: 1>} : vector<1x128xi32>
    %c768 = arith.constant 768 : index
    %c0_174 = arith.constant 0 : index
    %545 = vector.load %arg2[%c768, %c0_174] : memref<928x128xf32, #tpu.memory_space<vmem>>, vector<1x128xf32>
    %c776 = arith.constant 776 : index
    %c0_175 = arith.constant 0 : index
    %546 = vector.load %arg2[%c776, %c0_175] : memref<928x128xf32, #tpu.memory_space<vmem>>, vector<32x128xf32>
    %c808 = arith.constant 808 : index
    %c0_176 = arith.constant 0 : index
    %547 = vector.load %arg2[%c808, %c0_176] : memref<928x128xf32, #tpu.memory_space<vmem>>, vector<1x128xf32>
    %c816 = arith.constant 816 : index
    %c0_177 = arith.constant 0 : index
    %548 = vector.load %arg2[%c816, %c0_177] : memref<928x128xf32, #tpu.memory_space<vmem>>, vector<32x128xf32>
    %c848 = arith.constant 848 : index
    %c0_178 = arith.constant 0 : index
    %549 = vector.load %arg2[%c848, %c0_178] : memref<928x128xf32, #tpu.memory_space<vmem>>, vector<32x128xf32>
    %c880 = arith.constant 880 : index
    %c0_179 = arith.constant 0 : index
    %550 = vector.load %arg2[%c880, %c0_179] : memref<928x128xf32, #tpu.memory_space<vmem>>, vector<1x128xf32>
    %c888 = arith.constant 888 : index
    %c0_180 = arith.constant 0 : index
    %551 = vector.load %arg2[%c888, %c0_180] : memref<928x128xf32, #tpu.memory_space<vmem>>, vector<32x128xf32>
    %c920 = arith.constant 920 : index
    %c0_181 = arith.constant 0 : index
    %552 = vector.load %arg2[%c920, %c0_181] : memref<928x128xf32, #tpu.memory_space<vmem>>, vector<1x128xf32>
    %c0_182 = arith.constant 0 : index
    %553 = memref.load %arg1[%c0_182] : memref<1xi32, #tpu.memory_space<smem>>
    %554 = arith.sitofp %553 : i32 to f32
    %555 = vector.broadcast %554 : f32 to vector<1x1xf32>
    %c0_i32_183 = arith.constant 0 : i32
    %556 = vector.broadcast %555 : vector<1x1xf32> to vector<1x128xf32>
    %557 = arith.mulf %556, %545 : vector<1x128xf32>
    %cst_184 = arith.constant dense<0.000000e+00> : vector<1x128xf32>
    %558 = tpu.matmul %541, %546, %cst_184 {dimension_numbers = #tpu.dot_dimension_numbers<[1], [0], [0], [1], [0, 0, 1, 1], [], []>} : vector<1x32xf32>, vector<32x128xf32>, vector<1x128xf32> -> vector<1x128xf32>
    %559 = arith.addf %557, %558 : vector<1x128xf32>
    %560 = arith.addf %559, %547 : vector<1x128xf32>
    %561 = arith.negf %560 : vector<1x128xf32>
    %562 = math.exp %561 : vector<1x128xf32>
    %cst_185 = arith.constant 1.000000e+00 : f32
    %563 = vector.broadcast %cst_185 : f32 to vector<1x128xf32>
    %564 = arith.addf %563, %562 : vector<1x128xf32>
    %565 = arith.divf %563, %564 : vector<1x128xf32>
    %566 = math.tanh %560 : vector<1x128xf32>
    %567 = vector.extract_strided_slice %565 {offsets = [0, 32], sizes = [1, 32], strides = [1, 1]} : vector<1x128xf32> to vector<1x32xf32>
    %568 = arith.mulf %567, %541 : vector<1x32xf32>
    %569 = vector.extract_strided_slice %565 {offsets = [0, 0], sizes = [1, 32], strides = [1, 1]} : vector<1x128xf32> to vector<1x32xf32>
    %570 = vector.extract_strided_slice %566 {offsets = [0, 64], sizes = [1, 32], strides = [1, 1]} : vector<1x128xf32> to vector<1x32xf32>
    %571 = arith.mulf %569, %570 : vector<1x32xf32>
    %572 = arith.addf %568, %571 : vector<1x32xf32>
    %573 = vector.extract_strided_slice %565 {offsets = [0, 96], sizes = [1, 32], strides = [1, 1]} : vector<1x128xf32> to vector<1x32xf32>
    %574 = math.tanh %572 : vector<1x32xf32>
    %575 = arith.mulf %573, %574 : vector<1x32xf32>
    %cst_186 = arith.constant dense<0.000000e+00> : vector<1x128xf32>
    %576 = tpu.matmul %575, %548, %cst_186 {dimension_numbers = #tpu.dot_dimension_numbers<[1], [0], [0], [1], [0, 0, 1, 1], [], []>} : vector<1x32xf32>, vector<32x128xf32>, vector<1x128xf32> -> vector<1x128xf32>
    %cst_187 = arith.constant dense<0.000000e+00> : vector<1x128xf32>
    %577 = tpu.matmul %541, %549, %cst_187 {dimension_numbers = #tpu.dot_dimension_numbers<[1], [0], [0], [1], [0, 0, 1, 1], [], []>} : vector<1x32xf32>, vector<32x128xf32>, vector<1x128xf32> -> vector<1x128xf32>
    %578 = arith.addf %576, %577 : vector<1x128xf32>
    %579 = arith.addf %578, %550 : vector<1x128xf32>
    %580 = arith.negf %579 : vector<1x128xf32>
    %581 = math.exp %580 : vector<1x128xf32>
    %cst_188 = arith.constant 1.000000e+00 : f32
    %582 = vector.broadcast %cst_188 : f32 to vector<1x128xf32>
    %583 = arith.addf %582, %581 : vector<1x128xf32>
    %584 = arith.divf %582, %583 : vector<1x128xf32>
    %585 = math.tanh %579 : vector<1x128xf32>
    %586 = vector.extract_strided_slice %584 {offsets = [0, 32], sizes = [1, 32], strides = [1, 1]} : vector<1x128xf32> to vector<1x32xf32>
    %587 = arith.mulf %586, %541 : vector<1x32xf32>
    %588 = vector.extract_strided_slice %584 {offsets = [0, 0], sizes = [1, 32], strides = [1, 1]} : vector<1x128xf32> to vector<1x32xf32>
    %589 = vector.extract_strided_slice %585 {offsets = [0, 64], sizes = [1, 32], strides = [1, 1]} : vector<1x128xf32> to vector<1x32xf32>
    %590 = arith.mulf %588, %589 : vector<1x32xf32>
    %591 = arith.addf %587, %590 : vector<1x32xf32>
    %592 = vector.extract_strided_slice %584 {offsets = [0, 96], sizes = [1, 32], strides = [1, 1]} : vector<1x128xf32> to vector<1x32xf32>
    %593 = math.tanh %591 : vector<1x32xf32>
    %594 = arith.mulf %592, %593 : vector<1x32xf32>
    %cst_189 = arith.constant dense<0.000000e+00> : vector<1x128xf32>
    %595 = tpu.matmul %594, %551, %cst_189 {dimension_numbers = #tpu.dot_dimension_numbers<[1], [0], [0], [1], [0, 0, 1, 1], [], []>} : vector<1x32xf32>, vector<32x128xf32>, vector<1x128xf32> -> vector<1x128xf32>
    %596 = arith.addf %595, %552 : vector<1x128xf32>
    %cst_190 = arith.constant 0.000000e+00 : f32
    %597 = vector.broadcast %cst_190 : f32 to vector<1x128xf32>
    %598 = arith.maximumf %596, %597 : vector<1x128xf32>
    %599 = arith.index_cast %c0_i32_183 : i32 to index
    %c0_191 = arith.constant 0 : index
    %600 = vector.load %arg3[%599, %c0_191] : memref<8x128xf32, #tpu.memory_space<vmem>>, vector<1x128xf32>
    tpu.vector_store %arg3[%599, %c0_191], %598 {strides = array<i32>} : memref<8x128xf32, #tpu.memory_space<vmem>>, vector<1x128xf32>,
    %601 = tpu.bitcast %598 : vector<1x128xf32> -> vector<1x128xi32>
    %c127_i32 = arith.constant 127 : i32
    %602 = vector.broadcast %c127_i32 : i32 to vector<1x128xi32>
    %603 = arith.ori %601, %602 : vector<1x128xi32>
    %604 = arith.subi %603, %544 : vector<1x128xi32>
    %cst_192 = arith.constant dense<-2147483648> : vector<1xi32>
    %605 = vector.multi_reduction <maxsi>, %604, %cst_192 [1] : vector<1x128xi32> to vector<1xi32>
    %606 = vector.shape_cast %605 : vector<1xi32> to vector<1x1xi32>
    %c127_i32_193 = arith.constant 127 : i32
    %607 = vector.broadcast %c127_i32_193 : i32 to vector<1x1xi32>
    %608 = arith.andi %606, %607 : vector<1x1xi32>
    %c127_i32_194 = arith.constant 127 : i32
    %609 = vector.broadcast %c127_i32_194 : i32 to vector<1x1xi32>
    %610 = arith.subi %609, %608 : vector<1x1xi32>
    %611 = arith.sitofp %610 : vector<1x1xi32> to vector<1x1xf32>
    %c1_i32_195 = arith.constant 1 : i32
    %612 = vector.broadcast %611 : vector<1x1xf32> to vector<1x128xf32>
    %613 = arith.mulf %612, %545 : vector<1x128xf32>
    %cst_196 = arith.constant dense<0.000000e+00> : vector<1x128xf32>
    %614 = tpu.matmul %575, %546, %cst_196 {dimension_numbers = #tpu.dot_dimension_numbers<[1], [0], [0], [1], [0, 0, 1, 1], [], []>} : vector<1x32xf32>, vector<32x128xf32>, vector<1x128xf32> -> vector<1x128xf32>
    %615 = arith.addf %613, %614 : vector<1x128xf32>
    %616 = arith.addf %615, %547 : vector<1x128xf32>
    %617 = arith.negf %616 : vector<1x128xf32>
    %618 = math.exp %617 : vector<1x128xf32>
    %cst_197 = arith.constant 1.000000e+00 : f32
    %619 = vector.broadcast %cst_197 : f32 to vector<1x128xf32>
    %620 = arith.addf %619, %618 : vector<1x128xf32>
    %621 = arith.divf %619, %620 : vector<1x128xf32>
    %622 = math.tanh %616 : vector<1x128xf32>
    %623 = vector.extract_strided_slice %621 {offsets = [0, 32], sizes = [1, 32], strides = [1, 1]} : vector<1x128xf32> to vector<1x32xf32>
    %624 = arith.mulf %623, %572 : vector<1x32xf32>
    %625 = vector.extract_strided_slice %621 {offsets = [0, 0], sizes = [1, 32], strides = [1, 1]} : vector<1x128xf32> to vector<1x32xf32>
    %626 = vector.extract_strided_slice %622 {offsets = [0, 64], sizes = [1, 32], strides = [1, 1]} : vector<1x128xf32> to vector<1x32xf32>
    %627 = arith.mulf %625, %626 : vector<1x32xf32>
    %628 = arith.addf %624, %627 : vector<1x32xf32>
    %629 = vector.extract_strided_slice %621 {offsets = [0, 96], sizes = [1, 32], strides = [1, 1]} : vector<1x128xf32> to vector<1x32xf32>
    %630 = math.tanh %628 : vector<1x32xf32>
    %631 = arith.mulf %629, %630 : vector<1x32xf32>
    %cst_198 = arith.constant dense<0.000000e+00> : vector<1x128xf32>
    %632 = tpu.matmul %631, %548, %cst_198 {dimension_numbers = #tpu.dot_dimension_numbers<[1], [0], [0], [1], [0, 0, 1, 1], [], []>} : vector<1x32xf32>, vector<32x128xf32>, vector<1x128xf32> -> vector<1x128xf32>
    %cst_199 = arith.constant dense<0.000000e+00> : vector<1x128xf32>
    %633 = tpu.matmul %594, %549, %cst_199 {dimension_numbers = #tpu.dot_dimension_numbers<[1], [0], [0], [1], [0, 0, 1, 1], [], []>} : vector<1x32xf32>, vector<32x128xf32>, vector<1x128xf32> -> vector<1x128xf32>
    %634 = arith.addf %632, %633 : vector<1x128xf32>
    %635 = arith.addf %634, %550 : vector<1x128xf32>
    %636 = arith.negf %635 : vector<1x128xf32>
    %637 = math.exp %636 : vector<1x128xf32>
    %cst_200 = arith.constant 1.000000e+00 : f32
    %638 = vector.broadcast %cst_200 : f32 to vector<1x128xf32>
    %639 = arith.addf %638, %637 : vector<1x128xf32>
    %640 = arith.divf %638, %639 : vector<1x128xf32>
    %641 = math.tanh %635 : vector<1x128xf32>
    %642 = vector.extract_strided_slice %640 {offsets = [0, 32], sizes = [1, 32], strides = [1, 1]} : vector<1x128xf32> to vector<1x32xf32>
    %643 = arith.mulf %642, %591 : vector<1x32xf32>
    %644 = vector.extract_strided_slice %640 {offsets = [0, 0], sizes = [1, 32], strides = [1, 1]} : vector<1x128xf32> to vector<1x32xf32>
    %645 = vector.extract_strided_slice %641 {offsets = [0, 64], sizes = [1, 32], strides = [1, 1]} : vector<1x128xf32> to vector<1x32xf32>
    %646 = arith.mulf %644, %645 : vector<1x32xf32>
    %647 = arith.addf %643, %646 : vector<1x32xf32>
    %648 = vector.extract_strided_slice %640 {offsets = [0, 96], sizes = [1, 32], strides = [1, 1]} : vector<1x128xf32> to vector<1x32xf32>
    %649 = math.tanh %647 : vector<1x32xf32>
    %650 = arith.mulf %648, %649 : vector<1x32xf32>
    %cst_201 = arith.constant dense<0.000000e+00> : vector<1x128xf32>
    %651 = tpu.matmul %650, %551, %cst_201 {dimension_numbers = #tpu.dot_dimension_numbers<[1], [0], [0], [1], [0, 0, 1, 1], [], []>} : vector<1x32xf32>, vector<32x128xf32>, vector<1x128xf32> -> vector<1x128xf32>
    %652 = arith.addf %651, %552 : vector<1x128xf32>
    %cst_202 = arith.constant 0.000000e+00 : f32
    %653 = vector.broadcast %cst_202 : f32 to vector<1x128xf32>
    %654 = arith.maximumf %652, %653 : vector<1x128xf32>
    %655 = arith.index_cast %c1_i32_195 : i32 to index
    %c0_203 = arith.constant 0 : index
    %656 = vector.load %arg3[%655, %c0_203] : memref<8x128xf32, #tpu.memory_space<vmem>>, vector<1x128xf32>
    tpu.vector_store %arg3[%655, %c0_203], %654 {strides = array<i32>} : memref<8x128xf32, #tpu.memory_space<vmem>>, vector<1x128xf32>,
    %657 = tpu.bitcast %654 : vector<1x128xf32> -> vector<1x128xi32>
    %c127_i32_204 = arith.constant 127 : i32
    %658 = vector.broadcast %c127_i32_204 : i32 to vector<1x128xi32>
    %659 = arith.ori %657, %658 : vector<1x128xi32>
    %660 = arith.subi %659, %544 : vector<1x128xi32>
    %cst_205 = arith.constant dense<-2147483648> : vector<1xi32>
    %661 = vector.multi_reduction <maxsi>, %660, %cst_205 [1] : vector<1x128xi32> to vector<1xi32>
    %662 = vector.shape_cast %661 : vector<1xi32> to vector<1x1xi32>
    %c127_i32_206 = arith.constant 127 : i32
    %663 = vector.broadcast %c127_i32_206 : i32 to vector<1x1xi32>
    %664 = arith.andi %662, %663 : vector<1x1xi32>
    %c127_i32_207 = arith.constant 127 : i32
    %665 = vector.broadcast %c127_i32_207 : i32 to vector<1x1xi32>
    %666 = arith.subi %665, %664 : vector<1x1xi32>
    %667 = arith.sitofp %666 : vector<1x1xi32> to vector<1x1xf32>
    %c2_i32_208 = arith.constant 2 : i32
    %668 = vector.broadcast %667 : vector<1x1xf32> to vector<1x128xf32>
    %669 = arith.mulf %668, %545 : vector<1x128xf32>
    %cst_209 = arith.constant dense<0.000000e+00> : vector<1x128xf32>
    %670 = tpu.matmul %631, %546, %cst_209 {dimension_numbers = #tpu.dot_dimension_numbers<[1], [0], [0], [1], [0, 0, 1, 1], [], []>} : vector<1x32xf32>, vector<32x128xf32>, vector<1x128xf32> -> vector<1x128xf32>
    %671 = arith.addf %669, %670 : vector<1x128xf32>
    %672 = arith.addf %671, %547 : vector<1x128xf32>
    %673 = arith.negf %672 : vector<1x128xf32>
    %674 = math.exp %673 : vector<1x128xf32>
    %cst_210 = arith.constant 1.000000e+00 : f32
    %675 = vector.broadcast %cst_210 : f32 to vector<1x128xf32>
    %676 = arith.addf %675, %674 : vector<1x128xf32>
    %677 = arith.divf %675, %676 : vector<1x128xf32>
    %678 = math.tanh %672 : vector<1x128xf32>
    %679 = vector.extract_strided_slice %677 {offsets = [0, 32], sizes = [1, 32], strides = [1, 1]} : vector<1x128xf32> to vector<1x32xf32>
    %680 = arith.mulf %679, %628 : vector<1x32xf32>
    %681 = vector.extract_strided_slice %677 {offsets = [0, 0], sizes = [1, 32], strides = [1, 1]} : vector<1x128xf32> to vector<1x32xf32>
    %682 = vector.extract_strided_slice %678 {offsets = [0, 64], sizes = [1, 32], strides = [1, 1]} : vector<1x128xf32> to vector<1x32xf32>
    %683 = arith.mulf %681, %682 : vector<1x32xf32>
    %684 = arith.addf %680, %683 : vector<1x32xf32>
    %685 = vector.extract_strided_slice %677 {offsets = [0, 96], sizes = [1, 32], strides = [1, 1]} : vector<1x128xf32> to vector<1x32xf32>
    %686 = math.tanh %684 : vector<1x32xf32>
    %687 = arith.mulf %685, %686 : vector<1x32xf32>
    %cst_211 = arith.constant dense<0.000000e+00> : vector<1x128xf32>
    %688 = tpu.matmul %687, %548, %cst_211 {dimension_numbers = #tpu.dot_dimension_numbers<[1], [0], [0], [1], [0, 0, 1, 1], [], []>} : vector<1x32xf32>, vector<32x128xf32>, vector<1x128xf32> -> vector<1x128xf32>
    %cst_212 = arith.constant dense<0.000000e+00> : vector<1x128xf32>
    %689 = tpu.matmul %650, %549, %cst_212 {dimension_numbers = #tpu.dot_dimension_numbers<[1], [0], [0], [1], [0, 0, 1, 1], [], []>} : vector<1x32xf32>, vector<32x128xf32>, vector<1x128xf32> -> vector<1x128xf32>
    %690 = arith.addf %688, %689 : vector<1x128xf32>
    %691 = arith.addf %690, %550 : vector<1x128xf32>
    %692 = arith.negf %691 : vector<1x128xf32>
    %693 = math.exp %692 : vector<1x128xf32>
    %cst_213 = arith.constant 1.000000e+00 : f32
    %694 = vector.broadcast %cst_213 : f32 to vector<1x128xf32>
    %695 = arith.addf %694, %693 : vector<1x128xf32>
    %696 = arith.divf %694, %695 : vector<1x128xf32>
    %697 = math.tanh %691 : vector<1x128xf32>
    %698 = vector.extract_strided_slice %696 {offsets = [0, 32], sizes = [1, 32], strides = [1, 1]} : vector<1x128xf32> to vector<1x32xf32>
    %699 = arith.mulf %698, %647 : vector<1x32xf32>
    %700 = vector.extract_strided_slice %696 {offsets = [0, 0], sizes = [1, 32], strides = [1, 1]} : vector<1x128xf32> to vector<1x32xf32>
    %701 = vector.extract_strided_slice %697 {offsets = [0, 64], sizes = [1, 32], strides = [1, 1]} : vector<1x128xf32> to vector<1x32xf32>
    %702 = arith.mulf %700, %701 : vector<1x32xf32>
    %703 = arith.addf %699, %702 : vector<1x32xf32>
    %704 = vector.extract_strided_slice %696 {offsets = [0, 96], sizes = [1, 32], strides = [1, 1]} : vector<1x128xf32> to vector<1x32xf32>
    %705 = math.tanh %703 : vector<1x32xf32>
    %706 = arith.mulf %704, %705 : vector<1x32xf32>
    %cst_214 = arith.constant dense<0.000000e+00> : vector<1x128xf32>
    %707 = tpu.matmul %706, %551, %cst_214 {dimension_numbers = #tpu.dot_dimension_numbers<[1], [0], [0], [1], [0, 0, 1, 1], [], []>} : vector<1x32xf32>, vector<32x128xf32>, vector<1x128xf32> -> vector<1x128xf32>
    %708 = arith.addf %707, %552 : vector<1x128xf32>
    %cst_215 = arith.constant 0.000000e+00 : f32
    %709 = vector.broadcast %cst_215 : f32 to vector<1x128xf32>
    %710 = arith.maximumf %708, %709 : vector<1x128xf32>
    %711 = arith.index_cast %c2_i32_208 : i32 to index
    %c0_216 = arith.constant 0 : index
    %712 = vector.load %arg3[%711, %c0_216] : memref<8x128xf32, #tpu.memory_space<vmem>>, vector<1x128xf32>
    tpu.vector_store %arg3[%711, %c0_216], %710 {strides = array<i32>} : memref<8x128xf32, #tpu.memory_space<vmem>>, vector<1x128xf32>,
    %713 = tpu.bitcast %710 : vector<1x128xf32> -> vector<1x128xi32>
    %c127_i32_217 = arith.constant 127 : i32
    %714 = vector.broadcast %c127_i32_217 : i32 to vector<1x128xi32>
    %715 = arith.ori %713, %714 : vector<1x128xi32>
    %716 = arith.subi %715, %544 : vector<1x128xi32>
    %cst_218 = arith.constant dense<-2147483648> : vector<1xi32>
    %717 = vector.multi_reduction <maxsi>, %716, %cst_218 [1] : vector<1x128xi32> to vector<1xi32>
    %718 = vector.shape_cast %717 : vector<1xi32> to vector<1x1xi32>
    %c127_i32_219 = arith.constant 127 : i32
    %719 = vector.broadcast %c127_i32_219 : i32 to vector<1x1xi32>
    %720 = arith.andi %718, %719 : vector<1x1xi32>
    %c127_i32_220 = arith.constant 127 : i32
    %721 = vector.broadcast %c127_i32_220 : i32 to vector<1x1xi32>
    %722 = arith.subi %721, %720 : vector<1x1xi32>
    %723 = arith.sitofp %722 : vector<1x1xi32> to vector<1x1xf32>
    %c3_i32_221 = arith.constant 3 : i32
    %724 = vector.broadcast %723 : vector<1x1xf32> to vector<1x128xf32>
    %725 = arith.mulf %724, %545 : vector<1x128xf32>
    %cst_222 = arith.constant dense<0.000000e+00> : vector<1x128xf32>
    %726 = tpu.matmul %687, %546, %cst_222 {dimension_numbers = #tpu.dot_dimension_numbers<[1], [0], [0], [1], [0, 0, 1, 1], [], []>} : vector<1x32xf32>, vector<32x128xf32>, vector<1x128xf32> -> vector<1x128xf32>
    %727 = arith.addf %725, %726 : vector<1x128xf32>
    %728 = arith.addf %727, %547 : vector<1x128xf32>
    %729 = arith.negf %728 : vector<1x128xf32>
    %730 = math.exp %729 : vector<1x128xf32>
    %cst_223 = arith.constant 1.000000e+00 : f32
    %731 = vector.broadcast %cst_223 : f32 to vector<1x128xf32>
    %732 = arith.addf %731, %730 : vector<1x128xf32>
    %733 = arith.divf %731, %732 : vector<1x128xf32>
    %734 = math.tanh %728 : vector<1x128xf32>
    %735 = vector.extract_strided_slice %733 {offsets = [0, 32], sizes = [1, 32], strides = [1, 1]} : vector<1x128xf32> to vector<1x32xf32>
    %736 = arith.mulf %735, %684 : vector<1x32xf32>
    %737 = vector.extract_strided_slice %733 {offsets = [0, 0], sizes = [1, 32], strides = [1, 1]} : vector<1x128xf32> to vector<1x32xf32>
    %738 = vector.extract_strided_slice %734 {offsets = [0, 64], sizes = [1, 32], strides = [1, 1]} : vector<1x128xf32> to vector<1x32xf32>
    %739 = arith.mulf %737, %738 : vector<1x32xf32>
    %740 = arith.addf %736, %739 : vector<1x32xf32>
    %741 = vector.extract_strided_slice %733 {offsets = [0, 96], sizes = [1, 32], strides = [1, 1]} : vector<1x128xf32> to vector<1x32xf32>
    %742 = math.tanh %740 : vector<1x32xf32>
    %743 = arith.mulf %741, %742 : vector<1x32xf32>
    %cst_224 = arith.constant dense<0.000000e+00> : vector<1x128xf32>
    %744 = tpu.matmul %743, %548, %cst_224 {dimension_numbers = #tpu.dot_dimension_numbers<[1], [0], [0], [1], [0, 0, 1, 1], [], []>} : vector<1x32xf32>, vector<32x128xf32>, vector<1x128xf32> -> vector<1x128xf32>
    %cst_225 = arith.constant dense<0.000000e+00> : vector<1x128xf32>
    %745 = tpu.matmul %706, %549, %cst_225 {dimension_numbers = #tpu.dot_dimension_numbers<[1], [0], [0], [1], [0, 0, 1, 1], [], []>} : vector<1x32xf32>, vector<32x128xf32>, vector<1x128xf32> -> vector<1x128xf32>
    %746 = arith.addf %744, %745 : vector<1x128xf32>
    %747 = arith.addf %746, %550 : vector<1x128xf32>
    %748 = arith.negf %747 : vector<1x128xf32>
    %749 = math.exp %748 : vector<1x128xf32>
    %cst_226 = arith.constant 1.000000e+00 : f32
    %750 = vector.broadcast %cst_226 : f32 to vector<1x128xf32>
    %751 = arith.addf %750, %749 : vector<1x128xf32>
    %752 = arith.divf %750, %751 : vector<1x128xf32>
    %753 = math.tanh %747 : vector<1x128xf32>
    %754 = vector.extract_strided_slice %752 {offsets = [0, 32], sizes = [1, 32], strides = [1, 1]} : vector<1x128xf32> to vector<1x32xf32>
    %755 = arith.mulf %754, %703 : vector<1x32xf32>
    %756 = vector.extract_strided_slice %752 {offsets = [0, 0], sizes = [1, 32], strides = [1, 1]} : vector<1x128xf32> to vector<1x32xf32>
    %757 = vector.extract_strided_slice %753 {offsets = [0, 64], sizes = [1, 32], strides = [1, 1]} : vector<1x128xf32> to vector<1x32xf32>
    %758 = arith.mulf %756, %757 : vector<1x32xf32>
    %759 = arith.addf %755, %758 : vector<1x32xf32>
    %760 = vector.extract_strided_slice %752 {offsets = [0, 96], sizes = [1, 32], strides = [1, 1]} : vector<1x128xf32> to vector<1x32xf32>
    %761 = math.tanh %759 : vector<1x32xf32>
    %762 = arith.mulf %760, %761 : vector<1x32xf32>
    %cst_227 = arith.constant dense<0.000000e+00> : vector<1x128xf32>
    %763 = tpu.matmul %762, %551, %cst_227 {dimension_numbers = #tpu.dot_dimension_numbers<[1], [0], [0], [1], [0, 0, 1, 1], [], []>} : vector<1x32xf32>, vector<32x128xf32>, vector<1x128xf32> -> vector<1x128xf32>
    %764 = arith.addf %763, %552 : vector<1x128xf32>
    %cst_228 = arith.constant 0.000000e+00 : f32
    %765 = vector.broadcast %cst_228 : f32 to vector<1x128xf32>
    %766 = arith.maximumf %764, %765 : vector<1x128xf32>
    %767 = arith.index_cast %c3_i32_221 : i32 to index
    %c0_229 = arith.constant 0 : index
    %768 = vector.load %arg3[%767, %c0_229] : memref<8x128xf32, #tpu.memory_space<vmem>>, vector<1x128xf32>
    tpu.vector_store %arg3[%767, %c0_229], %766 {strides = array<i32>} : memref<8x128xf32, #tpu.memory_space<vmem>>, vector<1x128xf32>,
    %769 = tpu.bitcast %766 : vector<1x128xf32> -> vector<1x128xi32>
    %c127_i32_230 = arith.constant 127 : i32
    %770 = vector.broadcast %c127_i32_230 : i32 to vector<1x128xi32>
    %771 = arith.ori %769, %770 : vector<1x128xi32>
    %772 = arith.subi %771, %544 : vector<1x128xi32>
    %cst_231 = arith.constant dense<-2147483648> : vector<1xi32>
    %773 = vector.multi_reduction <maxsi>, %772, %cst_231 [1] : vector<1x128xi32> to vector<1xi32>
    %774 = vector.shape_cast %773 : vector<1xi32> to vector<1x1xi32>
    %c127_i32_232 = arith.constant 127 : i32
    %775 = vector.broadcast %c127_i32_232 : i32 to vector<1x1xi32>
    %776 = arith.andi %774, %775 : vector<1x1xi32>
    %c127_i32_233 = arith.constant 127 : i32
    %777 = vector.broadcast %c127_i32_233 : i32 to vector<1x1xi32>
    %778 = arith.subi %777, %776 : vector<1x1xi32>
    %779 = arith.sitofp %778 : vector<1x1xi32> to vector<1x1xf32>
    %c4_i32_234 = arith.constant 4 : i32
    %c32_i32 = arith.constant 32 : i32
    %780 = vector.broadcast %c32_i32 : i32 to vector<1x128xi32>
    %781 = arith.cmpi slt, %544, %780 : vector<1x128xi32>
    %c0_235 = arith.constant 0 : index
    %c0_236 = arith.constant 0 : index
    %782 = vector.load %arg3[%c0_235, %c0_236] : memref<8x128xf32, #tpu.memory_space<vmem>>, vector<8x128xf32>
    %cst_237 = arith.constant 0xFF800000 : f32
    %783 = vector.shape_cast %781 : vector<1x128xi1> to vector<1x128xi1>
    %784 = vector.broadcast %783 : vector<1x128xi1> to vector<8x128xi1>
    %785 = vector.broadcast %cst_237 : f32 to vector<8x128xf32>
    %786 = arith.select %784, %782, %785 : vector<8x128xi1>, vector<8x128xf32>
    %cst_238 = arith.constant dense<0xFF800000> : vector<8xf32>
    %787 = vector.multi_reduction <maximumf>, %786, %cst_238 [1] : vector<8x128xf32> to vector<8xf32>
    %788 = vector.shape_cast %787 : vector<8xf32> to vector<8x1xf32>
    %789 = vector.broadcast %788 : vector<8x1xf32> to vector<8x128xf32>
    %790 = arith.subf %786, %789 : vector<8x128xf32>
    %791 = math.exp %790 : vector<8x128xf32>
    %cst_239 = arith.constant dense<0.000000e+00> : vector<8xf32>
    %792 = vector.multi_reduction <add>, %791, %cst_239 [1] : vector<8x128xf32> to vector<8xf32>
    %793 = vector.shape_cast %792 : vector<8xf32> to vector<8x1xf32>
    %794 = math.log %793 : vector<8x1xf32>
    %795 = vector.broadcast %794 : vector<8x1xf32> to vector<8x128xf32>
    %796 = arith.subf %790, %795 : vector<8x128xf32>
    %c0_240 = arith.constant 0 : index
    %c0_241 = arith.constant 0 : index
    %797 = vector.load %arg3[%c0_240, %c0_241] : memref<8x128xf32, #tpu.memory_space<vmem>>, vector<8x128xf32>
    tpu.vector_store %arg3[%c0_240, %c0_241], %796 {strides = array<i32>} : memref<8x128xf32, #tpu.memory_space<vmem>>, vector<8x128xf32>,
    return
  }
}

</mosaic_0001>

<llo_original>
// kernel: denoising_ae_forward.1
$region0: #{denoising_ae_forward.1}
  #allocation0 [shape = 'u32[]', space=smem, size = 0x4, offset = 0x4, fixed_abs, tag = 'smem constant byte address 0x4 - core index']
  #allocation1 [shape = 'u32[144,128]{1,0:T(1,128)}', space=vmem, size = 0x12000, scoped, tag = 'internal scratch']
  #allocation2 [shape = 'f32[8,128]{1,0:T(8,128)}', space=vmem, size = 0x1000, scoped, tag = 'scratch operand']
  #allocation3 [shape = 'f32[8,32]{1,0:T(8,128)}', space=vmem, size = 0x1000, scoped, tag = 'scratch operand']
  #allocation4 [shape = 'f32[8,32]{1,0:T(8,128)}', space=vmem, size = 0x1000, scoped, tag = 'scratch operand']
  #allocation5 [shape = 'f32[8,128]{1,0:T(8,128)}', space=vmem, size = 0x1000, scoped, tag = 'scratch operand']
  #allocation6 [shape = 'f32[8,128]{1,0:T(8,128)}', space=vmem, size = 0x1000, scoped, tag = 'scratch operand']
  #allocation7 [shape = 's32[1]{0:T(128)S(6)}', space=smem, size = 0x200, scoped, tag = 'scoped memory for denoising_ae_forward.1']
  %s0 = inlined_call_operand.vmem [shape: s32[8,1], index: 0, kind: input, shape index: {}]
  %s1 = inlined_call_operand.<no memory space> [shape: s32[1], index: 1, kind: input, shape index: {}]
  %s2 = inlined_call_operand.hbm [shape: f32[928,128], index: 2, kind: input, shape index: {}]
  %s3 = inlined_call_operand.hbm [shape: f32[8,128], index: 3, kind: output, shape index: {}]
  %s4 = sld [smem:[#allocation0]]
  $region26: #{denoising_ae_forward.1} parent=0
    _
  %s6 = ssub.s32 1, %s4
  %s7 = scalar_select 0, %s6, %s4
  %8 = sst [smem:[#allocation7]] %s1
  $region1: #{denoising_ae_forward.1} parent=0
    #allocation8 [shape = 'u8[475136]{0}', space=vmem, size = 0x74000, scoped, tag = 'input window, operand 2, single buffered']
    #allocation9 [shape = 's32[1]{0}', space=sflag, size = 0x4, scoped, tag = 'scoped memory for denoising_ae_forward.1']
    #allocation10 [shape = 's32[1]{0}', space=sflag, size = 0x4, scoped, tag = 'scoped memory for denoising_ae_forward.1']
    #allocation11 [shape = 'u8[4096]{0}', space=vmem, size = 0x1000, scoped, tag = 'output window, operand 0, single buffered']
    %9 = vsyncpa [#allocation9], 0
    %10 = vsyncpa [#allocation10], 0
    // Predicated region
    $region2: #{denoising_ae_forward.1} parent=1 // pred_check
      _
    $region3: #{denoising_ae_forward.1} parent=1 // pred_check_branch
      %12 = sbr.rel (0) target = $region5
    $region4: #{denoising_ae_forward.1} parent=1 // pred_region
      _
    $region5: #{denoising_ae_forward.1} parent=1 // pred_fallthru
      _
    // Predicated region
    $region6: #{denoising_ae_forward.1} parent=1 // pred_check
      _
    $region7: #{denoising_ae_forward.1} parent=1 // pred_check_branch
      %14 = sbr.rel (0) target = $region9
    $region8: #{denoising_ae_forward.1} parent=1 // pred_region
      _
    $region9: #{denoising_ae_forward.1} parent=1 // pred_fallthru
      _
    // Predicated region
    $region10: #{denoising_ae_forward.1} parent=1 // pred_check
      _
    $region11: #{denoising_ae_forward.1} parent=1 // pred_check_branch
      %16 = sbr.rel (0) target = $region13
    $region12: #{denoising_ae_forward.1} parent=1 // pred_region
      %s18 = ssub.s32 14848, 14848
      %19 = vsyncadd [#allocation9], %s18
      %s20 = sshll.u32 [#allocation8], 4
      %s21 = int_to_ptr.vmem [resolvable:$true] %s20
      %26 = dma.hbm_to_vmem [thread:$0]  %s2, 14848, %s21, [#allocation9], 128, 128, 8
    $region13: #{denoising_ae_forward.1} parent=1 // pred_fallthru
      _
    // Predicated region
    $region14: #{denoising_ae_forward.1} parent=1 // pred_check
      _
    $region15: #{denoising_ae_forward.1} parent=1 // pred_check_branch
      %28 = sbr.rel (0) target = $region17
    $region16: #{denoising_ae_forward.1} parent=1 // pred_region
      %29 = dma.done [#allocation9], 14848
    $region17: #{denoising_ae_forward.1} parent=1 // pred_fallthru
      _
    %v30 = vlaneseq
    %v31 = vand.u32 %v30, 127
    %v32 = vld [vmem:[%s0] sm:$0xff]
    %33 = vset.pattern.permute.xlu0 0
    %34 = vperm.xlu0 %33, %v32
    %v35 = vpop.permute.xlu0 %34
    %vm36 = vcmp.eq.s32.totalorder %v35, %v31
    %v37 = vsel %vm36, 1, 0
    %v38 = vcvt.s32.f32 %v37
    %v39 = vld [vmem:[#allocation8 + $0x2a0] sm:$0xff]
    %v40 = vld [vmem:[#allocation8 + $0x2a8] sm:$0xff]
    %v41 = vld [vmem:[#allocation8 + $0x2b0] sm:$0xff]
    %v42 = vld [vmem:[#allocation8 + $0x2b8] sm:$0xff]
    %vm43 = vcmask 261120
    %v45 = vsel %vm43, %v38, 0
    %47 = vmatprep.subr.mxu0 0.0
    %48 = vmatpush1.msra.mxu0 %v39
    %49 = vmatprep.subr.mxu0 0.0
    %50 = vmatpush1.msra.mxu0 %v40
    %51 = vmatprep.subr.mxu0 0.0
    %52 = vmatpush1.msra.mxu0 %v41
    %53 = vmatprep.subr.mxu0 0.0
    %54 = vmatpush1.msra.mxu0 %v42
    %55 = vmatprep.subr.mxu0 0.0
    %56 = vmatpush1.msra.mxu0 0.0
    %57 = vmatprep.subr.mxu0 0.0
    %58 = vmatpush1.msra.mxu0 0.0
    %59 = vmatprep.subr.mxu0 0.0
    %60 = vmatpush1.msra.mxu0 0.0
    %61 = vmatprep.subr.mxu0 0.0
    %62 = vmatpush1.msra.mxu0 0.0
    %63 = vmatprep.subr.mxu0 0.0
    %64 = vmatpush1.msra.mxu0 0.0
    %65 = vmatprep.subr.mxu0 0.0
    %66 = vmatpush1.msra.mxu0 0.0
    %67 = vmatprep.subr.mxu0 0.0
    %68 = vmatpush1.msra.mxu0 0.0
    %69 = vmatprep.subr.mxu0 0.0
    %70 = vmatpush1.msra.mxu0 0.0
    %71 = vmatprep.subr.mxu0 0.0
    %72 = vmatpush1.msra.mxu0 0.0
    %73 = vmatprep.subr.mxu0 0.0
    %74 = vmatpush1.msra.mxu0 0.0
    %75 = vmatprep.subr.mxu0 0.0
    %76 = vmatpush1.msra.mxu0 0.0
    %77 = vmatprep.subr.mxu0 0.0
    %78 = vmatpush1.msra.mxu0 0.0
    %79 = vmatprep.subr.mxu0 0.0
    %80 = vmatpush1.msra.mxu0 0.0
    %81 = vmatprep.subr.mxu0 0.0
    %82 = vmatpush1.msra.mxu0 0.0
    %83 = vmatprep.subr.mxu0 0.0
    %84 = vmatpush1.msra.mxu0 0.0
    %85 = vmatprep.subr.mxu0 0.0
    %86 = vmatpush1.msra.mxu0 0.0
    %87 = vmatprep.subr.mxu0 0.0
    %88 = vmatpush1.msra.mxu0 0.0
    %89 = vmatprep.subr.mxu0 0.0
    %90 = vmatpush1.msra.mxu0 0.0
    %91 = vmatprep.subr.mxu0 0.0
    %92 = vmatpush1.msra.mxu0 0.0
    %93 = vmatprep.subr.mxu0 0.0
    %94 = vmatpush1.msra.mxu0 0.0
    %95 = vmatprep.subr.mxu0 0.0
    %96 = vmatpush1.msra.mxu0 0.0
    %97 = vmatprep.subr.mxu0 0.0
    %98 = vmatpush1.msra.mxu0 0.0
    %99 = vmatprep.subr.mxu0 0.0
    %100 = vmatpush1.msra.mxu0 0.0
    %101 = vmatprep.subr.mxu0 0.0
    %102 = vmatpush1.msra.mxu0 0.0
    %103 = vmatprep.subr.mxu0 0.0
    %104 = vmatpush1.msra.mxu0 0.0
    %105 = vmatprep.subr.mxu0 0.0
    %106 = vmatpush1.msra.mxu0 0.0
    %107 = vmatprep.subr.mxu0 0.0
    %108 = vmatpush1.msra.mxu0 0.0
    %109 = vmatprep.subr.mxu0 0.0
    %110 = vmatpush1.msra.mxu0 0.0
    %111 = vmatprep.mubr.f32.mxu0 0.0
    %112 = vmatmul.mubr.f32.gmra.mrb[0].mxu0 %v45
    %v113 = vpop.f32.mrb[0].mxu0
    %v114 = vadd.f32 0.0, %v113
    %v115 = vpop.f32.mrb[0].mxu0
    %116 = vdwg.mxu0
    %117 = vst [vmem:[#allocation2] sm:$0xff] %v114
    %v118 = vld [vmem:[#allocation8 + $0x200] sm:$0xff]
    %v119 = vld [vmem:[#allocation8 + $0x208] sm:$0xff]
    %v120 = vld [vmem:[#allocation8 + $0x210] sm:$0xff]
    %v121 = vld [vmem:[#allocation8 + $0x218] sm:$0xff]
    %v122 = vld [vmem:[#allocation8 + $0x220] sm:$0xff]
    %v123 = vld [vmem:[#allocation8 + $0x228] sm:$0xff]
    %v124 = vld [vmem:[#allocation8 + $0x230] sm:$0xff]
    %v125 = vld [vmem:[#allocation8 + $0x238] sm:$0xff]
    %v126 = vld [vmem:[#allocation8 + $0x280] sm:$0x1]
    %v127 = vld [vmem:[#allocation8 + $0x288] sm:$0x1]
    %v128 = vld [vmem:[#allocation2] sm:$0xff]
    %v129 = vld [vmem:[#allocation8] sm:$0xff]
    %v130 = vld [vmem:[#allocation8 + $0x8] sm:$0xff]
    %v131 = vld [vmem:[#allocation8 + $0x10] sm:$0xff]
    %v132 = vld [vmem:[#allocation8 + $0x18] sm:$0xff]
    %v133 = vld [vmem:[#allocation8 + $0x20] sm:$0xff]
    %v134 = vld [vmem:[#allocation8 + $0x28] sm:$0xff]
    %v135 = vld [vmem:[#allocation8 + $0x30] sm:$0xff]
    %v136 = vld [vmem:[#allocation8 + $0x38] sm:$0xff]
    %v137 = vld [vmem:[#allocation8 + $0x40] sm:$0xff]
    %v138 = vld [vmem:[#allocation8 + $0x48] sm:$0xff]
    %v139 = vld [vmem:[#allocation8 + $0x50] sm:$0xff]
    %v140 = vld [vmem:[#allocation8 + $0x58] sm:$0xff]
    %v141 = vld [vmem:[#allocation8 + $0x60] sm:$0xff]
    %v142 = vld [vmem:[#allocation8 + $0x68] sm:$0xff]
    %v143 = vld [vmem:[#allocation8 + $0x70] sm:$0xff]
    %v144 = vld [vmem:[#allocation8 + $0x78] sm:$0xff]
    %v145 = vlaneseq
    %v146 = vshrl.u32 %v145, 7
    %v147 = vsub.s32 0, %v146
    %v148 = vrot.slane %v126, %v147
    %149 = vmatprep.subr.mxu0 0.0
    %150 = vmatpush1.msra.mxu0 %v129
    %151 = vmatprep.subr.mxu0 0.0
    %152 = vmatpush1.msra.mxu0 %v130
    %153 = vmatprep.subr.mxu0 0.0
    %154 = vmatpush1.msra.mxu0 %v131
    %155 = vmatprep.subr.mxu0 0.0
    %156 = vmatpush1.msra.mxu0 %v132
    %157 = vmatprep.subr.mxu0 0.0
    %158 = vmatpush1.msra.mxu0 %v133
    %159 = vmatprep.subr.mxu0 0.0
    %160 = vmatpush1.msra.mxu0 %v134
    %161 = vmatprep.subr.mxu0 0.0
    %162 = vmatpush1.msra.mxu0 %v135
    %163 = vmatprep.subr.mxu0 0.0
    %164 = vmatpush1.msra.mxu0 %v136
    %165 = vmatprep.subr.mxu0 0.0
    %166 = vmatpush1.msra.mxu0 %v137
    %167 = vmatprep.subr.mxu0 0.0
    %168 = vmatpush1.msra.mxu0 %v138
    %169 = vmatprep.subr.mxu0 0.0
    %170 = vmatpush1.msra.mxu0 %v139
    %171 = vmatprep.subr.mxu0 0.0
    %172 = vmatpush1.msra.mxu0 %v140
    %173 = vmatprep.subr.mxu0 0.0
    %174 = vmatpush1.msra.mxu0 %v141
    %175 = vmatprep.subr.mxu0 0.0
    %176 = vmatpush1.msra.mxu0 %v142
    %177 = vmatprep.subr.mxu0 0.0
    %178 = vmatpush1.msra.mxu0 %v143
    %179 = vmatprep.subr.mxu0 0.0
    %180 = vmatpush1.msra.mxu0 %v144
    %181 = vmatprep.subr.mxu0 0.0
    %182 = vmatpush1.msra.mxu0 0.0
    %183 = vmatprep.subr.mxu0 0.0
    %184 = vmatpush1.msra.mxu0 0.0
    %185 = vmatprep.subr.mxu0 0.0
    %186 = vmatpush1.msra.mxu0 0.0
    %187 = vmatprep.subr.mxu0 0.0
    %188 = vmatpush1.msra.mxu0 0.0
    %189 = vmatprep.subr.mxu0 0.0
    %190 = vmatpush1.msra.mxu0 0.0
    %191 = vmatprep.subr.mxu0 0.0
    %192 = vmatpush1.msra.mxu0 0.0
    %193 = vmatprep.subr.mxu0 0.0
    %194 = vmatpush1.msra.mxu0 0.0
    %195 = vmatprep.subr.mxu0 0.0
    %196 = vmatpush1.msra.mxu0 0.0
    %197 = vmatprep.subr.mxu0 0.0
    %198 = vmatpush1.msra.mxu0 0.0
    %199 = vmatprep.subr.mxu0 0.0
    %200 = vmatpush1.msra.mxu0 0.0
    %201 = vmatprep.subr.mxu0 0.0
    %202 = vmatpush1.msra.mxu0 0.0
    %203 = vmatprep.subr.mxu0 0.0
    %204 = vmatpush1.msra.mxu0 0.0
    %205 = vmatprep.subr.mxu0 0.0
    %206 = vmatpush1.msra.mxu0 0.0
    %207 = vmatprep.subr.mxu0 0.0
    %208 = vmatpush1.msra.mxu0 0.0
    %209 = vmatprep.subr.mxu0 0.0
    %210 = vmatpush1.msra.mxu0 0.0
    %211 = vmatprep.subr.mxu0 0.0
    %212 = vmatpush1.msra.mxu0 0.0
    %213 = vmatprep.mubr.f32.mxu0 0.0
    %214 = vmatmul.mubr.f32.gmra.mrb[0].mxu0 %v128
    %v215 = vpop.f32.mrb[0].mxu0
    %v216 = vadd.f32 %v148, %v215
    %v217 = vpop.f32.mrb[0].mxu0
    %218 = vdwg.mxu0
    %219 = vst [vmem:[#allocation5] sm:$0xff] %v216
    %v220 = vld [vmem:[#allocation8 + $0x80] sm:$0xff]
    %v221 = vld [vmem:[#allocation8 + $0x88] sm:$0xff]
    %v222 = vld [vmem:[#allocation8 + $0x90] sm:$0xff]
    %v223 = vld [vmem:[#allocation8 + $0x98] sm:$0xff]
    %v224 = vld [vmem:[#allocation8 + $0xa0] sm:$0xff]
    %v225 = vld [vmem:[#allocation8 + $0xa8] sm:$0xff]
    %v226 = vld [vmem:[#allocation8 + $0xb0] sm:$0xff]
    %v227 = vld [vmem:[#allocation8 + $0xb8] sm:$0xff]
    %v228 = vld [vmem:[#allocation8 + $0xc0] sm:$0xff]
    %v229 = vld [vmem:[#allocation8 + $0xc8] sm:$0xff]
    %v230 = vld [vmem:[#allocation8 + $0xd0] sm:$0xff]
    %v231 = vld [vmem:[#allocation8 + $0xd8] sm:$0xff]
    %v232 = vld [vmem:[#allocation8 + $0xe0] sm:$0xff]
    %v233 = vld [vmem:[#allocation8 + $0xe8] sm:$0xff]
    %v234 = vld [vmem:[#allocation8 + $0xf0] sm:$0xff]
    %v235 = vld [vmem:[#allocation8 + $0xf8] sm:$0xff]
    %v236 = vlaneseq
    %v237 = vshrl.u32 %v236, 7
    %v238 = vsub.s32 0, %v237
    %v239 = vrot.slane %v127, %v238
    %240 = vmatprep.subr.mxu0 0.0
    %241 = vmatpush1.msra.mxu0 %v220
    %242 = vmatprep.subr.mxu0 0.0
    %243 = vmatpush1.msra.mxu0 %v221
    %244 = vmatprep.subr.mxu0 0.0
    %245 = vmatpush1.msra.mxu0 %v222
    %246 = vmatprep.subr.mxu0 0.0
    %247 = vmatpush1.msra.mxu0 %v223
    %248 = vmatprep.subr.mxu0 0.0
    %249 = vmatpush1.msra.mxu0 %v224
    %250 = vmatprep.subr.mxu0 0.0
    %251 = vmatpush1.msra.mxu0 %v225
    %252 = vmatprep.subr.mxu0 0.0
    %253 = vmatpush1.msra.mxu0 %v226
    %254 = vmatprep.subr.mxu0 0.0
    %255 = vmatpush1.msra.mxu0 %v227
    %256 = vmatprep.subr.mxu0 0.0
    %257 = vmatpush1.msra.mxu0 %v228
    %258 = vmatprep.subr.mxu0 0.0
    %259 = vmatpush1.msra.mxu0 %v229
    %260 = vmatprep.subr.mxu0 0.0
    %261 = vmatpush1.msra.mxu0 %v230
    %262 = vmatprep.subr.mxu0 0.0
    %263 = vmatpush1.msra.mxu0 %v231
    %264 = vmatprep.subr.mxu0 0.0
    %265 = vmatpush1.msra.mxu0 %v232
    %266 = vmatprep.subr.mxu0 0.0
    %267 = vmatpush1.msra.mxu0 %v233
    %268 = vmatprep.subr.mxu0 0.0
    %269 = vmatpush1.msra.mxu0 %v234
    %270 = vmatprep.subr.mxu0 0.0
    %271 = vmatpush1.msra.mxu0 %v235
    %272 = vmatprep.subr.mxu0 0.0
    %273 = vmatpush1.msra.mxu0 0.0
    %274 = vmatprep.subr.mxu0 0.0
    %275 = vmatpush1.msra.mxu0 0.0
    %276 = vmatprep.subr.mxu0 0.0
    %277 = vmatpush1.msra.mxu0 0.0
    %278 = vmatprep.subr.mxu0 0.0
    %279 = vmatpush1.msra.mxu0 0.0
    %280 = vmatprep.subr.mxu0 0.0
    %281 = vmatpush1.msra.mxu0 0.0
    %282 = vmatprep.subr.mxu0 0.0
    %283 = vmatpush1.msra.mxu0 0.0
    %284 = vmatprep.subr.mxu0 0.0
    %285 = vmatpush1.msra.mxu0 0.0
    %286 = vmatprep.subr.mxu0 0.0
    %287 = vmatpush1.msra.mxu0 0.0
    %288 = vmatprep.subr.mxu0 0.0
    %289 = vmatpush1.msra.mxu0 0.0
    %290 = vmatprep.subr.mxu0 0.0
    %291 = vmatpush1.msra.mxu0 0.0
    %292 = vmatprep.subr.mxu0 0.0
    %293 = vmatpush1.msra.mxu0 0.0
    %294 = vmatprep.subr.mxu0 0.0
    %295 = vmatpush1.msra.mxu0 0.0
    %296 = vmatprep.subr.mxu0 0.0
    %297 = vmatpush1.msra.mxu0 0.0
    %298 = vmatprep.subr.mxu0 0.0
    %299 = vmatpush1.msra.mxu0 0.0
    %300 = vmatprep.subr.mxu0 0.0
    %301 = vmatpush1.msra.mxu0 0.0
    %302 = vmatprep.subr.mxu0 0.0
    %303 = vmatpush1.msra.mxu0 0.0
    %304 = vmatprep.mubr.f32.mxu0 0.0
    %305 = vmatmul.mubr.f32.gmra.mrb[0].mxu0 %v128
    %v306 = vpop.f32.mrb[0].mxu0
    %v307 = vadd.f32 %v239, %v306
    %v308 = vpop.f32.mrb[0].mxu0
    %309 = vdwg.mxu0
    %310 = vst [vmem:[#allocation6] sm:$0xff] %v307
    %v312 = vsel %vm43, 0.0, 0
    %314 = vmatprep.subr.mxu0 0.0
    %315 = vmatpush1.msra.mxu0 %v118
    %316 = vmatprep.subr.mxu0 0.0
    %317 = vmatpush1.msra.mxu0 %v119
    %318 = vmatprep.subr.mxu0 0.0
    %319 = vmatpush1.msra.mxu0 %v120
    %320 = vmatprep.subr.mxu0 0.0
    %321 = vmatpush1.msra.mxu0 %v121
    %322 = vmatprep.subr.mxu0 0.0
    %323 = vmatpush1.msra.mxu0 0.0
    %324 = vmatprep.subr.mxu0 0.0
    %325 = vmatpush1.msra.mxu0 0.0
    %326 = vmatprep.subr.mxu0 0.0
    %327 = vmatpush1.msra.mxu0 0.0
    %328 = vmatprep.subr.mxu0 0.0
    %329 = vmatpush1.msra.mxu0 0.0
    %330 = vmatprep.subr.mxu0 0.0
    %331 = vmatpush1.msra.mxu0 0.0
    %332 = vmatprep.subr.mxu0 0.0
    %333 = vmatpush1.msra.mxu0 0.0
    %334 = vmatprep.subr.mxu0 0.0
    %335 = vmatpush1.msra.mxu0 0.0
    %336 = vmatprep.subr.mxu0 0.0
    %337 = vmatpush1.msra.mxu0 0.0
    %338 = vmatprep.subr.mxu0 0.0
    %339 = vmatpush1.msra.mxu0 0.0
    %340 = vmatprep.subr.mxu0 0.0
    %341 = vmatpush1.msra.mxu0 0.0
    %342 = vmatprep.subr.mxu0 0.0
    %343 = vmatpush1.msra.mxu0 0.0
    %344 = vmatprep.subr.mxu0 0.0
    %345 = vmatpush1.msra.mxu0 0.0
    %346 = vmatprep.subr.mxu0 0.0
    %347 = vmatpush1.msra.mxu0 0.0
    %348 = vmatprep.subr.mxu0 0.0
    %349 = vmatpush1.msra.mxu0 0.0
    %350 = vmatprep.subr.mxu0 0.0
    %351 = vmatpush1.msra.mxu0 0.0
    %352 = vmatprep.subr.mxu0 0.0
    %353 = vmatpush1.msra.mxu0 0.0
    %354 = vmatprep.subr.mxu0 0.0
    %355 = vmatpush1.msra.mxu0 0.0
    %356 = vmatprep.subr.mxu0 0.0
    %357 = vmatpush1.msra.mxu0 0.0
    %358 = vmatprep.subr.mxu0 0.0
    %359 = vmatpush1.msra.mxu0 0.0
    %360 = vmatprep.subr.mxu0 0.0
    %361 = vmatpush1.msra.mxu0 0.0
    %362 = vmatprep.subr.mxu0 0.0
    %363 = vmatpush1.msra.mxu0 0.0
    %364 = vmatprep.subr.mxu0 0.0
    %365 = vmatpush1.msra.mxu0 0.0
    %366 = vmatprep.subr.mxu0 0.0
    %367 = vmatpush1.msra.mxu0 0.0
    %368 = vmatprep.subr.mxu0 0.0
    %369 = vmatpush1.msra.mxu0 0.0
    %370 = vmatprep.subr.mxu0 0.0
    %371 = vmatpush1.msra.mxu0 0.0
    %372 = vmatprep.subr.mxu0 0.0
    %373 = vmatpush1.msra.mxu0 0.0
    %374 = vmatprep.subr.mxu0 0.0
    %375 = vmatpush1.msra.mxu0 0.0
    %376 = vmatprep.subr.mxu0 0.0
    %377 = vmatpush1.msra.mxu0 0.0
    %378 = vmatprep.mubr.f32.mxu0 0.0
    %379 = vmatmul.mubr.f32.gmra.mrb[0].mxu0 %v312
    %v380 = vpop.f32.mrb[0].mxu0
    %v381 = vadd.f32 0.0, %v380
    %v382 = vpop.f32.mrb[0].mxu0
    %383 = vdwg.mxu0
    %384 = vmatprep.subr.mxu0 0.0
    %385 = vmatpush1.msra.mxu0 %v122
    %386 = vmatprep.subr.mxu0 0.0
    %387 = vmatpush1.msra.mxu0 %v123
    %388 = vmatprep.subr.mxu0 0.0
    %389 = vmatpush1.msra.mxu0 %v124
    %390 = vmatprep.subr.mxu0 0.0
    %391 = vmatpush1.msra.mxu0 %v125
    %392 = vmatprep.subr.mxu0 0.0
    %393 = vmatpush1.msra.mxu0 0.0
    %394 = vmatprep.subr.mxu0 0.0
    %395 = vmatpush1.msra.mxu0 0.0
    %396 = vmatprep.subr.mxu0 0.0
    %397 = vmatpush1.msra.mxu0 0.0
    %398 = vmatprep.subr.mxu0 0.0
    %399 = vmatpush1.msra.mxu0 0.0
    %400 = vmatprep.subr.mxu0 0.0
    %401 = vmatpush1.msra.mxu0 0.0
    %402 = vmatprep.subr.mxu0 0.0
    %403 = vmatpush1.msra.mxu0 0.0
    %404 = vmatprep.subr.mxu0 0.0
    %405 = vmatpush1.msra.mxu0 0.0
    %406 = vmatprep.subr.mxu0 0.0
    %407 = vmatpush1.msra.mxu0 0.0
    %408 = vmatprep.subr.mxu0 0.0
    %409 = vmatpush1.msra.mxu0 0.0
    %410 = vmatprep.subr.mxu0 0.0
    %411 = vmatpush1.msra.mxu0 0.0
    %412 = vmatprep.subr.mxu0 0.0
    %413 = vmatpush1.msra.mxu0 0.0
    %414 = vmatprep.subr.mxu0 0.0
    %415 = vmatpush1.msra.mxu0 0.0
    %416 = vmatprep.subr.mxu0 0.0
    %417 = vmatpush1.msra.mxu0 0.0
    %418 = vmatprep.subr.mxu0 0.0
    %419 = vmatpush1.msra.mxu0 0.0
    %420 = vmatprep.subr.mxu0 0.0
    %421 = vmatpush1.msra.mxu0 0.0
    %422 = vmatprep.subr.mxu0 0.0
    %423 = vmatpush1.msra.mxu0 0.0
    %424 = vmatprep.subr.mxu0 0.0
    %425 = vmatpush1.msra.mxu0 0.0
    %426 = vmatprep.subr.mxu0 0.0
    %427 = vmatpush1.msra.mxu0 0.0
    %428 = vmatprep.subr.mxu0 0.0
    %429 = vmatpush1.msra.mxu0 0.0
    %430 = vmatprep.subr.mxu0 0.0
    %431 = vmatpush1.msra.mxu0 0.0
    %432 = vmatprep.subr.mxu0 0.0
    %433 = vmatpush1.msra.mxu0 0.0
    %434 = vmatprep.subr.mxu0 0.0
    %435 = vmatpush1.msra.mxu0 0.0
    %436 = vmatprep.subr.mxu0 0.0
    %437 = vmatpush1.msra.mxu0 0.0
    %438 = vmatprep.subr.mxu0 0.0
    %439 = vmatpush1.msra.mxu0 0.0
    %440 = vmatprep.subr.mxu0 0.0
    %441 = vmatpush1.msra.mxu0 0.0
    %442 = vmatprep.subr.mxu0 0.0
    %443 = vmatpush1.msra.mxu0 0.0
    %444 = vmatprep.subr.mxu0 0.0
    %445 = vmatpush1.msra.mxu0 0.0
    %446 = vmatprep.subr.mxu0 0.0
    %447 = vmatpush1.msra.mxu0 0.0
    %448 = vmatprep.mubr.f32.mxu0 0.0
    %449 = vmatmul.mubr.f32.gmra.mrb[0].mxu0 %v312
    %v450 = vpop.f32.mrb[0].mxu0
    %v451 = vadd.f32 0.0, %v450
    %v452 = vpop.f32.mrb[0].mxu0
    %453 = vdwg.mxu0
    %v454 = vld [vmem:[#allocation5] sm:$0x1]
    %v455 = vadd.f32 %v454, %v381
    %v456 = vld [vmem:[#allocation6 + $0x7] sm:$0x1]
    %v457 = vadd.f32 %v456, %v451
    %v459 = vrot.slane %v457, 7
    %vm461 = vcmask 1040384
    %v462 = vsel %vm461, %v455, %v459
    %v463 = vxor.u32 %v462, 2147483648
    %v464 = vmul.f32 %v463, 1.442695
    %v465 = vpow.pop %v464
    %v466 = vadd.f32 %v465, 1.0
    %v467 = vrcp.pop %v466
    %v468 = vmul.f32 1.0, %v467
    %v469 = vtanh.pop %v462
    %v470 = vmul.f32 %v468, 0.0
    %472 = vrot.lane.b32.xlu0 %v469, 64
    %v473 = vpop.permute.xlu0 %472
    %v475 = vmul.f32 %v468, %v473
    %477 = vrot.lane.b32.xlu0 %v475, 32
    %v478 = vpop.permute.xlu0 %477
    %v480 = vadd.f32 %v470, %v478
    %v481 = vtanh.pop %v480
    %483 = vrot.lane.b32.xlu0 %v481, 64
    %v484 = vpop.permute.xlu0 %483
    %v486 = vmul.f32 %v468, %v484
    %488 = vrot.lane.b32.xlu0 %v486, 32
    %v489 = vpop.permute.xlu0 %488
    %vm491 = vcmask 253952
    %492 = vst.msk [vmem:[#allocation3] sm:$0x1] %vm491, %v489
    %vm493 = vcmask 254977
    %494 = vst.msk [vmem:[#allocation4 + $0x6] sm:$0x2] %vm493, %v489
    %v495 = vsel %vm43, %v489, 0
    %497 = vmatprep.subr.mxu0 0.0
    %498 = vmatpush1.msra.mxu0 %v118
    %499 = vmatprep.subr.mxu0 0.0
    %500 = vmatpush1.msra.mxu0 %v119
    %501 = vmatprep.subr.mxu0 0.0
    %502 = vmatpush1.msra.mxu0 %v120
    %503 = vmatprep.subr.mxu0 0.0
    %504 = vmatpush1.msra.mxu0 %v121
    %505 = vmatprep.subr.mxu0 0.0
    %506 = vmatpush1.msra.mxu0 0.0
    %507 = vmatprep.subr.mxu0 0.0
    %508 = vmatpush1.msra.mxu0 0.0
    %509 = vmatprep.subr.mxu0 0.0
    %510 = vmatpush1.msra.mxu0 0.0
    %511 = vmatprep.subr.mxu0 0.0
    %512 = vmatpush1.msra.mxu0 0.0
    %513 = vmatprep.subr.mxu0 0.0
    %514 = vmatpush1.msra.mxu0 0.0
    %515 = vmatprep.subr.mxu0 0.0
    %516 = vmatpush1.msra.mxu0 0.0
    %517 = vmatprep.subr.mxu0 0.0
    %518 = vmatpush1.msra.mxu0 0.0
    %519 = vmatprep.subr.mxu0 0.0
    %520 = vmatpush1.msra.mxu0 0.0
    %521 = vmatprep.subr.mxu0 0.0
    %522 = vmatpush1.msra.mxu0 0.0
    %523 = vmatprep.subr.mxu0 0.0
    %524 = vmatpush1.msra.mxu0 0.0
    %525 = vmatprep.subr.mxu0 0.0
    %526 = vmatpush1.msra.mxu0 0.0
    %527 = vmatprep.subr.mxu0 0.0
    %528 = vmatpush1.msra.mxu0 0.0
    %529 = vmatprep.subr.mxu0 0.0
    %530 = vmatpush1.msra.mxu0 0.0
    %531 = vmatprep.subr.mxu0 0.0
    %532 = vmatpush1.msra.mxu0 0.0
    %533 = vmatprep.subr.mxu0 0.0
    %534 = vmatpush1.msra.mxu0 0.0
    %535 = vmatprep.subr.mxu0 0.0
    %536 = vmatpush1.msra.mxu0 0.0
    %537 = vmatprep.subr.mxu0 0.0
    %538 = vmatpush1.msra.mxu0 0.0
    %539 = vmatprep.subr.mxu0 0.0
    %540 = vmatpush1.msra.mxu0 0.0
    %541 = vmatprep.subr.mxu0 0.0
    %542 = vmatpush1.msra.mxu0 0.0
    %543 = vmatprep.subr.mxu0 0.0
    %544 = vmatpush1.msra.mxu0 0.0
    %545 = vmatprep.subr.mxu0 0.0
    %546 = vmatpush1.msra.mxu0 0.0
    %547 = vmatprep.subr.mxu0 0.0
    %548 = vmatpush1.msra.mxu0 0.0
    %549 = vmatprep.subr.mxu0 0.0
    %550 = vmatpush1.msra.mxu0 0.0
    %551 = vmatprep.subr.mxu0 0.0
    %552 = vmatpush1.msra.mxu0 0.0
    %553 = vmatprep.subr.mxu0 0.0
    %554 = vmatpush1.msra.mxu0 0.0
    %555 = vmatprep.subr.mxu0 0.0
    %556 = vmatpush1.msra.mxu0 0.0
    %557 = vmatprep.subr.mxu0 0.0
    %558 = vmatpush1.msra.mxu0 0.0
    %559 = vmatprep.subr.mxu0 0.0
    %560 = vmatpush1.msra.mxu0 0.0
    %561 = vmatprep.mubr.f32.mxu0 0.0
    %562 = vmatmul.mubr.f32.gmra.mrb[0].mxu0 %v495
    %v563 = vpop.f32.mrb[0].mxu0
    %v564 = vadd.f32 0.0, %v563
    %v565 = vpop.f32.mrb[0].mxu0
    %566 = vdwg.mxu0
    %v567 = vrot.slane %v486, 1
    %568 = vrot.lane.b32.xlu0 %v567, 32
    %v569 = vpop.permute.xlu0 %568
    %v570 = vsel %vm43, %v569, 0
    %572 = vmatprep.subr.mxu0 0.0
    %573 = vmatpush1.msra.mxu0 %v122
    %574 = vmatprep.subr.mxu0 0.0
    %575 = vmatpush1.msra.mxu0 %v123
    %576 = vmatprep.subr.mxu0 0.0
    %577 = vmatpush1.msra.mxu0 %v124
    %578 = vmatprep.subr.mxu0 0.0
    %579 = vmatpush1.msra.mxu0 %v125
    %580 = vmatprep.subr.mxu0 0.0
    %581 = vmatpush1.msra.mxu0 0.0
    %582 = vmatprep.subr.mxu0 0.0
    %583 = vmatpush1.msra.mxu0 0.0
    %584 = vmatprep.subr.mxu0 0.0
    %585 = vmatpush1.msra.mxu0 0.0
    %586 = vmatprep.subr.mxu0 0.0
    %587 = vmatpush1.msra.mxu0 0.0
    %588 = vmatprep.subr.mxu0 0.0
    %589 = vmatpush1.msra.mxu0 0.0
    %590 = vmatprep.subr.mxu0 0.0
    %591 = vmatpush1.msra.mxu0 0.0
    %592 = vmatprep.subr.mxu0 0.0
    %593 = vmatpush1.msra.mxu0 0.0
    %594 = vmatprep.subr.mxu0 0.0
    %595 = vmatpush1.msra.mxu0 0.0
    %596 = vmatprep.subr.mxu0 0.0
    %597 = vmatpush1.msra.mxu0 0.0
    %598 = vmatprep.subr.mxu0 0.0
    %599 = vmatpush1.msra.mxu0 0.0
    %600 = vmatprep.subr.mxu0 0.0
    %601 = vmatpush1.msra.mxu0 0.0
    %602 = vmatprep.subr.mxu0 0.0
    %603 = vmatpush1.msra.mxu0 0.0
    %604 = vmatprep.subr.mxu0 0.0
    %605 = vmatpush1.msra.mxu0 0.0
    %606 = vmatprep.subr.mxu0 0.0
    %607 = vmatpush1.msra.mxu0 0.0
    %608 = vmatprep.subr.mxu0 0.0
    %609 = vmatpush1.msra.mxu0 0.0
    %610 = vmatprep.subr.mxu0 0.0
    %611 = vmatpush1.msra.mxu0 0.0
    %612 = vmatprep.subr.mxu0 0.0
    %613 = vmatpush1.msra.mxu0 0.0
    %614 = vmatprep.subr.mxu0 0.0
    %615 = vmatpush1.msra.mxu0 0.0
    %616 = vmatprep.subr.mxu0 0.0
    %617 = vmatpush1.msra.mxu0 0.0
    %618 = vmatprep.subr.mxu0 0.0
    %619 = vmatpush1.msra.mxu0 0.0
    %620 = vmatprep.subr.mxu0 0.0
    %621 = vmatpush1.msra.mxu0 0.0
    %622 = vmatprep.subr.mxu0 0.0
    %623 = vmatpush1.msra.mxu0 0.0
    %624 = vmatprep.subr.mxu0 0.0
    %625 = vmatpush1.msra.mxu0 0.0
    %626 = vmatprep.subr.mxu0 0.0
    %627 = vmatpush1.msra.mxu0 0.0
    %628 = vmatprep.subr.mxu0 0.0
    %629 = vmatpush1.msra.mxu0 0.0
    %630 = vmatprep.subr.mxu0 0.0
    %631 = vmatpush1.msra.mxu0 0.0
    %632 = vmatprep.subr.mxu0 0.0
    %633 = vmatpush1.msra.mxu0 0.0
    %634 = vmatprep.subr.mxu0 0.0
    %635 = vmatpush1.msra.mxu0 0.0
    %636 = vmatprep.mubr.f32.mxu0 0.0
    %637 = vmatmul.mubr.f32.gmra.mrb[0].mxu0 %v570
    %v638 = vpop.f32.mrb[0].mxu0
    %v639 = vadd.f32 0.0, %v638
    %v640 = vpop.f32.mrb[0].mxu0
    %641 = vdwg.mxu0
    %v642 = vld [vmem:[#allocation5 + $0x1] sm:$0x1]
    %v643 = vadd.f32 %v642, %v564
    %v644 = vld [vmem:[#allocation6 + $0x6] sm:$0x1]
    %v645 = vadd.f32 %v644, %v639
    %v647 = vrot.slane %v645, 7
    %v649 = vsel %vm461, %v643, %v647
    %v650 = vxor.u32 %v649, 2147483648
    %v651 = vmul.f32 %v650, 1.442695
    %v652 = vpow.pop %v651
    %v653 = vadd.f32 %v652, 1.0
    %v654 = vrcp.pop %v653
    %v655 = vmul.f32 1.0, %v654
    %v656 = vtanh.pop %v649
    %v657 = vmul.f32 %v655, %v480
    %659 = vrot.lane.b32.xlu0 %v656, 64
    %v660 = vpop.permute.xlu0 %659
    %v662 = vmul.f32 %v655, %v660
    %664 = vrot.lane.b32.xlu0 %v662, 32
    %v665 = vpop.permute.xlu0 %664
    %v667 = vadd.f32 %v657, %v665
    %v668 = vtanh.pop %v667
    %670 = vrot.lane.b32.xlu0 %v668, 64
    %v671 = vpop.permute.xlu0 %670
    %v673 = vmul.f32 %v655, %v671
    %675 = vrot.lane.b32.xlu0 %v673, 32
    %v676 = vpop.permute.xlu0 %675
    %678 = vst.msk [vmem:[#allocation3 + $0x1] sm:$0x1] %vm491, %v676
    %679 = vst.msk [vmem:[#allocation4 + $0x5] sm:$0x2] %vm493, %v676
    %v680 = vsel %vm43, %v676, 0
    %682 = vmatprep.subr.mxu0 0.0
    %683 = vmatpush1.msra.mxu0 %v118
    %684 = vmatprep.subr.mxu0 0.0
    %685 = vmatpush1.msra.mxu0 %v119
    %686 = vmatprep.subr.mxu0 0.0
    %687 = vmatpush1.msra.mxu0 %v120
    %688 = vmatprep.subr.mxu0 0.0
    %689 = vmatpush1.msra.mxu0 %v121
    %690 = vmatprep.subr.mxu0 0.0
    %691 = vmatpush1.msra.mxu0 0.0
    %692 = vmatprep.subr.mxu0 0.0
    %693 = vmatpush1.msra.mxu0 0.0
    %694 = vmatprep.subr.mxu0 0.0
    %695 = vmatpush1.msra.mxu0 0.0
    %696 = vmatprep.subr.mxu0 0.0
    %697 = vmatpush1.msra.mxu0 0.0
    %698 = vmatprep.subr.mxu0 0.0
    %699 = vmatpush1.msra.mxu0 0.0
    %700 = vmatprep.subr.mxu0 0.0
    %701 = vmatpush1.msra.mxu0 0.0
    %702 = vmatprep.subr.mxu0 0.0
    %703 = vmatpush1.msra.mxu0 0.0
    %704 = vmatprep.subr.mxu0 0.0
    %705 = vmatpush1.msra.mxu0 0.0
    %706 = vmatprep.subr.mxu0 0.0
    %707 = vmatpush1.msra.mxu0 0.0
    %708 = vmatprep.subr.mxu0 0.0
    %709 = vmatpush1.msra.mxu0 0.0
    %710 = vmatprep.subr.mxu0 0.0
    %711 = vmatpush1.msra.mxu0 0.0
    %712 = vmatprep.subr.mxu0 0.0
    %713 = vmatpush1.msra.mxu0 0.0
    %714 = vmatprep.subr.mxu0 0.0
    %715 = vmatpush1.msra.mxu0 0.0
    %716 = vmatprep.subr.mxu0 0.0
    %717 = vmatpush1.msra.mxu0 0.0
    %718 = vmatprep.subr.mxu0 0.0
    %719 = vmatpush1.msra.mxu0 0.0
    %720 = vmatprep.subr.mxu0 0.0
    %721 = vmatpush1.msra.mxu0 0.0
    %722 = vmatprep.subr.mxu0 0.0
    %723 = vmatpush1.msra.mxu0 0.0
    %724 = vmatprep.subr.mxu0 0.0
    %725 = vmatpush1.msra.mxu0 0.0
    %726 = vmatprep.subr.mxu0 0.0
    %727 = vmatpush1.msra.mxu0 0.0
    %728 = vmatprep.subr.mxu0 0.0
    %729 = vmatpush1.msra.mxu0 0.0
    %730 = vmatprep.subr.mxu0 0.0
    %731 = vmatpush1.msra.mxu0 0.0
    %732 = vmatprep.subr.mxu0 0.0
    %733 = vmatpush1.msra.mxu0 0.0
    %734 = vmatprep.subr.mxu0 0.0
    %735 = vmatpush1.msra.mxu0 0.0
    %736 = vmatprep.subr.mxu0 0.0
    %737 = vmatpush1.msra.mxu0 0.0
    %738 = vmatprep.subr.mxu0 0.0
    %739 = vmatpush1.msra.mxu0 0.0
    %740 = vmatprep.subr.mxu0 0.0
    %741 = vmatpush1.msra.mxu0 0.0
    %742 = vmatprep.subr.mxu0 0.0
    %743 = vmatpush1.msra.mxu0 0.0
    %744 = vmatprep.subr.mxu0 0.0
    %745 = vmatpush1.msra.mxu0 0.0
    %746 = vmatprep.mubr.f32.mxu0 0.0
    %747 = vmatmul.mubr.f32.gmra.mrb[0].mxu0 %v680
    %v748 = vpop.f32.mrb[0].mxu0
    %v749 = vadd.f32 0.0, %v748
    %v750 = vpop.f32.mrb[0].mxu0
    %751 = vdwg.mxu0
    %v752 = vrot.slane %v673, 1
    %753 = vrot.lane.b32.xlu0 %v752, 32
    %v754 = vpop.permute.xlu0 %753
    %v755 = vsel %vm43, %v754, 0
    %757 = vmatprep.subr.mxu0 0.0
    %758 = vmatpush1.msra.mxu0 %v122
    %759 = vmatprep.subr.mxu0 0.0
    %760 = vmatpush1.msra.mxu0 %v123
    %761 = vmatprep.subr.mxu0 0.0
    %762 = vmatpush1.msra.mxu0 %v124
    %763 = vmatprep.subr.mxu0 0.0
    %764 = vmatpush1.msra.mxu0 %v125
    %765 = vmatprep.subr.mxu0 0.0
    %766 = vmatpush1.msra.mxu0 0.0
    %767 = vmatprep.subr.mxu0 0.0
    %768 = vmatpush1.msra.mxu0 0.0
    %769 = vmatprep.subr.mxu0 0.0
    %770 = vmatpush1.msra.mxu0 0.0
    %771 = vmatprep.subr.mxu0 0.0
    %772 = vmatpush1.msra.mxu0 0.0
    %773 = vmatprep.subr.mxu0 0.0
    %774 = vmatpush1.msra.mxu0 0.0
    %775 = vmatprep.subr.mxu0 0.0
    %776 = vmatpush1.msra.mxu0 0.0
    %777 = vmatprep.subr.mxu0 0.0
    %778 = vmatpush1.msra.mxu0 0.0
    %779 = vmatprep.subr.mxu0 0.0
    %780 = vmatpush1.msra.mxu0 0.0
    %781 = vmatprep.subr.mxu0 0.0
    %782 = vmatpush1.msra.mxu0 0.0
    %783 = vmatprep.subr.mxu0 0.0
    %784 = vmatpush1.msra.mxu0 0.0
    %785 = vmatprep.subr.mxu0 0.0
    %786 = vmatpush1.msra.mxu0 0.0
    %787 = vmatprep.subr.mxu0 0.0
    %788 = vmatpush1.msra.mxu0 0.0
    %789 = vmatprep.subr.mxu0 0.0
    %790 = vmatpush1.msra.mxu0 0.0
    %791 = vmatprep.subr.mxu0 0.0
    %792 = vmatpush1.msra.mxu0 0.0
    %793 = vmatprep.subr.mxu0 0.0
    %794 = vmatpush1.msra.mxu0 0.0
    %795 = vmatprep.subr.mxu0 0.0
    %796 = vmatpush1.msra.mxu0 0.0
    %797 = vmatprep.subr.mxu0 0.0
    %798 = vmatpush1.msra.mxu0 0.0
    %799 = vmatprep.subr.mxu0 0.0
    %800 = vmatpush1.msra.mxu0 0.0
    %801 = vmatprep.subr.mxu0 0.0
    %802 = vmatpush1.msra.mxu0 0.0
    %803 = vmatprep.subr.mxu0 0.0
    %804 = vmatpush1.msra.mxu0 0.0
    %805 = vmatprep.subr.mxu0 0.0
    %806 = vmatpush1.msra.mxu0 0.0
    %807 = vmatprep.subr.mxu0 0.0
    %808 = vmatpush1.msra.mxu0 0.0
    %809 = vmatprep.subr.mxu0 0.0
    %810 = vmatpush1.msra.mxu0 0.0
    %811 = vmatprep.subr.mxu0 0.0
    %812 = vmatpush1.msra.mxu0 0.0
    %813 = vmatprep.subr.mxu0 0.0
    %814 = vmatpush1.msra.mxu0 0.0
    %815 = vmatprep.subr.mxu0 0.0
    %816 = vmatpush1.msra.mxu0 0.0
    %817 = vmatprep.subr.mxu0 0.0
    %818 = vmatpush1.msra.mxu0 0.0
    %819 = vmatprep.subr.mxu0 0.0
    %820 = vmatpush1.msra.mxu0 0.0
    %821 = vmatprep.mubr.f32.mxu0 0.0
    %822 = vmatmul.mubr.f32.gmra.mrb[0].mxu0 %v755
    %v823 = vpop.f32.mrb[0].mxu0
    %v824 = vadd.f32 0.0, %v823
    %v825 = vpop.f32.mrb[0].mxu0
    %826 = vdwg.mxu0
    %v827 = vld [vmem:[#allocation5 + $0x2] sm:$0x1]
    %v828 = vadd.f32 %v827, %v749
    %v829 = vld [vmem:[#allocation6 + $0x5] sm:$0x1]
    %v830 = vadd.f32 %v829, %v824
    %v832 = vrot.slane %v830, 7
    %v834 = vsel %vm461, %v828, %v832
    %v835 = vxor.u32 %v834, 2147483648
    %v836 = vmul.f32 %v835, 1.442695
    %v837 = vpow.pop %v836
    %v838 = vadd.f32 %v837, 1.0
    %v839 = vrcp.pop %v838
    %v840 = vmul.f32 1.0, %v839
    %v841 = vtanh.pop %v834
    %v842 = vmul.f32 %v840, %v667
    %844 = vrot.lane.b32.xlu0 %v841, 64
    %v845 = vpop.permute.xlu0 %844
    %v847 = vmul.f32 %v840, %v845
    %849 = vrot.lane.b32.xlu0 %v847, 32
    %v850 = vpop.permute.xlu0 %849
    %v852 = vadd.f32 %v842, %v850
    %v853 = vtanh.pop %v852
    %855 = vrot.lane.b32.xlu0 %v853, 64
    %v856 = vpop.permute.xlu0 %855
    %v858 = vmul.f32 %v840, %v856
    %860 = vrot.lane.b32.xlu0 %v858, 32
    %v861 = vpop.permute.xlu0 %860
    %863 = vst.msk [vmem:[#allocation3 + $0x2] sm:$0x1] %vm491, %v861
    %864 = vst.msk [vmem:[#allocation4 + $0x4] sm:$0x2] %vm493, %v861
    %v865 = vsel %vm43, %v861, 0
    %867 = vmatprep.subr.mxu0 0.0
    %868 = vmatpush1.msra.mxu0 %v118
    %869 = vmatprep.subr.mxu0 0.0
    %870 = vmatpush1.msra.mxu0 %v119
    %871 = vmatprep.subr.mxu0 0.0
    %872 = vmatpush1.msra.mxu0 %v120
    %873 = vmatprep.subr.mxu0 0.0
    %874 = vmatpush1.msra.mxu0 %v121
    %875 = vmatprep.subr.mxu0 0.0
    %876 = vmatpush1.msra.mxu0 0.0
    %877 = vmatprep.subr.mxu0 0.0
    %878 = vmatpush1.msra.mxu0 0.0
    %879 = vmatprep.subr.mxu0 0.0
    %880 = vmatpush1.msra.mxu0 0.0
    %881 = vmatprep.subr.mxu0 0.0
    %882 = vmatpush1.msra.mxu0 0.0
    %883 = vmatprep.subr.mxu0 0.0
    %884 = vmatpush1.msra.mxu0 0.0
    %885 = vmatprep.subr.mxu0 0.0
    %886 = vmatpush1.msra.mxu0 0.0
    %887 = vmatprep.subr.mxu0 0.0
    %888 = vmatpush1.msra.mxu0 0.0
    %889 = vmatprep.subr.mxu0 0.0
    %890 = vmatpush1.msra.mxu0 0.0
    %891 = vmatprep.subr.mxu0 0.0
    %892 = vmatpush1.msra.mxu0 0.0
    %893 = vmatprep.subr.mxu0 0.0
    %894 = vmatpush1.msra.mxu0 0.0
    %895 = vmatprep.subr.mxu0 0.0
    %896 = vmatpush1.msra.mxu0 0.0
    %897 = vmatprep.subr.mxu0 0.0
    %898 = vmatpush1.msra.mxu0 0.0
    %899 = vmatprep.subr.mxu0 0.0
    %900 = vmatpush1.msra.mxu0 0.0
    %901 = vmatprep.subr.mxu0 0.0
    %902 = vmatpush1.msra.mxu0 0.0
    %903 = vmatprep.subr.mxu0 0.0
    %904 = vmatpush1.msra.mxu0 0.0
    %905 = vmatprep.subr.mxu0 0.0
    %906 = vmatpush1.msra.mxu0 0.0
    %907 = vmatprep.subr.mxu0 0.0
    %908 = vmatpush1.msra.mxu0 0.0
    %909 = vmatprep.subr.mxu0 0.0
    %910 = vmatpush1.msra.mxu0 0.0
    %911 = vmatprep.subr.mxu0 0.0
    %912 = vmatpush1.msra.mxu0 0.0
    %913 = vmatprep.subr.mxu0 0.0
    %914 = vmatpush1.msra.mxu0 0.0
    %915 = vmatprep.subr.mxu0 0.0
    %916 = vmatpush1.msra.mxu0 0.0
    %917 = vmatprep.subr.mxu0 0.0
    %918 = vmatpush1.msra.mxu0 0.0
    %919 = vmatprep.subr.mxu0 0.0
    %920 = vmatpush1.msra.mxu0 0.0
    %921 = vmatprep.subr.mxu0 0.0
    %922 = vmatpush1.msra.mxu0 0.0
    %923 = vmatprep.subr.mxu0 0.0
    %924 = vmatpush1.msra.mxu0 0.0
    %925 = vmatprep.subr.mxu0 0.0
    %926 = vmatpush1.msra.mxu0 0.0
    %927 = vmatprep.subr.mxu0 0.0
    %928 = vmatpush1.msra.mxu0 0.0
    %929 = vmatprep.subr.mxu0 0.0
    %930 = vmatpush1.msra.mxu0 0.0
    %931 = vmatprep.mubr.f32.mxu0 0.0
    %932 = vmatmul.mubr.f32.gmra.mrb[0].mxu0 %v865
    %v933 = vpop.f32.mrb[0].mxu0
    %v934 = vadd.f32 0.0, %v933
    %v935 = vpop.f32.mrb[0].mxu0
    %936 = vdwg.mxu0
    %v937 = vrot.slane %v858, 1
    %938 = vrot.lane.b32.xlu0 %v937, 32
    %v939 = vpop.permute.xlu0 %938
    %v940 = vsel %vm43, %v939, 0
    %942 = vmatprep.subr.mxu0 0.0
    %943 = vmatpush1.msra.mxu0 %v122
    %944 = vmatprep.subr.mxu0 0.0
    %945 = vmatpush1.msra.mxu0 %v123
    %946 = vmatprep.subr.mxu0 0.0
    %947 = vmatpush1.msra.mxu0 %v124
    %948 = vmatprep.subr.mxu0 0.0
    %949 = vmatpush1.msra.mxu0 %v125
    %950 = vmatprep.subr.mxu0 0.0
    %951 = vmatpush1.msra.mxu0 0.0
    %952 = vmatprep.subr.mxu0 0.0
    %953 = vmatpush1.msra.mxu0 0.0
    %954 = vmatprep.subr.mxu0 0.0
    %955 = vmatpush1.msra.mxu0 0.0
    %956 = vmatprep.subr.mxu0 0.0
    %957 = vmatpush1.msra.mxu0 0.0
    %958 = vmatprep.subr.mxu0 0.0
    %959 = vmatpush1.msra.mxu0 0.0
    %960 = vmatprep.subr.mxu0 0.0
    %961 = vmatpush1.msra.mxu0 0.0
    %962 = vmatprep.subr.mxu0 0.0
    %963 = vmatpush1.msra.mxu0 0.0
    %964 = vmatprep.subr.mxu0 0.0
    %965 = vmatpush1.msra.mxu0 0.0
    %966 = vmatprep.subr.mxu0 0.0
    %967 = vmatpush1.msra.mxu0 0.0
    %968 = vmatprep.subr.mxu0 0.0
    %969 = vmatpush1.msra.mxu0 0.0
    %970 = vmatprep.subr.mxu0 0.0
    %971 = vmatpush1.msra.mxu0 0.0
    %972 = vmatprep.subr.mxu0 0.0
    %973 = vmatpush1.msra.mxu0 0.0
    %974 = vmatprep.subr.mxu0 0.0
    %975 = vmatpush1.msra.mxu0 0.0
    %976 = vmatprep.subr.mxu0 0.0
    %977 = vmatpush1.msra.mxu0 0.0
    %978 = vmatprep.subr.mxu0 0.0
    %979 = vmatpush1.msra.mxu0 0.0
    %980 = vmatprep.subr.mxu0 0.0
    %981 = vmatpush1.msra.mxu0 0.0
    %982 = vmatprep.subr.mxu0 0.0
    %983 = vmatpush1.msra.mxu0 0.0
    %984 = vmatprep.subr.mxu0 0.0
    %985 = vmatpush1.msra.mxu0 0.0
    %986 = vmatprep.subr.mxu0 0.0
    %987 = vmatpush1.msra.mxu0 0.0
    %988 = vmatprep.subr.mxu0 0.0
    %989 = vmatpush1.msra.mxu0 0.0
    %990 = vmatprep.subr.mxu0 0.0
    %991 = vmatpush1.msra.mxu0 0.0
    %992 = vmatprep.subr.mxu0 0.0
    %993 = vmatpush1.msra.mxu0 0.0
    %994 = vmatprep.subr.mxu0 0.0
    %995 = vmatpush1.msra.mxu0 0.0
    %996 = vmatprep.subr.mxu0 0.0
    %997 = vmatpush1.msra.mxu0 0.0
    %998 = vmatprep.subr.mxu0 0.0
    %999 = vmatpush1.msra.mxu0 0.0
    %1000 = vmatprep.subr.mxu0 0.0
    %1001 = vmatpush1.msra.mxu0 0.0
    %1002 = vmatprep.subr.mxu0 0.0
    %1003 = vmatpush1.msra.mxu0 0.0
    %1004 = vmatprep.subr.mxu0 0.0
    %1005 = vmatpush1.msra.mxu0 0.0
    %1006 = vmatprep.mubr.f32.mxu0 0.0
    %1007 = vmatmul.mubr.f32.gmra.mrb[0].mxu0 %v940
    %v1008 = vpop.f32.mrb[0].mxu0
    %v1009 = vadd.f32 0.0, %v1008
    %v1010 = vpop.f32.mrb[0].mxu0
    %1011 = vdwg.mxu0
    %v1012 = vld [vmem:[#allocation5 + $0x3] sm:$0x1]
    %v1013 = vadd.f32 %v1012, %v934
    %v1014 = vld [vmem:[#allocation6 + $0x4] sm:$0x1]
    %v1015 = vadd.f32 %v1014, %v1009
    %v1017 = vrot.slane %v1015, 7
    %v1019 = vsel %vm461, %v1013, %v1017
    %v1020 = vxor.u32 %v1019, 2147483648
    %v1021 = vmul.f32 %v1020, 1.442695
    %v1022 = vpow.pop %v1021
    %v1023 = vadd.f32 %v1022, 1.0
    %v1024 = vrcp.pop %v1023
    %v1025 = vmul.f32 1.0, %v1024
    %v1026 = vtanh.pop %v1019
    %v1027 = vmul.f32 %v1025, %v852
    %1029 = vrot.lane.b32.xlu0 %v1026, 64
    %v1030 = vpop.permute.xlu0 %1029
    %v1032 = vmul.f32 %v1025, %v1030
    %1034 = vrot.lane.b32.xlu0 %v1032, 32
    %v1035 = vpop.permute.xlu0 %1034
    %v1037 = vadd.f32 %v1027, %v1035
    %v1038 = vtanh.pop %v1037
    %1040 = vrot.lane.b32.xlu0 %v1038, 64
    %v1041 = vpop.permute.xlu0 %1040
    %v1043 = vmul.f32 %v1025, %v1041
    %1045 = vrot.lane.b32.xlu0 %v1043, 32
    %v1046 = vpop.permute.xlu0 %1045
    %1048 = vst.msk [vmem:[#allocation3 + $0x3] sm:$0x1] %vm491, %v1046
    %1049 = vst.msk [vmem:[#allocation4 + $0x3] sm:$0x2] %vm493, %v1046
    %v1050 = vsel %vm43, %v1046, 0
    %1052 = vmatprep.subr.mxu0 0.0
    %1053 = vmatpush1.msra.mxu0 %v118
    %1054 = vmatprep.subr.mxu0 0.0
    %1055 = vmatpush1.msra.mxu0 %v119
    %1056 = vmatprep.subr.mxu0 0.0
    %1057 = vmatpush1.msra.mxu0 %v120
    %1058 = vmatprep.subr.mxu0 0.0
    %1059 = vmatpush1.msra.mxu0 %v121
    %1060 = vmatprep.subr.mxu0 0.0
    %1061 = vmatpush1.msra.mxu0 0.0
    %1062 = vmatprep.subr.mxu0 0.0
    %1063 = vmatpush1.msra.mxu0 0.0
    %1064 = vmatprep.subr.mxu0 0.0
    %1065 = vmatpush1.msra.mxu0 0.0
    %1066 = vmatprep.subr.mxu0 0.0
    %1067 = vmatpush1.msra.mxu0 0.0
    %1068 = vmatprep.subr.mxu0 0.0
    %1069 = vmatpush1.msra.mxu0 0.0
    %1070 = vmatprep.subr.mxu0 0.0
    %1071 = vmatpush1.msra.mxu0 0.0
    %1072 = vmatprep.subr.mxu0 0.0
    %1073 = vmatpush1.msra.mxu0 0.0
    %1074 = vmatprep.subr.mxu0 0.0
    %1075 = vmatpush1.msra.mxu0 0.0
    %1076 = vmatprep.subr.mxu0 0.0
    %1077 = vmatpush1.msra.mxu0 0.0
    %1078 = vmatprep.subr.mxu0 0.0
    %1079 = vmatpush1.msra.mxu0 0.0
    %1080 = vmatprep.subr.mxu0 0.0
    %1081 = vmatpush1.msra.mxu0 0.0
    %1082 = vmatprep.subr.mxu0 0.0
    %1083 = vmatpush1.msra.mxu0 0.0
    %1084 = vmatprep.subr.mxu0 0.0
    %1085 = vmatpush1.msra.mxu0 0.0
    %1086 = vmatprep.subr.mxu0 0.0
    %1087 = vmatpush1.msra.mxu0 0.0
    %1088 = vmatprep.subr.mxu0 0.0
    %1089 = vmatpush1.msra.mxu0 0.0
    %1090 = vmatprep.subr.mxu0 0.0
    %1091 = vmatpush1.msra.mxu0 0.0
    %1092 = vmatprep.subr.mxu0 0.0
    %1093 = vmatpush1.msra.mxu0 0.0
    %1094 = vmatprep.subr.mxu0 0.0
    %1095 = vmatpush1.msra.mxu0 0.0
    %1096 = vmatprep.subr.mxu0 0.0
    %1097 = vmatpush1.msra.mxu0 0.0
    %1098 = vmatprep.subr.mxu0 0.0
    %1099 = vmatpush1.msra.mxu0 0.0
    %1100 = vmatprep.subr.mxu0 0.0
    %1101 = vmatpush1.msra.mxu0 0.0
    %1102 = vmatprep.subr.mxu0 0.0
    %1103 = vmatpush1.msra.mxu0 0.0
    %1104 = vmatprep.subr.mxu0 0.0
    %1105 = vmatpush1.msra.mxu0 0.0
    %1106 = vmatprep.subr.mxu0 0.0
    %1107 = vmatpush1.msra.mxu0 0.0
    %1108 = vmatprep.subr.mxu0 0.0
    %1109 = vmatpush1.msra.mxu0 0.0
    %1110 = vmatprep.subr.mxu0 0.0
    %1111 = vmatpush1.msra.mxu0 0.0
    %1112 = vmatprep.subr.mxu0 0.0
    %1113 = vmatpush1.msra.mxu0 0.0
    %1114 = vmatprep.subr.mxu0 0.0
    %1115 = vmatpush1.msra.mxu0 0.0
    %1116 = vmatprep.mubr.f32.mxu0 0.0
    %1117 = vmatmul.mubr.f32.gmra.mrb[0].mxu0 %v1050
    %v1118 = vpop.f32.mrb[0].mxu0
    %v1119 = vadd.f32 0.0, %v1118
    %v1120 = vpop.f32.mrb[0].mxu0
    %1121 = vdwg.mxu0
    %v1122 = vrot.slane %v1043, 1
    %1123 = vrot.lane.b32.xlu0 %v1122, 32
    %v1124 = vpop.permute.xlu0 %1123
    %v1125 = vsel %vm43, %v1124, 0
    %1127 = vmatprep.subr.mxu0 0.0
    %1128 = vmatpush1.msra.mxu0 %v122
    %1129 = vmatprep.subr.mxu0 0.0
    %1130 = vmatpush1.msra.mxu0 %v123
    %1131 = vmatprep.subr.mxu0 0.0
    %1132 = vmatpush1.msra.mxu0 %v124
    %1133 = vmatprep.subr.mxu0 0.0
    %1134 = vmatpush1.msra.mxu0 %v125
    %1135 = vmatprep.subr.mxu0 0.0
    %1136 = vmatpush1.msra.mxu0 0.0
    %1137 = vmatprep.subr.mxu0 0.0
    %1138 = vmatpush1.msra.mxu0 0.0
    %1139 = vmatprep.subr.mxu0 0.0
    %1140 = vmatpush1.msra.mxu0 0.0
    %1141 = vmatprep.subr.mxu0 0.0
    %1142 = vmatpush1.msra.mxu0 0.0
    %1143 = vmatprep.subr.mxu0 0.0
    %1144 = vmatpush1.msra.mxu0 0.0
    %1145 = vmatprep.subr.mxu0 0.0
    %1146 = vmatpush1.msra.mxu0 0.0
    %1147 = vmatprep.subr.mxu0 0.0
    %1148 = vmatpush1.msra.mxu0 0.0
    %1149 = vmatprep.subr.mxu0 0.0
    %1150 = vmatpush1.msra.mxu0 0.0
    %1151 = vmatprep.subr.mxu0 0.0
    %1152 = vmatpush1.msra.mxu0 0.0
    %1153 = vmatprep.subr.mxu0 0.0
    %1154 = vmatpush1.msra.mxu0 0.0
    %1155 = vmatprep.subr.mxu0 0.0
    %1156 = vmatpush1.msra.mxu0 0.0
    %1157 = vmatprep.subr.mxu0 0.0
    %1158 = vmatpush1.msra.mxu0 0.0
    %1159 = vmatprep.subr.mxu0 0.0
    %1160 = vmatpush1.msra.mxu0 0.0
    %1161 = vmatprep.subr.mxu0 0.0
    %1162 = vmatpush1.msra.mxu0 0.0
    %1163 = vmatprep.subr.mxu0 0.0
    %1164 = vmatpush1.msra.mxu0 0.0
    %1165 = vmatprep.subr.mxu0 0.0
    %1166 = vmatpush1.msra.mxu0 0.0
    %1167 = vmatprep.subr.mxu0 0.0
    %1168 = vmatpush1.msra.mxu0 0.0
    %1169 = vmatprep.subr.mxu0 0.0
    %1170 = vmatpush1.msra.mxu0 0.0
    %1171 = vmatprep.subr.mxu0 0.0
    %1172 = vmatpush1.msra.mxu0 0.0
    %1173 = vmatprep.subr.mxu0 0.0
    %1174 = vmatpush1.msra.mxu0 0.0
    %1175 = vmatprep.subr.mxu0 0.0
    %1176 = vmatpush1.msra.mxu0 0.0
    %1177 = vmatprep.subr.mxu0 0.0
    %1178 = vmatpush1.msra.mxu0 0.0
    %1179 = vmatprep.subr.mxu0 0.0
    %1180 = vmatpush1.msra.mxu0 0.0
    %1181 = vmatprep.subr.mxu0 0.0
    %1182 = vmatpush1.msra.mxu0 0.0
    %1183 = vmatprep.subr.mxu0 0.0
    %1184 = vmatpush1.msra.mxu0 0.0
    %1185 = vmatprep.subr.mxu0 0.0
    %1186 = vmatpush1.msra.mxu0 0.0
    %1187 = vmatprep.subr.mxu0 0.0
    %1188 = vmatpush1.msra.mxu0 0.0
    %1189 = vmatprep.subr.mxu0 0.0
    %1190 = vmatpush1.msra.mxu0 0.0
    %1191 = vmatprep.mubr.f32.mxu0 0.0
    %1192 = vmatmul.mubr.f32.gmra.mrb[0].mxu0 %v1125
    %v1193 = vpop.f32.mrb[0].mxu0
    %v1194 = vadd.f32 0.0, %v1193
    %v1195 = vpop.f32.mrb[0].mxu0
    %1196 = vdwg.mxu0
    %v1197 = vld [vmem:[#allocation5 + $0x4] sm:$0x1]
    %v1198 = vadd.f32 %v1197, %v1119
    %v1199 = vld [vmem:[#allocation6 + $0x3] sm:$0x1]
    %v1200 = vadd.f32 %v1199, %v1194
    %v1202 = vrot.slane %v1200, 7
    %v1204 = vsel %vm461, %v1198, %v1202
    %v1205 = vxor.u32 %v1204, 2147483648
    %v1206 = vmul.f32 %v1205, 1.442695
    %v1207 = vpow.pop %v1206
    %v1208 = vadd.f32 %v1207, 1.0
    %v1209 = vrcp.pop %v1208
    %v1210 = vmul.f32 1.0, %v1209
    %v1211 = vtanh.pop %v1204
    %v1212 = vmul.f32 %v1210, %v1037
    %1214 = vrot.lane.b32.xlu0 %v1211, 64
    %v1215 = vpop.permute.xlu0 %1214
    %v1217 = vmul.f32 %v1210, %v1215
    %1219 = vrot.lane.b32.xlu0 %v1217, 32
    %v1220 = vpop.permute.xlu0 %1219
    %v1222 = vadd.f32 %v1212, %v1220
    %v1223 = vtanh.pop %v1222
    %1225 = vrot.lane.b32.xlu0 %v1223, 64
    %v1226 = vpop.permute.xlu0 %1225
    %v1228 = vmul.f32 %v1210, %v1226
    %1230 = vrot.lane.b32.xlu0 %v1228, 32
    %v1231 = vpop.permute.xlu0 %1230
    %1233 = vst.msk [vmem:[#allocation3 + $0x4] sm:$0x1] %vm491, %v1231
    %1234 = vst.msk [vmem:[#allocation4 + $0x2] sm:$0x2] %vm493, %v1231
    %v1235 = vsel %vm43, %v1231, 0
    %1237 = vmatprep.subr.mxu0 0.0
    %1238 = vmatpush1.msra.mxu0 %v118
    %1239 = vmatprep.subr.mxu0 0.0
    %1240 = vmatpush1.msra.mxu0 %v119
    %1241 = vmatprep.subr.mxu0 0.0
    %1242 = vmatpush1.msra.mxu0 %v120
    %1243 = vmatprep.subr.mxu0 0.0
    %1244 = vmatpush1.msra.mxu0 %v121
    %1245 = vmatprep.subr.mxu0 0.0
    %1246 = vmatpush1.msra.mxu0 0.0
    %1247 = vmatprep.subr.mxu0 0.0
    %1248 = vmatpush1.msra.mxu0 0.0
    %1249 = vmatprep.subr.mxu0 0.0
    %1250 = vmatpush1.msra.mxu0 0.0
    %1251 = vmatprep.subr.mxu0 0.0
    %1252 = vmatpush1.msra.mxu0 0.0
    %1253 = vmatprep.subr.mxu0 0.0
    %1254 = vmatpush1.msra.mxu0 0.0
    %1255 = vmatprep.subr.mxu0 0.0
    %1256 = vmatpush1.msra.mxu0 0.0
    %1257 = vmatprep.subr.mxu0 0.0
    %1258 = vmatpush1.msra.mxu0 0.0
    %1259 = vmatprep.subr.mxu0 0.0
    %1260 = vmatpush1.msra.mxu0 0.0
    %1261 = vmatprep.subr.mxu0 0.0
    %1262 = vmatpush1.msra.mxu0 0.0
    %1263 = vmatprep.subr.mxu0 0.0
    %1264 = vmatpush1.msra.mxu0 0.0
    %1265 = vmatprep.subr.mxu0 0.0
    %1266 = vmatpush1.msra.mxu0 0.0
    %1267 = vmatprep.subr.mxu0 0.0
    %1268 = vmatpush1.msra.mxu0 0.0
    %1269 = vmatprep.subr.mxu0 0.0
    %1270 = vmatpush1.msra.mxu0 0.0
    %1271 = vmatprep.subr.mxu0 0.0
    %1272 = vmatpush1.msra.mxu0 0.0
    %1273 = vmatprep.subr.mxu0 0.0
    %1274 = vmatpush1.msra.mxu0 0.0
    %1275 = vmatprep.subr.mxu0 0.0
    %1276 = vmatpush1.msra.mxu0 0.0
    %1277 = vmatprep.subr.mxu0 0.0
    %1278 = vmatpush1.msra.mxu0 0.0
    %1279 = vmatprep.subr.mxu0 0.0
    %1280 = vmatpush1.msra.mxu0 0.0
    %1281 = vmatprep.subr.mxu0 0.0
    %1282 = vmatpush1.msra.mxu0 0.0
    %1283 = vmatprep.subr.mxu0 0.0
    %1284 = vmatpush1.msra.mxu0 0.0
    %1285 = vmatprep.subr.mxu0 0.0
    %1286 = vmatpush1.msra.mxu0 0.0
    %1287 = vmatprep.subr.mxu0 0.0
    %1288 = vmatpush1.msra.mxu0 0.0
    %1289 = vmatprep.subr.mxu0 0.0
    %1290 = vmatpush1.msra.mxu0 0.0
    %1291 = vmatprep.subr.mxu0 0.0
    %1292 = vmatpush1.msra.mxu0 0.0
    %1293 = vmatprep.subr.mxu0 0.0
    %1294 = vmatpush1.msra.mxu0 0.0
    %1295 = vmatprep.subr.mxu0 0.0
    %1296 = vmatpush1.msra.mxu0 0.0
    %1297 = vmatprep.subr.mxu0 0.0
    %1298 = vmatpush1.msra.mxu0 0.0
    %1299 = vmatprep.subr.mxu0 0.0
    %1300 = vmatpush1.msra.mxu0 0.0
    %1301 = vmatprep.mubr.f32.mxu0 0.0
    %1302 = vmatmul.mubr.f32.gmra.mrb[0].mxu0 %v1235
    %v1303 = vpop.f32.mrb[0].mxu0
    %v1304 = vadd.f32 0.0, %v1303
    %v1305 = vpop.f32.mrb[0].mxu0
    %1306 = vdwg.mxu0
    %v1307 = vrot.slane %v1228, 1
    %1308 = vrot.lane.b32.xlu0 %v1307, 32
    %v1309 = vpop.permute.xlu0 %1308
    %v1310 = vsel %vm43, %v1309, 0
    %1312 = vmatprep.subr.mxu0 0.0
    %1313 = vmatpush1.msra.mxu0 %v122
    %1314 = vmatprep.subr.mxu0 0.0
    %1315 = vmatpush1.msra.mxu0 %v123
    %1316 = vmatprep.subr.mxu0 0.0
    %1317 = vmatpush1.msra.mxu0 %v124
    %1318 = vmatprep.subr.mxu0 0.0
    %1319 = vmatpush1.msra.mxu0 %v125
    %1320 = vmatprep.subr.mxu0 0.0
    %1321 = vmatpush1.msra.mxu0 0.0
    %1322 = vmatprep.subr.mxu0 0.0
    %1323 = vmatpush1.msra.mxu0 0.0
    %1324 = vmatprep.subr.mxu0 0.0
    %1325 = vmatpush1.msra.mxu0 0.0
    %1326 = vmatprep.subr.mxu0 0.0
    %1327 = vmatpush1.msra.mxu0 0.0
    %1328 = vmatprep.subr.mxu0 0.0
    %1329 = vmatpush1.msra.mxu0 0.0
    %1330 = vmatprep.subr.mxu0 0.0
    %1331 = vmatpush1.msra.mxu0 0.0
    %1332 = vmatprep.subr.mxu0 0.0
    %1333 = vmatpush1.msra.mxu0 0.0
    %1334 = vmatprep.subr.mxu0 0.0
    %1335 = vmatpush1.msra.mxu0 0.0
    %1336 = vmatprep.subr.mxu0 0.0
    %1337 = vmatpush1.msra.mxu0 0.0
    %1338 = vmatprep.subr.mxu0 0.0
    %1339 = vmatpush1.msra.mxu0 0.0
    %1340 = vmatprep.subr.mxu0 0.0
    %1341 = vmatpush1.msra.mxu0 0.0
    %1342 = vmatprep.subr.mxu0 0.0
    %1343 = vmatpush1.msra.mxu0 0.0
    %1344 = vmatprep.subr.mxu0 0.0
    %1345 = vmatpush1.msra.mxu0 0.0
    %1346 = vmatprep.subr.mxu0 0.0
    %1347 = vmatpush1.msra.mxu0 0.0
    %1348 = vmatprep.subr.mxu0 0.0
    %1349 = vmatpush1.msra.mxu0 0.0
    %1350 = vmatprep.subr.mxu0 0.0
    %1351 = vmatpush1.msra.mxu0 0.0
    %1352 = vmatprep.subr.mxu0 0.0
    %1353 = vmatpush1.msra.mxu0 0.0
    %1354 = vmatprep.subr.mxu0 0.0
    %1355 = vmatpush1.msra.mxu0 0.0
    %1356 = vmatprep.subr.mxu0 0.0
    %1357 = vmatpush1.msra.mxu0 0.0
    %1358 = vmatprep.subr.mxu0 0.0
    %1359 = vmatpush1.msra.mxu0 0.0
    %1360 = vmatprep.subr.mxu0 0.0
    %1361 = vmatpush1.msra.mxu0 0.0
    %1362 = vmatprep.subr.mxu0 0.0
    %1363 = vmatpush1.msra.mxu0 0.0
    %1364 = vmatprep.subr.mxu0 0.0
    %1365 = vmatpush1.msra.mxu0 0.0
    %1366 = vmatprep.subr.mxu0 0.0
    %1367 = vmatpush1.msra.mxu0 0.0
    %1368 = vmatprep.subr.mxu0 0.0
    %1369 = vmatpush1.msra.mxu0 0.0
    %1370 = vmatprep.subr.mxu0 0.0
    %1371 = vmatpush1.msra.mxu0 0.0
    %1372 = vmatprep.subr.mxu0 0.0
    %1373 = vmatpush1.msra.mxu0 0.0
    %1374 = vmatprep.subr.mxu0 0.0
    %1375 = vmatpush1.msra.mxu0 0.0
    %1376 = vmatprep.mubr.f32.mxu0 0.0
    %1377 = vmatmul.mubr.f32.gmra.mrb[0].mxu0 %v1310
    %v1378 = vpop.f32.mrb[0].mxu0
    %v1379 = vadd.f32 0.0, %v1378
    %v1380 = vpop.f32.mrb[0].mxu0
    %1381 = vdwg.mxu0
    %v1382 = vld [vmem:[#allocation5 + $0x5] sm:$0x1]
    %v1383 = vadd.f32 %v1382, %v1304
    %v1384 = vld [vmem:[#allocation6 + $0x2] sm:$0x1]
    %v1385 = vadd.f32 %v1384, %v1379
    %v1387 = vrot.slane %v1385, 7
    %v1389 = vsel %vm461, %v1383, %v1387
    %v1390 = vxor.u32 %v1389, 2147483648
    %v1391 = vmul.f32 %v1390, 1.442695
    %v1392 = vpow.pop %v1391
    %v1393 = vadd.f32 %v1392, 1.0
    %v1394 = vrcp.pop %v1393
    %v1395 = vmul.f32 1.0, %v1394
    %v1396 = vtanh.pop %v1389
    %v1397 = vmul.f32 %v1395, %v1222
    %1399 = vrot.lane.b32.xlu0 %v1396, 64
    %v1400 = vpop.permute.xlu0 %1399
    %v1402 = vmul.f32 %v1395, %v1400
    %1404 = vrot.lane.b32.xlu0 %v1402, 32
    %v1405 = vpop.permute.xlu0 %1404
    %v1407 = vadd.f32 %v1397, %v1405
    %v1408 = vtanh.pop %v1407
    %1410 = vrot.lane.b32.xlu0 %v1408, 64
    %v1411 = vpop.permute.xlu0 %1410
    %v1413 = vmul.f32 %v1395, %v1411
    %1415 = vrot.lane.b32.xlu0 %v1413, 32
    %v1416 = vpop.permute.xlu0 %1415
    %1418 = vst.msk [vmem:[#allocation3 + $0x5] sm:$0x1] %vm491, %v1416
    %1419 = vst.msk [vmem:[#allocation4 + $0x1] sm:$0x2] %vm493, %v1416
    %v1420 = vsel %vm43, %v1416, 0
    %1422 = vmatprep.subr.mxu0 0.0
    %1423 = vmatpush1.msra.mxu0 %v118
    %1424 = vmatprep.subr.mxu0 0.0
    %1425 = vmatpush1.msra.mxu0 %v119
    %1426 = vmatprep.subr.mxu0 0.0
    %1427 = vmatpush1.msra.mxu0 %v120
    %1428 = vmatprep.subr.mxu0 0.0
    %1429 = vmatpush1.msra.mxu0 %v121
    %1430 = vmatprep.subr.mxu0 0.0
    %1431 = vmatpush1.msra.mxu0 0.0
    %1432 = vmatprep.subr.mxu0 0.0
    %1433 = vmatpush1.msra.mxu0 0.0
    %1434 = vmatprep.subr.mxu0 0.0
    %1435 = vmatpush1.msra.mxu0 0.0
    %1436 = vmatprep.subr.mxu0 0.0
    %1437 = vmatpush1.msra.mxu0 0.0
    %1438 = vmatprep.subr.mxu0 0.0
    %1439 = vmatpush1.msra.mxu0 0.0
    %1440 = vmatprep.subr.mxu0 0.0
    %1441 = vmatpush1.msra.mxu0 0.0
    %1442 = vmatprep.subr.mxu0 0.0
    %1443 = vmatpush1.msra.mxu0 0.0
    %1444 = vmatprep.subr.mxu0 0.0
    %1445 = vmatpush1.msra.mxu0 0.0
    %1446 = vmatprep.subr.mxu0 0.0
    %1447 = vmatpush1.msra.mxu0 0.0
    %1448 = vmatprep.subr.mxu0 0.0
    %1449 = vmatpush1.msra.mxu0 0.0
    %1450 = vmatprep.subr.mxu0 0.0
    %1451 = vmatpush1.msra.mxu0 0.0
    %1452 = vmatprep.subr.mxu0 0.0
    %1453 = vmatpush1.msra.mxu0 0.0
    %1454 = vmatprep.subr.mxu0 0.0
    %1455 = vmatpush1.msra.mxu0 0.0
    %1456 = vmatprep.subr.mxu0 0.0
    %1457 = vmatpush1.msra.mxu0 0.0
    %1458 = vmatprep.subr.mxu0 0.0
    %1459 = vmatpush1.msra.mxu0 0.0
    %1460 = vmatprep.subr.mxu0 0.0
    %1461 = vmatpush1.msra.mxu0 0.0
    %1462 = vmatprep.subr.mxu0 0.0
    %1463 = vmatpush1.msra.mxu0 0.0
    %1464 = vmatprep.subr.mxu0 0.0
    %1465 = vmatpush1.msra.mxu0 0.0
    %1466 = vmatprep.subr.mxu0 0.0
    %1467 = vmatpush1.msra.mxu0 0.0
    %1468 = vmatprep.subr.mxu0 0.0
    %1469 = vmatpush1.msra.mxu0 0.0
    %1470 = vmatprep.subr.mxu0 0.0
    %1471 = vmatpush1.msra.mxu0 0.0
    %1472 = vmatprep.subr.mxu0 0.0
    %1473 = vmatpush1.msra.mxu0 0.0
    %1474 = vmatprep.subr.mxu0 0.0
    %1475 = vmatpush1.msra.mxu0 0.0
    %1476 = vmatprep.subr.mxu0 0.0
    %1477 = vmatpush1.msra.mxu0 0.0
    %1478 = vmatprep.subr.mxu0 0.0
    %1479 = vmatpush1.msra.mxu0 0.0
    %1480 = vmatprep.subr.mxu0 0.0
    %1481 = vmatpush1.msra.mxu0 0.0
    %1482 = vmatprep.subr.mxu0 0.0
    %1483 = vmatpush1.msra.mxu0 0.0
    %1484 = vmatprep.subr.mxu0 0.0
    %1485 = vmatpush1.msra.mxu0 0.0
    %1486 = vmatprep.mubr.f32.mxu0 0.0
    %1487 = vmatmul.mubr.f32.gmra.mrb[0].mxu0 %v1420
    %v1488 = vpop.f32.mrb[0].mxu0
    %v1489 = vadd.f32 0.0, %v1488
    %v1490 = vpop.f32.mrb[0].mxu0
    %1491 = vdwg.mxu0
    %v1492 = vrot.slane %v1413, 1
    %1493 = vrot.lane.b32.xlu0 %v1492, 32
    %v1494 = vpop.permute.xlu0 %1493
    %v1495 = vsel %vm43, %v1494, 0
    %1497 = vmatprep.subr.mxu0 0.0
    %1498 = vmatpush1.msra.mxu0 %v122
    %1499 = vmatprep.subr.mxu0 0.0
    %1500 = vmatpush1.msra.mxu0 %v123
    %1501 = vmatprep.subr.mxu0 0.0
    %1502 = vmatpush1.msra.mxu0 %v124
    %1503 = vmatprep.subr.mxu0 0.0
    %1504 = vmatpush1.msra.mxu0 %v125
    %1505 = vmatprep.subr.mxu0 0.0
    %1506 = vmatpush1.msra.mxu0 0.0
    %1507 = vmatprep.subr.mxu0 0.0
    %1508 = vmatpush1.msra.mxu0 0.0
    %1509 = vmatprep.subr.mxu0 0.0
    %1510 = vmatpush1.msra.mxu0 0.0
    %1511 = vmatprep.subr.mxu0 0.0
    %1512 = vmatpush1.msra.mxu0 0.0
    %1513 = vmatprep.subr.mxu0 0.0
    %1514 = vmatpush1.msra.mxu0 0.0
    %1515 = vmatprep.subr.mxu0 0.0
    %1516 = vmatpush1.msra.mxu0 0.0
    %1517 = vmatprep.subr.mxu0 0.0
    %1518 = vmatpush1.msra.mxu0 0.0
    %1519 = vmatprep.subr.mxu0 0.0
    %1520 = vmatpush1.msra.mxu0 0.0
    %1521 = vmatprep.subr.mxu0 0.0
    %1522 = vmatpush1.msra.mxu0 0.0
    %1523 = vmatprep.subr.mxu0 0.0
    %1524 = vmatpush1.msra.mxu0 0.0
    %1525 = vmatprep.subr.mxu0 0.0
    %1526 = vmatpush1.msra.mxu0 0.0
    %1527 = vmatprep.subr.mxu0 0.0
    %1528 = vmatpush1.msra.mxu0 0.0
    %1529 = vmatprep.subr.mxu0 0.0
    %1530 = vmatpush1.msra.mxu0 0.0
    %1531 = vmatprep.subr.mxu0 0.0
    %1532 = vmatpush1.msra.mxu0 0.0
    %1533 = vmatprep.subr.mxu0 0.0
    %1534 = vmatpush1.msra.mxu0 0.0
    %1535 = vmatprep.subr.mxu0 0.0
    %1536 = vmatpush1.msra.mxu0 0.0
    %1537 = vmatprep.subr.mxu0 0.0
    %1538 = vmatpush1.msra.mxu0 0.0
    %1539 = vmatprep.subr.mxu0 0.0
    %1540 = vmatpush1.msra.mxu0 0.0
    %1541 = vmatprep.subr.mxu0 0.0
    %1542 = vmatpush1.msra.mxu0 0.0
    %1543 = vmatprep.subr.mxu0 0.0
    %1544 = vmatpush1.msra.mxu0 0.0
    %1545 = vmatprep.subr.mxu0 0.0
    %1546 = vmatpush1.msra.mxu0 0.0
    %1547 = vmatprep.subr.mxu0 0.0
    %1548 = vmatpush1.msra.mxu0 0.0
    %1549 = vmatprep.subr.mxu0 0.0
    %1550 = vmatpush1.msra.mxu0 0.0
    %1551 = vmatprep.subr.mxu0 0.0
    %1552 = vmatpush1.msra.mxu0 0.0
    %1553 = vmatprep.subr.mxu0 0.0
    %1554 = vmatpush1.msra.mxu0 0.0
    %1555 = vmatprep.subr.mxu0 0.0
    %1556 = vmatpush1.msra.mxu0 0.0
    %1557 = vmatprep.subr.mxu0 0.0
    %1558 = vmatpush1.msra.mxu0 0.0
    %1559 = vmatprep.subr.mxu0 0.0
    %1560 = vmatpush1.msra.mxu0 0.0
    %1561 = vmatprep.mubr.f32.mxu0 0.0
    %1562 = vmatmul.mubr.f32.gmra.mrb[0].mxu0 %v1495
    %v1563 = vpop.f32.mrb[0].mxu0
    %v1564 = vadd.f32 0.0, %v1563
    %v1565 = vpop.f32.mrb[0].mxu0
    %1566 = vdwg.mxu0
    %v1567 = vld [vmem:[#allocation5 + $0x6] sm:$0x1]
    %v1568 = vadd.f32 %v1567, %v1489
    %v1569 = vld [vmem:[#allocation6 + $0x1] sm:$0x1]
    %v1570 = vadd.f32 %v1569, %v1564
    %v1572 = vrot.slane %v1570, 7
    %v1574 = vsel %vm461, %v1568, %v1572
    %v1575 = vxor.u32 %v1574, 2147483648
    %v1576 = vmul.f32 %v1575, 1.442695
    %v1577 = vpow.pop %v1576
    %v1578 = vadd.f32 %v1577, 1.0
    %v1579 = vrcp.pop %v1578
    %v1580 = vmul.f32 1.0, %v1579
    %v1581 = vtanh.pop %v1574
    %v1582 = vmul.f32 %v1580, %v1407
    %1584 = vrot.lane.b32.xlu0 %v1581, 64
    %v1585 = vpop.permute.xlu0 %1584
    %v1587 = vmul.f32 %v1580, %v1585
    %1589 = vrot.lane.b32.xlu0 %v1587, 32
    %v1590 = vpop.permute.xlu0 %1589
    %v1592 = vadd.f32 %v1582, %v1590
    %v1593 = vtanh.pop %v1592
    %1595 = vrot.lane.b32.xlu0 %v1593, 64
    %v1596 = vpop.permute.xlu0 %1595
    %v1598 = vmul.f32 %v1580, %v1596
    %1600 = vrot.lane.b32.xlu0 %v1598, 32
    %v1601 = vpop.permute.xlu0 %1600
    %1603 = vst.msk [vmem:[#allocation3 + $0x6] sm:$0x1] %vm491, %v1601
    %1604 = vst.msk [vmem:[#allocation4] sm:$0x2] %vm493, %v1601
    %v1605 = vsel %vm43, %v1601, 0
    %1607 = vmatprep.subr.mxu0 0.0
    %1608 = vmatpush1.msra.mxu0 %v118
    %1609 = vmatprep.subr.mxu0 0.0
    %1610 = vmatpush1.msra.mxu0 %v119
    %1611 = vmatprep.subr.mxu0 0.0
    %1612 = vmatpush1.msra.mxu0 %v120
    %1613 = vmatprep.subr.mxu0 0.0
    %1614 = vmatpush1.msra.mxu0 %v121
    %1615 = vmatprep.subr.mxu0 0.0
    %1616 = vmatpush1.msra.mxu0 0.0
    %1617 = vmatprep.subr.mxu0 0.0
    %1618 = vmatpush1.msra.mxu0 0.0
    %1619 = vmatprep.subr.mxu0 0.0
    %1620 = vmatpush1.msra.mxu0 0.0
    %1621 = vmatprep.subr.mxu0 0.0
    %1622 = vmatpush1.msra.mxu0 0.0
    %1623 = vmatprep.subr.mxu0 0.0
    %1624 = vmatpush1.msra.mxu0 0.0
    %1625 = vmatprep.subr.mxu0 0.0
    %1626 = vmatpush1.msra.mxu0 0.0
    %1627 = vmatprep.subr.mxu0 0.0
    %1628 = vmatpush1.msra.mxu0 0.0
    %1629 = vmatprep.subr.mxu0 0.0
    %1630 = vmatpush1.msra.mxu0 0.0
    %1631 = vmatprep.subr.mxu0 0.0
    %1632 = vmatpush1.msra.mxu0 0.0
    %1633 = vmatprep.subr.mxu0 0.0
    %1634 = vmatpush1.msra.mxu0 0.0
    %1635 = vmatprep.subr.mxu0 0.0
    %1636 = vmatpush1.msra.mxu0 0.0
    %1637 = vmatprep.subr.mxu0 0.0
    %1638 = vmatpush1.msra.mxu0 0.0
    %1639 = vmatprep.subr.mxu0 0.0
    %1640 = vmatpush1.msra.mxu0 0.0
    %1641 = vmatprep.subr.mxu0 0.0
    %1642 = vmatpush1.msra.mxu0 0.0
    %1643 = vmatprep.subr.mxu0 0.0
    %1644 = vmatpush1.msra.mxu0 0.0
    %1645 = vmatprep.subr.mxu0 0.0
    %1646 = vmatpush1.msra.mxu0 0.0
    %1647 = vmatprep.subr.mxu0 0.0
    %1648 = vmatpush1.msra.mxu0 0.0
    %1649 = vmatprep.subr.mxu0 0.0
    %1650 = vmatpush1.msra.mxu0 0.0
    %1651 = vmatprep.subr.mxu0 0.0
    %1652 = vmatpush1.msra.mxu0 0.0
    %1653 = vmatprep.subr.mxu0 0.0
    %1654 = vmatpush1.msra.mxu0 0.0
    %1655 = vmatprep.subr.mxu0 0.0
    %1656 = vmatpush1.msra.mxu0 0.0
    %1657 = vmatprep.subr.mxu0 0.0
    %1658 = vmatpush1.msra.mxu0 0.0
    %1659 = vmatprep.subr.mxu0 0.0
    %1660 = vmatpush1.msra.mxu0 0.0
    %1661 = vmatprep.subr.mxu0 0.0
    %1662 = vmatpush1.msra.mxu0 0.0
    %1663 = vmatprep.subr.mxu0 0.0
    %1664 = vmatpush1.msra.mxu0 0.0
    %1665 = vmatprep.subr.mxu0 0.0
    %1666 = vmatpush1.msra.mxu0 0.0
    %1667 = vmatprep.subr.mxu0 0.0
    %1668 = vmatpush1.msra.mxu0 0.0
    %1669 = vmatprep.subr.mxu0 0.0
    %1670 = vmatpush1.msra.mxu0 0.0
    %1671 = vmatprep.mubr.f32.mxu0 0.0
    %1672 = vmatmul.mubr.f32.gmra.mrb[0].mxu0 %v1605
    %v1673 = vpop.f32.mrb[0].mxu0
    %v1674 = vadd.f32 0.0, %v1673
    %v1675 = vpop.f32.mrb[0].mxu0
    %1676 = vdwg.mxu0
    %v1677 = vrot.slane %v1598, 1
    %1678 = vrot.lane.b32.xlu0 %v1677, 32
    %v1679 = vpop.permute.xlu0 %1678
    %v1680 = vsel %vm43, %v1679, 0
    %1682 = vmatprep.subr.mxu0 0.0
    %1683 = vmatpush1.msra.mxu0 %v122
    %1684 = vmatprep.subr.mxu0 0.0
    %1685 = vmatpush1.msra.mxu0 %v123
    %1686 = vmatprep.subr.mxu0 0.0
    %1687 = vmatpush1.msra.mxu0 %v124
    %1688 = vmatprep.subr.mxu0 0.0
    %1689 = vmatpush1.msra.mxu0 %v125
    %1690 = vmatprep.subr.mxu0 0.0
    %1691 = vmatpush1.msra.mxu0 0.0
    %1692 = vmatprep.subr.mxu0 0.0
    %1693 = vmatpush1.msra.mxu0 0.0
    %1694 = vmatprep.subr.mxu0 0.0
    %1695 = vmatpush1.msra.mxu0 0.0
    %1696 = vmatprep.subr.mxu0 0.0
    %1697 = vmatpush1.msra.mxu0 0.0
    %1698 = vmatprep.subr.mxu0 0.0
    %1699 = vmatpush1.msra.mxu0 0.0
    %1700 = vmatprep.subr.mxu0 0.0
    %1701 = vmatpush1.msra.mxu0 0.0
    %1702 = vmatprep.subr.mxu0 0.0
    %1703 = vmatpush1.msra.mxu0 0.0
    %1704 = vmatprep.subr.mxu0 0.0
    %1705 = vmatpush1.msra.mxu0 0.0
    %1706 = vmatprep.subr.mxu0 0.0
    %1707 = vmatpush1.msra.mxu0 0.0
    %1708 = vmatprep.subr.mxu0 0.0
    %1709 = vmatpush1.msra.mxu0 0.0
    %1710 = vmatprep.subr.mxu0 0.0
    %1711 = vmatpush1.msra.mxu0 0.0
    %1712 = vmatprep.subr.mxu0 0.0
    %1713 = vmatpush1.msra.mxu0 0.0
    %1714 = vmatprep.subr.mxu0 0.0
    %1715 = vmatpush1.msra.mxu0 0.0
    %1716 = vmatprep.subr.mxu0 0.0
    %1717 = vmatpush1.msra.mxu0 0.0
    %1718 = vmatprep.subr.mxu0 0.0
    %1719 = vmatpush1.msra.mxu0 0.0
    %1720 = vmatprep.subr.mxu0 0.0
    %1721 = vmatpush1.msra.mxu0 0.0
    %1722 = vmatprep.subr.mxu0 0.0
    %1723 = vmatpush1.msra.mxu0 0.0
    %1724 = vmatprep.subr.mxu0 0.0
    %1725 = vmatpush1.msra.mxu0 0.0
    %1726 = vmatprep.subr.mxu0 0.0
    %1727 = vmatpush1.msra.mxu0 0.0
    %1728 = vmatprep.subr.mxu0 0.0
    %1729 = vmatpush1.msra.mxu0 0.0
    %1730 = vmatprep.subr.mxu0 0.0
    %1731 = vmatpush1.msra.mxu0 0.0
    %1732 = vmatprep.subr.mxu0 0.0
    %1733 = vmatpush1.msra.mxu0 0.0
    %1734 = vmatprep.subr.mxu0 0.0
    %1735 = vmatpush1.msra.mxu0 0.0
    %1736 = vmatprep.subr.mxu0 0.0
    %1737 = vmatpush1.msra.mxu0 0.0
    %1738 = vmatprep.subr.mxu0 0.0
    %1739 = vmatpush1.msra.mxu0 0.0
    %1740 = vmatprep.subr.mxu0 0.0
    %1741 = vmatpush1.msra.mxu0 0.0
    %1742 = vmatprep.subr.mxu0 0.0
    %1743 = vmatpush1.msra.mxu0 0.0
    %1744 = vmatprep.subr.mxu0 0.0
    %1745 = vmatpush1.msra.mxu0 0.0
    %1746 = vmatprep.mubr.f32.mxu0 0.0
    %1747 = vmatmul.mubr.f32.gmra.mrb[0].mxu0 %v1680
    %v1748 = vpop.f32.mrb[0].mxu0
    %v1749 = vadd.f32 0.0, %v1748
    %v1750 = vpop.f32.mrb[0].mxu0
    %1751 = vdwg.mxu0
    %v1752 = vld [vmem:[#allocation5 + $0x7] sm:$0x1]
    %v1753 = vadd.f32 %v1752, %v1674
    %v1754 = vld [vmem:[#allocation6] sm:$0x1]
    %v1755 = vadd.f32 %v1754, %v1749
    %v1757 = vrot.slane %v1755, 7
    %v1759 = vsel %vm461, %v1753, %v1757
    %v1760 = vxor.u32 %v1759, 2147483648
    %v1761 = vmul.f32 %v1760, 1.442695
    %v1762 = vpow.pop %v1761
    %v1763 = vadd.f32 %v1762, 1.0
    %v1764 = vrcp.pop %v1763
    %v1765 = vmul.f32 1.0, %v1764
    %v1766 = vtanh.pop %v1759
    %v1767 = vmul.f32 %v1765, %v1592
    %1769 = vrot.lane.b32.xlu0 %v1766, 64
    %v1770 = vpop.permute.xlu0 %1769
    %v1772 = vmul.f32 %v1765, %v1770
    %1774 = vrot.lane.b32.xlu0 %v1772, 32
    %v1775 = vpop.permute.xlu0 %1774
    %v1777 = vadd.f32 %v1767, %v1775
    %v1778 = vtanh.pop %v1777
    %1780 = vrot.lane.b32.xlu0 %v1778, 64
    %v1781 = vpop.permute.xlu0 %1780
    %v1783 = vmul.f32 %v1765, %v1781
    %1785 = vrot.lane.b32.xlu0 %v1783, 32
    %v1786 = vpop.permute.xlu0 %1785
    %1788 = vst.msk [vmem:[#allocation3 + $0x7] sm:$0x1] %vm491, %v1786
    %1789 = vst.msk [vmem:[#allocation4 - $0x1] sm:$0x2] %vm493, %v1786
    %v1790 = vld [vmem:[#allocation3] sm:$0xff]
    %v1791 = vld [vmem:[#allocation4] sm:$0xff]
    %1793 = vrot.lane.b32.xlu0 %v1791, 32
    %v1794 = vpop.permute.xlu0 %1793
    %v1796 = vsel %vm43, %v1790, %v1794
    %vm1797 = vcmask 523264
    %v1798 = vsel %vm1797, %v1796, 0.0
    %1799 = vst [vmem:[#allocation2] sm:$0xff] %v1798
    %v1800 = vld [vmem:[#allocation8 + $0x240] sm:$0xff]
    %v1801 = vld [vmem:[#allocation8 + $0x248] sm:$0xff]
    %v1802 = vld [vmem:[#allocation8 + $0x250] sm:$0xff]
    %v1803 = vld [vmem:[#allocation8 + $0x258] sm:$0xff]
    %v1804 = vld [vmem:[#allocation8 + $0x260] sm:$0xff]
    %v1805 = vld [vmem:[#allocation8 + $0x268] sm:$0xff]
    %v1806 = vld [vmem:[#allocation8 + $0x270] sm:$0xff]
    %v1807 = vld [vmem:[#allocation8 + $0x278] sm:$0xff]
    %v1808 = vld [vmem:[#allocation8 + $0x290] sm:$0x1]
    %v1809 = vld [vmem:[#allocation8 + $0x298] sm:$0x1]
    %v1810 = vld [vmem:[#allocation2] sm:$0xff]
    %v1811 = vld [vmem:[#allocation8 + $0x100] sm:$0xff]
    %v1812 = vld [vmem:[#allocation8 + $0x108] sm:$0xff]
    %v1813 = vld [vmem:[#allocation8 + $0x110] sm:$0xff]
    %v1814 = vld [vmem:[#allocation8 + $0x118] sm:$0xff]
    %v1815 = vld [vmem:[#allocation8 + $0x120] sm:$0xff]
    %v1816 = vld [vmem:[#allocation8 + $0x128] sm:$0xff]
    %v1817 = vld [vmem:[#allocation8 + $0x130] sm:$0xff]
    %v1818 = vld [vmem:[#allocation8 + $0x138] sm:$0xff]
    %v1819 = vld [vmem:[#allocation8 + $0x140] sm:$0xff]
    %v1820 = vld [vmem:[#allocation8 + $0x148] sm:$0xff]
    %v1821 = vld [vmem:[#allocation8 + $0x150] sm:$0xff]
    %v1822 = vld [vmem:[#allocation8 + $0x158] sm:$0xff]
    %v1823 = vld [vmem:[#allocation8 + $0x160] sm:$0xff]
    %v1824 = vld [vmem:[#allocation8 + $0x168] sm:$0xff]
    %v1825 = vld [vmem:[#allocation8 + $0x170] sm:$0xff]
    %v1826 = vld [vmem:[#allocation8 + $0x178] sm:$0xff]
    %v1827 = vlaneseq
    %v1828 = vshrl.u32 %v1827, 7
    %v1829 = vsub.s32 0, %v1828
    %v1830 = vrot.slane %v1808, %v1829
    %1831 = vmatprep.subr.mxu0 0.0
    %1832 = vmatpush1.msra.mxu0 %v1811
    %1833 = vmatprep.subr.mxu0 0.0
    %1834 = vmatpush1.msra.mxu0 %v1812
    %1835 = vmatprep.subr.mxu0 0.0
    %1836 = vmatpush1.msra.mxu0 %v1813
    %1837 = vmatprep.subr.mxu0 0.0
    %1838 = vmatpush1.msra.mxu0 %v1814
    %1839 = vmatprep.subr.mxu0 0.0
    %1840 = vmatpush1.msra.mxu0 %v1815
    %1841 = vmatprep.subr.mxu0 0.0
    %1842 = vmatpush1.msra.mxu0 %v1816
    %1843 = vmatprep.subr.mxu0 0.0
    %1844 = vmatpush1.msra.mxu0 %v1817
    %1845 = vmatprep.subr.mxu0 0.0
    %1846 = vmatpush1.msra.mxu0 %v1818
    %1847 = vmatprep.subr.mxu0 0.0
    %1848 = vmatpush1.msra.mxu0 %v1819
    %1849 = vmatprep.subr.mxu0 0.0
    %1850 = vmatpush1.msra.mxu0 %v1820
    %1851 = vmatprep.subr.mxu0 0.0
    %1852 = vmatpush1.msra.mxu0 %v1821
    %1853 = vmatprep.subr.mxu0 0.0
    %1854 = vmatpush1.msra.mxu0 %v1822
    %1855 = vmatprep.subr.mxu0 0.0
    %1856 = vmatpush1.msra.mxu0 %v1823
    %1857 = vmatprep.subr.mxu0 0.0
    %1858 = vmatpush1.msra.mxu0 %v1824
    %1859 = vmatprep.subr.mxu0 0.0
    %1860 = vmatpush1.msra.mxu0 %v1825
    %1861 = vmatprep.subr.mxu0 0.0
    %1862 = vmatpush1.msra.mxu0 %v1826
    %1863 = vmatprep.subr.mxu0 0.0
    %1864 = vmatpush1.msra.mxu0 0.0
    %1865 = vmatprep.subr.mxu0 0.0
    %1866 = vmatpush1.msra.mxu0 0.0
    %1867 = vmatprep.subr.mxu0 0.0
    %1868 = vmatpush1.msra.mxu0 0.0
    %1869 = vmatprep.subr.mxu0 0.0
    %1870 = vmatpush1.msra.mxu0 0.0
    %1871 = vmatprep.subr.mxu0 0.0
    %1872 = vmatpush1.msra.mxu0 0.0
    %1873 = vmatprep.subr.mxu0 0.0
    %1874 = vmatpush1.msra.mxu0 0.0
    %1875 = vmatprep.subr.mxu0 0.0
    %1876 = vmatpush1.msra.mxu0 0.0
    %1877 = vmatprep.subr.mxu0 0.0
    %1878 = vmatpush1.msra.mxu0 0.0
    %1879 = vmatprep.subr.mxu0 0.0
    %1880 = vmatpush1.msra.mxu0 0.0
    %1881 = vmatprep.subr.mxu0 0.0
    %1882 = vmatpush1.msra.mxu0 0.0
    %1883 = vmatprep.subr.mxu0 0.0
    %1884 = vmatpush1.msra.mxu0 0.0
    %1885 = vmatprep.subr.mxu0 0.0
    %1886 = vmatpush1.msra.mxu0 0.0
    %1887 = vmatprep.subr.mxu0 0.0
    %1888 = vmatpush1.msra.mxu0 0.0
    %1889 = vmatprep.subr.mxu0 0.0
    %1890 = vmatpush1.msra.mxu0 0.0
    %1891 = vmatprep.subr.mxu0 0.0
    %1892 = vmatpush1.msra.mxu0 0.0
    %1893 = vmatprep.subr.mxu0 0.0
    %1894 = vmatpush1.msra.mxu0 0.0
    %1895 = vmatprep.mubr.f32.mxu0 0.0
    %1896 = vmatmul.mubr.f32.gmra.mrb[0].mxu0 %v1810
    %v1897 = vpop.f32.mrb[0].mxu0
    %v1898 = vadd.f32 %v1830, %v1897
    %v1899 = vpop.f32.mrb[0].mxu0
    %1900 = vdwg.mxu0
    %1901 = vst [vmem:[#allocation5] sm:$0xff] %v1898
    %v1902 = vld [vmem:[#allocation8 + $0x180] sm:$0xff]
    %v1903 = vld [vmem:[#allocation8 + $0x188] sm:$0xff]
    %v1904 = vld [vmem:[#allocation8 + $0x190] sm:$0xff]
    %v1905 = vld [vmem:[#allocation8 + $0x198] sm:$0xff]
    %v1906 = vld [vmem:[#allocation8 + $0x1a0] sm:$0xff]
    %v1907 = vld [vmem:[#allocation8 + $0x1a8] sm:$0xff]
    %v1908 = vld [vmem:[#allocation8 + $0x1b0] sm:$0xff]
    %v1909 = vld [vmem:[#allocation8 + $0x1b8] sm:$0xff]
    %v1910 = vld [vmem:[#allocation8 + $0x1c0] sm:$0xff]
    %v1911 = vld [vmem:[#allocation8 + $0x1c8] sm:$0xff]
    %v1912 = vld [vmem:[#allocation8 + $0x1d0] sm:$0xff]
    %v1913 = vld [vmem:[#allocation8 + $0x1d8] sm:$0xff]
    %v1914 = vld [vmem:[#allocation8 + $0x1e0] sm:$0xff]
    %v1915 = vld [vmem:[#allocation8 + $0x1e8] sm:$0xff]
    %v1916 = vld [vmem:[#allocation8 + $0x1f0] sm:$0xff]
    %v1917 = vld [vmem:[#allocation8 + $0x1f8] sm:$0xff]
    %v1918 = vlaneseq
    %v1919 = vshrl.u32 %v1918, 7
    %v1920 = vsub.s32 0, %v1919
    %v1921 = vrot.slane %v1809, %v1920
    %1922 = vmatprep.subr.mxu0 0.0
    %1923 = vmatpush1.msra.mxu0 %v1902
    %1924 = vmatprep.subr.mxu0 0.0
    %1925 = vmatpush1.msra.mxu0 %v1903
    %1926 = vmatprep.subr.mxu0 0.0
    %1927 = vmatpush1.msra.mxu0 %v1904
    %1928 = vmatprep.subr.mxu0 0.0
    %1929 = vmatpush1.msra.mxu0 %v1905
    %1930 = vmatprep.subr.mxu0 0.0
    %1931 = vmatpush1.msra.mxu0 %v1906
    %1932 = vmatprep.subr.mxu0 0.0
    %1933 = vmatpush1.msra.mxu0 %v1907
    %1934 = vmatprep.subr.mxu0 0.0
    %1935 = vmatpush1.msra.mxu0 %v1908
    %1936 = vmatprep.subr.mxu0 0.0
    %1937 = vmatpush1.msra.mxu0 %v1909
    %1938 = vmatprep.subr.mxu0 0.0
    %1939 = vmatpush1.msra.mxu0 %v1910
    %1940 = vmatprep.subr.mxu0 0.0
    %1941 = vmatpush1.msra.mxu0 %v1911
    %1942 = vmatprep.subr.mxu0 0.0
    %1943 = vmatpush1.msra.mxu0 %v1912
    %1944 = vmatprep.subr.mxu0 0.0
    %1945 = vmatpush1.msra.mxu0 %v1913
    %1946 = vmatprep.subr.mxu0 0.0
    %1947 = vmatpush1.msra.mxu0 %v1914
    %1948 = vmatprep.subr.mxu0 0.0
    %1949 = vmatpush1.msra.mxu0 %v1915
    %1950 = vmatprep.subr.mxu0 0.0
    %1951 = vmatpush1.msra.mxu0 %v1916
    %1952 = vmatprep.subr.mxu0 0.0
    %1953 = vmatpush1.msra.mxu0 %v1917
    %1954 = vmatprep.subr.mxu0 0.0
    %1955 = vmatpush1.msra.mxu0 0.0
    %1956 = vmatprep.subr.mxu0 0.0
    %1957 = vmatpush1.msra.mxu0 0.0
    %1958 = vmatprep.subr.mxu0 0.0
    %1959 = vmatpush1.msra.mxu0 0.0
    %1960 = vmatprep.subr.mxu0 0.0
    %1961 = vmatpush1.msra.mxu0 0.0
    %1962 = vmatprep.subr.mxu0 0.0
    %1963 = vmatpush1.msra.mxu0 0.0
    %1964 = vmatprep.subr.mxu0 0.0
    %1965 = vmatpush1.msra.mxu0 0.0
    %1966 = vmatprep.subr.mxu0 0.0
    %1967 = vmatpush1.msra.mxu0 0.0
    %1968 = vmatprep.subr.mxu0 0.0
    %1969 = vmatpush1.msra.mxu0 0.0
    %1970 = vmatprep.subr.mxu0 0.0
    %1971 = vmatpush1.msra.mxu0 0.0
    %1972 = vmatprep.subr.mxu0 0.0
    %1973 = vmatpush1.msra.mxu0 0.0
    %1974 = vmatprep.subr.mxu0 0.0
    %1975 = vmatpush1.msra.mxu0 0.0
    %1976 = vmatprep.subr.mxu0 0.0
    %1977 = vmatpush1.msra.mxu0 0.0
    %1978 = vmatprep.subr.mxu0 0.0
    %1979 = vmatpush1.msra.mxu0 0.0
    %1980 = vmatprep.subr.mxu0 0.0
    %1981 = vmatpush1.msra.mxu0 0.0
    %1982 = vmatprep.subr.mxu0 0.0
    %1983 = vmatpush1.msra.mxu0 0.0
    %1984 = vmatprep.subr.mxu0 0.0
    %1985 = vmatpush1.msra.mxu0 0.0
    %1986 = vmatprep.mubr.f32.mxu0 0.0
    %1987 = vmatmul.mubr.f32.gmra.mrb[0].mxu0 %v1810
    %v1988 = vpop.f32.mrb[0].mxu0
    %v1989 = vadd.f32 %v1921, %v1988
    %v1990 = vpop.f32.mrb[0].mxu0
    %1991 = vdwg.mxu0
    %1992 = vst [vmem:[#allocation6] sm:$0xff] %v1989
    %1993 = vmatprep.subr.mxu0 0.0
    %1994 = vmatpush1.msra.mxu0 %v1800
    %1995 = vmatprep.subr.mxu0 0.0
    %1996 = vmatpush1.msra.mxu0 %v1801
    %1997 = vmatprep.subr.mxu0 0.0
    %1998 = vmatpush1.msra.mxu0 %v1802
    %1999 = vmatprep.subr.mxu0 0.0
    %2000 = vmatpush1.msra.mxu0 %v1803
    %2001 = vmatprep.subr.mxu0 0.0
    %2002 = vmatpush1.msra.mxu0 0.0
    %2003 = vmatprep.subr.mxu0 0.0
    %2004 = vmatpush1.msra.mxu0 0.0
    %2005 = vmatprep.subr.mxu0 0.0
    %2006 = vmatpush1.msra.mxu0 0.0
    %2007 = vmatprep.subr.mxu0 0.0
    %2008 = vmatpush1.msra.mxu0 0.0
    %2009 = vmatprep.subr.mxu0 0.0
    %2010 = vmatpush1.msra.mxu0 0.0
    %2011 = vmatprep.subr.mxu0 0.0
    %2012 = vmatpush1.msra.mxu0 0.0
    %2013 = vmatprep.subr.mxu0 0.0
    %2014 = vmatpush1.msra.mxu0 0.0
    %2015 = vmatprep.subr.mxu0 0.0
    %2016 = vmatpush1.msra.mxu0 0.0
    %2017 = vmatprep.subr.mxu0 0.0
    %2018 = vmatpush1.msra.mxu0 0.0
    %2019 = vmatprep.subr.mxu0 0.0
    %2020 = vmatpush1.msra.mxu0 0.0
    %2021 = vmatprep.subr.mxu0 0.0
    %2022 = vmatpush1.msra.mxu0 0.0
    %2023 = vmatprep.subr.mxu0 0.0
    %2024 = vmatpush1.msra.mxu0 0.0
    %2025 = vmatprep.subr.mxu0 0.0
    %2026 = vmatpush1.msra.mxu0 0.0
    %2027 = vmatprep.subr.mxu0 0.0
    %2028 = vmatpush1.msra.mxu0 0.0
    %2029 = vmatprep.subr.mxu0 0.0
    %2030 = vmatpush1.msra.mxu0 0.0
    %2031 = vmatprep.subr.mxu0 0.0
    %2032 = vmatpush1.msra.mxu0 0.0
    %2033 = vmatprep.subr.mxu0 0.0
    %2034 = vmatpush1.msra.mxu0 0.0
    %2035 = vmatprep.subr.mxu0 0.0
    %2036 = vmatpush1.msra.mxu0 0.0
    %2037 = vmatprep.subr.mxu0 0.0
    %2038 = vmatpush1.msra.mxu0 0.0
    %2039 = vmatprep.subr.mxu0 0.0
    %2040 = vmatpush1.msra.mxu0 0.0
    %2041 = vmatprep.subr.mxu0 0.0
    %2042 = vmatpush1.msra.mxu0 0.0
    %2043 = vmatprep.subr.mxu0 0.0
    %2044 = vmatpush1.msra.mxu0 0.0
    %2045 = vmatprep.subr.mxu0 0.0
    %2046 = vmatpush1.msra.mxu0 0.0
    %2047 = vmatprep.subr.mxu0 0.0
    %2048 = vmatpush1.msra.mxu0 0.0
    %2049 = vmatprep.subr.mxu0 0.0
    %2050 = vmatpush1.msra.mxu0 0.0
    %2051 = vmatprep.subr.mxu0 0.0
    %2052 = vmatpush1.msra.mxu0 0.0
    %2053 = vmatprep.subr.mxu0 0.0
    %2054 = vmatpush1.msra.mxu0 0.0
    %2055 = vmatprep.subr.mxu0 0.0
    %2056 = vmatpush1.msra.mxu0 0.0
    %2057 = vmatprep.mubr.f32.mxu0 0.0
    %2058 = vmatmul.mubr.f32.gmra.mrb[0].mxu0 %v312
    %v2059 = vpop.f32.mrb[0].mxu0
    %v2060 = vadd.f32 0.0, %v2059
    %v2061 = vpop.f32.mrb[0].mxu0
    %2062 = vdwg.mxu0
    %2063 = vmatprep.subr.mxu0 0.0
    %2064 = vmatpush1.msra.mxu0 %v1804
    %2065 = vmatprep.subr.mxu0 0.0
    %2066 = vmatpush1.msra.mxu0 %v1805
    %2067 = vmatprep.subr.mxu0 0.0
    %2068 = vmatpush1.msra.mxu0 %v1806
    %2069 = vmatprep.subr.mxu0 0.0
    %2070 = vmatpush1.msra.mxu0 %v1807
    %2071 = vmatprep.subr.mxu0 0.0
    %2072 = vmatpush1.msra.mxu0 0.0
    %2073 = vmatprep.subr.mxu0 0.0
    %2074 = vmatpush1.msra.mxu0 0.0
    %2075 = vmatprep.subr.mxu0 0.0
    %2076 = vmatpush1.msra.mxu0 0.0
    %2077 = vmatprep.subr.mxu0 0.0
    %2078 = vmatpush1.msra.mxu0 0.0
    %2079 = vmatprep.subr.mxu0 0.0
    %2080 = vmatpush1.msra.mxu0 0.0
    %2081 = vmatprep.subr.mxu0 0.0
    %2082 = vmatpush1.msra.mxu0 0.0
    %2083 = vmatprep.subr.mxu0 0.0
    %2084 = vmatpush1.msra.mxu0 0.0
    %2085 = vmatprep.subr.mxu0 0.0
    %2086 = vmatpush1.msra.mxu0 0.0
    %2087 = vmatprep.subr.mxu0 0.0
    %2088 = vmatpush1.msra.mxu0 0.0
    %2089 = vmatprep.subr.mxu0 0.0
    %2090 = vmatpush1.msra.mxu0 0.0
    %2091 = vmatprep.subr.mxu0 0.0
    %2092 = vmatpush1.msra.mxu0 0.0
    %2093 = vmatprep.subr.mxu0 0.0
    %2094 = vmatpush1.msra.mxu0 0.0
    %2095 = vmatprep.subr.mxu0 0.0
    %2096 = vmatpush1.msra.mxu0 0.0
    %2097 = vmatprep.subr.mxu0 0.0
    %2098 = vmatpush1.msra.mxu0 0.0
    %2099 = vmatprep.subr.mxu0 0.0
    %2100 = vmatpush1.msra.mxu0 0.0
    %2101 = vmatprep.subr.mxu0 0.0
    %2102 = vmatpush1.msra.mxu0 0.0
    %2103 = vmatprep.subr.mxu0 0.0
    %2104 = vmatpush1.msra.mxu0 0.0
    %2105 = vmatprep.subr.mxu0 0.0
    %2106 = vmatpush1.msra.mxu0 0.0
    %2107 = vmatprep.subr.mxu0 0.0
    %2108 = vmatpush1.msra.mxu0 0.0
    %2109 = vmatprep.subr.mxu0 0.0
    %2110 = vmatpush1.msra.mxu0 0.0
    %2111 = vmatprep.subr.mxu0 0.0
    %2112 = vmatpush1.msra.mxu0 0.0
    %2113 = vmatprep.subr.mxu0 0.0
    %2114 = vmatpush1.msra.mxu0 0.0
    %2115 = vmatprep.subr.mxu0 0.0
    %2116 = vmatpush1.msra.mxu0 0.0
    %2117 = vmatprep.subr.mxu0 0.0
    %2118 = vmatpush1.msra.mxu0 0.0
    %2119 = vmatprep.subr.mxu0 0.0
    %2120 = vmatpush1.msra.mxu0 0.0
    %2121 = vmatprep.subr.mxu0 0.0
    %2122 = vmatpush1.msra.mxu0 0.0
    %2123 = vmatprep.subr.mxu0 0.0
    %2124 = vmatpush1.msra.mxu0 0.0
    %2125 = vmatprep.subr.mxu0 0.0
    %2126 = vmatpush1.msra.mxu0 0.0
    %2127 = vmatprep.mubr.f32.mxu0 0.0
    %2128 = vmatmul.mubr.f32.gmra.mrb[0].mxu0 %v312
    %v2129 = vpop.f32.mrb[0].mxu0
    %v2130 = vadd.f32 0.0, %v2129
    %v2131 = vpop.f32.mrb[0].mxu0
    %2132 = vdwg.mxu0
    %v2133 = vld [vmem:[#allocation5] sm:$0x1]
    %v2134 = vadd.f32 %v2133, %v2060
    %v2135 = vld [vmem:[#allocation6 + $0x7] sm:$0x1]
    %v2136 = vadd.f32 %v2135, %v2130
    %v2138 = vrot.slane %v2136, 7
    %v2140 = vsel %vm461, %v2134, %v2138
    %v2141 = vxor.u32 %v2140, 2147483648
    %v2142 = vmul.f32 %v2141, 1.442695
    %v2143 = vpow.pop %v2142
    %v2144 = vadd.f32 %v2143, 1.0
    %v2145 = vrcp.pop %v2144
    %v2146 = vmul.f32 1.0, %v2145
    %v2147 = vtanh.pop %v2140
    %v2148 = vmul.f32 %v2146, 0.0
    %2150 = vrot.lane.b32.xlu0 %v2147, 64
    %v2151 = vpop.permute.xlu0 %2150
    %v2153 = vmul.f32 %v2146, %v2151
    %2155 = vrot.lane.b32.xlu0 %v2153, 32
    %v2156 = vpop.permute.xlu0 %2155
    %v2158 = vadd.f32 %v2148, %v2156
    %v2159 = vtanh.pop %v2158
    %2161 = vrot.lane.b32.xlu0 %v2159, 64
    %v2162 = vpop.permute.xlu0 %2161
    %v2164 = vmul.f32 %v2146, %v2162
    %2166 = vrot.lane.b32.xlu0 %v2164, 32
    %v2167 = vpop.permute.xlu0 %2166
    %v2168 = vsel %vm43, %v2167, 0
    %2170 = vmatprep.subr.mxu0 0.0
    %2171 = vmatpush1.msra.mxu0 %v1800
    %2172 = vmatprep.subr.mxu0 0.0
    %2173 = vmatpush1.msra.mxu0 %v1801
    %2174 = vmatprep.subr.mxu0 0.0
    %2175 = vmatpush1.msra.mxu0 %v1802
    %2176 = vmatprep.subr.mxu0 0.0
    %2177 = vmatpush1.msra.mxu0 %v1803
    %2178 = vmatprep.subr.mxu0 0.0
    %2179 = vmatpush1.msra.mxu0 0.0
    %2180 = vmatprep.subr.mxu0 0.0
    %2181 = vmatpush1.msra.mxu0 0.0
    %2182 = vmatprep.subr.mxu0 0.0
    %2183 = vmatpush1.msra.mxu0 0.0
    %2184 = vmatprep.subr.mxu0 0.0
    %2185 = vmatpush1.msra.mxu0 0.0
    %2186 = vmatprep.subr.mxu0 0.0
    %2187 = vmatpush1.msra.mxu0 0.0
    %2188 = vmatprep.subr.mxu0 0.0
    %2189 = vmatpush1.msra.mxu0 0.0
    %2190 = vmatprep.subr.mxu0 0.0
    %2191 = vmatpush1.msra.mxu0 0.0
    %2192 = vmatprep.subr.mxu0 0.0
    %2193 = vmatpush1.msra.mxu0 0.0
    %2194 = vmatprep.subr.mxu0 0.0
    %2195 = vmatpush1.msra.mxu0 0.0
    %2196 = vmatprep.subr.mxu0 0.0
    %2197 = vmatpush1.msra.mxu0 0.0
    %2198 = vmatprep.subr.mxu0 0.0
    %2199 = vmatpush1.msra.mxu0 0.0
    %2200 = vmatprep.subr.mxu0 0.0
    %2201 = vmatpush1.msra.mxu0 0.0
    %2202 = vmatprep.subr.mxu0 0.0
    %2203 = vmatpush1.msra.mxu0 0.0
    %2204 = vmatprep.subr.mxu0 0.0
    %2205 = vmatpush1.msra.mxu0 0.0
    %2206 = vmatprep.subr.mxu0 0.0
    %2207 = vmatpush1.msra.mxu0 0.0
    %2208 = vmatprep.subr.mxu0 0.0
    %2209 = vmatpush1.msra.mxu0 0.0
    %2210 = vmatprep.subr.mxu0 0.0
    %2211 = vmatpush1.msra.mxu0 0.0
    %2212 = vmatprep.subr.mxu0 0.0
    %2213 = vmatpush1.msra.mxu0 0.0
    %2214 = vmatprep.subr.mxu0 0.0
    %2215 = vmatpush1.msra.mxu0 0.0
    %2216 = vmatprep.subr.mxu0 0.0
    %2217 = vmatpush1.msra.mxu0 0.0
    %2218 = vmatprep.subr.mxu0 0.0
    %2219 = vmatpush1.msra.mxu0 0.0
    %2220 = vmatprep.subr.mxu0 0.0
    %2221 = vmatpush1.msra.mxu0 0.0
    %2222 = vmatprep.subr.mxu0 0.0
    %2223 = vmatpush1.msra.mxu0 0.0
    %2224 = vmatprep.subr.mxu0 0.0
    %2225 = vmatpush1.msra.mxu0 0.0
    %2226 = vmatprep.subr.mxu0 0.0
    %2227 = vmatpush1.msra.mxu0 0.0
    %2228 = vmatprep.subr.mxu0 0.0
    %2229 = vmatpush1.msra.mxu0 0.0
    %2230 = vmatprep.subr.mxu0 0.0
    %2231 = vmatpush1.msra.mxu0 0.0
    %2232 = vmatprep.subr.mxu0 0.0
    %2233 = vmatpush1.msra.mxu0 0.0
    %2234 = vmatprep.mubr.f32.mxu0 0.0
    %2235 = vmatmul.mubr.f32.gmra.mrb[0].mxu0 %v2168
    %v2236 = vpop.f32.mrb[0].mxu0
    %v2237 = vadd.f32 0.0, %v2236
    %v2238 = vpop.f32.mrb[0].mxu0
    %2239 = vdwg.mxu0
    %v2240 = vrot.slane %v2164, 1
    %2241 = vrot.lane.b32.xlu0 %v2240, 32
    %v2242 = vpop.permute.xlu0 %2241
    %v2243 = vsel %vm43, %v2242, 0
    %2245 = vmatprep.subr.mxu0 0.0
    %2246 = vmatpush1.msra.mxu0 %v1804
    %2247 = vmatprep.subr.mxu0 0.0
    %2248 = vmatpush1.msra.mxu0 %v1805
    %2249 = vmatprep.subr.mxu0 0.0
    %2250 = vmatpush1.msra.mxu0 %v1806
    %2251 = vmatprep.subr.mxu0 0.0
    %2252 = vmatpush1.msra.mxu0 %v1807
    %2253 = vmatprep.subr.mxu0 0.0
    %2254 = vmatpush1.msra.mxu0 0.0
    %2255 = vmatprep.subr.mxu0 0.0
    %2256 = vmatpush1.msra.mxu0 0.0
    %2257 = vmatprep.subr.mxu0 0.0
    %2258 = vmatpush1.msra.mxu0 0.0
    %2259 = vmatprep.subr.mxu0 0.0
    %2260 = vmatpush1.msra.mxu0 0.0
    %2261 = vmatprep.subr.mxu0 0.0
    %2262 = vmatpush1.msra.mxu0 0.0
    %2263 = vmatprep.subr.mxu0 0.0
    %2264 = vmatpush1.msra.mxu0 0.0
    %2265 = vmatprep.subr.mxu0 0.0
    %2266 = vmatpush1.msra.mxu0 0.0
    %2267 = vmatprep.subr.mxu0 0.0
    %2268 = vmatpush1.msra.mxu0 0.0
    %2269 = vmatprep.subr.mxu0 0.0
    %2270 = vmatpush1.msra.mxu0 0.0
    %2271 = vmatprep.subr.mxu0 0.0
    %2272 = vmatpush1.msra.mxu0 0.0
    %2273 = vmatprep.subr.mxu0 0.0
    %2274 = vmatpush1.msra.mxu0 0.0
    %2275 = vmatprep.subr.mxu0 0.0
    %2276 = vmatpush1.msra.mxu0 0.0
    %2277 = vmatprep.subr.mxu0 0.0
    %2278 = vmatpush1.msra.mxu0 0.0
    %2279 = vmatprep.subr.mxu0 0.0
    %2280 = vmatpush1.msra.mxu0 0.0
    %2281 = vmatprep.subr.mxu0 0.0
    %2282 = vmatpush1.msra.mxu0 0.0
    %2283 = vmatprep.subr.mxu0 0.0
    %2284 = vmatpush1.msra.mxu0 0.0
    %2285 = vmatprep.subr.mxu0 0.0
    %2286 = vmatpush1.msra.mxu0 0.0
    %2287 = vmatprep.subr.mxu0 0.0
    %2288 = vmatpush1.msra.mxu0 0.0
    %2289 = vmatprep.subr.mxu0 0.0
    %2290 = vmatpush1.msra.mxu0 0.0
    %2291 = vmatprep.subr.mxu0 0.0
    %2292 = vmatpush1.msra.mxu0 0.0
    %2293 = vmatprep.subr.mxu0 0.0
    %2294 = vmatpush1.msra.mxu0 0.0
    %2295 = vmatprep.subr.mxu0 0.0
    %2296 = vmatpush1.msra.mxu0 0.0
    %2297 = vmatprep.subr.mxu0 0.0
    %2298 = vmatpush1.msra.mxu0 0.0
    %2299 = vmatprep.subr.mxu0 0.0
    %2300 = vmatpush1.msra.mxu0 0.0
    %2301 = vmatprep.subr.mxu0 0.0
    %2302 = vmatpush1.msra.mxu0 0.0
    %2303 = vmatprep.subr.mxu0 0.0
    %2304 = vmatpush1.msra.mxu0 0.0
    %2305 = vmatprep.subr.mxu0 0.0
    %2306 = vmatpush1.msra.mxu0 0.0
    %2307 = vmatprep.subr.mxu0 0.0
    %2308 = vmatpush1.msra.mxu0 0.0
    %2309 = vmatprep.mubr.f32.mxu0 0.0
    %2310 = vmatmul.mubr.f32.gmra.mrb[0].mxu0 %v2243
    %v2311 = vpop.f32.mrb[0].mxu0
    %v2312 = vadd.f32 0.0, %v2311
    %v2313 = vpop.f32.mrb[0].mxu0
    %2314 = vdwg.mxu0
    %v2315 = vld [vmem:[#allocation5 + $0x1] sm:$0x1]
    %v2316 = vadd.f32 %v2315, %v2237
    %v2317 = vld [vmem:[#allocation6 + $0x6] sm:$0x1]
    %v2318 = vadd.f32 %v2317, %v2312
    %v2320 = vrot.slane %v2318, 7
    %v2322 = vsel %vm461, %v2316, %v2320
    %v2323 = vxor.u32 %v2322, 2147483648
    %v2324 = vmul.f32 %v2323, 1.442695
    %v2325 = vpow.pop %v2324
    %v2326 = vadd.f32 %v2325, 1.0
    %v2327 = vrcp.pop %v2326
    %v2328 = vmul.f32 1.0, %v2327
    %v2329 = vtanh.pop %v2322
    %v2330 = vmul.f32 %v2328, %v2158
    %2332 = vrot.lane.b32.xlu0 %v2329, 64
    %v2333 = vpop.permute.xlu0 %2332
    %v2335 = vmul.f32 %v2328, %v2333
    %2337 = vrot.lane.b32.xlu0 %v2335, 32
    %v2338 = vpop.permute.xlu0 %2337
    %v2340 = vadd.f32 %v2330, %v2338
    %v2341 = vtanh.pop %v2340
    %2343 = vrot.lane.b32.xlu0 %v2341, 64
    %v2344 = vpop.permute.xlu0 %2343
    %v2346 = vmul.f32 %v2328, %v2344
    %2348 = vrot.lane.b32.xlu0 %v2346, 32
    %v2349 = vpop.permute.xlu0 %2348
    %v2350 = vsel %vm43, %v2349, 0
    %2352 = vmatprep.subr.mxu0 0.0
    %2353 = vmatpush1.msra.mxu0 %v1800
    %2354 = vmatprep.subr.mxu0 0.0
    %2355 = vmatpush1.msra.mxu0 %v1801
    %2356 = vmatprep.subr.mxu0 0.0
    %2357 = vmatpush1.msra.mxu0 %v1802
    %2358 = vmatprep.subr.mxu0 0.0
    %2359 = vmatpush1.msra.mxu0 %v1803
    %2360 = vmatprep.subr.mxu0 0.0
    %2361 = vmatpush1.msra.mxu0 0.0
    %2362 = vmatprep.subr.mxu0 0.0
    %2363 = vmatpush1.msra.mxu0 0.0
    %2364 = vmatprep.subr.mxu0 0.0
    %2365 = vmatpush1.msra.mxu0 0.0
    %2366 = vmatprep.subr.mxu0 0.0
    %2367 = vmatpush1.msra.mxu0 0.0
    %2368 = vmatprep.subr.mxu0 0.0
    %2369 = vmatpush1.msra.mxu0 0.0
    %2370 = vmatprep.subr.mxu0 0.0
    %2371 = vmatpush1.msra.mxu0 0.0
    %2372 = vmatprep.subr.mxu0 0.0
    %2373 = vmatpush1.msra.mxu0 0.0
    %2374 = vmatprep.subr.mxu0 0.0
    %2375 = vmatpush1.msra.mxu0 0.0
    %2376 = vmatprep.subr.mxu0 0.0
    %2377 = vmatpush1.msra.mxu0 0.0
    %2378 = vmatprep.subr.mxu0 0.0
    %2379 = vmatpush1.msra.mxu0 0.0
    %2380 = vmatprep.subr.mxu0 0.0
    %2381 = vmatpush1.msra.mxu0 0.0
    %2382 = vmatprep.subr.mxu0 0.0
    %2383 = vmatpush1.msra.mxu0 0.0
    %2384 = vmatprep.subr.mxu0 0.0
    %2385 = vmatpush1.msra.mxu0 0.0
    %2386 = vmatprep.subr.mxu0 0.0
    %2387 = vmatpush1.msra.mxu0 0.0
    %2388 = vmatprep.subr.mxu0 0.0
    %2389 = vmatpush1.msra.mxu0 0.0
    %2390 = vmatprep.subr.mxu0 0.0
    %2391 = vmatpush1.msra.mxu0 0.0
    %2392 = vmatprep.subr.mxu0 0.0
    %2393 = vmatpush1.msra.mxu0 0.0
    %2394 = vmatprep.subr.mxu0 0.0
    %2395 = vmatpush1.msra.mxu0 0.0
    %2396 = vmatprep.subr.mxu0 0.0
    %2397 = vmatpush1.msra.mxu0 0.0
    %2398 = vmatprep.subr.mxu0 0.0
    %2399 = vmatpush1.msra.mxu0 0.0
    %2400 = vmatprep.subr.mxu0 0.0
    %2401 = vmatpush1.msra.mxu0 0.0
    %2402 = vmatprep.subr.mxu0 0.0
    %2403 = vmatpush1.msra.mxu0 0.0
    %2404 = vmatprep.subr.mxu0 0.0
    %2405 = vmatpush1.msra.mxu0 0.0
    %2406 = vmatprep.subr.mxu0 0.0
    %2407 = vmatpush1.msra.mxu0 0.0
    %2408 = vmatprep.subr.mxu0 0.0
    %2409 = vmatpush1.msra.mxu0 0.0
    %2410 = vmatprep.subr.mxu0 0.0
    %2411 = vmatpush1.msra.mxu0 0.0
    %2412 = vmatprep.subr.mxu0 0.0
    %2413 = vmatpush1.msra.mxu0 0.0
    %2414 = vmatprep.subr.mxu0 0.0
    %2415 = vmatpush1.msra.mxu0 0.0
    %2416 = vmatprep.mubr.f32.mxu0 0.0
    %2417 = vmatmul.mubr.f32.gmra.mrb[0].mxu0 %v2350
    %v2418 = vpop.f32.mrb[0].mxu0
    %v2419 = vadd.f32 0.0, %v2418
    %v2420 = vpop.f32.mrb[0].mxu0
    %2421 = vdwg.mxu0
    %v2422 = vrot.slane %v2346, 1
    %2423 = vrot.lane.b32.xlu0 %v2422, 32
    %v2424 = vpop.permute.xlu0 %2423
    %v2425 = vsel %vm43, %v2424, 0
    %2427 = vmatprep.subr.mxu0 0.0
    %2428 = vmatpush1.msra.mxu0 %v1804
    %2429 = vmatprep.subr.mxu0 0.0
    %2430 = vmatpush1.msra.mxu0 %v1805
    %2431 = vmatprep.subr.mxu0 0.0
    %2432 = vmatpush1.msra.mxu0 %v1806
    %2433 = vmatprep.subr.mxu0 0.0
    %2434 = vmatpush1.msra.mxu0 %v1807
    %2435 = vmatprep.subr.mxu0 0.0
    %2436 = vmatpush1.msra.mxu0 0.0
    %2437 = vmatprep.subr.mxu0 0.0
    %2438 = vmatpush1.msra.mxu0 0.0
    %2439 = vmatprep.subr.mxu0 0.0
    %2440 = vmatpush1.msra.mxu0 0.0
    %2441 = vmatprep.subr.mxu0 0.0
    %2442 = vmatpush1.msra.mxu0 0.0
    %2443 = vmatprep.subr.mxu0 0.0
    %2444 = vmatpush1.msra.mxu0 0.0
    %2445 = vmatprep.subr.mxu0 0.0
    %2446 = vmatpush1.msra.mxu0 0.0
    %2447 = vmatprep.subr.mxu0 0.0
    %2448 = vmatpush1.msra.mxu0 0.0
    %2449 = vmatprep.subr.mxu0 0.0
    %2450 = vmatpush1.msra.mxu0 0.0
    %2451 = vmatprep.subr.mxu0 0.0
    %2452 = vmatpush1.msra.mxu0 0.0
    %2453 = vmatprep.subr.mxu0 0.0
    %2454 = vmatpush1.msra.mxu0 0.0
    %2455 = vmatprep.subr.mxu0 0.0
    %2456 = vmatpush1.msra.mxu0 0.0
    %2457 = vmatprep.subr.mxu0 0.0
    %2458 = vmatpush1.msra.mxu0 0.0
    %2459 = vmatprep.subr.mxu0 0.0
    %2460 = vmatpush1.msra.mxu0 0.0
    %2461 = vmatprep.subr.mxu0 0.0
    %2462 = vmatpush1.msra.mxu0 0.0
    %2463 = vmatprep.subr.mxu0 0.0
    %2464 = vmatpush1.msra.mxu0 0.0
    %2465 = vmatprep.subr.mxu0 0.0
    %2466 = vmatpush1.msra.mxu0 0.0
    %2467 = vmatprep.subr.mxu0 0.0
    %2468 = vmatpush1.msra.mxu0 0.0
    %2469 = vmatprep.subr.mxu0 0.0
    %2470 = vmatpush1.msra.mxu0 0.0
    %2471 = vmatprep.subr.mxu0 0.0
    %2472 = vmatpush1.msra.mxu0 0.0
    %2473 = vmatprep.subr.mxu0 0.0
    %2474 = vmatpush1.msra.mxu0 0.0
    %2475 = vmatprep.subr.mxu0 0.0
    %2476 = vmatpush1.msra.mxu0 0.0
    %2477 = vmatprep.subr.mxu0 0.0
    %2478 = vmatpush1.msra.mxu0 0.0
    %2479 = vmatprep.subr.mxu0 0.0
    %2480 = vmatpush1.msra.mxu0 0.0
    %2481 = vmatprep.subr.mxu0 0.0
    %2482 = vmatpush1.msra.mxu0 0.0
    %2483 = vmatprep.subr.mxu0 0.0
    %2484 = vmatpush1.msra.mxu0 0.0
    %2485 = vmatprep.subr.mxu0 0.0
    %2486 = vmatpush1.msra.mxu0 0.0
    %2487 = vmatprep.subr.mxu0 0.0
    %2488 = vmatpush1.msra.mxu0 0.0
    %2489 = vmatprep.subr.mxu0 0.0
    %2490 = vmatpush1.msra.mxu0 0.0
    %2491 = vmatprep.mubr.f32.mxu0 0.0
    %2492 = vmatmul.mubr.f32.gmra.mrb[0].mxu0 %v2425
    %v2493 = vpop.f32.mrb[0].mxu0
    %v2494 = vadd.f32 0.0, %v2493
    %v2495 = vpop.f32.mrb[0].mxu0
    %2496 = vdwg.mxu0
    %v2497 = vld [vmem:[#allocation5 + $0x2] sm:$0x1]
    %v2498 = vadd.f32 %v2497, %v2419
    %v2499 = vld [vmem:[#allocation6 + $0x5] sm:$0x1]
    %v2500 = vadd.f32 %v2499, %v2494
    %v2502 = vrot.slane %v2500, 7
    %v2504 = vsel %vm461, %v2498, %v2502
    %v2505 = vxor.u32 %v2504, 2147483648
    %v2506 = vmul.f32 %v2505, 1.442695
    %v2507 = vpow.pop %v2506
    %v2508 = vadd.f32 %v2507, 1.0
    %v2509 = vrcp.pop %v2508
    %v2510 = vmul.f32 1.0, %v2509
    %v2511 = vtanh.pop %v2504
    %v2512 = vmul.f32 %v2510, %v2340
    %2514 = vrot.lane.b32.xlu0 %v2511, 64
    %v2515 = vpop.permute.xlu0 %2514
    %v2517 = vmul.f32 %v2510, %v2515
    %2519 = vrot.lane.b32.xlu0 %v2517, 32
    %v2520 = vpop.permute.xlu0 %2519
    %v2522 = vadd.f32 %v2512, %v2520
    %v2523 = vtanh.pop %v2522
    %2525 = vrot.lane.b32.xlu0 %v2523, 64
    %v2526 = vpop.permute.xlu0 %2525
    %v2528 = vmul.f32 %v2510, %v2526
    %2530 = vrot.lane.b32.xlu0 %v2528, 32
    %v2531 = vpop.permute.xlu0 %2530
    %v2532 = vsel %vm43, %v2531, 0
    %2534 = vmatprep.subr.mxu0 0.0
    %2535 = vmatpush1.msra.mxu0 %v1800
    %2536 = vmatprep.subr.mxu0 0.0
    %2537 = vmatpush1.msra.mxu0 %v1801
    %2538 = vmatprep.subr.mxu0 0.0
    %2539 = vmatpush1.msra.mxu0 %v1802
    %2540 = vmatprep.subr.mxu0 0.0
    %2541 = vmatpush1.msra.mxu0 %v1803
    %2542 = vmatprep.subr.mxu0 0.0
    %2543 = vmatpush1.msra.mxu0 0.0
    %2544 = vmatprep.subr.mxu0 0.0
    %2545 = vmatpush1.msra.mxu0 0.0
    %2546 = vmatprep.subr.mxu0 0.0
    %2547 = vmatpush1.msra.mxu0 0.0
    %2548 = vmatprep.subr.mxu0 0.0
    %2549 = vmatpush1.msra.mxu0 0.0
    %2550 = vmatprep.subr.mxu0 0.0
    %2551 = vmatpush1.msra.mxu0 0.0
    %2552 = vmatprep.subr.mxu0 0.0
    %2553 = vmatpush1.msra.mxu0 0.0
    %2554 = vmatprep.subr.mxu0 0.0
    %2555 = vmatpush1.msra.mxu0 0.0
    %2556 = vmatprep.subr.mxu0 0.0
    %2557 = vmatpush1.msra.mxu0 0.0
    %2558 = vmatprep.subr.mxu0 0.0
    %2559 = vmatpush1.msra.mxu0 0.0
    %2560 = vmatprep.subr.mxu0 0.0
    %2561 = vmatpush1.msra.mxu0 0.0
    %2562 = vmatprep.subr.mxu0 0.0
    %2563 = vmatpush1.msra.mxu0 0.0
    %2564 = vmatprep.subr.mxu0 0.0
    %2565 = vmatpush1.msra.mxu0 0.0
    %2566 = vmatprep.subr.mxu0 0.0
    %2567 = vmatpush1.msra.mxu0 0.0
    %2568 = vmatprep.subr.mxu0 0.0
    %2569 = vmatpush1.msra.mxu0 0.0
    %2570 = vmatprep.subr.mxu0 0.0
    %2571 = vmatpush1.msra.mxu0 0.0
    %2572 = vmatprep.subr.mxu0 0.0
    %2573 = vmatpush1.msra.mxu0 0.0
    %2574 = vmatprep.subr.mxu0 0.0
    %2575 = vmatpush1.msra.mxu0 0.0
    %2576 = vmatprep.subr.mxu0 0.0
    %2577 = vmatpush1.msra.mxu0 0.0
    %2578 = vmatprep.subr.mxu0 0.0
    %2579 = vmatpush1.msra.mxu0 0.0
    %2580 = vmatprep.subr.mxu0 0.0
    %2581 = vmatpush1.msra.mxu0 0.0
    %2582 = vmatprep.subr.mxu0 0.0
    %2583 = vmatpush1.msra.mxu0 0.0
    %2584 = vmatprep.subr.mxu0 0.0
    %2585 = vmatpush1.msra.mxu0 0.0
    %2586 = vmatprep.subr.mxu0 0.0
    %2587 = vmatpush1.msra.mxu0 0.0
    %2588 = vmatprep.subr.mxu0 0.0
    %2589 = vmatpush1.msra.mxu0 0.0
    %2590 = vmatprep.subr.mxu0 0.0
    %2591 = vmatpush1.msra.mxu0 0.0
    %2592 = vmatprep.subr.mxu0 0.0
    %2593 = vmatpush1.msra.mxu0 0.0
    %2594 = vmatprep.subr.mxu0 0.0
    %2595 = vmatpush1.msra.mxu0 0.0
    %2596 = vmatprep.subr.mxu0 0.0
    %2597 = vmatpush1.msra.mxu0 0.0
    %2598 = vmatprep.mubr.f32.mxu0 0.0
    %2599 = vmatmul.mubr.f32.gmra.mrb[0].mxu0 %v2532
    %v2600 = vpop.f32.mrb[0].mxu0
    %v2601 = vadd.f32 0.0, %v2600
    %v2602 = vpop.f32.mrb[0].mxu0
    %2603 = vdwg.mxu0
    %v2604 = vrot.slane %v2528, 1
    %2605 = vrot.lane.b32.xlu0 %v2604, 32
    %v2606 = vpop.permute.xlu0 %2605
    %v2607 = vsel %vm43, %v2606, 0
    %2609 = vmatprep.subr.mxu0 0.0
    %2610 = vmatpush1.msra.mxu0 %v1804
    %2611 = vmatprep.subr.mxu0 0.0
    %2612 = vmatpush1.msra.mxu0 %v1805
    %2613 = vmatprep.subr.mxu0 0.0
    %2614 = vmatpush1.msra.mxu0 %v1806
    %2615 = vmatprep.subr.mxu0 0.0
    %2616 = vmatpush1.msra.mxu0 %v1807
    %2617 = vmatprep.subr.mxu0 0.0
    %2618 = vmatpush1.msra.mxu0 0.0
    %2619 = vmatprep.subr.mxu0 0.0
    %2620 = vmatpush1.msra.mxu0 0.0
    %2621 = vmatprep.subr.mxu0 0.0
    %2622 = vmatpush1.msra.mxu0 0.0
    %2623 = vmatprep.subr.mxu0 0.0
    %2624 = vmatpush1.msra.mxu0 0.0
    %2625 = vmatprep.subr.mxu0 0.0
    %2626 = vmatpush1.msra.mxu0 0.0
    %2627 = vmatprep.subr.mxu0 0.0
    %2628 = vmatpush1.msra.mxu0 0.0
    %2629 = vmatprep.subr.mxu0 0.0
    %2630 = vmatpush1.msra.mxu0 0.0
    %2631 = vmatprep.subr.mxu0 0.0
    %2632 = vmatpush1.msra.mxu0 0.0
    %2633 = vmatprep.subr.mxu0 0.0
    %2634 = vmatpush1.msra.mxu0 0.0
    %2635 = vmatprep.subr.mxu0 0.0
    %2636 = vmatpush1.msra.mxu0 0.0
    %2637 = vmatprep.subr.mxu0 0.0
    %2638 = vmatpush1.msra.mxu0 0.0
    %2639 = vmatprep.subr.mxu0 0.0
    %2640 = vmatpush1.msra.mxu0 0.0
    %2641 = vmatprep.subr.mxu0 0.0
    %2642 = vmatpush1.msra.mxu0 0.0
    %2643 = vmatprep.subr.mxu0 0.0
    %2644 = vmatpush1.msra.mxu0 0.0
    %2645 = vmatprep.subr.mxu0 0.0
    %2646 = vmatpush1.msra.mxu0 0.0
    %2647 = vmatprep.subr.mxu0 0.0
    %2648 = vmatpush1.msra.mxu0 0.0
    %2649 = vmatprep.subr.mxu0 0.0
    %2650 = vmatpush1.msra.mxu0 0.0
    %2651 = vmatprep.subr.mxu0 0.0
    %2652 = vmatpush1.msra.mxu0 0.0
    %2653 = vmatprep.subr.mxu0 0.0
    %2654 = vmatpush1.msra.mxu0 0.0
    %2655 = vmatprep.subr.mxu0 0.0
    %2656 = vmatpush1.msra.mxu0 0.0
    %2657 = vmatprep.subr.mxu0 0.0
    %2658 = vmatpush1.msra.mxu0 0.0
    %2659 = vmatprep.subr.mxu0 0.0
    %2660 = vmatpush1.msra.mxu0 0.0
    %2661 = vmatprep.subr.mxu0 0.0
    %2662 = vmatpush1.msra.mxu0 0.0
    %2663 = vmatprep.subr.mxu0 0.0
    %2664 = vmatpush1.msra.mxu0 0.0
    %2665 = vmatprep.subr.mxu0 0.0
    %2666 = vmatpush1.msra.mxu0 0.0
    %2667 = vmatprep.subr.mxu0 0.0
    %2668 = vmatpush1.msra.mxu0 0.0
    %2669 = vmatprep.subr.mxu0 0.0
    %2670 = vmatpush1.msra.mxu0 0.0
    %2671 = vmatprep.subr.mxu0 0.0
    %2672 = vmatpush1.msra.mxu0 0.0
    %2673 = vmatprep.mubr.f32.mxu0 0.0
    %2674 = vmatmul.mubr.f32.gmra.mrb[0].mxu0 %v2607
    %v2675 = vpop.f32.mrb[0].mxu0
    %v2676 = vadd.f32 0.0, %v2675
    %v2677 = vpop.f32.mrb[0].mxu0
    %2678 = vdwg.mxu0
    %v2679 = vld [vmem:[#allocation5 + $0x3] sm:$0x1]
    %v2680 = vadd.f32 %v2679, %v2601
    %v2681 = vld [vmem:[#allocation6 + $0x4] sm:$0x1]
    %v2682 = vadd.f32 %v2681, %v2676
    %v2684 = vrot.slane %v2682, 7
    %v2686 = vsel %vm461, %v2680, %v2684
    %v2687 = vxor.u32 %v2686, 2147483648
    %v2688 = vmul.f32 %v2687, 1.442695
    %v2689 = vpow.pop %v2688
    %v2690 = vadd.f32 %v2689, 1.0
    %v2691 = vrcp.pop %v2690
    %v2692 = vmul.f32 1.0, %v2691
    %v2693 = vtanh.pop %v2686
    %v2694 = vmul.f32 %v2692, %v2522
    %2696 = vrot.lane.b32.xlu0 %v2693, 64
    %v2697 = vpop.permute.xlu0 %2696
    %v2699 = vmul.f32 %v2692, %v2697
    %2701 = vrot.lane.b32.xlu0 %v2699, 32
    %v2702 = vpop.permute.xlu0 %2701
    %v2704 = vadd.f32 %v2694, %v2702
    %v2705 = vtanh.pop %v2704
    %2707 = vrot.lane.b32.xlu0 %v2705, 64
    %v2708 = vpop.permute.xlu0 %2707
    %v2710 = vmul.f32 %v2692, %v2708
    %2712 = vrot.lane.b32.xlu0 %v2710, 32
    %v2713 = vpop.permute.xlu0 %2712
    %v2714 = vsel %vm43, %v2713, 0
    %2716 = vmatprep.subr.mxu0 0.0
    %2717 = vmatpush1.msra.mxu0 %v1800
    %2718 = vmatprep.subr.mxu0 0.0
    %2719 = vmatpush1.msra.mxu0 %v1801
    %2720 = vmatprep.subr.mxu0 0.0
    %2721 = vmatpush1.msra.mxu0 %v1802
    %2722 = vmatprep.subr.mxu0 0.0
    %2723 = vmatpush1.msra.mxu0 %v1803
    %2724 = vmatprep.subr.mxu0 0.0
    %2725 = vmatpush1.msra.mxu0 0.0
    %2726 = vmatprep.subr.mxu0 0.0
    %2727 = vmatpush1.msra.mxu0 0.0
    %2728 = vmatprep.subr.mxu0 0.0
    %2729 = vmatpush1.msra.mxu0 0.0
    %2730 = vmatprep.subr.mxu0 0.0
    %2731 = vmatpush1.msra.mxu0 0.0
    %2732 = vmatprep.subr.mxu0 0.0
    %2733 = vmatpush1.msra.mxu0 0.0
    %2734 = vmatprep.subr.mxu0 0.0
    %2735 = vmatpush1.msra.mxu0 0.0
    %2736 = vmatprep.subr.mxu0 0.0
    %2737 = vmatpush1.msra.mxu0 0.0
    %2738 = vmatprep.subr.mxu0 0.0
    %2739 = vmatpush1.msra.mxu0 0.0
    %2740 = vmatprep.subr.mxu0 0.0
    %2741 = vmatpush1.msra.mxu0 0.0
    %2742 = vmatprep.subr.mxu0 0.0
    %2743 = vmatpush1.msra.mxu0 0.0
    %2744 = vmatprep.subr.mxu0 0.0
    %2745 = vmatpush1.msra.mxu0 0.0
    %2746 = vmatprep.subr.mxu0 0.0
    %2747 = vmatpush1.msra.mxu0 0.0
    %2748 = vmatprep.subr.mxu0 0.0
    %2749 = vmatpush1.msra.mxu0 0.0
    %2750 = vmatprep.subr.mxu0 0.0
    %2751 = vmatpush1.msra.mxu0 0.0
    %2752 = vmatprep.subr.mxu0 0.0
    %2753 = vmatpush1.msra.mxu0 0.0
    %2754 = vmatprep.subr.mxu0 0.0
    %2755 = vmatpush1.msra.mxu0 0.0
    %2756 = vmatprep.subr.mxu0 0.0
    %2757 = vmatpush1.msra.mxu0 0.0
    %2758 = vmatprep.subr.mxu0 0.0
    %2759 = vmatpush1.msra.mxu0 0.0
    %2760 = vmatprep.subr.mxu0 0.0
    %2761 = vmatpush1.msra.mxu0 0.0
    %2762 = vmatprep.subr.mxu0 0.0
    %2763 = vmatpush1.msra.mxu0 0.0
    %2764 = vmatprep.subr.mxu0 0.0
    %2765 = vmatpush1.msra.mxu0 0.0
    %2766 = vmatprep.subr.mxu0 0.0
    %2767 = vmatpush1.msra.mxu0 0.0
    %2768 = vmatprep.subr.mxu0 0.0
    %2769 = vmatpush1.msra.mxu0 0.0
    %2770 = vmatprep.subr.mxu0 0.0
    %2771 = vmatpush1.msra.mxu0 0.0
    %2772 = vmatprep.subr.mxu0 0.0
    %2773 = vmatpush1.msra.mxu0 0.0
    %2774 = vmatprep.subr.mxu0 0.0
    %2775 = vmatpush1.msra.mxu0 0.0
    %2776 = vmatprep.subr.mxu0 0.0
    %2777 = vmatpush1.msra.mxu0 0.0
    %2778 = vmatprep.subr.mxu0 0.0
    %2779 = vmatpush1.msra.mxu0 0.0
    %2780 = vmatprep.mubr.f32.mxu0 0.0
    %2781 = vmatmul.mubr.f32.gmra.mrb[0].mxu0 %v2714
    %v2782 = vpop.f32.mrb[0].mxu0
    %v2783 = vadd.f32 0.0, %v2782
    %v2784 = vpop.f32.mrb[0].mxu0
    %2785 = vdwg.mxu0
    %v2786 = vrot.slane %v2710, 1
    %2787 = vrot.lane.b32.xlu0 %v2786, 32
    %v2788 = vpop.permute.xlu0 %2787
    %v2789 = vsel %vm43, %v2788, 0
    %2791 = vmatprep.subr.mxu0 0.0
    %2792 = vmatpush1.msra.mxu0 %v1804
    %2793 = vmatprep.subr.mxu0 0.0
    %2794 = vmatpush1.msra.mxu0 %v1805
    %2795 = vmatprep.subr.mxu0 0.0
    %2796 = vmatpush1.msra.mxu0 %v1806
    %2797 = vmatprep.subr.mxu0 0.0
    %2798 = vmatpush1.msra.mxu0 %v1807
    %2799 = vmatprep.subr.mxu0 0.0
    %2800 = vmatpush1.msra.mxu0 0.0
    %2801 = vmatprep.subr.mxu0 0.0
    %2802 = vmatpush1.msra.mxu0 0.0
    %2803 = vmatprep.subr.mxu0 0.0
    %2804 = vmatpush1.msra.mxu0 0.0
    %2805 = vmatprep.subr.mxu0 0.0
    %2806 = vmatpush1.msra.mxu0 0.0
    %2807 = vmatprep.subr.mxu0 0.0
    %2808 = vmatpush1.msra.mxu0 0.0
    %2809 = vmatprep.subr.mxu0 0.0
    %2810 = vmatpush1.msra.mxu0 0.0
    %2811 = vmatprep.subr.mxu0 0.0
    %2812 = vmatpush1.msra.mxu0 0.0
    %2813 = vmatprep.subr.mxu0 0.0
    %2814 = vmatpush1.msra.mxu0 0.0
    %2815 = vmatprep.subr.mxu0 0.0
    %2816 = vmatpush1.msra.mxu0 0.0
    %2817 = vmatprep.subr.mxu0 0.0
    %2818 = vmatpush1.msra.mxu0 0.0
    %2819 = vmatprep.subr.mxu0 0.0
    %2820 = vmatpush1.msra.mxu0 0.0
    %2821 = vmatprep.subr.mxu0 0.0
    %2822 = vmatpush1.msra.mxu0 0.0
    %2823 = vmatprep.subr.mxu0 0.0
    %2824 = vmatpush1.msra.mxu0 0.0
    %2825 = vmatprep.subr.mxu0 0.0
    %2826 = vmatpush1.msra.mxu0 0.0
    %2827 = vmatprep.subr.mxu0 0.0
    %2828 = vmatpush1.msra.mxu0 0.0
    %2829 = vmatprep.subr.mxu0 0.0
    %2830 = vmatpush1.msra.mxu0 0.0
    %2831 = vmatprep.subr.mxu0 0.0
    %2832 = vmatpush1.msra.mxu0 0.0
    %2833 = vmatprep.subr.mxu0 0.0
    %2834 = vmatpush1.msra.mxu0 0.0
    %2835 = vmatprep.subr.mxu0 0.0
    %2836 = vmatpush1.msra.mxu0 0.0
    %2837 = vmatprep.subr.mxu0 0.0
    %2838 = vmatpush1.msra.mxu0 0.0
    %2839 = vmatprep.subr.mxu0 0.0
    %2840 = vmatpush1.msra.mxu0 0.0
    %2841 = vmatprep.subr.mxu0 0.0
    %2842 = vmatpush1.msra.mxu0 0.0
    %2843 = vmatprep.subr.mxu0 0.0
    %2844 = vmatpush1.msra.mxu0 0.0
    %2845 = vmatprep.subr.mxu0 0.0
    %2846 = vmatpush1.msra.mxu0 0.0
    %2847 = vmatprep.subr.mxu0 0.0
    %2848 = vmatpush1.msra.mxu0 0.0
    %2849 = vmatprep.subr.mxu0 0.0
    %2850 = vmatpush1.msra.mxu0 0.0
    %2851 = vmatprep.subr.mxu0 0.0
    %2852 = vmatpush1.msra.mxu0 0.0
    %2853 = vmatprep.subr.mxu0 0.0
    %2854 = vmatpush1.msra.mxu0 0.0
    %2855 = vmatprep.mubr.f32.mxu0 0.0
    %2856 = vmatmul.mubr.f32.gmra.mrb[0].mxu0 %v2789
    %v2857 = vpop.f32.mrb[0].mxu0
    %v2858 = vadd.f32 0.0, %v2857
    %v2859 = vpop.f32.mrb[0].mxu0
    %2860 = vdwg.mxu0
    %v2861 = vld [vmem:[#allocation5 + $0x4] sm:$0x1]
    %v2862 = vadd.f32 %v2861, %v2783
    %v2863 = vld [vmem:[#allocation6 + $0x3] sm:$0x1]
    %v2864 = vadd.f32 %v2863, %v2858
    %v2866 = vrot.slane %v2864, 7
    %v2868 = vsel %vm461, %v2862, %v2866
    %v2869 = vxor.u32 %v2868, 2147483648
    %v2870 = vmul.f32 %v2869, 1.442695
    %v2871 = vpow.pop %v2870
    %v2872 = vadd.f32 %v2871, 1.0
    %v2873 = vrcp.pop %v2872
    %v2874 = vmul.f32 1.0, %v2873
    %v2875 = vtanh.pop %v2868
    %v2876 = vmul.f32 %v2874, %v2704
    %2878 = vrot.lane.b32.xlu0 %v2875, 64
    %v2879 = vpop.permute.xlu0 %2878
    %v2881 = vmul.f32 %v2874, %v2879
    %2883 = vrot.lane.b32.xlu0 %v2881, 32
    %v2884 = vpop.permute.xlu0 %2883
    %v2886 = vadd.f32 %v2876, %v2884
    %v2887 = vtanh.pop %v2886
    %2889 = vrot.lane.b32.xlu0 %v2887, 64
    %v2890 = vpop.permute.xlu0 %2889
    %v2892 = vmul.f32 %v2874, %v2890
    %2894 = vrot.lane.b32.xlu0 %v2892, 32
    %v2895 = vpop.permute.xlu0 %2894
    %v2896 = vsel %vm43, %v2895, 0
    %2898 = vmatprep.subr.mxu0 0.0
    %2899 = vmatpush1.msra.mxu0 %v1800
    %2900 = vmatprep.subr.mxu0 0.0
    %2901 = vmatpush1.msra.mxu0 %v1801
    %2902 = vmatprep.subr.mxu0 0.0
    %2903 = vmatpush1.msra.mxu0 %v1802
    %2904 = vmatprep.subr.mxu0 0.0
    %2905 = vmatpush1.msra.mxu0 %v1803
    %2906 = vmatprep.subr.mxu0 0.0
    %2907 = vmatpush1.msra.mxu0 0.0
    %2908 = vmatprep.subr.mxu0 0.0
    %2909 = vmatpush1.msra.mxu0 0.0
    %2910 = vmatprep.subr.mxu0 0.0
    %2911 = vmatpush1.msra.mxu0 0.0
    %2912 = vmatprep.subr.mxu0 0.0
    %2913 = vmatpush1.msra.mxu0 0.0
    %2914 = vmatprep.subr.mxu0 0.0
    %2915 = vmatpush1.msra.mxu0 0.0
    %2916 = vmatprep.subr.mxu0 0.0
    %2917 = vmatpush1.msra.mxu0 0.0
    %2918 = vmatprep.subr.mxu0 0.0
    %2919 = vmatpush1.msra.mxu0 0.0
    %2920 = vmatprep.subr.mxu0 0.0
    %2921 = vmatpush1.msra.mxu0 0.0
    %2922 = vmatprep.subr.mxu0 0.0
    %2923 = vmatpush1.msra.mxu0 0.0
    %2924 = vmatprep.subr.mxu0 0.0
    %2925 = vmatpush1.msra.mxu0 0.0
    %2926 = vmatprep.subr.mxu0 0.0
    %2927 = vmatpush1.msra.mxu0 0.0
    %2928 = vmatprep.subr.mxu0 0.0
    %2929 = vmatpush1.msra.mxu0 0.0
    %2930 = vmatprep.subr.mxu0 0.0
    %2931 = vmatpush1.msra.mxu0 0.0
    %2932 = vmatprep.subr.mxu0 0.0
    %2933 = vmatpush1.msra.mxu0 0.0
    %2934 = vmatprep.subr.mxu0 0.0
    %2935 = vmatpush1.msra.mxu0 0.0
    %2936 = vmatprep.subr.mxu0 0.0
    %2937 = vmatpush1.msra.mxu0 0.0
    %2938 = vmatprep.subr.mxu0 0.0
    %2939 = vmatpush1.msra.mxu0 0.0
    %2940 = vmatprep.subr.mxu0 0.0
    %2941 = vmatpush1.msra.mxu0 0.0
    %2942 = vmatprep.subr.mxu0 0.0
    %2943 = vmatpush1.msra.mxu0 0.0
    %2944 = vmatprep.subr.mxu0 0.0
    %2945 = vmatpush1.msra.mxu0 0.0
    %2946 = vmatprep.subr.mxu0 0.0
    %2947 = vmatpush1.msra.mxu0 0.0
    %2948 = vmatprep.subr.mxu0 0.0
    %2949 = vmatpush1.msra.mxu0 0.0
    %2950 = vmatprep.subr.mxu0 0.0
    %2951 = vmatpush1.msra.mxu0 0.0
    %2952 = vmatprep.subr.mxu0 0.0
    %2953 = vmatpush1.msra.mxu0 0.0
    %2954 = vmatprep.subr.mxu0 0.0
    %2955 = vmatpush1.msra.mxu0 0.0
    %2956 = vmatprep.subr.mxu0 0.0
    %2957 = vmatpush1.msra.mxu0 0.0
    %2958 = vmatprep.subr.mxu0 0.0
    %2959 = vmatpush1.msra.mxu0 0.0
    %2960 = vmatprep.subr.mxu0 0.0
    %2961 = vmatpush1.msra.mxu0 0.0
    %2962 = vmatprep.mubr.f32.mxu0 0.0
    %2963 = vmatmul.mubr.f32.gmra.mrb[0].mxu0 %v2896
    %v2964 = vpop.f32.mrb[0].mxu0
    %v2965 = vadd.f32 0.0, %v2964
    %v2966 = vpop.f32.mrb[0].mxu0
    %2967 = vdwg.mxu0
    %v2968 = vrot.slane %v2892, 1
    %2969 = vrot.lane.b32.xlu0 %v2968, 32
    %v2970 = vpop.permute.xlu0 %2969
    %v2971 = vsel %vm43, %v2970, 0
    %2973 = vmatprep.subr.mxu0 0.0
    %2974 = vmatpush1.msra.mxu0 %v1804
    %2975 = vmatprep.subr.mxu0 0.0
    %2976 = vmatpush1.msra.mxu0 %v1805
    %2977 = vmatprep.subr.mxu0 0.0
    %2978 = vmatpush1.msra.mxu0 %v1806
    %2979 = vmatprep.subr.mxu0 0.0
    %2980 = vmatpush1.msra.mxu0 %v1807
    %2981 = vmatprep.subr.mxu0 0.0
    %2982 = vmatpush1.msra.mxu0 0.0
    %2983 = vmatprep.subr.mxu0 0.0
    %2984 = vmatpush1.msra.mxu0 0.0
    %2985 = vmatprep.subr.mxu0 0.0
    %2986 = vmatpush1.msra.mxu0 0.0
    %2987 = vmatprep.subr.mxu0 0.0
    %2988 = vmatpush1.msra.mxu0 0.0
    %2989 = vmatprep.subr.mxu0 0.0
    %2990 = vmatpush1.msra.mxu0 0.0
    %2991 = vmatprep.subr.mxu0 0.0
    %2992 = vmatpush1.msra.mxu0 0.0
    %2993 = vmatprep.subr.mxu0 0.0
    %2994 = vmatpush1.msra.mxu0 0.0
    %2995 = vmatprep.subr.mxu0 0.0
    %2996 = vmatpush1.msra.mxu0 0.0
    %2997 = vmatprep.subr.mxu0 0.0
    %2998 = vmatpush1.msra.mxu0 0.0
    %2999 = vmatprep.subr.mxu0 0.0
    %3000 = vmatpush1.msra.mxu0 0.0
    %3001 = vmatprep.subr.mxu0 0.0
    %3002 = vmatpush1.msra.mxu0 0.0
    %3003 = vmatprep.subr.mxu0 0.0
    %3004 = vmatpush1.msra.mxu0 0.0
    %3005 = vmatprep.subr.mxu0 0.0
    %3006 = vmatpush1.msra.mxu0 0.0
    %3007 = vmatprep.subr.mxu0 0.0
    %3008 = vmatpush1.msra.mxu0 0.0
    %3009 = vmatprep.subr.mxu0 0.0
    %3010 = vmatpush1.msra.mxu0 0.0
    %3011 = vmatprep.subr.mxu0 0.0
    %3012 = vmatpush1.msra.mxu0 0.0
    %3013 = vmatprep.subr.mxu0 0.0
    %3014 = vmatpush1.msra.mxu0 0.0
    %3015 = vmatprep.subr.mxu0 0.0
    %3016 = vmatpush1.msra.mxu0 0.0
    %3017 = vmatprep.subr.mxu0 0.0
    %3018 = vmatpush1.msra.mxu0 0.0
    %3019 = vmatprep.subr.mxu0 0.0
    %3020 = vmatpush1.msra.mxu0 0.0
    %3021 = vmatprep.subr.mxu0 0.0
    %3022 = vmatpush1.msra.mxu0 0.0
    %3023 = vmatprep.subr.mxu0 0.0
    %3024 = vmatpush1.msra.mxu0 0.0
    %3025 = vmatprep.subr.mxu0 0.0
    %3026 = vmatpush1.msra.mxu0 0.0
    %3027 = vmatprep.subr.mxu0 0.0
    %3028 = vmatpush1.msra.mxu0 0.0
    %3029 = vmatprep.subr.mxu0 0.0
    %3030 = vmatpush1.msra.mxu0 0.0
    %3031 = vmatprep.subr.mxu0 0.0
    %3032 = vmatpush1.msra.mxu0 0.0
    %3033 = vmatprep.subr.mxu0 0.0
    %3034 = vmatpush1.msra.mxu0 0.0
    %3035 = vmatprep.subr.mxu0 0.0
    %3036 = vmatpush1.msra.mxu0 0.0
    %3037 = vmatprep.mubr.f32.mxu0 0.0
    %3038 = vmatmul.mubr.f32.gmra.mrb[0].mxu0 %v2971
    %v3039 = vpop.f32.mrb[0].mxu0
    %v3040 = vadd.f32 0.0, %v3039
    %v3041 = vpop.f32.mrb[0].mxu0
    %3042 = vdwg.mxu0
    %v3043 = vld [vmem:[#allocation5 + $0x5] sm:$0x1]
    %v3044 = vadd.f32 %v3043, %v2965
    %v3045 = vld [vmem:[#allocation6 + $0x2] sm:$0x1]
    %v3046 = vadd.f32 %v3045, %v3040
    %v3048 = vrot.slane %v3046, 7
    %v3050 = vsel %vm461, %v3044, %v3048
    %v3051 = vxor.u32 %v3050, 2147483648
    %v3052 = vmul.f32 %v3051, 1.442695
    %v3053 = vpow.pop %v3052
    %v3054 = vadd.f32 %v3053, 1.0
    %v3055 = vrcp.pop %v3054
    %v3056 = vmul.f32 1.0, %v3055
    %v3057 = vtanh.pop %v3050
    %v3058 = vmul.f32 %v3056, %v2886
    %3060 = vrot.lane.b32.xlu0 %v3057, 64
    %v3061 = vpop.permute.xlu0 %3060
    %v3063 = vmul.f32 %v3056, %v3061
    %3065 = vrot.lane.b32.xlu0 %v3063, 32
    %v3066 = vpop.permute.xlu0 %3065
    %v3068 = vadd.f32 %v3058, %v3066
    %v3069 = vtanh.pop %v3068
    %3071 = vrot.lane.b32.xlu0 %v3069, 64
    %v3072 = vpop.permute.xlu0 %3071
    %v3074 = vmul.f32 %v3056, %v3072
    %3076 = vrot.lane.b32.xlu0 %v3074, 32
    %v3077 = vpop.permute.xlu0 %3076
    %v3078 = vsel %vm43, %v3077, 0
    %3080 = vmatprep.subr.mxu0 0.0
    %3081 = vmatpush1.msra.mxu0 %v1800
    %3082 = vmatprep.subr.mxu0 0.0
    %3083 = vmatpush1.msra.mxu0 %v1801
    %3084 = vmatprep.subr.mxu0 0.0
    %3085 = vmatpush1.msra.mxu0 %v1802
    %3086 = vmatprep.subr.mxu0 0.0
    %3087 = vmatpush1.msra.mxu0 %v1803
    %3088 = vmatprep.subr.mxu0 0.0
    %3089 = vmatpush1.msra.mxu0 0.0
    %3090 = vmatprep.subr.mxu0 0.0
    %3091 = vmatpush1.msra.mxu0 0.0
    %3092 = vmatprep.subr.mxu0 0.0
    %3093 = vmatpush1.msra.mxu0 0.0
    %3094 = vmatprep.subr.mxu0 0.0
    %3095 = vmatpush1.msra.mxu0 0.0
    %3096 = vmatprep.subr.mxu0 0.0
    %3097 = vmatpush1.msra.mxu0 0.0
    %3098 = vmatprep.subr.mxu0 0.0
    %3099 = vmatpush1.msra.mxu0 0.0
    %3100 = vmatprep.subr.mxu0 0.0
    %3101 = vmatpush1.msra.mxu0 0.0
    %3102 = vmatprep.subr.mxu0 0.0
    %3103 = vmatpush1.msra.mxu0 0.0
    %3104 = vmatprep.subr.mxu0 0.0
    %3105 = vmatpush1.msra.mxu0 0.0
    %3106 = vmatprep.subr.mxu0 0.0
    %3107 = vmatpush1.msra.mxu0 0.0
    %3108 = vmatprep.subr.mxu0 0.0
    %3109 = vmatpush1.msra.mxu0 0.0
    %3110 = vmatprep.subr.mxu0 0.0
    %3111 = vmatpush1.msra.mxu0 0.0
    %3112 = vmatprep.subr.mxu0 0.0
    %3113 = vmatpush1.msra.mxu0 0.0
    %3114 = vmatprep.subr.mxu0 0.0
    %3115 = vmatpush1.msra.mxu0 0.0
    %3116 = vmatprep.subr.mxu0 0.0
    %3117 = vmatpush1.msra.mxu0 0.0
    %3118 = vmatprep.subr.mxu0 0.0
    %3119 = vmatpush1.msra.mxu0 0.0
    %3120 = vmatprep.subr.mxu0 0.0
    %3121 = vmatpush1.msra.mxu0 0.0
    %3122 = vmatprep.subr.mxu0 0.0
    %3123 = vmatpush1.msra.mxu0 0.0
    %3124 = vmatprep.subr.mxu0 0.0
    %3125 = vmatpush1.msra.mxu0 0.0
    %3126 = vmatprep.subr.mxu0 0.0
    %3127 = vmatpush1.msra.mxu0 0.0
    %3128 = vmatprep.subr.mxu0 0.0
    %3129 = vmatpush1.msra.mxu0 0.0
    %3130 = vmatprep.subr.mxu0 0.0
    %3131 = vmatpush1.msra.mxu0 0.0
    %3132 = vmatprep.subr.mxu0 0.0
    %3133 = vmatpush1.msra.mxu0 0.0
    %3134 = vmatprep.subr.mxu0 0.0
    %3135 = vmatpush1.msra.mxu0 0.0
    %3136 = vmatprep.subr.mxu0 0.0
    %3137 = vmatpush1.msra.mxu0 0.0
    %3138 = vmatprep.subr.mxu0 0.0
    %3139 = vmatpush1.msra.mxu0 0.0
    %3140 = vmatprep.subr.mxu0 0.0
    %3141 = vmatpush1.msra.mxu0 0.0
    %3142 = vmatprep.subr.mxu0 0.0
    %3143 = vmatpush1.msra.mxu0 0.0
    %3144 = vmatprep.mubr.f32.mxu0 0.0
    %3145 = vmatmul.mubr.f32.gmra.mrb[0].mxu0 %v3078
    %v3146 = vpop.f32.mrb[0].mxu0
    %v3147 = vadd.f32 0.0, %v3146
    %v3148 = vpop.f32.mrb[0].mxu0
    %3149 = vdwg.mxu0
    %v3150 = vrot.slane %v3074, 1
    %3151 = vrot.lane.b32.xlu0 %v3150, 32
    %v3152 = vpop.permute.xlu0 %3151
    %v3153 = vsel %vm43, %v3152, 0
    %3155 = vmatprep.subr.mxu0 0.0
    %3156 = vmatpush1.msra.mxu0 %v1804
    %3157 = vmatprep.subr.mxu0 0.0
    %3158 = vmatpush1.msra.mxu0 %v1805
    %3159 = vmatprep.subr.mxu0 0.0
    %3160 = vmatpush1.msra.mxu0 %v1806
    %3161 = vmatprep.subr.mxu0 0.0
    %3162 = vmatpush1.msra.mxu0 %v1807
    %3163 = vmatprep.subr.mxu0 0.0
    %3164 = vmatpush1.msra.mxu0 0.0
    %3165 = vmatprep.subr.mxu0 0.0
    %3166 = vmatpush1.msra.mxu0 0.0
    %3167 = vmatprep.subr.mxu0 0.0
    %3168 = vmatpush1.msra.mxu0 0.0
    %3169 = vmatprep.subr.mxu0 0.0
    %3170 = vmatpush1.msra.mxu0 0.0
    %3171 = vmatprep.subr.mxu0 0.0
    %3172 = vmatpush1.msra.mxu0 0.0
    %3173 = vmatprep.subr.mxu0 0.0
    %3174 = vmatpush1.msra.mxu0 0.0
    %3175 = vmatprep.subr.mxu0 0.0
    %3176 = vmatpush1.msra.mxu0 0.0
    %3177 = vmatprep.subr.mxu0 0.0
    %3178 = vmatpush1.msra.mxu0 0.0
    %3179 = vmatprep.subr.mxu0 0.0
    %3180 = vmatpush1.msra.mxu0 0.0
    %3181 = vmatprep.subr.mxu0 0.0
    %3182 = vmatpush1.msra.mxu0 0.0
    %3183 = vmatprep.subr.mxu0 0.0
    %3184 = vmatpush1.msra.mxu0 0.0
    %3185 = vmatprep.subr.mxu0 0.0
    %3186 = vmatpush1.msra.mxu0 0.0
    %3187 = vmatprep.subr.mxu0 0.0
    %3188 = vmatpush1.msra.mxu0 0.0
    %3189 = vmatprep.subr.mxu0 0.0
    %3190 = vmatpush1.msra.mxu0 0.0
    %3191 = vmatprep.subr.mxu0 0.0
    %3192 = vmatpush1.msra.mxu0 0.0
    %3193 = vmatprep.subr.mxu0 0.0
    %3194 = vmatpush1.msra.mxu0 0.0
    %3195 = vmatprep.subr.mxu0 0.0
    %3196 = vmatpush1.msra.mxu0 0.0
    %3197 = vmatprep.subr.mxu0 0.0
    %3198 = vmatpush1.msra.mxu0 0.0
    %3199 = vmatprep.subr.mxu0 0.0
    %3200 = vmatpush1.msra.mxu0 0.0
    %3201 = vmatprep.subr.mxu0 0.0
    %3202 = vmatpush1.msra.mxu0 0.0
    %3203 = vmatprep.subr.mxu0 0.0
    %3204 = vmatpush1.msra.mxu0 0.0
    %3205 = vmatprep.subr.mxu0 0.0
    %3206 = vmatpush1.msra.mxu0 0.0
    %3207 = vmatprep.subr.mxu0 0.0
    %3208 = vmatpush1.msra.mxu0 0.0
    %3209 = vmatprep.subr.mxu0 0.0
    %3210 = vmatpush1.msra.mxu0 0.0
    %3211 = vmatprep.subr.mxu0 0.0
    %3212 = vmatpush1.msra.mxu0 0.0
    %3213 = vmatprep.subr.mxu0 0.0
    %3214 = vmatpush1.msra.mxu0 0.0
    %3215 = vmatprep.subr.mxu0 0.0
    %3216 = vmatpush1.msra.mxu0 0.0
    %3217 = vmatprep.subr.mxu0 0.0
    %3218 = vmatpush1.msra.mxu0 0.0
    %3219 = vmatprep.mubr.f32.mxu0 0.0
    %3220 = vmatmul.mubr.f32.gmra.mrb[0].mxu0 %v3153
    %v3221 = vpop.f32.mrb[0].mxu0
    %v3222 = vadd.f32 0.0, %v3221
    %v3223 = vpop.f32.mrb[0].mxu0
    %3224 = vdwg.mxu0
    %v3225 = vld [vmem:[#allocation5 + $0x6] sm:$0x1]
    %v3226 = vadd.f32 %v3225, %v3147
    %v3227 = vld [vmem:[#allocation6 + $0x1] sm:$0x1]
    %v3228 = vadd.f32 %v3227, %v3222
    %v3230 = vrot.slane %v3228, 7
    %v3232 = vsel %vm461, %v3226, %v3230
    %v3233 = vxor.u32 %v3232, 2147483648
    %v3234 = vmul.f32 %v3233, 1.442695
    %v3235 = vpow.pop %v3234
    %v3236 = vadd.f32 %v3235, 1.0
    %v3237 = vrcp.pop %v3236
    %v3238 = vmul.f32 1.0, %v3237
    %v3239 = vtanh.pop %v3232
    %v3240 = vmul.f32 %v3238, %v3068
    %3242 = vrot.lane.b32.xlu0 %v3239, 64
    %v3243 = vpop.permute.xlu0 %3242
    %v3245 = vmul.f32 %v3238, %v3243
    %3247 = vrot.lane.b32.xlu0 %v3245, 32
    %v3248 = vpop.permute.xlu0 %3247
    %v3250 = vadd.f32 %v3240, %v3248
    %v3251 = vtanh.pop %v3250
    %3253 = vrot.lane.b32.xlu0 %v3251, 64
    %v3254 = vpop.permute.xlu0 %3253
    %v3256 = vmul.f32 %v3238, %v3254
    %3258 = vrot.lane.b32.xlu0 %v3256, 32
    %v3259 = vpop.permute.xlu0 %3258
    %v3260 = vsel %vm43, %v3259, 0
    %3262 = vmatprep.subr.mxu0 0.0
    %3263 = vmatpush1.msra.mxu0 %v1800
    %3264 = vmatprep.subr.mxu0 0.0
    %3265 = vmatpush1.msra.mxu0 %v1801
    %3266 = vmatprep.subr.mxu0 0.0
    %3267 = vmatpush1.msra.mxu0 %v1802
    %3268 = vmatprep.subr.mxu0 0.0
    %3269 = vmatpush1.msra.mxu0 %v1803
    %3270 = vmatprep.subr.mxu0 0.0
    %3271 = vmatpush1.msra.mxu0 0.0
    %3272 = vmatprep.subr.mxu0 0.0
    %3273 = vmatpush1.msra.mxu0 0.0
    %3274 = vmatprep.subr.mxu0 0.0
    %3275 = vmatpush1.msra.mxu0 0.0
    %3276 = vmatprep.subr.mxu0 0.0
    %3277 = vmatpush1.msra.mxu0 0.0
    %3278 = vmatprep.subr.mxu0 0.0
    %3279 = vmatpush1.msra.mxu0 0.0
    %3280 = vmatprep.subr.mxu0 0.0
    %3281 = vmatpush1.msra.mxu0 0.0
    %3282 = vmatprep.subr.mxu0 0.0
    %3283 = vmatpush1.msra.mxu0 0.0
    %3284 = vmatprep.subr.mxu0 0.0
    %3285 = vmatpush1.msra.mxu0 0.0
    %3286 = vmatprep.subr.mxu0 0.0
    %3287 = vmatpush1.msra.mxu0 0.0
    %3288 = vmatprep.subr.mxu0 0.0
    %3289 = vmatpush1.msra.mxu0 0.0
    %3290 = vmatprep.subr.mxu0 0.0
    %3291 = vmatpush1.msra.mxu0 0.0
    %3292 = vmatprep.subr.mxu0 0.0
    %3293 = vmatpush1.msra.mxu0 0.0
    %3294 = vmatprep.subr.mxu0 0.0
    %3295 = vmatpush1.msra.mxu0 0.0
    %3296 = vmatprep.subr.mxu0 0.0
    %3297 = vmatpush1.msra.mxu0 0.0
    %3298 = vmatprep.subr.mxu0 0.0
    %3299 = vmatpush1.msra.mxu0 0.0
    %3300 = vmatprep.subr.mxu0 0.0
    %3301 = vmatpush1.msra.mxu0 0.0
    %3302 = vmatprep.subr.mxu0 0.0
    %3303 = vmatpush1.msra.mxu0 0.0
    %3304 = vmatprep.subr.mxu0 0.0
    %3305 = vmatpush1.msra.mxu0 0.0
    %3306 = vmatprep.subr.mxu0 0.0
    %3307 = vmatpush1.msra.mxu0 0.0
    %3308 = vmatprep.subr.mxu0 0.0
    %3309 = vmatpush1.msra.mxu0 0.0
    %3310 = vmatprep.subr.mxu0 0.0
    %3311 = vmatpush1.msra.mxu0 0.0
    %3312 = vmatprep.subr.mxu0 0.0
    %3313 = vmatpush1.msra.mxu0 0.0
    %3314 = vmatprep.subr.mxu0 0.0
    %3315 = vmatpush1.msra.mxu0 0.0
    %3316 = vmatprep.subr.mxu0 0.0
    %3317 = vmatpush1.msra.mxu0 0.0
    %3318 = vmatprep.subr.mxu0 0.0
    %3319 = vmatpush1.msra.mxu0 0.0
    %3320 = vmatprep.subr.mxu0 0.0
    %3321 = vmatpush1.msra.mxu0 0.0
    %3322 = vmatprep.subr.mxu0 0.0
    %3323 = vmatpush1.msra.mxu0 0.0
    %3324 = vmatprep.subr.mxu0 0.0
    %3325 = vmatpush1.msra.mxu0 0.0
    %3326 = vmatprep.mubr.f32.mxu0 0.0
    %3327 = vmatmul.mubr.f32.gmra.mrb[0].mxu0 %v3260
    %v3328 = vpop.f32.mrb[0].mxu0
    %v3329 = vadd.f32 0.0, %v3328
    %v3330 = vpop.f32.mrb[0].mxu0
    %3331 = vdwg.mxu0
    %v3332 = vrot.slane %v3256, 1
    %3333 = vrot.lane.b32.xlu0 %v3332, 32
    %v3334 = vpop.permute.xlu0 %3333
    %v3335 = vsel %vm43, %v3334, 0
    %3337 = vmatprep.subr.mxu0 0.0
    %3338 = vmatpush1.msra.mxu0 %v1804
    %3339 = vmatprep.subr.mxu0 0.0
    %3340 = vmatpush1.msra.mxu0 %v1805
    %3341 = vmatprep.subr.mxu0 0.0
    %3342 = vmatpush1.msra.mxu0 %v1806
    %3343 = vmatprep.subr.mxu0 0.0
    %3344 = vmatpush1.msra.mxu0 %v1807
    %3345 = vmatprep.subr.mxu0 0.0
    %3346 = vmatpush1.msra.mxu0 0.0
    %3347 = vmatprep.subr.mxu0 0.0
    %3348 = vmatpush1.msra.mxu0 0.0
    %3349 = vmatprep.subr.mxu0 0.0
    %3350 = vmatpush1.msra.mxu0 0.0
    %3351 = vmatprep.subr.mxu0 0.0
    %3352 = vmatpush1.msra.mxu0 0.0
    %3353 = vmatprep.subr.mxu0 0.0
    %3354 = vmatpush1.msra.mxu0 0.0
    %3355 = vmatprep.subr.mxu0 0.0
    %3356 = vmatpush1.msra.mxu0 0.0
    %3357 = vmatprep.subr.mxu0 0.0
    %3358 = vmatpush1.msra.mxu0 0.0
    %3359 = vmatprep.subr.mxu0 0.0
    %3360 = vmatpush1.msra.mxu0 0.0
    %3361 = vmatprep.subr.mxu0 0.0
    %3362 = vmatpush1.msra.mxu0 0.0
    %3363 = vmatprep.subr.mxu0 0.0
    %3364 = vmatpush1.msra.mxu0 0.0
    %3365 = vmatprep.subr.mxu0 0.0
    %3366 = vmatpush1.msra.mxu0 0.0
    %3367 = vmatprep.subr.mxu0 0.0
    %3368 = vmatpush1.msra.mxu0 0.0
    %3369 = vmatprep.subr.mxu0 0.0
    %3370 = vmatpush1.msra.mxu0 0.0
    %3371 = vmatprep.subr.mxu0 0.0
    %3372 = vmatpush1.msra.mxu0 0.0
    %3373 = vmatprep.subr.mxu0 0.0
    %3374 = vmatpush1.msra.mxu0 0.0
    %3375 = vmatprep.subr.mxu0 0.0
    %3376 = vmatpush1.msra.mxu0 0.0
    %3377 = vmatprep.subr.mxu0 0.0
    %3378 = vmatpush1.msra.mxu0 0.0
    %3379 = vmatprep.subr.mxu0 0.0
    %3380 = vmatpush1.msra.mxu0 0.0
    %3381 = vmatprep.subr.mxu0 0.0
    %3382 = vmatpush1.msra.mxu0 0.0
    %3383 = vmatprep.subr.mxu0 0.0
    %3384 = vmatpush1.msra.mxu0 0.0
    %3385 = vmatprep.subr.mxu0 0.0
    %3386 = vmatpush1.msra.mxu0 0.0
    %3387 = vmatprep.subr.mxu0 0.0
    %3388 = vmatpush1.msra.mxu0 0.0
    %3389 = vmatprep.subr.mxu0 0.0
    %3390 = vmatpush1.msra.mxu0 0.0
    %3391 = vmatprep.subr.mxu0 0.0
    %3392 = vmatpush1.msra.mxu0 0.0
    %3393 = vmatprep.subr.mxu0 0.0
    %3394 = vmatpush1.msra.mxu0 0.0
    %3395 = vmatprep.subr.mxu0 0.0
    %3396 = vmatpush1.msra.mxu0 0.0
    %3397 = vmatprep.subr.mxu0 0.0
    %3398 = vmatpush1.msra.mxu0 0.0
    %3399 = vmatprep.subr.mxu0 0.0
    %3400 = vmatpush1.msra.mxu0 0.0
    %3401 = vmatprep.mubr.f32.mxu0 0.0
    %3402 = vmatmul.mubr.f32.gmra.mrb[0].mxu0 %v3335
    %v3403 = vpop.f32.mrb[0].mxu0
    %v3404 = vadd.f32 0.0, %v3403
    %v3405 = vpop.f32.mrb[0].mxu0
    %3406 = vdwg.mxu0
    %v3407 = vld [vmem:[#allocation5 + $0x7] sm:$0x1]
    %v3408 = vadd.f32 %v3407, %v3329
    %v3409 = vld [vmem:[#allocation6] sm:$0x1]
    %v3410 = vadd.f32 %v3409, %v3404
    %v3412 = vrot.slane %v3410, 7
    %v3414 = vsel %vm461, %v3408, %v3412
    %v3415 = vxor.u32 %v3414, 2147483648
    %v3416 = vmul.f32 %v3415, 1.442695
    %v3417 = vpow.pop %v3416
    %v3418 = vadd.f32 %v3417, 1.0
    %v3419 = vrcp.pop %v3418
    %v3420 = vmul.f32 1.0, %v3419
    %v3421 = vtanh.pop %v3414
    %v3422 = vmul.f32 %v3420, %v3250
    %3424 = vrot.lane.b32.xlu0 %v3421, 64
    %v3425 = vpop.permute.xlu0 %3424
    %v3427 = vmul.f32 %v3420, %v3425
    %3429 = vrot.lane.b32.xlu0 %v3427, 32
    %v3430 = vpop.permute.xlu0 %3429
    %v3432 = vadd.f32 %v3422, %v3430
    %v3433 = vtanh.pop %v3432
    %3435 = vrot.lane.b32.xlu0 %v3433, 64
    %v3436 = vpop.permute.xlu0 %3435
    %v3438 = vmul.f32 %v3420, %v3436
    %v3439 = vld [vmem:[#allocation8 + $0x2c0] sm:$0xff]
    %v3440 = vld [vmem:[#allocation8 + $0x2c8] sm:$0xff]
    %v3441 = vld [vmem:[#allocation8 + $0x2d0] sm:$0xff]
    %v3442 = vld [vmem:[#allocation8 + $0x2d8] sm:$0xff]
    %v3443 = vld [vmem:[#allocation8 + $0x2e0] sm:$0x1]
    %v3444 = vlaneseq
    %v3445 = vshrl.u32 %v3444, 7
    %v3446 = vsub.s32 0, %v3445
    %v3447 = vrot.slane %v3443, %v3446
    %3449 = vrot.lane.b32.xlu0 %v3438, 32
    %v3450 = vpop.permute.xlu0 %3449
    %v3451 = vsel %vm43, %v3450, 0
    %3453 = vmatprep.subr.mxu0 0.0
    %3454 = vmatpush1.msra.mxu0 %v3439
    %3455 = vmatprep.subr.mxu0 0.0
    %3456 = vmatpush1.msra.mxu0 %v3440
    %3457 = vmatprep.subr.mxu0 0.0
    %3458 = vmatpush1.msra.mxu0 %v3441
    %3459 = vmatprep.subr.mxu0 0.0
    %3460 = vmatpush1.msra.mxu0 %v3442
    %3461 = vmatprep.subr.mxu0 0.0
    %3462 = vmatpush1.msra.mxu0 0.0
    %3463 = vmatprep.subr.mxu0 0.0
    %3464 = vmatpush1.msra.mxu0 0.0
    %3465 = vmatprep.subr.mxu0 0.0
    %3466 = vmatpush1.msra.mxu0 0.0
    %3467 = vmatprep.subr.mxu0 0.0
    %3468 = vmatpush1.msra.mxu0 0.0
    %3469 = vmatprep.subr.mxu0 0.0
    %3470 = vmatpush1.msra.mxu0 0.0
    %3471 = vmatprep.subr.mxu0 0.0
    %3472 = vmatpush1.msra.mxu0 0.0
    %3473 = vmatprep.subr.mxu0 0.0
    %3474 = vmatpush1.msra.mxu0 0.0
    %3475 = vmatprep.subr.mxu0 0.0
    %3476 = vmatpush1.msra.mxu0 0.0
    %3477 = vmatprep.subr.mxu0 0.0
    %3478 = vmatpush1.msra.mxu0 0.0
    %3479 = vmatprep.subr.mxu0 0.0
    %3480 = vmatpush1.msra.mxu0 0.0
    %3481 = vmatprep.subr.mxu0 0.0
    %3482 = vmatpush1.msra.mxu0 0.0
    %3483 = vmatprep.subr.mxu0 0.0
    %3484 = vmatpush1.msra.mxu0 0.0
    %3485 = vmatprep.subr.mxu0 0.0
    %3486 = vmatpush1.msra.mxu0 0.0
    %3487 = vmatprep.subr.mxu0 0.0
    %3488 = vmatpush1.msra.mxu0 0.0
    %3489 = vmatprep.subr.mxu0 0.0
    %3490 = vmatpush1.msra.mxu0 0.0
    %3491 = vmatprep.subr.mxu0 0.0
    %3492 = vmatpush1.msra.mxu0 0.0
    %3493 = vmatprep.subr.mxu0 0.0
    %3494 = vmatpush1.msra.mxu0 0.0
    %3495 = vmatprep.subr.mxu0 0.0
    %3496 = vmatpush1.msra.mxu0 0.0
    %3497 = vmatprep.subr.mxu0 0.0
    %3498 = vmatpush1.msra.mxu0 0.0
    %3499 = vmatprep.subr.mxu0 0.0
    %3500 = vmatpush1.msra.mxu0 0.0
    %3501 = vmatprep.subr.mxu0 0.0
    %3502 = vmatpush1.msra.mxu0 0.0
    %3503 = vmatprep.subr.mxu0 0.0
    %3504 = vmatpush1.msra.mxu0 0.0
    %3505 = vmatprep.subr.mxu0 0.0
    %3506 = vmatpush1.msra.mxu0 0.0
    %3507 = vmatprep.subr.mxu0 0.0
    %3508 = vmatpush1.msra.mxu0 0.0
    %3509 = vmatprep.subr.mxu0 0.0
    %3510 = vmatpush1.msra.mxu0 0.0
    %3511 = vmatprep.subr.mxu0 0.0
    %3512 = vmatpush1.msra.mxu0 0.0
    %3513 = vmatprep.subr.mxu0 0.0
    %3514 = vmatpush1.msra.mxu0 0.0
    %3515 = vmatprep.subr.mxu0 0.0
    %3516 = vmatpush1.msra.mxu0 0.0
    %3517 = vmatprep.mubr.f32.mxu0 0.0
    %3518 = vmatmul.mubr.f32.gmra.mrb[0].mxu0 %v3451
    %v3519 = vpop.f32.mrb[0].mxu0
    %v3520 = vadd.f32 %v3447, %v3519
    %v3521 = vpop.f32.mrb[0].mxu0
    %3522 = vdwg.mxu0
    %v3524 = vrot.slane %v3520, 1
    %v3526 = vmul.f32 %v3520, %v3524
    %v3527 = vld [vmem:[#allocation8 + $0x2e8] sm:$0xff]
    %v3528 = vld [vmem:[#allocation8 + $0x2f0] sm:$0xff]
    %v3529 = vld [vmem:[#allocation8 + $0x2f8] sm:$0x1]
    %vm3530 = vcmask 130048
    %v3532 = vsel %vm3530, %v3526, 0
    %3534 = vmatprep.subr.mxu0 0.0
    %3535 = vmatpush1.msra.mxu0 %v3527
    %3536 = vmatprep.subr.mxu0 0.0
    %3537 = vmatpush1.msra.mxu0 %v3528
    %3538 = vmatprep.subr.mxu0 0.0
    %3539 = vmatpush1.msra.mxu0 0.0
    %3540 = vmatprep.subr.mxu0 0.0
    %3541 = vmatpush1.msra.mxu0 0.0
    %3542 = vmatprep.subr.mxu0 0.0
    %3543 = vmatpush1.msra.mxu0 0.0
    %3544 = vmatprep.subr.mxu0 0.0
    %3545 = vmatpush1.msra.mxu0 0.0
    %3546 = vmatprep.subr.mxu0 0.0
    %3547 = vmatpush1.msra.mxu0 0.0
    %3548 = vmatprep.subr.mxu0 0.0
    %3549 = vmatpush1.msra.mxu0 0.0
    %3550 = vmatprep.subr.mxu0 0.0
    %3551 = vmatpush1.msra.mxu0 0.0
    %3552 = vmatprep.subr.mxu0 0.0
    %3553 = vmatpush1.msra.mxu0 0.0
    %3554 = vmatprep.subr.mxu0 0.0
    %3555 = vmatpush1.msra.mxu0 0.0
    %3556 = vmatprep.subr.mxu0 0.0
    %3557 = vmatpush1.msra.mxu0 0.0
    %3558 = vmatprep.subr.mxu0 0.0
    %3559 = vmatpush1.msra.mxu0 0.0
    %3560 = vmatprep.subr.mxu0 0.0
    %3561 = vmatpush1.msra.mxu0 0.0
    %3562 = vmatprep.subr.mxu0 0.0
    %3563 = vmatpush1.msra.mxu0 0.0
    %3564 = vmatprep.subr.mxu0 0.0
    %3565 = vmatpush1.msra.mxu0 0.0
    %3566 = vmatprep.subr.mxu0 0.0
    %3567 = vmatpush1.msra.mxu0 0.0
    %3568 = vmatprep.subr.mxu0 0.0
    %3569 = vmatpush1.msra.mxu0 0.0
    %3570 = vmatprep.subr.mxu0 0.0
    %3571 = vmatpush1.msra.mxu0 0.0
    %3572 = vmatprep.subr.mxu0 0.0
    %3573 = vmatpush1.msra.mxu0 0.0
    %3574 = vmatprep.subr.mxu0 0.0
    %3575 = vmatpush1.msra.mxu0 0.0
    %3576 = vmatprep.subr.mxu0 0.0
    %3577 = vmatpush1.msra.mxu0 0.0
    %3578 = vmatprep.subr.mxu0 0.0
    %3579 = vmatpush1.msra.mxu0 0.0
    %3580 = vmatprep.subr.mxu0 0.0
    %3581 = vmatpush1.msra.mxu0 0.0
    %3582 = vmatprep.subr.mxu0 0.0
    %3583 = vmatpush1.msra.mxu0 0.0
    %3584 = vmatprep.subr.mxu0 0.0
    %3585 = vmatpush1.msra.mxu0 0.0
    %3586 = vmatprep.subr.mxu0 0.0
    %3587 = vmatpush1.msra.mxu0 0.0
    %3588 = vmatprep.subr.mxu0 0.0
    %3589 = vmatpush1.msra.mxu0 0.0
    %3590 = vmatprep.subr.mxu0 0.0
    %3591 = vmatpush1.msra.mxu0 0.0
    %3592 = vmatprep.subr.mxu0 0.0
    %3593 = vmatpush1.msra.mxu0 0.0
    %3594 = vmatprep.subr.mxu0 0.0
    %3595 = vmatpush1.msra.mxu0 0.0
    %3596 = vmatprep.subr.mxu0 0.0
    %3597 = vmatpush1.msra.mxu0 0.0
    %3598 = vmatprep.mubr.f32.mxu0 0.0
    %3599 = vmatmul.mubr.f32.gmra.mrb[0].mxu0 %v3532
    %v3600 = vpop.f32.mrb[0].mxu0
    %v3601 = vadd.f32 %v3529, %v3600
    %v3602 = vpop.f32.mrb[0].mxu0
    %3603 = vdwg.mxu0
    %3604 = vst [vmem:[#allocation11] sm:$0xff] 0.0
    %v3605 = vld [vmem:[#allocation8 + $0x300] sm:$0x1]
    %v3606 = vld [vmem:[#allocation8 + $0x308] sm:$0xff]
    %v3607 = vld [vmem:[#allocation8 + $0x310] sm:$0xff]
    %v3608 = vld [vmem:[#allocation8 + $0x318] sm:$0xff]
    %v3609 = vld [vmem:[#allocation8 + $0x320] sm:$0xff]
    %v3610 = vld [vmem:[#allocation8 + $0x328] sm:$0x1]
    %v3611 = vld [vmem:[#allocation8 + $0x330] sm:$0xff]
    %v3612 = vld [vmem:[#allocation8 + $0x338] sm:$0xff]
    %v3613 = vld [vmem:[#allocation8 + $0x340] sm:$0xff]
    %v3614 = vld [vmem:[#allocation8 + $0x348] sm:$0xff]
    %v3615 = vld [vmem:[#allocation8 + $0x350] sm:$0xff]
    %v3616 = vld [vmem:[#allocation8 + $0x358] sm:$0xff]
    %v3617 = vld [vmem:[#allocation8 + $0x360] sm:$0xff]
    %v3618 = vld [vmem:[#allocation8 + $0x368] sm:$0xff]
    %v3619 = vld [vmem:[#allocation8 + $0x370] sm:$0x1]
    %v3620 = vld [vmem:[#allocation8 + $0x378] sm:$0xff]
    %v3621 = vld [vmem:[#allocation8 + $0x380] sm:$0xff]
    %v3622 = vld [vmem:[#allocation8 + $0x388] sm:$0xff]
    %v3623 = vld [vmem:[#allocation8 + $0x390] sm:$0xff]
    %v3624 = vld [vmem:[#allocation8 + $0x398] sm:$0x1]
    %s3625 = sld [smem:[#allocation7]]
    %s3626 = scvt.s32.f32 %s3625
    %v3627 = vstv %s3626
    %v3628 = vmul.f32 %v3627, %v3605
    %v3630 = vsel %vm43, %v3601, 0
    %3632 = vmatprep.subr.mxu0 0.0
    %3633 = vmatpush1.msra.mxu0 %v3606
    %3634 = vmatprep.subr.mxu0 0.0
    %3635 = vmatpush1.msra.mxu0 %v3607
    %3636 = vmatprep.subr.mxu0 0.0
    %3637 = vmatpush1.msra.mxu0 %v3608
    %3638 = vmatprep.subr.mxu0 0.0
    %3639 = vmatpush1.msra.mxu0 %v3609
    %3640 = vmatprep.subr.mxu0 0.0
    %3641 = vmatpush1.msra.mxu0 0.0
    %3642 = vmatprep.subr.mxu0 0.0
    %3643 = vmatpush1.msra.mxu0 0.0
    %3644 = vmatprep.subr.mxu0 0.0
    %3645 = vmatpush1.msra.mxu0 0.0
    %3646 = vmatprep.subr.mxu0 0.0
    %3647 = vmatpush1.msra.mxu0 0.0
    %3648 = vmatprep.subr.mxu0 0.0
    %3649 = vmatpush1.msra.mxu0 0.0
    %3650 = vmatprep.subr.mxu0 0.0
    %3651 = vmatpush1.msra.mxu0 0.0
    %3652 = vmatprep.subr.mxu0 0.0
    %3653 = vmatpush1.msra.mxu0 0.0
    %3654 = vmatprep.subr.mxu0 0.0
    %3655 = vmatpush1.msra.mxu0 0.0
    %3656 = vmatprep.subr.mxu0 0.0
    %3657 = vmatpush1.msra.mxu0 0.0
    %3658 = vmatprep.subr.mxu0 0.0
    %3659 = vmatpush1.msra.mxu0 0.0
    %3660 = vmatprep.subr.mxu0 0.0
    %3661 = vmatpush1.msra.mxu0 0.0
    %3662 = vmatprep.subr.mxu0 0.0
    %3663 = vmatpush1.msra.mxu0 0.0
    %3664 = vmatprep.subr.mxu0 0.0
    %3665 = vmatpush1.msra.mxu0 0.0
    %3666 = vmatprep.subr.mxu0 0.0
    %3667 = vmatpush1.msra.mxu0 0.0
    %3668 = vmatprep.subr.mxu0 0.0
    %3669 = vmatpush1.msra.mxu0 0.0
    %3670 = vmatprep.subr.mxu0 0.0
    %3671 = vmatpush1.msra.mxu0 0.0
    %3672 = vmatprep.subr.mxu0 0.0
    %3673 = vmatpush1.msra.mxu0 0.0
    %3674 = vmatprep.subr.mxu0 0.0
    %3675 = vmatpush1.msra.mxu0 0.0
    %3676 = vmatprep.subr.mxu0 0.0
    %3677 = vmatpush1.msra.mxu0 0.0
    %3678 = vmatprep.subr.mxu0 0.0
    %3679 = vmatpush1.msra.mxu0 0.0
    %3680 = vmatprep.subr.mxu0 0.0
    %3681 = vmatpush1.msra.mxu0 0.0
    %3682 = vmatprep.subr.mxu0 0.0
    %3683 = vmatpush1.msra.mxu0 0.0
    %3684 = vmatprep.subr.mxu0 0.0
    %3685 = vmatpush1.msra.mxu0 0.0
    %3686 = vmatprep.subr.mxu0 0.0
    %3687 = vmatpush1.msra.mxu0 0.0
    %3688 = vmatprep.subr.mxu0 0.0
    %3689 = vmatpush1.msra.mxu0 0.0
    %3690 = vmatprep.subr.mxu0 0.0
    %3691 = vmatpush1.msra.mxu0 0.0
    %3692 = vmatprep.subr.mxu0 0.0
    %3693 = vmatpush1.msra.mxu0 0.0
    %3694 = vmatprep.subr.mxu0 0.0
    %3695 = vmatpush1.msra.mxu0 0.0
    %3696 = vmatprep.mubr.f32.mxu0 0.0
    %3697 = vmatmul.mubr.f32.gmra.mrb[0].mxu0 %v3630
    %v3698 = vpop.f32.mrb[0].mxu0
    %v3699 = vadd.f32 0.0, %v3698
    %v3700 = vpop.f32.mrb[0].mxu0
    %3701 = vdwg.mxu0
    %v3702 = vadd.f32 %v3628, %v3699
    %v3703 = vadd.f32 %v3702, %v3610
    %v3704 = vxor.u32 %v3703, 2147483648
    %v3705 = vmul.f32 %v3704, 1.442695
    %v3706 = vpow.pop %v3705
    %v3707 = vadd.f32 %v3706, 1.0
    %v3708 = vrcp.pop %v3707
    %v3709 = vmul.f32 1.0, %v3708
    %v3710 = vtanh.pop %v3703
    %3711 = vrot.lane.b32.xlu0 %v3601, 32
    %v3712 = vpop.permute.xlu0 %3711
    %v3714 = vmul.f32 %v3709, %v3712
    %3716 = vrot.lane.b32.xlu0 %v3710, 64
    %v3717 = vpop.permute.xlu0 %3716
    %v3719 = vmul.f32 %v3709, %v3717
    %3721 = vrot.lane.b32.xlu0 %v3719, 32
    %v3722 = vpop.permute.xlu0 %3721
    %v3724 = vadd.f32 %v3714, %v3722
    %v3725 = vtanh.pop %v3724
    %3727 = vrot.lane.b32.xlu0 %v3725, 64
    %v3728 = vpop.permute.xlu0 %3727
    %v3730 = vmul.f32 %v3709, %v3728
    %3731 = vmatprep.subr.mxu0 0.0
    %3732 = vmatpush1.msra.mxu0 %v3615
    %3733 = vmatprep.subr.mxu0 0.0
    %3734 = vmatpush1.msra.mxu0 %v3616
    %3735 = vmatprep.subr.mxu0 0.0
    %3736 = vmatpush1.msra.mxu0 %v3617
    %3737 = vmatprep.subr.mxu0 0.0
    %3738 = vmatpush1.msra.mxu0 %v3618
    %3739 = vmatprep.subr.mxu0 0.0
    %3740 = vmatpush1.msra.mxu0 0.0
    %3741 = vmatprep.subr.mxu0 0.0
    %3742 = vmatpush1.msra.mxu0 0.0
    %3743 = vmatprep.subr.mxu0 0.0
    %3744 = vmatpush1.msra.mxu0 0.0
    %3745 = vmatprep.subr.mxu0 0.0
    %3746 = vmatpush1.msra.mxu0 0.0
    %3747 = vmatprep.subr.mxu0 0.0
    %3748 = vmatpush1.msra.mxu0 0.0
    %3749 = vmatprep.subr.mxu0 0.0
    %3750 = vmatpush1.msra.mxu0 0.0
    %3751 = vmatprep.subr.mxu0 0.0
    %3752 = vmatpush1.msra.mxu0 0.0
    %3753 = vmatprep.subr.mxu0 0.0
    %3754 = vmatpush1.msra.mxu0 0.0
    %3755 = vmatprep.subr.mxu0 0.0
    %3756 = vmatpush1.msra.mxu0 0.0
    %3757 = vmatprep.subr.mxu0 0.0
    %3758 = vmatpush1.msra.mxu0 0.0
    %3759 = vmatprep.subr.mxu0 0.0
    %3760 = vmatpush1.msra.mxu0 0.0
    %3761 = vmatprep.subr.mxu0 0.0
    %3762 = vmatpush1.msra.mxu0 0.0
    %3763 = vmatprep.subr.mxu0 0.0
    %3764 = vmatpush1.msra.mxu0 0.0
    %3765 = vmatprep.subr.mxu0 0.0
    %3766 = vmatpush1.msra.mxu0 0.0
    %3767 = vmatprep.subr.mxu0 0.0
    %3768 = vmatpush1.msra.mxu0 0.0
    %3769 = vmatprep.subr.mxu0 0.0
    %3770 = vmatpush1.msra.mxu0 0.0
    %3771 = vmatprep.subr.mxu0 0.0
    %3772 = vmatpush1.msra.mxu0 0.0
    %3773 = vmatprep.subr.mxu0 0.0
    %3774 = vmatpush1.msra.mxu0 0.0
    %3775 = vmatprep.subr.mxu0 0.0
    %3776 = vmatpush1.msra.mxu0 0.0
    %3777 = vmatprep.subr.mxu0 0.0
    %3778 = vmatpush1.msra.mxu0 0.0
    %3779 = vmatprep.subr.mxu0 0.0
    %3780 = vmatpush1.msra.mxu0 0.0
    %3781 = vmatprep.subr.mxu0 0.0
    %3782 = vmatpush1.msra.mxu0 0.0
    %3783 = vmatprep.subr.mxu0 0.0
    %3784 = vmatpush1.msra.mxu0 0.0
    %3785 = vmatprep.subr.mxu0 0.0
    %3786 = vmatpush1.msra.mxu0 0.0
    %3787 = vmatprep.subr.mxu0 0.0
    %3788 = vmatpush1.msra.mxu0 0.0
    %3789 = vmatprep.subr.mxu0 0.0
    %3790 = vmatpush1.msra.mxu0 0.0
    %3791 = vmatprep.subr.mxu0 0.0
    %3792 = vmatpush1.msra.mxu0 0.0
    %3793 = vmatprep.subr.mxu0 0.0
    %3794 = vmatpush1.msra.mxu0 0.0
    %3795 = vmatprep.mubr.f32.mxu0 0.0
    %3796 = vmatmul.mubr.f32.gmra.mrb[0].mxu0 %v3630
    %v3797 = vpop.f32.mrb[0].mxu0
    %v3798 = vadd.f32 0.0, %v3797
    %v3799 = vpop.f32.mrb[0].mxu0
    %3800 = vdwg.mxu0
    %3802 = vrot.lane.b32.xlu0 %v3730, 32
    %v3803 = vpop.permute.xlu0 %3802
    %v3804 = vsel %vm43, %v3803, 0
    %3806 = vmatprep.subr.mxu0 0.0
    %3807 = vmatpush1.msra.mxu0 %v3611
    %3808 = vmatprep.subr.mxu0 0.0
    %3809 = vmatpush1.msra.mxu0 %v3612
    %3810 = vmatprep.subr.mxu0 0.0
    %3811 = vmatpush1.msra.mxu0 %v3613
    %3812 = vmatprep.subr.mxu0 0.0
    %3813 = vmatpush1.msra.mxu0 %v3614
    %3814 = vmatprep.subr.mxu0 0.0
    %3815 = vmatpush1.msra.mxu0 0.0
    %3816 = vmatprep.subr.mxu0 0.0
    %3817 = vmatpush1.msra.mxu0 0.0
    %3818 = vmatprep.subr.mxu0 0.0
    %3819 = vmatpush1.msra.mxu0 0.0
    %3820 = vmatprep.subr.mxu0 0.0
    %3821 = vmatpush1.msra.mxu0 0.0
    %3822 = vmatprep.subr.mxu0 0.0
    %3823 = vmatpush1.msra.mxu0 0.0
    %3824 = vmatprep.subr.mxu0 0.0
    %3825 = vmatpush1.msra.mxu0 0.0
    %3826 = vmatprep.subr.mxu0 0.0
    %3827 = vmatpush1.msra.mxu0 0.0
    %3828 = vmatprep.subr.mxu0 0.0
    %3829 = vmatpush1.msra.mxu0 0.0
    %3830 = vmatprep.subr.mxu0 0.0
    %3831 = vmatpush1.msra.mxu0 0.0
    %3832 = vmatprep.subr.mxu0 0.0
    %3833 = vmatpush1.msra.mxu0 0.0
    %3834 = vmatprep.subr.mxu0 0.0
    %3835 = vmatpush1.msra.mxu0 0.0
    %3836 = vmatprep.subr.mxu0 0.0
    %3837 = vmatpush1.msra.mxu0 0.0
    %3838 = vmatprep.subr.mxu0 0.0
    %3839 = vmatpush1.msra.mxu0 0.0
    %3840 = vmatprep.subr.mxu0 0.0
    %3841 = vmatpush1.msra.mxu0 0.0
    %3842 = vmatprep.subr.mxu0 0.0
    %3843 = vmatpush1.msra.mxu0 0.0
    %3844 = vmatprep.subr.mxu0 0.0
    %3845 = vmatpush1.msra.mxu0 0.0
    %3846 = vmatprep.subr.mxu0 0.0
    %3847 = vmatpush1.msra.mxu0 0.0
    %3848 = vmatprep.subr.mxu0 0.0
    %3849 = vmatpush1.msra.mxu0 0.0
    %3850 = vmatprep.subr.mxu0 0.0
    %3851 = vmatpush1.msra.mxu0 0.0
    %3852 = vmatprep.subr.mxu0 0.0
    %3853 = vmatpush1.msra.mxu0 0.0
    %3854 = vmatprep.subr.mxu0 0.0
    %3855 = vmatpush1.msra.mxu0 0.0
    %3856 = vmatprep.subr.mxu0 0.0
    %3857 = vmatpush1.msra.mxu0 0.0
    %3858 = vmatprep.subr.mxu0 0.0
    %3859 = vmatpush1.msra.mxu0 0.0
    %3860 = vmatprep.subr.mxu0 0.0
    %3861 = vmatpush1.msra.mxu0 0.0
    %3862 = vmatprep.subr.mxu0 0.0
    %3863 = vmatpush1.msra.mxu0 0.0
    %3864 = vmatprep.subr.mxu0 0.0
    %3865 = vmatpush1.msra.mxu0 0.0
    %3866 = vmatprep.subr.mxu0 0.0
    %3867 = vmatpush1.msra.mxu0 0.0
    %3868 = vmatprep.subr.mxu0 0.0
    %3869 = vmatpush1.msra.mxu0 0.0
    %3870 = vmatprep.mubr.f32.mxu0 0.0
    %3871 = vmatmul.mubr.f32.gmra.mrb[0].mxu0 %v3804
    %v3872 = vpop.f32.mrb[0].mxu0
    %v3873 = vadd.f32 %v3798, %v3872
    %v3874 = vpop.f32.mrb[0].mxu0
    %3875 = vdwg.mxu0
    %v3876 = vadd.f32 %v3873, %v3619
    %v3877 = vxor.u32 %v3876, 2147483648
    %v3878 = vmul.f32 %v3877, 1.442695
    %v3879 = vpow.pop %v3878
    %v3880 = vadd.f32 %v3879, 1.0
    %v3881 = vrcp.pop %v3880
    %v3882 = vmul.f32 1.0, %v3881
    %v3883 = vtanh.pop %v3876
    %v3884 = vmul.f32 %v3882, %v3712
    %3886 = vrot.lane.b32.xlu0 %v3883, 64
    %v3887 = vpop.permute.xlu0 %3886
    %v3889 = vmul.f32 %v3882, %v3887
    %3891 = vrot.lane.b32.xlu0 %v3889, 32
    %v3892 = vpop.permute.xlu0 %3891
    %v3894 = vadd.f32 %v3884, %v3892
    %v3895 = vtanh.pop %v3894
    %3897 = vrot.lane.b32.xlu0 %v3895, 64
    %v3898 = vpop.permute.xlu0 %3897
    %v3900 = vmul.f32 %v3882, %v3898
    %3902 = vrot.lane.b32.xlu0 %v3900, 32
    %v3903 = vpop.permute.xlu0 %3902
    %v3904 = vsel %vm43, %v3903, 0
    %3906 = vmatprep.subr.mxu0 0.0
    %3907 = vmatpush1.msra.mxu0 %v3620
    %3908 = vmatprep.subr.mxu0 0.0
    %3909 = vmatpush1.msra.mxu0 %v3621
    %3910 = vmatprep.subr.mxu0 0.0
    %3911 = vmatpush1.msra.mxu0 %v3622
    %3912 = vmatprep.subr.mxu0 0.0
    %3913 = vmatpush1.msra.mxu0 %v3623
    %3914 = vmatprep.subr.mxu0 0.0
    %3915 = vmatpush1.msra.mxu0 0.0
    %3916 = vmatprep.subr.mxu0 0.0
    %3917 = vmatpush1.msra.mxu0 0.0
    %3918 = vmatprep.subr.mxu0 0.0
    %3919 = vmatpush1.msra.mxu0 0.0
    %3920 = vmatprep.subr.mxu0 0.0
    %3921 = vmatpush1.msra.mxu0 0.0
    %3922 = vmatprep.subr.mxu0 0.0
    %3923 = vmatpush1.msra.mxu0 0.0
    %3924 = vmatprep.subr.mxu0 0.0
    %3925 = vmatpush1.msra.mxu0 0.0
    %3926 = vmatprep.subr.mxu0 0.0
    %3927 = vmatpush1.msra.mxu0 0.0
    %3928 = vmatprep.subr.mxu0 0.0
    %3929 = vmatpush1.msra.mxu0 0.0
    %3930 = vmatprep.subr.mxu0 0.0
    %3931 = vmatpush1.msra.mxu0 0.0
    %3932 = vmatprep.subr.mxu0 0.0
    %3933 = vmatpush1.msra.mxu0 0.0
    %3934 = vmatprep.subr.mxu0 0.0
    %3935 = vmatpush1.msra.mxu0 0.0
    %3936 = vmatprep.subr.mxu0 0.0
    %3937 = vmatpush1.msra.mxu0 0.0
    %3938 = vmatprep.subr.mxu0 0.0
    %3939 = vmatpush1.msra.mxu0 0.0
    %3940 = vmatprep.subr.mxu0 0.0
    %3941 = vmatpush1.msra.mxu0 0.0
    %3942 = vmatprep.subr.mxu0 0.0
    %3943 = vmatpush1.msra.mxu0 0.0
    %3944 = vmatprep.subr.mxu0 0.0
    %3945 = vmatpush1.msra.mxu0 0.0
    %3946 = vmatprep.subr.mxu0 0.0
    %3947 = vmatpush1.msra.mxu0 0.0
    %3948 = vmatprep.subr.mxu0 0.0
    %3949 = vmatpush1.msra.mxu0 0.0
    %3950 = vmatprep.subr.mxu0 0.0
    %3951 = vmatpush1.msra.mxu0 0.0
    %3952 = vmatprep.subr.mxu0 0.0
    %3953 = vmatpush1.msra.mxu0 0.0
    %3954 = vmatprep.subr.mxu0 0.0
    %3955 = vmatpush1.msra.mxu0 0.0
    %3956 = vmatprep.subr.mxu0 0.0
    %3957 = vmatpush1.msra.mxu0 0.0
    %3958 = vmatprep.subr.mxu0 0.0
    %3959 = vmatpush1.msra.mxu0 0.0
    %3960 = vmatprep.subr.mxu0 0.0
    %3961 = vmatpush1.msra.mxu0 0.0
    %3962 = vmatprep.subr.mxu0 0.0
    %3963 = vmatpush1.msra.mxu0 0.0
    %3964 = vmatprep.subr.mxu0 0.0
    %3965 = vmatpush1.msra.mxu0 0.0
    %3966 = vmatprep.subr.mxu0 0.0
    %3967 = vmatpush1.msra.mxu0 0.0
    %3968 = vmatprep.subr.mxu0 0.0
    %3969 = vmatpush1.msra.mxu0 0.0
    %3970 = vmatprep.mubr.f32.mxu0 0.0
    %3971 = vmatmul.mubr.f32.gmra.mrb[0].mxu0 %v3904
    %v3972 = vpop.f32.mrb[0].mxu0
    %v3973 = vadd.f32 %v3624, %v3972
    %v3974 = vpop.f32.mrb[0].mxu0
    %3975 = vdwg.mxu0
    %v3976 = vmax.f32 %v3973, 0.0
    %3977 = vst [vmem:[#allocation11] sm:$0x1] %v3976
    %v3979 = vor.u32 %v3976, 127
    %v3980 = vsub.s32 %v3979, %v31
    %v3981 = vsel %vm461, %v3980, 2147483648
    %v3982 = vand.u32 %v3981, 65535
    %v3983 = vshra.s32 %v3981, 16
    %v3984 = vcvt.s32.f32 %v3982
    %v3985 = vcvt.s32.f32 %v3983
    %3986 = vmax.xlane.f32.xlu0 %v3985
    %v3987 = vpop.xlane.xlu0 %3986
    %vm3988 = vcmp.eq.f32.partialorder %v3985, %v3987
    %v3989 = vsel %vm3988, %v3984, -inf
    %3990 = vmax.xlane.f32.xlu0 %v3989
    %v3991 = vpop.xlane.xlu0 %3990
    %v3992 = vcvt.f32.s32 %v3991
    %v3993 = vcvt.f32.s32 %v3987
    %v3994 = vshll.u32 %v3993, 16
    %v3995 = vadd.s32 %v3994, %v3992
    %v3996 = vand.u32 %v3995, 127
    %v3997 = vsub.s32 127, %v3996
    %v3998 = vcvt.s32.f32 %v3997
    %v3999 = vmul.f32 %v3998, %v3605
    %4000 = vmatprep.subr.mxu0 0.0
    %4001 = vmatpush1.msra.mxu0 %v3606
    %4002 = vmatprep.subr.mxu0 0.0
    %4003 = vmatpush1.msra.mxu0 %v3607
    %4004 = vmatprep.subr.mxu0 0.0
    %4005 = vmatpush1.msra.mxu0 %v3608
    %4006 = vmatprep.subr.mxu0 0.0
    %4007 = vmatpush1.msra.mxu0 %v3609
    %4008 = vmatprep.subr.mxu0 0.0
    %4009 = vmatpush1.msra.mxu0 0.0
    %4010 = vmatprep.subr.mxu0 0.0
    %4011 = vmatpush1.msra.mxu0 0.0
    %4012 = vmatprep.subr.mxu0 0.0
    %4013 = vmatpush1.msra.mxu0 0.0
    %4014 = vmatprep.subr.mxu0 0.0
    %4015 = vmatpush1.msra.mxu0 0.0
    %4016 = vmatprep.subr.mxu0 0.0
    %4017 = vmatpush1.msra.mxu0 0.0
    %4018 = vmatprep.subr.mxu0 0.0
    %4019 = vmatpush1.msra.mxu0 0.0
    %4020 = vmatprep.subr.mxu0 0.0
    %4021 = vmatpush1.msra.mxu0 0.0
    %4022 = vmatprep.subr.mxu0 0.0
    %4023 = vmatpush1.msra.mxu0 0.0
    %4024 = vmatprep.subr.mxu0 0.0
    %4025 = vmatpush1.msra.mxu0 0.0
    %4026 = vmatprep.subr.mxu0 0.0
    %4027 = vmatpush1.msra.mxu0 0.0
    %4028 = vmatprep.subr.mxu0 0.0
    %4029 = vmatpush1.msra.mxu0 0.0
    %4030 = vmatprep.subr.mxu0 0.0
    %4031 = vmatpush1.msra.mxu0 0.0
    %4032 = vmatprep.subr.mxu0 0.0
    %4033 = vmatpush1.msra.mxu0 0.0
    %4034 = vmatprep.subr.mxu0 0.0
    %4035 = vmatpush1.msra.mxu0 0.0
    %4036 = vmatprep.subr.mxu0 0.0
    %4037 = vmatpush1.msra.mxu0 0.0
    %4038 = vmatprep.subr.mxu0 0.0
    %4039 = vmatpush1.msra.mxu0 0.0
    %4040 = vmatprep.subr.mxu0 0.0
    %4041 = vmatpush1.msra.mxu0 0.0
    %4042 = vmatprep.subr.mxu0 0.0
    %4043 = vmatpush1.msra.mxu0 0.0
    %4044 = vmatprep.subr.mxu0 0.0
    %4045 = vmatpush1.msra.mxu0 0.0
    %4046 = vmatprep.subr.mxu0 0.0
    %4047 = vmatpush1.msra.mxu0 0.0
    %4048 = vmatprep.subr.mxu0 0.0
    %4049 = vmatpush1.msra.mxu0 0.0
    %4050 = vmatprep.subr.mxu0 0.0
    %4051 = vmatpush1.msra.mxu0 0.0
    %4052 = vmatprep.subr.mxu0 0.0
    %4053 = vmatpush1.msra.mxu0 0.0
    %4054 = vmatprep.subr.mxu0 0.0
    %4055 = vmatpush1.msra.mxu0 0.0
    %4056 = vmatprep.subr.mxu0 0.0
    %4057 = vmatpush1.msra.mxu0 0.0
    %4058 = vmatprep.subr.mxu0 0.0
    %4059 = vmatpush1.msra.mxu0 0.0
    %4060 = vmatprep.subr.mxu0 0.0
    %4061 = vmatpush1.msra.mxu0 0.0
    %4062 = vmatprep.subr.mxu0 0.0
    %4063 = vmatpush1.msra.mxu0 0.0
    %4064 = vmatprep.mubr.f32.mxu0 0.0
    %4065 = vmatmul.mubr.f32.gmra.mrb[0].mxu0 %v3804
    %v4066 = vpop.f32.mrb[0].mxu0
    %v4067 = vadd.f32 0.0, %v4066
    %v4068 = vpop.f32.mrb[0].mxu0
    %4069 = vdwg.mxu0
    %v4070 = vadd.f32 %v3999, %v4067
    %v4071 = vadd.f32 %v4070, %v3610
    %v4072 = vxor.u32 %v4071, 2147483648
    %v4073 = vmul.f32 %v4072, 1.442695
    %v4074 = vpow.pop %v4073
    %v4075 = vadd.f32 %v4074, 1.0
    %v4076 = vrcp.pop %v4075
    %v4077 = vmul.f32 1.0, %v4076
    %v4078 = vtanh.pop %v4071
    %v4079 = vmul.f32 %v4077, %v3724
    %4081 = vrot.lane.b32.xlu0 %v4078, 64
    %v4082 = vpop.permute.xlu0 %4081
    %v4084 = vmul.f32 %v4077, %v4082
    %4086 = vrot.lane.b32.xlu0 %v4084, 32
    %v4087 = vpop.permute.xlu0 %4086
    %v4089 = vadd.f32 %v4079, %v4087
    %v4090 = vtanh.pop %v4089
    %4092 = vrot.lane.b32.xlu0 %v4090, 64
    %v4093 = vpop.permute.xlu0 %4092
    %v4095 = vmul.f32 %v4077, %v4093
    %4096 = vmatprep.subr.mxu0 0.0
    %4097 = vmatpush1.msra.mxu0 %v3615
    %4098 = vmatprep.subr.mxu0 0.0
    %4099 = vmatpush1.msra.mxu0 %v3616
    %4100 = vmatprep.subr.mxu0 0.0
    %4101 = vmatpush1.msra.mxu0 %v3617
    %4102 = vmatprep.subr.mxu0 0.0
    %4103 = vmatpush1.msra.mxu0 %v3618
    %4104 = vmatprep.subr.mxu0 0.0
    %4105 = vmatpush1.msra.mxu0 0.0
    %4106 = vmatprep.subr.mxu0 0.0
    %4107 = vmatpush1.msra.mxu0 0.0
    %4108 = vmatprep.subr.mxu0 0.0
    %4109 = vmatpush1.msra.mxu0 0.0
    %4110 = vmatprep.subr.mxu0 0.0
    %4111 = vmatpush1.msra.mxu0 0.0
    %4112 = vmatprep.subr.mxu0 0.0
    %4113 = vmatpush1.msra.mxu0 0.0
    %4114 = vmatprep.subr.mxu0 0.0
    %4115 = vmatpush1.msra.mxu0 0.0
    %4116 = vmatprep.subr.mxu0 0.0
    %4117 = vmatpush1.msra.mxu0 0.0
    %4118 = vmatprep.subr.mxu0 0.0
    %4119 = vmatpush1.msra.mxu0 0.0
    %4120 = vmatprep.subr.mxu0 0.0
    %4121 = vmatpush1.msra.mxu0 0.0
    %4122 = vmatprep.subr.mxu0 0.0
    %4123 = vmatpush1.msra.mxu0 0.0
    %4124 = vmatprep.subr.mxu0 0.0
    %4125 = vmatpush1.msra.mxu0 0.0
    %4126 = vmatprep.subr.mxu0 0.0
    %4127 = vmatpush1.msra.mxu0 0.0
    %4128 = vmatprep.subr.mxu0 0.0
    %4129 = vmatpush1.msra.mxu0 0.0
    %4130 = vmatprep.subr.mxu0 0.0
    %4131 = vmatpush1.msra.mxu0 0.0
    %4132 = vmatprep.subr.mxu0 0.0
    %4133 = vmatpush1.msra.mxu0 0.0
    %4134 = vmatprep.subr.mxu0 0.0
    %4135 = vmatpush1.msra.mxu0 0.0
    %4136 = vmatprep.subr.mxu0 0.0
    %4137 = vmatpush1.msra.mxu0 0.0
    %4138 = vmatprep.subr.mxu0 0.0
    %4139 = vmatpush1.msra.mxu0 0.0
    %4140 = vmatprep.subr.mxu0 0.0
    %4141 = vmatpush1.msra.mxu0 0.0
    %4142 = vmatprep.subr.mxu0 0.0
    %4143 = vmatpush1.msra.mxu0 0.0
    %4144 = vmatprep.subr.mxu0 0.0
    %4145 = vmatpush1.msra.mxu0 0.0
    %4146 = vmatprep.subr.mxu0 0.0
    %4147 = vmatpush1.msra.mxu0 0.0
    %4148 = vmatprep.subr.mxu0 0.0
    %4149 = vmatpush1.msra.mxu0 0.0
    %4150 = vmatprep.subr.mxu0 0.0
    %4151 = vmatpush1.msra.mxu0 0.0
    %4152 = vmatprep.subr.mxu0 0.0
    %4153 = vmatpush1.msra.mxu0 0.0
    %4154 = vmatprep.subr.mxu0 0.0
    %4155 = vmatpush1.msra.mxu0 0.0
    %4156 = vmatprep.subr.mxu0 0.0
    %4157 = vmatpush1.msra.mxu0 0.0
    %4158 = vmatprep.subr.mxu0 0.0
    %4159 = vmatpush1.msra.mxu0 0.0
    %4160 = vmatprep.mubr.f32.mxu0 0.0
    %4161 = vmatmul.mubr.f32.gmra.mrb[0].mxu0 %v3904
    %v4162 = vpop.f32.mrb[0].mxu0
    %v4163 = vadd.f32 0.0, %v4162
    %v4164 = vpop.f32.mrb[0].mxu0
    %4165 = vdwg.mxu0
    %4167 = vrot.lane.b32.xlu0 %v4095, 32
    %v4168 = vpop.permute.xlu0 %4167
    %v4169 = vsel %vm43, %v4168, 0
    %4171 = vmatprep.subr.mxu0 0.0
    %4172 = vmatpush1.msra.mxu0 %v3611
    %4173 = vmatprep.subr.mxu0 0.0
    %4174 = vmatpush1.msra.mxu0 %v3612
    %4175 = vmatprep.subr.mxu0 0.0
    %4176 = vmatpush1.msra.mxu0 %v3613
    %4177 = vmatprep.subr.mxu0 0.0
    %4178 = vmatpush1.msra.mxu0 %v3614
    %4179 = vmatprep.subr.mxu0 0.0
    %4180 = vmatpush1.msra.mxu0 0.0
    %4181 = vmatprep.subr.mxu0 0.0
    %4182 = vmatpush1.msra.mxu0 0.0
    %4183 = vmatprep.subr.mxu0 0.0
    %4184 = vmatpush1.msra.mxu0 0.0
    %4185 = vmatprep.subr.mxu0 0.0
    %4186 = vmatpush1.msra.mxu0 0.0
    %4187 = vmatprep.subr.mxu0 0.0
    %4188 = vmatpush1.msra.mxu0 0.0
    %4189 = vmatprep.subr.mxu0 0.0
    %4190 = vmatpush1.msra.mxu0 0.0
    %4191 = vmatprep.subr.mxu0 0.0
    %4192 = vmatpush1.msra.mxu0 0.0
    %4193 = vmatprep.subr.mxu0 0.0
    %4194 = vmatpush1.msra.mxu0 0.0
    %4195 = vmatprep.subr.mxu0 0.0
    %4196 = vmatpush1.msra.mxu0 0.0
    %4197 = vmatprep.subr.mxu0 0.0
    %4198 = vmatpush1.msra.mxu0 0.0
    %4199 = vmatprep.subr.mxu0 0.0
    %4200 = vmatpush1.msra.mxu0 0.0
    %4201 = vmatprep.subr.mxu0 0.0
    %4202 = vmatpush1.msra.mxu0 0.0
    %4203 = vmatprep.subr.mxu0 0.0
    %4204 = vmatpush1.msra.mxu0 0.0
    %4205 = vmatprep.subr.mxu0 0.0
    %4206 = vmatpush1.msra.mxu0 0.0
    %4207 = vmatprep.subr.mxu0 0.0
    %4208 = vmatpush1.msra.mxu0 0.0
    %4209 = vmatprep.subr.mxu0 0.0
    %4210 = vmatpush1.msra.mxu0 0.0
    %4211 = vmatprep.subr.mxu0 0.0
    %4212 = vmatpush1.msra.mxu0 0.0
    %4213 = vmatprep.subr.mxu0 0.0
    %4214 = vmatpush1.msra.mxu0 0.0
    %4215 = vmatprep.subr.mxu0 0.0
    %4216 = vmatpush1.msra.mxu0 0.0
    %4217 = vmatprep.subr.mxu0 0.0
    %4218 = vmatpush1.msra.mxu0 0.0
    %4219 = vmatprep.subr.mxu0 0.0
    %4220 = vmatpush1.msra.mxu0 0.0
    %4221 = vmatprep.subr.mxu0 0.0
    %4222 = vmatpush1.msra.mxu0 0.0
    %4223 = vmatprep.subr.mxu0 0.0
    %4224 = vmatpush1.msra.mxu0 0.0
    %4225 = vmatprep.subr.mxu0 0.0
    %4226 = vmatpush1.msra.mxu0 0.0
    %4227 = vmatprep.subr.mxu0 0.0
    %4228 = vmatpush1.msra.mxu0 0.0
    %4229 = vmatprep.subr.mxu0 0.0
    %4230 = vmatpush1.msra.mxu0 0.0
    %4231 = vmatprep.subr.mxu0 0.0
    %4232 = vmatpush1.msra.mxu0 0.0
    %4233 = vmatprep.subr.mxu0 0.0
    %4234 = vmatpush1.msra.mxu0 0.0
    %4235 = vmatprep.mubr.f32.mxu0 0.0
    %4236 = vmatmul.mubr.f32.gmra.mrb[0].mxu0 %v4169
    %v4237 = vpop.f32.mrb[0].mxu0
    %v4238 = vadd.f32 %v4163, %v4237
    %v4239 = vpop.f32.mrb[0].mxu0
    %4240 = vdwg.mxu0
    %v4241 = vadd.f32 %v4238, %v3619
    %v4242 = vxor.u32 %v4241, 2147483648
    %v4243 = vmul.f32 %v4242, 1.442695
    %v4244 = vpow.pop %v4243
    %v4245 = vadd.f32 %v4244, 1.0
    %v4246 = vrcp.pop %v4245
    %v4247 = vmul.f32 1.0, %v4246
    %v4248 = vtanh.pop %v4241
    %v4249 = vmul.f32 %v4247, %v3894
    %4251 = vrot.lane.b32.xlu0 %v4248, 64
    %v4252 = vpop.permute.xlu0 %4251
    %v4254 = vmul.f32 %v4247, %v4252
    %4256 = vrot.lane.b32.xlu0 %v4254, 32
    %v4257 = vpop.permute.xlu0 %4256
    %v4259 = vadd.f32 %v4249, %v4257
    %v4260 = vtanh.pop %v4259
    %4262 = vrot.lane.b32.xlu0 %v4260, 64
    %v4263 = vpop.permute.xlu0 %4262
    %v4265 = vmul.f32 %v4247, %v4263
    %4267 = vrot.lane.b32.xlu0 %v4265, 32
    %v4268 = vpop.permute.xlu0 %4267
    %v4269 = vsel %vm43, %v4268, 0
    %4271 = vmatprep.subr.mxu0 0.0
    %4272 = vmatpush1.msra.mxu0 %v3620
    %4273 = vmatprep.subr.mxu0 0.0
    %4274 = vmatpush1.msra.mxu0 %v3621
    %4275 = vmatprep.subr.mxu0 0.0
    %4276 = vmatpush1.msra.mxu0 %v3622
    %4277 = vmatprep.subr.mxu0 0.0
    %4278 = vmatpush1.msra.mxu0 %v3623
    %4279 = vmatprep.subr.mxu0 0.0
    %4280 = vmatpush1.msra.mxu0 0.0
    %4281 = vmatprep.subr.mxu0 0.0
    %4282 = vmatpush1.msra.mxu0 0.0
    %4283 = vmatprep.subr.mxu0 0.0
    %4284 = vmatpush1.msra.mxu0 0.0
    %4285 = vmatprep.subr.mxu0 0.0
    %4286 = vmatpush1.msra.mxu0 0.0
    %4287 = vmatprep.subr.mxu0 0.0
    %4288 = vmatpush1.msra.mxu0 0.0
    %4289 = vmatprep.subr.mxu0 0.0
    %4290 = vmatpush1.msra.mxu0 0.0
    %4291 = vmatprep.subr.mxu0 0.0
    %4292 = vmatpush1.msra.mxu0 0.0
    %4293 = vmatprep.subr.mxu0 0.0
    %4294 = vmatpush1.msra.mxu0 0.0
    %4295 = vmatprep.subr.mxu0 0.0
    %4296 = vmatpush1.msra.mxu0 0.0
    %4297 = vmatprep.subr.mxu0 0.0
    %4298 = vmatpush1.msra.mxu0 0.0
    %4299 = vmatprep.subr.mxu0 0.0
    %4300 = vmatpush1.msra.mxu0 0.0
    %4301 = vmatprep.subr.mxu0 0.0
    %4302 = vmatpush1.msra.mxu0 0.0
    %4303 = vmatprep.subr.mxu0 0.0
    %4304 = vmatpush1.msra.mxu0 0.0
    %4305 = vmatprep.subr.mxu0 0.0
    %4306 = vmatpush1.msra.mxu0 0.0
    %4307 = vmatprep.subr.mxu0 0.0
    %4308 = vmatpush1.msra.mxu0 0.0
    %4309 = vmatprep.subr.mxu0 0.0
    %4310 = vmatpush1.msra.mxu0 0.0
    %4311 = vmatprep.subr.mxu0 0.0
    %4312 = vmatpush1.msra.mxu0 0.0
    %4313 = vmatprep.subr.mxu0 0.0
    %4314 = vmatpush1.msra.mxu0 0.0
    %4315 = vmatprep.subr.mxu0 0.0
    %4316 = vmatpush1.msra.mxu0 0.0
    %4317 = vmatprep.subr.mxu0 0.0
    %4318 = vmatpush1.msra.mxu0 0.0
    %4319 = vmatprep.subr.mxu0 0.0
    %4320 = vmatpush1.msra.mxu0 0.0
    %4321 = vmatprep.subr.mxu0 0.0
    %4322 = vmatpush1.msra.mxu0 0.0
    %4323 = vmatprep.subr.mxu0 0.0
    %4324 = vmatpush1.msra.mxu0 0.0
    %4325 = vmatprep.subr.mxu0 0.0
    %4326 = vmatpush1.msra.mxu0 0.0
    %4327 = vmatprep.subr.mxu0 0.0
    %4328 = vmatpush1.msra.mxu0 0.0
    %4329 = vmatprep.subr.mxu0 0.0
    %4330 = vmatpush1.msra.mxu0 0.0
    %4331 = vmatprep.subr.mxu0 0.0
    %4332 = vmatpush1.msra.mxu0 0.0
    %4333 = vmatprep.subr.mxu0 0.0
    %4334 = vmatpush1.msra.mxu0 0.0
    %4335 = vmatprep.mubr.f32.mxu0 0.0
    %4336 = vmatmul.mubr.f32.gmra.mrb[0].mxu0 %v4269
    %v4337 = vpop.f32.mrb[0].mxu0
    %v4338 = vadd.f32 %v3624, %v4337
    %v4339 = vpop.f32.mrb[0].mxu0
    %4340 = vdwg.mxu0
    %v4341 = vmax.f32 %v4338, 0.0
    %4342 = vst [vmem:[#allocation11 + $0x1] sm:$0x1] %v4341
    %v4344 = vor.u32 %v4341, 127
    %v4345 = vsub.s32 %v4344, %v31
    %v4346 = vsel %vm461, %v4345, 2147483648
    %v4347 = vand.u32 %v4346, 65535
    %v4348 = vshra.s32 %v4346, 16
    %v4349 = vcvt.s32.f32 %v4347
    %v4350 = vcvt.s32.f32 %v4348
    %4351 = vmax.xlane.f32.xlu0 %v4350
    %v4352 = vpop.xlane.xlu0 %4351
    %vm4353 = vcmp.eq.f32.partialorder %v4350, %v4352
    %v4354 = vsel %vm4353, %v4349, -inf
    %4355 = vmax.xlane.f32.xlu0 %v4354
    %v4356 = vpop.xlane.xlu0 %4355
    %v4357 = vcvt.f32.s32 %v4356
    %v4358 = vcvt.f32.s32 %v4352
    %v4359 = vshll.u32 %v4358, 16
    %v4360 = vadd.s32 %v4359, %v4357
    %v4361 = vand.u32 %v4360, 127
    %v4362 = vsub.s32 127, %v4361
    %v4363 = vcvt.s32.f32 %v4362
    %v4364 = vmul.f32 %v4363, %v3605
    %4365 = vmatprep.subr.mxu0 0.0
    %4366 = vmatpush1.msra.mxu0 %v3606
    %4367 = vmatprep.subr.mxu0 0.0
    %4368 = vmatpush1.msra.mxu0 %v3607
    %4369 = vmatprep.subr.mxu0 0.0
    %4370 = vmatpush1.msra.mxu0 %v3608
    %4371 = vmatprep.subr.mxu0 0.0
    %4372 = vmatpush1.msra.mxu0 %v3609
    %4373 = vmatprep.subr.mxu0 0.0
    %4374 = vmatpush1.msra.mxu0 0.0
    %4375 = vmatprep.subr.mxu0 0.0
    %4376 = vmatpush1.msra.mxu0 0.0
    %4377 = vmatprep.subr.mxu0 0.0
    %4378 = vmatpush1.msra.mxu0 0.0
    %4379 = vmatprep.subr.mxu0 0.0
    %4380 = vmatpush1.msra.mxu0 0.0
    %4381 = vmatprep.subr.mxu0 0.0
    %4382 = vmatpush1.msra.mxu0 0.0
    %4383 = vmatprep.subr.mxu0 0.0
    %4384 = vmatpush1.msra.mxu0 0.0
    %4385 = vmatprep.subr.mxu0 0.0
    %4386 = vmatpush1.msra.mxu0 0.0
    %4387 = vmatprep.subr.mxu0 0.0
    %4388 = vmatpush1.msra.mxu0 0.0
    %4389 = vmatprep.subr.mxu0 0.0
    %4390 = vmatpush1.msra.mxu0 0.0
    %4391 = vmatprep.subr.mxu0 0.0
    %4392 = vmatpush1.msra.mxu0 0.0
    %4393 = vmatprep.subr.mxu0 0.0
    %4394 = vmatpush1.msra.mxu0 0.0
    %4395 = vmatprep.subr.mxu0 0.0
    %4396 = vmatpush1.msra.mxu0 0.0
    %4397 = vmatprep.subr.mxu0 0.0
    %4398 = vmatpush1.msra.mxu0 0.0
    %4399 = vmatprep.subr.mxu0 0.0
    %4400 = vmatpush1.msra.mxu0 0.0
    %4401 = vmatprep.subr.mxu0 0.0
    %4402 = vmatpush1.msra.mxu0 0.0
    %4403 = vmatprep.subr.mxu0 0.0
    %4404 = vmatpush1.msra.mxu0 0.0
    %4405 = vmatprep.subr.mxu0 0.0
    %4406 = vmatpush1.msra.mxu0 0.0
    %4407 = vmatprep.subr.mxu0 0.0
    %4408 = vmatpush1.msra.mxu0 0.0
    %4409 = vmatprep.subr.mxu0 0.0
    %4410 = vmatpush1.msra.mxu0 0.0
    %4411 = vmatprep.subr.mxu0 0.0
    %4412 = vmatpush1.msra.mxu0 0.0
    %4413 = vmatprep.subr.mxu0 0.0
    %4414 = vmatpush1.msra.mxu0 0.0
    %4415 = vmatprep.subr.mxu0 0.0
    %4416 = vmatpush1.msra.mxu0 0.0
    %4417 = vmatprep.subr.mxu0 0.0
    %4418 = vmatpush1.msra.mxu0 0.0
    %4419 = vmatprep.subr.mxu0 0.0
    %4420 = vmatpush1.msra.mxu0 0.0
    %4421 = vmatprep.subr.mxu0 0.0
    %4422 = vmatpush1.msra.mxu0 0.0
    %4423 = vmatprep.subr.mxu0 0.0
    %4424 = vmatpush1.msra.mxu0 0.0
    %4425 = vmatprep.subr.mxu0 0.0
    %4426 = vmatpush1.msra.mxu0 0.0
    %4427 = vmatprep.subr.mxu0 0.0
    %4428 = vmatpush1.msra.mxu0 0.0
    %4429 = vmatprep.mubr.f32.mxu0 0.0
    %4430 = vmatmul.mubr.f32.gmra.mrb[0].mxu0 %v4169
    %v4431 = vpop.f32.mrb[0].mxu0
    %v4432 = vadd.f32 0.0, %v4431
    %v4433 = vpop.f32.mrb[0].mxu0
    %4434 = vdwg.mxu0
    %v4435 = vadd.f32 %v4364, %v4432
    %v4436 = vadd.f32 %v4435, %v3610
    %v4437 = vxor.u32 %v4436, 2147483648
    %v4438 = vmul.f32 %v4437, 1.442695
    %v4439 = vpow.pop %v4438
    %v4440 = vadd.f32 %v4439, 1.0
    %v4441 = vrcp.pop %v4440
    %v4442 = vmul.f32 1.0, %v4441
    %v4443 = vtanh.pop %v4436
    %v4444 = vmul.f32 %v4442, %v4089
    %4446 = vrot.lane.b32.xlu0 %v4443, 64
    %v4447 = vpop.permute.xlu0 %4446
    %v4449 = vmul.f32 %v4442, %v4447
    %4451 = vrot.lane.b32.xlu0 %v4449, 32
    %v4452 = vpop.permute.xlu0 %4451
    %v4454 = vadd.f32 %v4444, %v4452
    %v4455 = vtanh.pop %v4454
    %4457 = vrot.lane.b32.xlu0 %v4455, 64
    %v4458 = vpop.permute.xlu0 %4457
    %v4460 = vmul.f32 %v4442, %v4458
    %4461 = vmatprep.subr.mxu0 0.0
    %4462 = vmatpush1.msra.mxu0 %v3615
    %4463 = vmatprep.subr.mxu0 0.0
    %4464 = vmatpush1.msra.mxu0 %v3616
    %4465 = vmatprep.subr.mxu0 0.0
    %4466 = vmatpush1.msra.mxu0 %v3617
    %4467 = vmatprep.subr.mxu0 0.0
    %4468 = vmatpush1.msra.mxu0 %v3618
    %4469 = vmatprep.subr.mxu0 0.0
    %4470 = vmatpush1.msra.mxu0 0.0
    %4471 = vmatprep.subr.mxu0 0.0
    %4472 = vmatpush1.msra.mxu0 0.0
    %4473 = vmatprep.subr.mxu0 0.0
    %4474 = vmatpush1.msra.mxu0 0.0
    %4475 = vmatprep.subr.mxu0 0.0
    %4476 = vmatpush1.msra.mxu0 0.0
    %4477 = vmatprep.subr.mxu0 0.0
    %4478 = vmatpush1.msra.mxu0 0.0
    %4479 = vmatprep.subr.mxu0 0.0
    %4480 = vmatpush1.msra.mxu0 0.0
    %4481 = vmatprep.subr.mxu0 0.0
    %4482 = vmatpush1.msra.mxu0 0.0
    %4483 = vmatprep.subr.mxu0 0.0
    %4484 = vmatpush1.msra.mxu0 0.0
    %4485 = vmatprep.subr.mxu0 0.0
    %4486 = vmatpush1.msra.mxu0 0.0
    %4487 = vmatprep.subr.mxu0 0.0
    %4488 = vmatpush1.msra.mxu0 0.0
    %4489 = vmatprep.subr.mxu0 0.0
    %4490 = vmatpush1.msra.mxu0 0.0
    %4491 = vmatprep.subr.mxu0 0.0
    %4492 = vmatpush1.msra.mxu0 0.0
    %4493 = vmatprep.subr.mxu0 0.0
    %4494 = vmatpush1.msra.mxu0 0.0
    %4495 = vmatprep.subr.mxu0 0.0
    %4496 = vmatpush1.msra.mxu0 0.0
    %4497 = vmatprep.subr.mxu0 0.0
    %4498 = vmatpush1.msra.mxu0 0.0
    %4499 = vmatprep.subr.mxu0 0.0
    %4500 = vmatpush1.msra.mxu0 0.0
    %4501 = vmatprep.subr.mxu0 0.0
    %4502 = vmatpush1.msra.mxu0 0.0
    %4503 = vmatprep.subr.mxu0 0.0
    %4504 = vmatpush1.msra.mxu0 0.0
    %4505 = vmatprep.subr.mxu0 0.0
    %4506 = vmatpush1.msra.mxu0 0.0
    %4507 = vmatprep.subr.mxu0 0.0
    %4508 = vmatpush1.msra.mxu0 0.0
    %4509 = vmatprep.subr.mxu0 0.0
    %4510 = vmatpush1.msra.mxu0 0.0
    %4511 = vmatprep.subr.mxu0 0.0
    %4512 = vmatpush1.msra.mxu0 0.0
    %4513 = vmatprep.subr.mxu0 0.0
    %4514 = vmatpush1.msra.mxu0 0.0
    %4515 = vmatprep.subr.mxu0 0.0
    %4516 = vmatpush1.msra.mxu0 0.0
    %4517 = vmatprep.subr.mxu0 0.0
    %4518 = vmatpush1.msra.mxu0 0.0
    %4519 = vmatprep.subr.mxu0 0.0
    %4520 = vmatpush1.msra.mxu0 0.0
    %4521 = vmatprep.subr.mxu0 0.0
    %4522 = vmatpush1.msra.mxu0 0.0
    %4523 = vmatprep.subr.mxu0 0.0
    %4524 = vmatpush1.msra.mxu0 0.0
    %4525 = vmatprep.mubr.f32.mxu0 0.0
    %4526 = vmatmul.mubr.f32.gmra.mrb[0].mxu0 %v4269
    %v4527 = vpop.f32.mrb[0].mxu0
    %v4528 = vadd.f32 0.0, %v4527
    %v4529 = vpop.f32.mrb[0].mxu0
    %4530 = vdwg.mxu0
    %4532 = vrot.lane.b32.xlu0 %v4460, 32
    %v4533 = vpop.permute.xlu0 %4532
    %v4534 = vsel %vm43, %v4533, 0
    %4536 = vmatprep.subr.mxu0 0.0
    %4537 = vmatpush1.msra.mxu0 %v3611
    %4538 = vmatprep.subr.mxu0 0.0
    %4539 = vmatpush1.msra.mxu0 %v3612
    %4540 = vmatprep.subr.mxu0 0.0
    %4541 = vmatpush1.msra.mxu0 %v3613
    %4542 = vmatprep.subr.mxu0 0.0
    %4543 = vmatpush1.msra.mxu0 %v3614
    %4544 = vmatprep.subr.mxu0 0.0
    %4545 = vmatpush1.msra.mxu0 0.0
    %4546 = vmatprep.subr.mxu0 0.0
    %4547 = vmatpush1.msra.mxu0 0.0
    %4548 = vmatprep.subr.mxu0 0.0
    %4549 = vmatpush1.msra.mxu0 0.0
    %4550 = vmatprep.subr.mxu0 0.0
    %4551 = vmatpush1.msra.mxu0 0.0
    %4552 = vmatprep.subr.mxu0 0.0
    %4553 = vmatpush1.msra.mxu0 0.0
    %4554 = vmatprep.subr.mxu0 0.0
    %4555 = vmatpush1.msra.mxu0 0.0
    %4556 = vmatprep.subr.mxu0 0.0
    %4557 = vmatpush1.msra.mxu0 0.0
    %4558 = vmatprep.subr.mxu0 0.0
    %4559 = vmatpush1.msra.mxu0 0.0
    %4560 = vmatprep.subr.mxu0 0.0
    %4561 = vmatpush1.msra.mxu0 0.0
    %4562 = vmatprep.subr.mxu0 0.0
    %4563 = vmatpush1.msra.mxu0 0.0
    %4564 = vmatprep.subr.mxu0 0.0
    %4565 = vmatpush1.msra.mxu0 0.0
    %4566 = vmatprep.subr.mxu0 0.0
    %4567 = vmatpush1.msra.mxu0 0.0
    %4568 = vmatprep.subr.mxu0 0.0
    %4569 = vmatpush1.msra.mxu0 0.0
    %4570 = vmatprep.subr.mxu0 0.0
    %4571 = vmatpush1.msra.mxu0 0.0
    %4572 = vmatprep.subr.mxu0 0.0
    %4573 = vmatpush1.msra.mxu0 0.0
    %4574 = vmatprep.subr.mxu0 0.0
    %4575 = vmatpush1.msra.mxu0 0.0
    %4576 = vmatprep.subr.mxu0 0.0
    %4577 = vmatpush1.msra.mxu0 0.0
    %4578 = vmatprep.subr.mxu0 0.0
    %4579 = vmatpush1.msra.mxu0 0.0
    %4580 = vmatprep.subr.mxu0 0.0
    %4581 = vmatpush1.msra.mxu0 0.0
    %4582 = vmatprep.subr.mxu0 0.0
    %4583 = vmatpush1.msra.mxu0 0.0
    %4584 = vmatprep.subr.mxu0 0.0
    %4585 = vmatpush1.msra.mxu0 0.0
    %4586 = vmatprep.subr.mxu0 0.0
    %4587 = vmatpush1.msra.mxu0 0.0
    %4588 = vmatprep.subr.mxu0 0.0
    %4589 = vmatpush1.msra.mxu0 0.0
    %4590 = vmatprep.subr.mxu0 0.0
    %4591 = vmatpush1.msra.mxu0 0.0
    %4592 = vmatprep.subr.mxu0 0.0
    %4593 = vmatpush1.msra.mxu0 0.0
    %4594 = vmatprep.subr.mxu0 0.0
    %4595 = vmatpush1.msra.mxu0 0.0
    %4596 = vmatprep.subr.mxu0 0.0
    %4597 = vmatpush1.msra.mxu0 0.0
    %4598 = vmatprep.subr.mxu0 0.0
    %4599 = vmatpush1.msra.mxu0 0.0
    %4600 = vmatprep.mubr.f32.mxu0 0.0
    %4601 = vmatmul.mubr.f32.gmra.mrb[0].mxu0 %v4534
    %v4602 = vpop.f32.mrb[0].mxu0
    %v4603 = vadd.f32 %v4528, %v4602
    %v4604 = vpop.f32.mrb[0].mxu0
    %4605 = vdwg.mxu0
    %v4606 = vadd.f32 %v4603, %v3619
    %v4607 = vxor.u32 %v4606, 2147483648
    %v4608 = vmul.f32 %v4607, 1.442695
    %v4609 = vpow.pop %v4608
    %v4610 = vadd.f32 %v4609, 1.0
    %v4611 = vrcp.pop %v4610
    %v4612 = vmul.f32 1.0, %v4611
    %v4613 = vtanh.pop %v4606
    %v4614 = vmul.f32 %v4612, %v4259
    %4616 = vrot.lane.b32.xlu0 %v4613, 64
    %v4617 = vpop.permute.xlu0 %4616
    %v4619 = vmul.f32 %v4612, %v4617
    %4621 = vrot.lane.b32.xlu0 %v4619, 32
    %v4622 = vpop.permute.xlu0 %4621
    %v4624 = vadd.f32 %v4614, %v4622
    %v4625 = vtanh.pop %v4624
    %4627 = vrot.lane.b32.xlu0 %v4625, 64
    %v4628 = vpop.permute.xlu0 %4627
    %v4630 = vmul.f32 %v4612, %v4628
    %4632 = vrot.lane.b32.xlu0 %v4630, 32
    %v4633 = vpop.permute.xlu0 %4632
    %v4634 = vsel %vm43, %v4633, 0
    %4636 = vmatprep.subr.mxu0 0.0
    %4637 = vmatpush1.msra.mxu0 %v3620
    %4638 = vmatprep.subr.mxu0 0.0
    %4639 = vmatpush1.msra.mxu0 %v3621
    %4640 = vmatprep.subr.mxu0 0.0
    %4641 = vmatpush1.msra.mxu0 %v3622
    %4642 = vmatprep.subr.mxu0 0.0
    %4643 = vmatpush1.msra.mxu0 %v3623
    %4644 = vmatprep.subr.mxu0 0.0
    %4645 = vmatpush1.msra.mxu0 0.0
    %4646 = vmatprep.subr.mxu0 0.0
    %4647 = vmatpush1.msra.mxu0 0.0
    %4648 = vmatprep.subr.mxu0 0.0
    %4649 = vmatpush1.msra.mxu0 0.0
    %4650 = vmatprep.subr.mxu0 0.0
    %4651 = vmatpush1.msra.mxu0 0.0
    %4652 = vmatprep.subr.mxu0 0.0
    %4653 = vmatpush1.msra.mxu0 0.0
    %4654 = vmatprep.subr.mxu0 0.0
    %4655 = vmatpush1.msra.mxu0 0.0
    %4656 = vmatprep.subr.mxu0 0.0
    %4657 = vmatpush1.msra.mxu0 0.0
    %4658 = vmatprep.subr.mxu0 0.0
    %4659 = vmatpush1.msra.mxu0 0.0
    %4660 = vmatprep.subr.mxu0 0.0
    %4661 = vmatpush1.msra.mxu0 0.0
    %4662 = vmatprep.subr.mxu0 0.0
    %4663 = vmatpush1.msra.mxu0 0.0
    %4664 = vmatprep.subr.mxu0 0.0
    %4665 = vmatpush1.msra.mxu0 0.0
    %4666 = vmatprep.subr.mxu0 0.0
    %4667 = vmatpush1.msra.mxu0 0.0
    %4668 = vmatprep.subr.mxu0 0.0
    %4669 = vmatpush1.msra.mxu0 0.0
    %4670 = vmatprep.subr.mxu0 0.0
    %4671 = vmatpush1.msra.mxu0 0.0
    %4672 = vmatprep.subr.mxu0 0.0
    %4673 = vmatpush1.msra.mxu0 0.0
    %4674 = vmatprep.subr.mxu0 0.0
    %4675 = vmatpush1.msra.mxu0 0.0
    %4676 = vmatprep.subr.mxu0 0.0
    %4677 = vmatpush1.msra.mxu0 0.0
    %4678 = vmatprep.subr.mxu0 0.0
    %4679 = vmatpush1.msra.mxu0 0.0
    %4680 = vmatprep.subr.mxu0 0.0
    %4681 = vmatpush1.msra.mxu0 0.0
    %4682 = vmatprep.subr.mxu0 0.0
    %4683 = vmatpush1.msra.mxu0 0.0
    %4684 = vmatprep.subr.mxu0 0.0
    %4685 = vmatpush1.msra.mxu0 0.0
    %4686 = vmatprep.subr.mxu0 0.0
    %4687 = vmatpush1.msra.mxu0 0.0
    %4688 = vmatprep.subr.mxu0 0.0
    %4689 = vmatpush1.msra.mxu0 0.0
    %4690 = vmatprep.subr.mxu0 0.0
    %4691 = vmatpush1.msra.mxu0 0.0
    %4692 = vmatprep.subr.mxu0 0.0
    %4693 = vmatpush1.msra.mxu0 0.0
    %4694 = vmatprep.subr.mxu0 0.0
    %4695 = vmatpush1.msra.mxu0 0.0
    %4696 = vmatprep.subr.mxu0 0.0
    %4697 = vmatpush1.msra.mxu0 0.0
    %4698 = vmatprep.subr.mxu0 0.0
    %4699 = vmatpush1.msra.mxu0 0.0
    %4700 = vmatprep.mubr.f32.mxu0 0.0
    %4701 = vmatmul.mubr.f32.gmra.mrb[0].mxu0 %v4634
    %v4702 = vpop.f32.mrb[0].mxu0
    %v4703 = vadd.f32 %v3624, %v4702
    %v4704 = vpop.f32.mrb[0].mxu0
    %4705 = vdwg.mxu0
    %v4706 = vmax.f32 %v4703, 0.0
    %4707 = vst [vmem:[#allocation11 + $0x2] sm:$0x1] %v4706
    %v4709 = vor.u32 %v4706, 127
    %v4710 = vsub.s32 %v4709, %v31
    %v4711 = vsel %vm461, %v4710, 2147483648
    %v4712 = vand.u32 %v4711, 65535
    %v4713 = vshra.s32 %v4711, 16
    %v4714 = vcvt.s32.f32 %v4712
    %v4715 = vcvt.s32.f32 %v4713
    %4716 = vmax.xlane.f32.xlu0 %v4715
    %v4717 = vpop.xlane.xlu0 %4716
    %vm4718 = vcmp.eq.f32.partialorder %v4715, %v4717
    %v4719 = vsel %vm4718, %v4714, -inf
    %4720 = vmax.xlane.f32.xlu0 %v4719
    %v4721 = vpop.xlane.xlu0 %4720
    %v4722 = vcvt.f32.s32 %v4721
    %v4723 = vcvt.f32.s32 %v4717
    %v4724 = vshll.u32 %v4723, 16
    %v4725 = vadd.s32 %v4724, %v4722
    %v4726 = vand.u32 %v4725, 127
    %v4727 = vsub.s32 127, %v4726
    %v4728 = vcvt.s32.f32 %v4727
    %v4729 = vmul.f32 %v4728, %v3605
    %4730 = vmatprep.subr.mxu0 0.0
    %4731 = vmatpush1.msra.mxu0 %v3606
    %4732 = vmatprep.subr.mxu0 0.0
    %4733 = vmatpush1.msra.mxu0 %v3607
    %4734 = vmatprep.subr.mxu0 0.0
    %4735 = vmatpush1.msra.mxu0 %v3608
    %4736 = vmatprep.subr.mxu0 0.0
    %4737 = vmatpush1.msra.mxu0 %v3609
    %4738 = vmatprep.subr.mxu0 0.0
    %4739 = vmatpush1.msra.mxu0 0.0
    %4740 = vmatprep.subr.mxu0 0.0
    %4741 = vmatpush1.msra.mxu0 0.0
    %4742 = vmatprep.subr.mxu0 0.0
    %4743 = vmatpush1.msra.mxu0 0.0
    %4744 = vmatprep.subr.mxu0 0.0
    %4745 = vmatpush1.msra.mxu0 0.0
    %4746 = vmatprep.subr.mxu0 0.0
    %4747 = vmatpush1.msra.mxu0 0.0
    %4748 = vmatprep.subr.mxu0 0.0
    %4749 = vmatpush1.msra.mxu0 0.0
    %4750 = vmatprep.subr.mxu0 0.0
    %4751 = vmatpush1.msra.mxu0 0.0
    %4752 = vmatprep.subr.mxu0 0.0
    %4753 = vmatpush1.msra.mxu0 0.0
    %4754 = vmatprep.subr.mxu0 0.0
    %4755 = vmatpush1.msra.mxu0 0.0
    %4756 = vmatprep.subr.mxu0 0.0
    %4757 = vmatpush1.msra.mxu0 0.0
    %4758 = vmatprep.subr.mxu0 0.0
    %4759 = vmatpush1.msra.mxu0 0.0
    %4760 = vmatprep.subr.mxu0 0.0
    %4761 = vmatpush1.msra.mxu0 0.0
    %4762 = vmatprep.subr.mxu0 0.0
    %4763 = vmatpush1.msra.mxu0 0.0
    %4764 = vmatprep.subr.mxu0 0.0
    %4765 = vmatpush1.msra.mxu0 0.0
    %4766 = vmatprep.subr.mxu0 0.0
    %4767 = vmatpush1.msra.mxu0 0.0
    %4768 = vmatprep.subr.mxu0 0.0
    %4769 = vmatpush1.msra.mxu0 0.0
    %4770 = vmatprep.subr.mxu0 0.0
    %4771 = vmatpush1.msra.mxu0 0.0
    %4772 = vmatprep.subr.mxu0 0.0
    %4773 = vmatpush1.msra.mxu0 0.0
    %4774 = vmatprep.subr.mxu0 0.0
    %4775 = vmatpush1.msra.mxu0 0.0
    %4776 = vmatprep.subr.mxu0 0.0
    %4777 = vmatpush1.msra.mxu0 0.0
    %4778 = vmatprep.subr.mxu0 0.0
    %4779 = vmatpush1.msra.mxu0 0.0
    %4780 = vmatprep.subr.mxu0 0.0
    %4781 = vmatpush1.msra.mxu0 0.0
    %4782 = vmatprep.subr.mxu0 0.0
    %4783 = vmatpush1.msra.mxu0 0.0
    %4784 = vmatprep.subr.mxu0 0.0
    %4785 = vmatpush1.msra.mxu0 0.0
    %4786 = vmatprep.subr.mxu0 0.0
    %4787 = vmatpush1.msra.mxu0 0.0
    %4788 = vmatprep.subr.mxu0 0.0
    %4789 = vmatpush1.msra.mxu0 0.0
    %4790 = vmatprep.subr.mxu0 0.0
    %4791 = vmatpush1.msra.mxu0 0.0
    %4792 = vmatprep.subr.mxu0 0.0
    %4793 = vmatpush1.msra.mxu0 0.0
    %4794 = vmatprep.mubr.f32.mxu0 0.0
    %4795 = vmatmul.mubr.f32.gmra.mrb[0].mxu0 %v4534
    %v4796 = vpop.f32.mrb[0].mxu0
    %v4797 = vadd.f32 0.0, %v4796
    %v4798 = vpop.f32.mrb[0].mxu0
    %4799 = vdwg.mxu0
    %v4800 = vadd.f32 %v4729, %v4797
    %v4801 = vadd.f32 %v4800, %v3610
    %v4802 = vxor.u32 %v4801, 2147483648
    %v4803 = vmul.f32 %v4802, 1.442695
    %v4804 = vpow.pop %v4803
    %v4805 = vadd.f32 %v4804, 1.0
    %v4806 = vrcp.pop %v4805
    %v4807 = vmul.f32 1.0, %v4806
    %v4808 = vtanh.pop %v4801
    %v4809 = vmul.f32 %v4807, %v4454
    %4811 = vrot.lane.b32.xlu0 %v4808, 64
    %v4812 = vpop.permute.xlu0 %4811
    %v4814 = vmul.f32 %v4807, %v4812
    %4816 = vrot.lane.b32.xlu0 %v4814, 32
    %v4817 = vpop.permute.xlu0 %4816
    %v4819 = vadd.f32 %v4809, %v4817
    %v4820 = vtanh.pop %v4819
    %4822 = vrot.lane.b32.xlu0 %v4820, 64
    %v4823 = vpop.permute.xlu0 %4822
    %v4825 = vmul.f32 %v4807, %v4823
    %4826 = vmatprep.subr.mxu0 0.0
    %4827 = vmatpush1.msra.mxu0 %v3615
    %4828 = vmatprep.subr.mxu0 0.0
    %4829 = vmatpush1.msra.mxu0 %v3616
    %4830 = vmatprep.subr.mxu0 0.0
    %4831 = vmatpush1.msra.mxu0 %v3617
    %4832 = vmatprep.subr.mxu0 0.0
    %4833 = vmatpush1.msra.mxu0 %v3618
    %4834 = vmatprep.subr.mxu0 0.0
    %4835 = vmatpush1.msra.mxu0 0.0
    %4836 = vmatprep.subr.mxu0 0.0
    %4837 = vmatpush1.msra.mxu0 0.0
    %4838 = vmatprep.subr.mxu0 0.0
    %4839 = vmatpush1.msra.mxu0 0.0
    %4840 = vmatprep.subr.mxu0 0.0
    %4841 = vmatpush1.msra.mxu0 0.0
    %4842 = vmatprep.subr.mxu0 0.0
    %4843 = vmatpush1.msra.mxu0 0.0
    %4844 = vmatprep.subr.mxu0 0.0
    %4845 = vmatpush1.msra.mxu0 0.0
    %4846 = vmatprep.subr.mxu0 0.0
    %4847 = vmatpush1.msra.mxu0 0.0
    %4848 = vmatprep.subr.mxu0 0.0
    %4849 = vmatpush1.msra.mxu0 0.0
    %4850 = vmatprep.subr.mxu0 0.0
    %4851 = vmatpush1.msra.mxu0 0.0
    %4852 = vmatprep.subr.mxu0 0.0
    %4853 = vmatpush1.msra.mxu0 0.0
    %4854 = vmatprep.subr.mxu0 0.0
    %4855 = vmatpush1.msra.mxu0 0.0
    %4856 = vmatprep.subr.mxu0 0.0
    %4857 = vmatpush1.msra.mxu0 0.0
    %4858 = vmatprep.subr.mxu0 0.0
    %4859 = vmatpush1.msra.mxu0 0.0
    %4860 = vmatprep.subr.mxu0 0.0
    %4861 = vmatpush1.msra.mxu0 0.0
    %4862 = vmatprep.subr.mxu0 0.0
    %4863 = vmatpush1.msra.mxu0 0.0
    %4864 = vmatprep.subr.mxu0 0.0
    %4865 = vmatpush1.msra.mxu0 0.0
    %4866 = vmatprep.subr.mxu0 0.0
    %4867 = vmatpush1.msra.mxu0 0.0
    %4868 = vmatprep.subr.mxu0 0.0
    %4869 = vmatpush1.msra.mxu0 0.0
    %4870 = vmatprep.subr.mxu0 0.0
    %4871 = vmatpush1.msra.mxu0 0.0
    %4872 = vmatprep.subr.mxu0 0.0
    %4873 = vmatpush1.msra.mxu0 0.0
    %4874 = vmatprep.subr.mxu0 0.0
    %4875 = vmatpush1.msra.mxu0 0.0
    %4876 = vmatprep.subr.mxu0 0.0
    %4877 = vmatpush1.msra.mxu0 0.0
    %4878 = vmatprep.subr.mxu0 0.0
    %4879 = vmatpush1.msra.mxu0 0.0
    %4880 = vmatprep.subr.mxu0 0.0
    %4881 = vmatpush1.msra.mxu0 0.0
    %4882 = vmatprep.subr.mxu0 0.0
    %4883 = vmatpush1.msra.mxu0 0.0
    %4884 = vmatprep.subr.mxu0 0.0
    %4885 = vmatpush1.msra.mxu0 0.0
    %4886 = vmatprep.subr.mxu0 0.0
    %4887 = vmatpush1.msra.mxu0 0.0
    %4888 = vmatprep.subr.mxu0 0.0
    %4889 = vmatpush1.msra.mxu0 0.0
    %4890 = vmatprep.mubr.f32.mxu0 0.0
    %4891 = vmatmul.mubr.f32.gmra.mrb[0].mxu0 %v4634
    %v4892 = vpop.f32.mrb[0].mxu0
    %v4893 = vadd.f32 0.0, %v4892
    %v4894 = vpop.f32.mrb[0].mxu0
    %4895 = vdwg.mxu0
    %4897 = vrot.lane.b32.xlu0 %v4825, 32
    %v4898 = vpop.permute.xlu0 %4897
    %v4899 = vsel %vm43, %v4898, 0
    %4901 = vmatprep.subr.mxu0 0.0
    %4902 = vmatpush1.msra.mxu0 %v3611
    %4903 = vmatprep.subr.mxu0 0.0
    %4904 = vmatpush1.msra.mxu0 %v3612
    %4905 = vmatprep.subr.mxu0 0.0
    %4906 = vmatpush1.msra.mxu0 %v3613
    %4907 = vmatprep.subr.mxu0 0.0
    %4908 = vmatpush1.msra.mxu0 %v3614
    %4909 = vmatprep.subr.mxu0 0.0
    %4910 = vmatpush1.msra.mxu0 0.0
    %4911 = vmatprep.subr.mxu0 0.0
    %4912 = vmatpush1.msra.mxu0 0.0
    %4913 = vmatprep.subr.mxu0 0.0
    %4914 = vmatpush1.msra.mxu0 0.0
    %4915 = vmatprep.subr.mxu0 0.0
    %4916 = vmatpush1.msra.mxu0 0.0
    %4917 = vmatprep.subr.mxu0 0.0
    %4918 = vmatpush1.msra.mxu0 0.0
    %4919 = vmatprep.subr.mxu0 0.0
    %4920 = vmatpush1.msra.mxu0 0.0
    %4921 = vmatprep.subr.mxu0 0.0
    %4922 = vmatpush1.msra.mxu0 0.0
    %4923 = vmatprep.subr.mxu0 0.0
    %4924 = vmatpush1.msra.mxu0 0.0
    %4925 = vmatprep.subr.mxu0 0.0
    %4926 = vmatpush1.msra.mxu0 0.0
    %4927 = vmatprep.subr.mxu0 0.0
    %4928 = vmatpush1.msra.mxu0 0.0
    %4929 = vmatprep.subr.mxu0 0.0
    %4930 = vmatpush1.msra.mxu0 0.0
    %4931 = vmatprep.subr.mxu0 0.0
    %4932 = vmatpush1.msra.mxu0 0.0
    %4933 = vmatprep.subr.mxu0 0.0
    %4934 = vmatpush1.msra.mxu0 0.0
    %4935 = vmatprep.subr.mxu0 0.0
    %4936 = vmatpush1.msra.mxu0 0.0
    %4937 = vmatprep.subr.mxu0 0.0
    %4938 = vmatpush1.msra.mxu0 0.0
    %4939 = vmatprep.subr.mxu0 0.0
    %4940 = vmatpush1.msra.mxu0 0.0
    %4941 = vmatprep.subr.mxu0 0.0
    %4942 = vmatpush1.msra.mxu0 0.0
    %4943 = vmatprep.subr.mxu0 0.0
    %4944 = vmatpush1.msra.mxu0 0.0
    %4945 = vmatprep.subr.mxu0 0.0
    %4946 = vmatpush1.msra.mxu0 0.0
    %4947 = vmatprep.subr.mxu0 0.0
    %4948 = vmatpush1.msra.mxu0 0.0
    %4949 = vmatprep.subr.mxu0 0.0
    %4950 = vmatpush1.msra.mxu0 0.0
    %4951 = vmatprep.subr.mxu0 0.0
    %4952 = vmatpush1.msra.mxu0 0.0
    %4953 = vmatprep.subr.mxu0 0.0
    %4954 = vmatpush1.msra.mxu0 0.0
    %4955 = vmatprep.subr.mxu0 0.0
    %4956 = vmatpush1.msra.mxu0 0.0
    %4957 = vmatprep.subr.mxu0 0.0
    %4958 = vmatpush1.msra.mxu0 0.0
    %4959 = vmatprep.subr.mxu0 0.0
    %4960 = vmatpush1.msra.mxu0 0.0
    %4961 = vmatprep.subr.mxu0 0.0
    %4962 = vmatpush1.msra.mxu0 0.0
    %4963 = vmatprep.subr.mxu0 0.0
    %4964 = vmatpush1.msra.mxu0 0.0
    %4965 = vmatprep.mubr.f32.mxu0 0.0
    %4966 = vmatmul.mubr.f32.gmra.mrb[0].mxu0 %v4899
    %v4967 = vpop.f32.mrb[0].mxu0
    %v4968 = vadd.f32 %v4893, %v4967
    %v4969 = vpop.f32.mrb[0].mxu0
    %4970 = vdwg.mxu0
    %v4971 = vadd.f32 %v4968, %v3619
    %v4972 = vxor.u32 %v4971, 2147483648
    %v4973 = vmul.f32 %v4972, 1.442695
    %v4974 = vpow.pop %v4973
    %v4975 = vadd.f32 %v4974, 1.0
    %v4976 = vrcp.pop %v4975
    %v4977 = vmul.f32 1.0, %v4976
    %v4978 = vtanh.pop %v4971
    %v4979 = vmul.f32 %v4977, %v4624
    %4981 = vrot.lane.b32.xlu0 %v4978, 64
    %v4982 = vpop.permute.xlu0 %4981
    %v4984 = vmul.f32 %v4977, %v4982
    %4986 = vrot.lane.b32.xlu0 %v4984, 32
    %v4987 = vpop.permute.xlu0 %4986
    %v4989 = vadd.f32 %v4979, %v4987
    %v4990 = vtanh.pop %v4989
    %4992 = vrot.lane.b32.xlu0 %v4990, 64
    %v4993 = vpop.permute.xlu0 %4992
    %v4995 = vmul.f32 %v4977, %v4993
    %4997 = vrot.lane.b32.xlu0 %v4995, 32
    %v4998 = vpop.permute.xlu0 %4997
    %v4999 = vsel %vm43, %v4998, 0
    %5001 = vmatprep.subr.mxu0 0.0
    %5002 = vmatpush1.msra.mxu0 %v3620
    %5003 = vmatprep.subr.mxu0 0.0
    %5004 = vmatpush1.msra.mxu0 %v3621
    %5005 = vmatprep.subr.mxu0 0.0
    %5006 = vmatpush1.msra.mxu0 %v3622
    %5007 = vmatprep.subr.mxu0 0.0
    %5008 = vmatpush1.msra.mxu0 %v3623
    %5009 = vmatprep.subr.mxu0 0.0
    %5010 = vmatpush1.msra.mxu0 0.0
    %5011 = vmatprep.subr.mxu0 0.0
    %5012 = vmatpush1.msra.mxu0 0.0
    %5013 = vmatprep.subr.mxu0 0.0
    %5014 = vmatpush1.msra.mxu0 0.0
    %5015 = vmatprep.subr.mxu0 0.0
    %5016 = vmatpush1.msra.mxu0 0.0
    %5017 = vmatprep.subr.mxu0 0.0
    %5018 = vmatpush1.msra.mxu0 0.0
    %5019 = vmatprep.subr.mxu0 0.0
    %5020 = vmatpush1.msra.mxu0 0.0
    %5021 = vmatprep.subr.mxu0 0.0
    %5022 = vmatpush1.msra.mxu0 0.0
    %5023 = vmatprep.subr.mxu0 0.0
    %5024 = vmatpush1.msra.mxu0 0.0
    %5025 = vmatprep.subr.mxu0 0.0
    %5026 = vmatpush1.msra.mxu0 0.0
    %5027 = vmatprep.subr.mxu0 0.0
    %5028 = vmatpush1.msra.mxu0 0.0
    %5029 = vmatprep.subr.mxu0 0.0
    %5030 = vmatpush1.msra.mxu0 0.0
    %5031 = vmatprep.subr.mxu0 0.0
    %5032 = vmatpush1.msra.mxu0 0.0
    %5033 = vmatprep.subr.mxu0 0.0
    %5034 = vmatpush1.msra.mxu0 0.0
    %5035 = vmatprep.subr.mxu0 0.0
    %5036 = vmatpush1.msra.mxu0 0.0
    %5037 = vmatprep.subr.mxu0 0.0
    %5038 = vmatpush1.msra.mxu0 0.0
    %5039 = vmatprep.subr.mxu0 0.0
    %5040 = vmatpush1.msra.mxu0 0.0
    %5041 = vmatprep.subr.mxu0 0.0
    %5042 = vmatpush1.msra.mxu0 0.0
    %5043 = vmatprep.subr.mxu0 0.0
    %5044 = vmatpush1.msra.mxu0 0.0
    %5045 = vmatprep.subr.mxu0 0.0
    %5046 = vmatpush1.msra.mxu0 0.0
    %5047 = vmatprep.subr.mxu0 0.0
    %5048 = vmatpush1.msra.mxu0 0.0
    %5049 = vmatprep.subr.mxu0 0.0
    %5050 = vmatpush1.msra.mxu0 0.0
    %5051 = vmatprep.subr.mxu0 0.0
    %5052 = vmatpush1.msra.mxu0 0.0
    %5053 = vmatprep.subr.mxu0 0.0
    %5054 = vmatpush1.msra.mxu0 0.0
    %5055 = vmatprep.subr.mxu0 0.0
    %5056 = vmatpush1.msra.mxu0 0.0
    %5057 = vmatprep.subr.mxu0 0.0
    %5058 = vmatpush1.msra.mxu0 0.0
    %5059 = vmatprep.subr.mxu0 0.0
    %5060 = vmatpush1.msra.mxu0 0.0
    %5061 = vmatprep.subr.mxu0 0.0
    %5062 = vmatpush1.msra.mxu0 0.0
    %5063 = vmatprep.subr.mxu0 0.0
    %5064 = vmatpush1.msra.mxu0 0.0
    %5065 = vmatprep.mubr.f32.mxu0 0.0
    %5066 = vmatmul.mubr.f32.gmra.mrb[0].mxu0 %v4999
    %v5067 = vpop.f32.mrb[0].mxu0
    %v5068 = vadd.f32 %v3624, %v5067
    %v5069 = vpop.f32.mrb[0].mxu0
    %5070 = vdwg.mxu0
    %v5071 = vmax.f32 %v5068, 0.0
    %5072 = vst [vmem:[#allocation11 + $0x3] sm:$0x1] %v5071
    %vm5073 = vcmp.lt.s32.totalorder %v31, 32
    %v5074 = vld [vmem:[#allocation11] sm:$0xff]
    %v5075 = vsel %vm5073, 1, 0
    %vm5076 = vcmp.eq.s32.totalorder %v5075, 1
    %v5077 = vsel %vm5076, %v5074, -inf
    %5078 = vmax.xlane.f32.xlu0 %v5077
    %v5079 = vpop.xlane.xlu0 %5078
    %v5080 = vsub.f32 %v5077, %v5079
    %v5081 = vmul.f32 %v5080, 1.442695
    %v5082 = vpow.pop %v5081
    %5083 = vadd.xlane.f32.xlu0 %v5082
    %v5084 = vpop.xlane.xlu0 %5083
    %v5085 = vlog2.pop %v5084
    %v5086 = vmul.f32 %v5085, 0.6931472
    %v5087 = vsub.f32 %v5080, %v5086
    %5088 = vst [vmem:[#allocation11] sm:$0xff] %v5087
    // Predicated region
    $region18: #{denoising_ae_forward.1} parent=1 // pred_check
      _
    $region19: #{denoising_ae_forward.1} parent=1 // pred_check_branch
      %5090 = sbr.rel (0) target = $region21
    $region20: #{denoising_ae_forward.1} parent=1 // pred_region
      %s5092 = ssub.s32 128, 128
      %5093 = vsyncadd [#allocation10], %s5092
      %s5095 = sshll.u32 [#allocation11], 4
      %s5096 = int_to_ptr.vmem [resolvable:$true] %s5095
      %5098 = dma.vmem_to_hbm [thread:$0]  %s5096, 128, %s3, [#allocation10]
    $region21: #{denoising_ae_forward.1} parent=1 // pred_fallthru
      _
    // Predicated region
    $region22: #{denoising_ae_forward.1} parent=1 // pred_check
      _
    $region23: #{denoising_ae_forward.1} parent=1 // pred_check_branch
      %5100 = sbr.rel (0) target = $region25
    $region24: #{denoising_ae_forward.1} parent=1 // pred_region
      %5101 = dma.done [#allocation10], 128
    $region25: #{denoising_ae_forward.1} parent=1 // pred_fallthru
      _
    %5102 = vsyncpa [#allocation9], 1
    %5103 = vsyncpa [#allocation10], 1

</llo_original>
